<compile_context>
chip_gen: v5e
topology: v5e:2x2
jax: 0.10.0
libtpu: 0.0.40
codegen_flags: <defaults>
</compile_context>

<pallas_src>
import jax
import jax.numpy as jnp
from jax import lax
from jax.experimental import pallas as pl
from jax.experimental.pallas import tpu as pltpu

BN_EPS = 1e-5
_TAPS = ((0, 0), (0, 1), (1, 0), (1, 1))   # (di, dj) order; matches weight reshape below


def cnn2_backbone_kernel(x_ref, w1_ref, g1_ref, be1_ref, w2t_ref, g2_ref, be2_ref,
                         o_ref, p1_ref, p2_ref):
    """Fused CNN2Backbone forward.

    x_ref:   (N, H, W, Cin)          VMEM  input, NHWC
    w1_ref:  (4*Cin, C1)             VMEM  block-1 weight, k = (di, dj, ci)
    g1_ref:  (1, C1)  be1_ref: (1, C1)
    w2t_ref: (C2, 4*C1)              VMEM  block-2 weight, transposed orientation
    g2_ref:  (C2, 1)  be2_ref: (C2, 1)
    o_ref:   (N, C2, Ho2*Wo2)        VMEM  output, NCHW order, lane-dense last dim
    p1_ref:  (N*Ho*Wo, 4*Cin)        VMEM scratch: block-1 im2col
    p2_ref:  (N*Ho2*Wo2, 4*C1)       VMEM scratch: block-2 im2col
    """
    N, H, W, Cin = x_ref.shape
    Ho, Wo = H - 1, W - 1
    Ho2, Wo2 = Ho - 1, Wo - 1
    C1 = w1_ref.shape[1]
    C2 = w2t_ref.shape[0]
    P1 = N * Ho * Wo
    P2 = Ho2 * Wo2

    x = x_ref[...].astype(jnp.float32)

    # ---------------- Block 1: 2x2 valid conv as ONE im2col matmul ----------------
    # Build the im2col buffer once (static lane-offset stores into VMEM scratch).
    for t, (di, dj) in enumerate(_TAPS):
        p1_ref[:, t * Cin:(t + 1) * Cin] = (
            x[:, di:di + Ho, dj:dj + Wo, :].reshape(P1, Cin))
    # Single MXU dot, K = 4*Cin.  Conv bias omitted: exactly cancelled by BN mean.
    y1 = jnp.dot(p1_ref[...], w1_ref[...],
                 preferred_element_type=jnp.float32)            # (P1, C1)

    # Single-pass BatchNorm (training mode, biased variance) + fused affine + ReLU.
    mean1 = jnp.sum(y1, axis=0, keepdims=True) / P1             # (1, C1)
    var1 = jnp.sum(y1 * y1, axis=0, keepdims=True) / P1 - mean1 * mean1
    scale1 = g1_ref[...] * lax.rsqrt(var1 + BN_EPS)             # (1, C1)
    shift1 = be1_ref[...] - mean1 * scale1
    y1 = jnp.maximum(y1 * scale1 + shift1, 0.0)                 # VPU
    y1 = y1.reshape(N, Ho, Wo, C1)

    # ---------------- Block 2: same, emitted output-channels-first ----------------
    for t, (di, dj) in enumerate(_TAPS):
        p2_ref[:, t * C1:(t + 1) * C1] = (
            y1[:, di:di + Ho2, dj:dj + Wo2, :].reshape(N * P2, C1))
    # (C2, 4*C1) x (N*P2, 4*C1) contracting the last dim of both -> (C2, N*P2):
    # result is already channel-major, i.e. NCHW order -> no exit transpose needed.
    y2 = lax.dot_general(w2t_ref[...], p2_ref[...],
                         dimension_numbers=(((1,), (1,)), ((), ())),
                         preferred_element_type=jnp.float32)    # (C2, N*P2)

    cnt2 = N * P2
    mean2 = jnp.sum(y2, axis=1, keepdims=True) / cnt2           # (C2, 1)
    var2 = jnp.sum(y2 * y2, axis=1, keepdims=True) / cnt2 - mean2 * mean2
    scale2 = g2_ref[...] * lax.rsqrt(var2 + BN_EPS)             # (C2, 1)
    shift2 = be2_ref[...] - mean2 * scale2
    y2 = jnp.maximum(y2 * scale2 + shift2, 0.0)                 # (C2, N*P2)

    # Lane-dense NCHW writeback: columns of y2 are ordered (n, i, j).
    for n in range(N):                                          # N is static; unrolled
        o_ref[n] = y2[:, n * P2:(n + 1) * P2].astype(o_ref.dtype)


def cnn2_backbone_pallas(x_nchw, params):
    """CNN2Backbone forward. Input/output in NCHW to match PyTorch."""
    N, Cin, H, W = x_nchw.shape
    C1 = params["w1"].shape[0]
    C2 = params["w2"].shape[0]
    Ho, Wo = H - 1, W - 1
    Ho2, Wo2 = Ho - 1, Wo - 1

    x_nhwc = jnp.transpose(x_nchw, (0, 2, 3, 1)).astype(jnp.float32)
    # (C1, Cin, 2, 2) -> (2, 2, Cin, C1) -> (4*Cin, C1); k order = (di, dj, ci)
    w1_2d = jnp.transpose(params["w1"], (2, 3, 1, 0)).reshape(4 * Cin, C1)
    w1_2d = w1_2d.astype(jnp.float32)
    # (C2, C1, 2, 2) -> (C2, 2, 2, C1) -> (C2, 4*C1); k order = (di, dj, ci)
    w2t = jnp.transpose(params["w2"], (0, 2, 3, 1)).reshape(C2, 4 * C1)
    w2t = w2t.astype(jnp.float32)

    g1 = params["g1"].reshape(1, C1).astype(jnp.float32)
    be1 = params["be1"].reshape(1, C1).astype(jnp.float32)
    g2 = params["g2"].reshape(C2, 1).astype(jnp.float32)
    be2 = params["be2"].reshape(C2, 1).astype(jnp.float32)
    # Conv biases b1/b2 intentionally not passed: training-mode BN cancels them exactly.

    vmem = pl.BlockSpec(memory_space=pltpu.MemorySpace.VMEM)
    out_flat = pl.pallas_call(
        cnn2_backbone_kernel,
        out_shape=jax.ShapeDtypeStruct((N, C2, Ho2 * Wo2), jnp.float32),
        in_specs=[vmem] * 7,
        out_specs=vmem,
        scratch_shapes=[
            pltpu.VMEM((N * Ho * Wo, 4 * Cin), jnp.float32),    # block-1 im2col
            pltpu.VMEM((N * Ho2 * Wo2, 4 * C1), jnp.float32),   # block-2 im2col
        ],
    )(x_nhwc, w1_2d, g1, be1, w2t, g2, be2)

    # Output is already NCHW-ordered; this reshape is free (no transpose).
    return out_flat.reshape(N, C2, Ho2, Wo2)


# ---------------- pure-JAX reference (correctness check only) ----------------
def _ref_block(x_nchw, w, b, gamma, beta):
    y = lax.conv_general_dilated(
        x_nchw.astype(jnp.float32), w.astype(jnp.float32),
        window_strides=(1, 1), padding="VALID",
        dimension_numbers=("NCHW", "OIHW", "NCHW"))
    y = y + b.reshape(1, -1, 1, 1)
    mean = jnp.mean(y, axis=(0, 2, 3), keepdims=True)
    var = jnp.mean((y - mean) ** 2, axis=(0, 2, 3), keepdims=True)  # biased variance
    y = (y - mean) * lax.rsqrt(var + BN_EPS)
    y = y * gamma.reshape(1, -1, 1, 1) + beta.reshape(1, -1, 1, 1)
    return jnp.maximum(y, 0.0)


def cnn2_backbone_ref(x_nchw, p):
    x = _ref_block(x_nchw, p["w1"], p["b1"], p["g1"], p["be1"])
    x = _ref_block(x, p["w2"], p["b2"], p["g2"], p["be2"])
    return x


if __name__ == "__main__":
    in_channel, out_channel = 4, 8
    N, H, W = 2, 16, 16

    key = jax.random.PRNGKey(0)
    k_x, k_w1, k_b1, k_w2, k_b2 = jax.random.split(key, 5)

    # Deterministic synthetic parameters (PyTorch-like uniform fan-in init).
    fan1 = in_channel * 2 * 2
    fan2 = out_channel * 2 * 2
    params = {
        "w1": jax.random.uniform(k_w1, (out_channel, in_channel, 2, 2),
                                 jnp.float32, -1.0 / fan1 ** 0.5, 1.0 / fan1 ** 0.5),
        "b1": jax.random.uniform(k_b1, (out_channel,),
                                 jnp.float32, -1.0 / fan1 ** 0.5, 1.0 / fan1 ** 0.5),
        "g1": jnp.ones((out_channel,), jnp.float32),
        "be1": jnp.zeros((out_channel,), jnp.float32),
        "w2": jax.random.uniform(k_w2, (out_channel, out_channel, 2, 2),
                                 jnp.float32, -1.0 / fan2 ** 0.5, 1.0 / fan2 ** 0.5),
        "b2": jax.random.uniform(k_b2, (out_channel,),
                                 jnp.float32, -1.0 / fan2 ** 0.5, 1.0 / fan2 ** 0.5),
        "g2": jnp.ones((out_channel,), jnp.float32),
        "be2": jnp.zeros((out_channel,), jnp.float32),
    }

    x = jax.random.normal(k_x, (N, in_channel, H, W), jnp.float32)

    out = jax.block_until_ready(cnn2_backbone_pallas(x, params))
    ref = jax.block_until_ready(cnn2_backbone_ref(x, params))

    assert out.shape == (N, out_channel, H - 2, W - 2), out.shape
    assert jnp.allclose(out, ref, rtol=1e-4, atol=1e-4), \
        float(jnp.max(jnp.abs(out - ref)))

    print("KERNEL_OK")
</pallas_src>

<mosaic_0001>
module attributes {stable_mosaic.version = 11 : i64} {
  func.func @cnn2_backbone_kernel(%arg0: memref<2x16x16x4xf32, #tpu.memory_space<vmem>>, %arg1: memref<16x8xf32, #tpu.memory_space<vmem>>, %arg2: memref<1x8xf32, #tpu.memory_space<vmem>>, %arg3: memref<1x8xf32, #tpu.memory_space<vmem>>, %arg4: memref<8x32xf32, #tpu.memory_space<vmem>>, %arg5: memref<8x1xf32, #tpu.memory_space<vmem>>, %arg6: memref<8x1xf32, #tpu.memory_space<vmem>>, %arg7: memref<2x8x196xf32, #tpu.memory_space<vmem>>, %arg8: memref<450x16xf32, #tpu.memory_space<vmem>>, %arg9: memref<392x32xf32, #tpu.memory_space<vmem>>) attributes {dimension_semantics = [], scalar_prefetch = 0 : i64, scratch_operands = 2 : i64, tpu.core_type = #tpu.core_type<tc>} {
    %c0 = arith.constant 0 : index
    %c0_0 = arith.constant 0 : index
    %c0_1 = arith.constant 0 : index
    %c0_2 = arith.constant 0 : index
    %0 = vector.load %arg0[%c0, %c0_0, %c0_1, %c0_2] : memref<2x16x16x4xf32, #tpu.memory_space<vmem>>, vector<2x16x16x4xf32>
    %1 = vector.extract_strided_slice %0 {offsets = [0, 0, 0, 0], sizes = [2, 15, 15, 4], strides = [1, 1, 1, 1]} : vector<2x16x16x4xf32> to vector<2x15x15x4xf32>
    %2 = vector.shape_cast %1 : vector<2x15x15x4xf32> to vector<450x4xf32>
    %c0_3 = arith.constant 0 : index
    %c0_4 = arith.constant 0 : index
    %3 = vector.load %arg8[%c0_3, %c0_4] : memref<450x16xf32, #tpu.memory_space<vmem>>, vector<450x4xf32>
    tpu.vector_store %arg8[%c0_3, %c0_4], %2 {strides = array<i32>} : memref<450x16xf32, #tpu.memory_space<vmem>>, vector<450x4xf32>,
    %4 = vector.extract_strided_slice %0 {offsets = [0, 0, 1, 0], sizes = [2, 15, 15, 4], strides = [1, 1, 1, 1]} : vector<2x16x16x4xf32> to vector<2x15x15x4xf32>
    %5 = vector.shape_cast %4 : vector<2x15x15x4xf32> to vector<450x4xf32>
    %c0_5 = arith.constant 0 : index
    %c4 = arith.constant 4 : index
    %6 = vector.load %arg8[%c0_5, %c4] : memref<450x16xf32, #tpu.memory_space<vmem>>, vector<450x4xf32>
    tpu.vector_store %arg8[%c0_5, %c4], %5 {strides = array<i32>} : memref<450x16xf32, #tpu.memory_space<vmem>>, vector<450x4xf32>,
    %7 = vector.extract_strided_slice %0 {offsets = [0, 1, 0, 0], sizes = [2, 15, 15, 4], strides = [1, 1, 1, 1]} : vector<2x16x16x4xf32> to vector<2x15x15x4xf32>
    %8 = vector.shape_cast %7 : vector<2x15x15x4xf32> to vector<450x4xf32>
    %c0_6 = arith.constant 0 : index
    %c8 = arith.constant 8 : index
    %9 = vector.load %arg8[%c0_6, %c8] : memref<450x16xf32, #tpu.memory_space<vmem>>, vector<450x4xf32>
    tpu.vector_store %arg8[%c0_6, %c8], %8 {strides = array<i32>} : memref<450x16xf32, #tpu.memory_space<vmem>>, vector<450x4xf32>,
    %10 = vector.extract_strided_slice %0 {offsets = [0, 1, 1, 0], sizes = [2, 15, 15, 4], strides = [1, 1, 1, 1]} : vector<2x16x16x4xf32> to vector<2x15x15x4xf32>
    %11 = vector.shape_cast %10 : vector<2x15x15x4xf32> to vector<450x4xf32>
    %c0_7 = arith.constant 0 : index
    %c12 = arith.constant 12 : index
    %12 = vector.load %arg8[%c0_7, %c12] : memref<450x16xf32, #tpu.memory_space<vmem>>, vector<450x4xf32>
    tpu.vector_store %arg8[%c0_7, %c12], %11 {strides = array<i32>} : memref<450x16xf32, #tpu.memory_space<vmem>>, vector<450x4xf32>,
    %c0_8 = arith.constant 0 : index
    %c0_9 = arith.constant 0 : index
    %13 = vector.load %arg8[%c0_8, %c0_9] : memref<450x16xf32, #tpu.memory_space<vmem>>, vector<450x16xf32>
    %c0_10 = arith.constant 0 : index
    %c0_11 = arith.constant 0 : index
    %14 = vector.load %arg1[%c0_10, %c0_11] : memref<16x8xf32, #tpu.memory_space<vmem>>, vector<16x8xf32>
    %cst = arith.constant dense<0.000000e+00> : vector<450x8xf32>
    %15 = tpu.matmul %13, %14, %cst {dimension_numbers = #tpu.dot_dimension_numbers<[1], [0], [0], [1], [0, 0, 1, 1], [], []>} : vector<450x16xf32>, vector<16x8xf32>, vector<450x8xf32> -> vector<450x8xf32>
    %cst_12 = arith.constant dense<0.000000e+00> : vector<8xf32>
    %16 = vector.multi_reduction <add>, %15, %cst_12 [0] : vector<450x8xf32> to vector<8xf32>
    %17 = vector.shape_cast %16 : vector<8xf32> to vector<1x8xf32>
    %cst_13 = arith.constant 4.500000e+02 : f32
    %18 = vector.broadcast %cst_13 : f32 to vector<1x8xf32>
    %19 = arith.divf %17, %18 : vector<1x8xf32>
    %20 = arith.mulf %15, %15 : vector<450x8xf32>
    %cst_14 = arith.constant dense<0.000000e+00> : vector<8xf32>
    %21 = vector.multi_reduction <add>, %20, %cst_14 [0] : vector<450x8xf32> to vector<8xf32>
    %22 = vector.shape_cast %21 : vector<8xf32> to vector<1x8xf32>
    %cst_15 = arith.constant 4.500000e+02 : f32
    %23 = vector.broadcast %cst_15 : f32 to vector<1x8xf32>
    %24 = arith.divf %22, %23 : vector<1x8xf32>
    %25 = arith.mulf %19, %19 : vector<1x8xf32>
    %26 = arith.subf %24, %25 : vector<1x8xf32>
    %c0_16 = arith.constant 0 : index
    %c0_17 = arith.constant 0 : index
    %27 = vector.load %arg2[%c0_16, %c0_17] : memref<1x8xf32, #tpu.memory_space<vmem>>, vector<1x8xf32>
    %cst_18 = arith.constant 9.99999974E-6 : f32
    %28 = vector.broadcast %cst_18 : f32 to vector<1x8xf32>
    %29 = arith.addf %26, %28 : vector<1x8xf32>
    %30 = math.rsqrt %29 : vector<1x8xf32>
    %31 = arith.mulf %27, %30 : vector<1x8xf32>
    %c0_19 = arith.constant 0 : index
    %c0_20 = arith.constant 0 : index
    %32 = vector.load %arg3[%c0_19, %c0_20] : memref<1x8xf32, #tpu.memory_space<vmem>>, vector<1x8xf32>
    %33 = arith.mulf %19, %31 : vector<1x8xf32>
    %34 = arith.subf %32, %33 : vector<1x8xf32>
    %35 = vector.broadcast %31 : vector<1x8xf32> to vector<450x8xf32>
    %36 = arith.mulf %15, %35 : vector<450x8xf32>
    %37 = vector.broadcast %34 : vector<1x8xf32> to vector<450x8xf32>
    %38 = arith.addf %36, %37 : vector<450x8xf32>
    %cst_21 = arith.constant 0.000000e+00 : f32
    %39 = vector.broadcast %cst_21 : f32 to vector<450x8xf32>
    %40 = arith.maximumf %38, %39 : vector<450x8xf32>
    %41 = vector.shape_cast %40 : vector<450x8xf32> to vector<2x15x15x8xf32>
    %42 = vector.extract_strided_slice %41 {offsets = [0, 0, 0, 0], sizes = [2, 14, 14, 8], strides = [1, 1, 1, 1]} : vector<2x15x15x8xf32> to vector<2x14x14x8xf32>
    %43 = vector.shape_cast %42 : vector<2x14x14x8xf32> to vector<392x8xf32>
    %c0_22 = arith.constant 0 : index
    %c0_23 = arith.constant 0 : index
    %44 = vector.load %arg9[%c0_22, %c0_23] : memref<392x32xf32, #tpu.memory_space<vmem>>, vector<392x8xf32>
    tpu.vector_store %arg9[%c0_22, %c0_23], %43 {strides = array<i32>} : memref<392x32xf32, #tpu.memory_space<vmem>>, vector<392x8xf32>,
    %45 = vector.extract_strided_slice %41 {offsets = [0, 0, 1, 0], sizes = [2, 14, 14, 8], strides = [1, 1, 1, 1]} : vector<2x15x15x8xf32> to vector<2x14x14x8xf32>
    %46 = vector.shape_cast %45 : vector<2x14x14x8xf32> to vector<392x8xf32>
    %c0_24 = arith.constant 0 : index
    %c8_25 = arith.constant 8 : index
    %47 = vector.load %arg9[%c0_24, %c8_25] : memref<392x32xf32, #tpu.memory_space<vmem>>, vector<392x8xf32>
    tpu.vector_store %arg9[%c0_24, %c8_25], %46 {strides = array<i32>} : memref<392x32xf32, #tpu.memory_space<vmem>>, vector<392x8xf32>,
    %48 = vector.extract_strided_slice %41 {offsets = [0, 1, 0, 0], sizes = [2, 14, 14, 8], strides = [1, 1, 1, 1]} : vector<2x15x15x8xf32> to vector<2x14x14x8xf32>
    %49 = vector.shape_cast %48 : vector<2x14x14x8xf32> to vector<392x8xf32>
    %c0_26 = arith.constant 0 : index
    %c16 = arith.constant 16 : index
    %50 = vector.load %arg9[%c0_26, %c16] : memref<392x32xf32, #tpu.memory_space<vmem>>, vector<392x8xf32>
    tpu.vector_store %arg9[%c0_26, %c16], %49 {strides = array<i32>} : memref<392x32xf32, #tpu.memory_space<vmem>>, vector<392x8xf32>,
    %51 = vector.extract_strided_slice %41 {offsets = [0, 1, 1, 0], sizes = [2, 14, 14, 8], strides = [1, 1, 1, 1]} : vector<2x15x15x8xf32> to vector<2x14x14x8xf32>
    %52 = vector.shape_cast %51 : vector<2x14x14x8xf32> to vector<392x8xf32>
    %c0_27 = arith.constant 0 : index
    %c24 = arith.constant 24 : index
    %53 = vector.load %arg9[%c0_27, %c24] : memref<392x32xf32, #tpu.memory_space<vmem>>, vector<392x8xf32>
    tpu.vector_store %arg9[%c0_27, %c24], %52 {strides = array<i32>} : memref<392x32xf32, #tpu.memory_space<vmem>>, vector<392x8xf32>,
    %c0_28 = arith.constant 0 : index
    %c0_29 = arith.constant 0 : index
    %54 = vector.load %arg4[%c0_28, %c0_29] : memref<8x32xf32, #tpu.memory_space<vmem>>, vector<8x32xf32>
    %c0_30 = arith.constant 0 : index
    %c0_31 = arith.constant 0 : index
    %55 = vector.load %arg9[%c0_30, %c0_31] : memref<392x32xf32, #tpu.memory_space<vmem>>, vector<392x32xf32>
    %cst_32 = arith.constant dense<0.000000e+00> : vector<8x392xf32>
    %56 = tpu.matmul %54, %55, %cst_32 {dimension_numbers = #tpu.dot_dimension_numbers<[1], [1], [0], [0], [0, 0, 1, 0], [], []>} : vector<8x32xf32>, vector<392x32xf32>, vector<8x392xf32> -> vector<8x392xf32>
    %cst_33 = arith.constant dense<0.000000e+00> : vector<8xf32>
    %57 = vector.multi_reduction <add>, %56, %cst_33 [1] : vector<8x392xf32> to vector<8xf32>
    %58 = vector.shape_cast %57 : vector<8xf32> to vector<8x1xf32>
    %cst_34 = arith.constant 3.920000e+02 : f32
    %59 = vector.broadcast %cst_34 : f32 to vector<8x1xf32>
    %60 = arith.divf %58, %59 : vector<8x1xf32>
    %61 = arith.mulf %56, %56 : vector<8x392xf32>
    %cst_35 = arith.constant dense<0.000000e+00> : vector<8xf32>
    %62 = vector.multi_reduction <add>, %61, %cst_35 [1] : vector<8x392xf32> to vector<8xf32>
    %63 = vector.shape_cast %62 : vector<8xf32> to vector<8x1xf32>
    %cst_36 = arith.constant 3.920000e+02 : f32
    %64 = vector.broadcast %cst_36 : f32 to vector<8x1xf32>
    %65 = arith.divf %63, %64 : vector<8x1xf32>
    %66 = arith.mulf %60, %60 : vector<8x1xf32>
    %67 = arith.subf %65, %66 : vector<8x1xf32>
    %c0_37 = arith.constant 0 : index
    %c0_38 = arith.constant 0 : index
    %68 = vector.load %arg5[%c0_37, %c0_38] : memref<8x1xf32, #tpu.memory_space<vmem>>, vector<8x1xf32>
    %cst_39 = arith.constant 9.99999974E-6 : f32
    %69 = vector.broadcast %cst_39 : f32 to vector<8x1xf32>
    %70 = arith.addf %67, %69 : vector<8x1xf32>
    %71 = math.rsqrt %70 : vector<8x1xf32>
    %72 = arith.mulf %68, %71 : vector<8x1xf32>
    %c0_40 = arith.constant 0 : index
    %c0_41 = arith.constant 0 : index
    %73 = vector.load %arg6[%c0_40, %c0_41] : memref<8x1xf32, #tpu.memory_space<vmem>>, vector<8x1xf32>
    %74 = arith.mulf %60, %72 : vector<8x1xf32>
    %75 = arith.subf %73, %74 : vector<8x1xf32>
    %76 = vector.broadcast %72 : vector<8x1xf32> to vector<8x392xf32>
    %77 = arith.mulf %56, %76 : vector<8x392xf32>
    %78 = vector.broadcast %75 : vector<8x1xf32> to vector<8x392xf32>
    %79 = arith.addf %77, %78 : vector<8x392xf32>
    %cst_42 = arith.constant 0.000000e+00 : f32
    %80 = vector.broadcast %cst_42 : f32 to vector<8x392xf32>
    %81 = arith.maximumf %79, %80 : vector<8x392xf32>
    %82 = vector.extract_strided_slice %81 {offsets = [0, 0], sizes = [8, 196], strides = [1, 1]} : vector<8x392xf32> to vector<8x196xf32>
    %c0_43 = arith.constant 0 : index
    %c0_44 = arith.constant 0 : index
    %c0_45 = arith.constant 0 : index
    %83 = vector.load %arg7[%c0_43, %c0_44, %c0_45] : memref<2x8x196xf32, #tpu.memory_space<vmem>>, vector<1x8x196xf32>
    %84 = vector.shape_cast %83 : vector<1x8x196xf32> to vector<8x196xf32>
    %85 = vector.shape_cast %82 : vector<8x196xf32> to vector<1x8x196xf32>
    tpu.vector_store %arg7[%c0_43, %c0_44, %c0_45], %85 {strides = array<i32>} : memref<2x8x196xf32, #tpu.memory_space<vmem>>, vector<1x8x196xf32>,
    %86 = vector.extract_strided_slice %81 {offsets = [0, 196], sizes = [8, 196], strides = [1, 1]} : vector<8x392xf32> to vector<8x196xf32>
    %c1 = arith.constant 1 : index
    %c0_46 = arith.constant 0 : index
    %c0_47 = arith.constant 0 : index
    %87 = vector.load %arg7[%c1, %c0_46, %c0_47] : memref<2x8x196xf32, #tpu.memory_space<vmem>>, vector<1x8x196xf32>
    %88 = vector.shape_cast %87 : vector<1x8x196xf32> to vector<8x196xf32>
    %89 = vector.shape_cast %86 : vector<8x196xf32> to vector<1x8x196xf32>
    tpu.vector_store %arg7[%c1, %c0_46, %c0_47], %89 {strides = array<i32>} : memref<2x8x196xf32, #tpu.memory_space<vmem>>, vector<1x8x196xf32>,
    return
  }
}

</mosaic_0001>

<llo_original>
// kernel: tpu_custom_call.1
$region0: #{tpu_custom_call.1}
  #allocation0 [shape = 'u32[]', space=smem, size = 0x4, offset = 0x4, fixed_abs, tag = 'smem constant byte address 0x4 - core index']
  #allocation1 [shape = 'u32[72,128]{1,0:T(1,128)}', space=vmem, size = 0x9000, scoped, tag = 'internal scratch']
  #allocation2 [shape = 'f32[450,16]{1,0:T(8,128)}', space=vmem, size = 0x39000, scoped, tag = 'scratch operand']
  #allocation3 [shape = 'f32[392,32]{1,0:T(8,128)}', space=vmem, size = 0x31000, scoped, tag = 'scratch operand']
  %s0 = inlined_call_operand.vmem [shape: f32[2,16,16,4], index: 0, kind: input, shape index: {}]
  %s1 = inlined_call_operand.vmem [shape: f32[16,8], index: 1, kind: input, shape index: {}]
  %s2 = inlined_call_operand.vmem [shape: f32[1,8], index: 2, kind: input, shape index: {}]
  %s3 = inlined_call_operand.vmem [shape: f32[1,8], index: 3, kind: input, shape index: {}]
  %s4 = inlined_call_operand.vmem [shape: f32[8,32], index: 4, kind: input, shape index: {}]
  %s5 = inlined_call_operand.vmem [shape: f32[8,1], index: 5, kind: input, shape index: {}]
  %s6 = inlined_call_operand.vmem [shape: f32[8,1], index: 6, kind: input, shape index: {}]
  %s7 = inlined_call_operand.hbm [shape: f32[2,8,196], index: 7, kind: output, shape index: {}]
  %s8 = sld [smem:[#allocation0]]
  $region38: #{tpu_custom_call.1} parent=0
    _
  %s10 = ssub.s32 1, %s8
  %s11 = scalar_select 0, %s10, %s8
  $region1: #{tpu_custom_call.1} parent=0
    #allocation4 [shape = 'u8[16384]{0}', space=vmem, size = 0x4000, scoped, tag = 'output window, operand 0, single buffered']
    #allocation5 [shape = 's32[1]{0}', space=sflag, size = 0x4, scoped, tag = 'scoped memory for tpu_custom_call.1']
    %12 = vsyncpa [#allocation5], 0
    // Predicated region
    $region2: #{tpu_custom_call.1} parent=1 // pred_check
      _
    $region3: #{tpu_custom_call.1} parent=1 // pred_check_branch
      %14 = sbr.rel (0) target = $region5
    $region4: #{tpu_custom_call.1} parent=1 // pred_region
      _
    $region5: #{tpu_custom_call.1} parent=1 // pred_fallthru
      _
    // Predicated region
    $region6: #{tpu_custom_call.1} parent=1 // pred_check
      _
    $region7: #{tpu_custom_call.1} parent=1 // pred_check_branch
      %16 = sbr.rel (0) target = $region9
    $region8: #{tpu_custom_call.1} parent=1 // pred_region
      _
    $region9: #{tpu_custom_call.1} parent=1 // pred_fallthru
      _
    // Predicated region
    $region10: #{tpu_custom_call.1} parent=1 // pred_check
      _
    $region11: #{tpu_custom_call.1} parent=1 // pred_check_branch
      %18 = sbr.rel (0) target = $region13
    $region12: #{tpu_custom_call.1} parent=1 // pred_region
      _
    $region13: #{tpu_custom_call.1} parent=1 // pred_fallthru
      _
    // Predicated region
    $region14: #{tpu_custom_call.1} parent=1 // pred_check
      _
    $region15: #{tpu_custom_call.1} parent=1 // pred_check_branch
      %20 = sbr.rel (0) target = $region17
    $region16: #{tpu_custom_call.1} parent=1 // pred_region
      _
    $region17: #{tpu_custom_call.1} parent=1 // pred_fallthru
      _
    // Predicated region
    $region18: #{tpu_custom_call.1} parent=1 // pred_check
      _
    $region19: #{tpu_custom_call.1} parent=1 // pred_check_branch
      %22 = sbr.rel (0) target = $region21
    $region20: #{tpu_custom_call.1} parent=1 // pred_region
      _
    $region21: #{tpu_custom_call.1} parent=1 // pred_fallthru
      _
    // Predicated region
    $region22: #{tpu_custom_call.1} parent=1 // pred_check
      _
    $region23: #{tpu_custom_call.1} parent=1 // pred_check_branch
      %24 = sbr.rel (0) target = $region25
    $region24: #{tpu_custom_call.1} parent=1 // pred_region
      _
    $region25: #{tpu_custom_call.1} parent=1 // pred_fallthru
      _
    // Predicated region
    $region26: #{tpu_custom_call.1} parent=1 // pred_check
      _
    $region27: #{tpu_custom_call.1} parent=1 // pred_check_branch
      %26 = sbr.rel (0) target = $region29
    $region28: #{tpu_custom_call.1} parent=1 // pred_region
      _
    $region29: #{tpu_custom_call.1} parent=1 // pred_fallthru
      _
    %v27 = vld [vmem:[%s0] sm:$0xff]
    %v28 = vld [vmem:[%s0 + $0x8] sm:$0xff]
    %v29 = vld [vmem:[%s0 + $0x10] sm:$0xff]
    %v30 = vld [vmem:[%s0 + $0x18] sm:$0xff]
    %v31 = vld [vmem:[%s0 + $0x20] sm:$0xff]
    %v32 = vld [vmem:[%s0 + $0x28] sm:$0xff]
    %v33 = vld [vmem:[%s0 + $0x30] sm:$0xff]
    %v34 = vld [vmem:[%s0 + $0x38] sm:$0xff]
    %v35 = vld [vmem:[%s0 + $0x40] sm:$0xff]
    %v36 = vld [vmem:[%s0 + $0x48] sm:$0xff]
    %v37 = vld [vmem:[%s0 + $0x50] sm:$0xff]
    %v38 = vld [vmem:[%s0 + $0x58] sm:$0xff]
    %v39 = vld [vmem:[%s0 + $0x60] sm:$0xff]
    %v40 = vld [vmem:[%s0 + $0x68] sm:$0xff]
    %v41 = vld [vmem:[%s0 + $0x70] sm:$0xff]
    %v42 = vld [vmem:[%s0 + $0x78] sm:$0xff]
    %v43 = vld [vmem:[%s0 + $0x80] sm:$0xff]
    %v44 = vld [vmem:[%s0 + $0x88] sm:$0xff]
    %v45 = vld [vmem:[%s0 + $0x90] sm:$0xff]
    %v46 = vld [vmem:[%s0 + $0x98] sm:$0xff]
    %v47 = vld [vmem:[%s0 + $0xa0] sm:$0xff]
    %v48 = vld [vmem:[%s0 + $0xa8] sm:$0xff]
    %v49 = vld [vmem:[%s0 + $0xb0] sm:$0xff]
    %v50 = vld [vmem:[%s0 + $0xb8] sm:$0xff]
    %v51 = vld [vmem:[%s0 + $0xc0] sm:$0xff]
    %v52 = vld [vmem:[%s0 + $0xc8] sm:$0xff]
    %v53 = vld [vmem:[%s0 + $0xd0] sm:$0xff]
    %v54 = vld [vmem:[%s0 + $0xd8] sm:$0xff]
    %v55 = vld [vmem:[%s0 + $0xe0] sm:$0xff]
    %v56 = vld [vmem:[%s0 + $0xe8] sm:$0xff]
    %v57 = vld [vmem:[%s0 + $0xf0] sm:$0xff]
    %v58 = vld [vmem:[%s0 + $0xf8] sm:$0xff]
    %v59 = vld [vmem:[%s0 + $0x100] sm:$0xff]
    %v60 = vld [vmem:[%s0 + $0x108] sm:$0xff]
    %v61 = vld [vmem:[%s0 + $0x110] sm:$0xff]
    %v62 = vld [vmem:[%s0 + $0x118] sm:$0xff]
    %v63 = vld [vmem:[%s0 + $0x120] sm:$0xff]
    %v64 = vld [vmem:[%s0 + $0x128] sm:$0xff]
    %v65 = vld [vmem:[%s0 + $0x130] sm:$0xff]
    %v66 = vld [vmem:[%s0 + $0x138] sm:$0xff]
    %v67 = vld [vmem:[%s0 + $0x140] sm:$0xff]
    %v68 = vld [vmem:[%s0 + $0x148] sm:$0xff]
    %v69 = vld [vmem:[%s0 + $0x150] sm:$0xff]
    %v70 = vld [vmem:[%s0 + $0x158] sm:$0xff]
    %v71 = vld [vmem:[%s0 + $0x160] sm:$0xff]
    %v72 = vld [vmem:[%s0 + $0x168] sm:$0xff]
    %v73 = vld [vmem:[%s0 + $0x170] sm:$0xff]
    %v74 = vld [vmem:[%s0 + $0x178] sm:$0xff]
    %v75 = vld [vmem:[%s0 + $0x180] sm:$0xff]
    %v76 = vld [vmem:[%s0 + $0x188] sm:$0xff]
    %v77 = vld [vmem:[%s0 + $0x190] sm:$0xff]
    %v78 = vld [vmem:[%s0 + $0x198] sm:$0xff]
    %v79 = vld [vmem:[%s0 + $0x1a0] sm:$0xff]
    %v80 = vld [vmem:[%s0 + $0x1a8] sm:$0xff]
    %v81 = vld [vmem:[%s0 + $0x1b0] sm:$0xff]
    %v82 = vld [vmem:[%s0 + $0x1b8] sm:$0xff]
    %v83 = vld [vmem:[%s0 + $0x1c0] sm:$0xff]
    %v84 = vld [vmem:[%s0 + $0x1c8] sm:$0xff]
    %v85 = vld [vmem:[%s0 + $0x1d0] sm:$0xff]
    %v86 = vld [vmem:[%s0 + $0x1d8] sm:$0xff]
    %v87 = vld [vmem:[%s0 + $0x1e0] sm:$0xff]
    %v88 = vld [vmem:[%s0 + $0x1e8] sm:$0xff]
    %v89 = vld [vmem:[%s0 + $0x1f0] sm:$0xff]
    %v90 = vld [vmem:[%s0 + $0x1f8] sm:$0xff]
    %v151 = vrot.slane %v27, 1
    %v152 = vrot.slane %v27, 2
    %v153 = vrot.slane %v27, 3
    %v154 = vrot.slane %v27, 4
    %v155 = vrot.slane %v27, 5
    %v156 = vrot.slane %v27, 6
    %v157 = vrot.slane %v27, 7
    %v158 = vrot.slane %v28, 1
    %v159 = vrot.slane %v28, 2
    %v160 = vrot.slane %v28, 3
    %v161 = vrot.slane %v28, 4
    %v162 = vrot.slane %v28, 5
    %v163 = vrot.slane %v28, 6
    %v164 = vrot.slane %v29, 1
    %v165 = vrot.slane %v29, 2
    %v166 = vrot.slane %v29, 3
    %v167 = vrot.slane %v29, 4
    %v168 = vrot.slane %v29, 5
    %v169 = vrot.slane %v29, 6
    %v170 = vrot.slane %v29, 7
    %v171 = vrot.slane %v30, 1
    %v172 = vrot.slane %v30, 2
    %v173 = vrot.slane %v30, 3
    %v174 = vrot.slane %v30, 4
    %v175 = vrot.slane %v30, 5
    %v176 = vrot.slane %v30, 6
    %v177 = vrot.slane %v31, 1
    %v178 = vrot.slane %v31, 2
    %v179 = vrot.slane %v31, 3
    %v180 = vrot.slane %v31, 4
    %v181 = vrot.slane %v31, 5
    %v182 = vrot.slane %v31, 6
    %v183 = vrot.slane %v31, 7
    %v184 = vrot.slane %v32, 1
    %v185 = vrot.slane %v32, 2
    %v186 = vrot.slane %v32, 3
    %v187 = vrot.slane %v32, 4
    %v188 = vrot.slane %v32, 5
    %v189 = vrot.slane %v32, 6
    %v190 = vrot.slane %v33, 1
    %v191 = vrot.slane %v33, 2
    %v192 = vrot.slane %v33, 3
    %v193 = vrot.slane %v33, 4
    %v194 = vrot.slane %v33, 5
    %v195 = vrot.slane %v33, 6
    %v196 = vrot.slane %v33, 7
    %v197 = vrot.slane %v34, 1
    %v198 = vrot.slane %v34, 2
    %v199 = vrot.slane %v34, 3
    %v200 = vrot.slane %v34, 4
    %v201 = vrot.slane %v34, 5
    %v202 = vrot.slane %v34, 6
    %v203 = vrot.slane %v35, 1
    %v204 = vrot.slane %v35, 2
    %v205 = vrot.slane %v35, 3
    %v206 = vrot.slane %v35, 4
    %v207 = vrot.slane %v35, 5
    %v208 = vrot.slane %v35, 6
    %v209 = vrot.slane %v35, 7
    %v210 = vrot.slane %v36, 1
    %v211 = vrot.slane %v36, 2
    %v212 = vrot.slane %v36, 3
    %v213 = vrot.slane %v36, 4
    %v214 = vrot.slane %v36, 5
    %v215 = vrot.slane %v36, 6
    %v216 = vrot.slane %v37, 1
    %v217 = vrot.slane %v37, 2
    %v218 = vrot.slane %v37, 3
    %v219 = vrot.slane %v37, 4
    %v220 = vrot.slane %v37, 5
    %v221 = vrot.slane %v37, 6
    %v222 = vrot.slane %v37, 7
    %v223 = vrot.slane %v38, 1
    %v224 = vrot.slane %v38, 2
    %v225 = vrot.slane %v38, 3
    %v226 = vrot.slane %v38, 4
    %v227 = vrot.slane %v38, 5
    %v228 = vrot.slane %v38, 6
    %v229 = vrot.slane %v39, 1
    %v230 = vrot.slane %v39, 2
    %v231 = vrot.slane %v39, 3
    %v232 = vrot.slane %v39, 4
    %v233 = vrot.slane %v39, 5
    %v234 = vrot.slane %v39, 6
    %v235 = vrot.slane %v39, 7
    %v236 = vrot.slane %v40, 1
    %v237 = vrot.slane %v40, 2
    %v238 = vrot.slane %v40, 3
    %v239 = vrot.slane %v40, 4
    %v240 = vrot.slane %v40, 5
    %v241 = vrot.slane %v40, 6
    %v242 = vrot.slane %v41, 1
    %v243 = vrot.slane %v41, 2
    %v244 = vrot.slane %v41, 3
    %v245 = vrot.slane %v41, 4
    %v246 = vrot.slane %v41, 5
    %v247 = vrot.slane %v41, 6
    %v248 = vrot.slane %v41, 7
    %v249 = vrot.slane %v42, 1
    %v250 = vrot.slane %v42, 2
    %v251 = vrot.slane %v42, 3
    %v252 = vrot.slane %v42, 4
    %v253 = vrot.slane %v42, 5
    %v254 = vrot.slane %v42, 6
    %v255 = vrot.slane %v43, 1
    %v256 = vrot.slane %v43, 2
    %v257 = vrot.slane %v43, 3
    %v258 = vrot.slane %v43, 4
    %v259 = vrot.slane %v43, 5
    %v260 = vrot.slane %v43, 6
    %v261 = vrot.slane %v43, 7
    %v262 = vrot.slane %v44, 1
    %v263 = vrot.slane %v44, 2
    %v264 = vrot.slane %v44, 3
    %v265 = vrot.slane %v44, 4
    %v266 = vrot.slane %v44, 5
    %v267 = vrot.slane %v44, 6
    %v268 = vrot.slane %v45, 1
    %v269 = vrot.slane %v45, 2
    %v270 = vrot.slane %v45, 3
    %v271 = vrot.slane %v45, 4
    %v272 = vrot.slane %v45, 5
    %v273 = vrot.slane %v45, 6
    %v274 = vrot.slane %v45, 7
    %v275 = vrot.slane %v46, 1
    %v276 = vrot.slane %v46, 2
    %v277 = vrot.slane %v46, 3
    %v278 = vrot.slane %v46, 4
    %v279 = vrot.slane %v46, 5
    %v280 = vrot.slane %v46, 6
    %v281 = vrot.slane %v47, 1
    %v282 = vrot.slane %v47, 2
    %v283 = vrot.slane %v47, 3
    %v284 = vrot.slane %v47, 4
    %v285 = vrot.slane %v47, 5
    %v286 = vrot.slane %v47, 6
    %v287 = vrot.slane %v47, 7
    %v288 = vrot.slane %v48, 1
    %v289 = vrot.slane %v48, 2
    %v290 = vrot.slane %v48, 3
    %v291 = vrot.slane %v48, 4
    %v292 = vrot.slane %v48, 5
    %v293 = vrot.slane %v48, 6
    %v294 = vrot.slane %v49, 1
    %v295 = vrot.slane %v49, 2
    %v296 = vrot.slane %v49, 3
    %v297 = vrot.slane %v49, 4
    %v298 = vrot.slane %v49, 5
    %v299 = vrot.slane %v49, 6
    %v300 = vrot.slane %v49, 7
    %v301 = vrot.slane %v50, 1
    %v302 = vrot.slane %v50, 2
    %v303 = vrot.slane %v50, 3
    %v304 = vrot.slane %v50, 4
    %v305 = vrot.slane %v50, 5
    %v306 = vrot.slane %v50, 6
    %v307 = vrot.slane %v51, 1
    %v308 = vrot.slane %v51, 2
    %v309 = vrot.slane %v51, 3
    %v310 = vrot.slane %v51, 4
    %v311 = vrot.slane %v51, 5
    %v312 = vrot.slane %v51, 6
    %v313 = vrot.slane %v51, 7
    %v314 = vrot.slane %v52, 1
    %v315 = vrot.slane %v52, 2
    %v316 = vrot.slane %v52, 3
    %v317 = vrot.slane %v52, 4
    %v318 = vrot.slane %v52, 5
    %v319 = vrot.slane %v52, 6
    %v320 = vrot.slane %v53, 1
    %v321 = vrot.slane %v53, 2
    %v322 = vrot.slane %v53, 3
    %v323 = vrot.slane %v53, 4
    %v324 = vrot.slane %v53, 5
    %v325 = vrot.slane %v53, 6
    %v326 = vrot.slane %v53, 7
    %v327 = vrot.slane %v54, 1
    %v328 = vrot.slane %v54, 2
    %v329 = vrot.slane %v54, 3
    %v330 = vrot.slane %v54, 4
    %v331 = vrot.slane %v54, 5
    %v332 = vrot.slane %v54, 6
    %v333 = vrot.slane %v55, 1
    %v334 = vrot.slane %v55, 2
    %v335 = vrot.slane %v55, 3
    %v336 = vrot.slane %v55, 4
    %v337 = vrot.slane %v55, 5
    %v338 = vrot.slane %v55, 6
    %v339 = vrot.slane %v55, 7
    %v340 = vrot.slane %v56, 1
    %v341 = vrot.slane %v56, 2
    %v342 = vrot.slane %v56, 3
    %v343 = vrot.slane %v56, 4
    %v344 = vrot.slane %v56, 5
    %v345 = vrot.slane %v56, 6
    %v346 = vrot.slane %v59, 1
    %v347 = vrot.slane %v59, 2
    %v348 = vrot.slane %v59, 3
    %v349 = vrot.slane %v59, 4
    %v350 = vrot.slane %v59, 5
    %v351 = vrot.slane %v59, 6
    %v352 = vrot.slane %v59, 7
    %v353 = vrot.slane %v60, 1
    %v354 = vrot.slane %v60, 2
    %v355 = vrot.slane %v60, 3
    %v356 = vrot.slane %v60, 4
    %v357 = vrot.slane %v60, 5
    %v358 = vrot.slane %v60, 6
    %v359 = vrot.slane %v61, 1
    %v360 = vrot.slane %v61, 2
    %v361 = vrot.slane %v61, 3
    %v362 = vrot.slane %v61, 4
    %v363 = vrot.slane %v61, 5
    %v364 = vrot.slane %v61, 6
    %v365 = vrot.slane %v61, 7
    %v366 = vrot.slane %v62, 1
    %v367 = vrot.slane %v62, 2
    %v368 = vrot.slane %v62, 3
    %v369 = vrot.slane %v62, 4
    %v370 = vrot.slane %v62, 5
    %v371 = vrot.slane %v62, 6
    %v372 = vrot.slane %v63, 1
    %v373 = vrot.slane %v63, 2
    %v374 = vrot.slane %v63, 3
    %v375 = vrot.slane %v63, 4
    %v376 = vrot.slane %v63, 5
    %v377 = vrot.slane %v63, 6
    %v378 = vrot.slane %v63, 7
    %v379 = vrot.slane %v64, 1
    %v380 = vrot.slane %v64, 2
    %v381 = vrot.slane %v64, 3
    %v382 = vrot.slane %v64, 4
    %v383 = vrot.slane %v64, 5
    %v384 = vrot.slane %v64, 6
    %v385 = vrot.slane %v65, 1
    %v386 = vrot.slane %v65, 2
    %v387 = vrot.slane %v65, 3
    %v388 = vrot.slane %v65, 4
    %v389 = vrot.slane %v65, 5
    %v390 = vrot.slane %v65, 6
    %v391 = vrot.slane %v65, 7
    %v392 = vrot.slane %v66, 1
    %v393 = vrot.slane %v66, 2
    %v394 = vrot.slane %v66, 3
    %v395 = vrot.slane %v66, 4
    %v396 = vrot.slane %v66, 5
    %v397 = vrot.slane %v66, 6
    %v398 = vrot.slane %v67, 1
    %v399 = vrot.slane %v67, 2
    %v400 = vrot.slane %v67, 3
    %v401 = vrot.slane %v67, 4
    %v402 = vrot.slane %v67, 5
    %v403 = vrot.slane %v67, 6
    %v404 = vrot.slane %v67, 7
    %v405 = vrot.slane %v68, 1
    %v406 = vrot.slane %v68, 2
    %v407 = vrot.slane %v68, 3
    %v408 = vrot.slane %v68, 4
    %v409 = vrot.slane %v68, 5
    %v410 = vrot.slane %v68, 6
    %v411 = vrot.slane %v69, 1
    %v412 = vrot.slane %v69, 2
    %v413 = vrot.slane %v69, 3
    %v414 = vrot.slane %v69, 4
    %v415 = vrot.slane %v69, 5
    %v416 = vrot.slane %v69, 6
    %v417 = vrot.slane %v69, 7
    %v418 = vrot.slane %v70, 1
    %v419 = vrot.slane %v70, 2
    %v420 = vrot.slane %v70, 3
    %v421 = vrot.slane %v70, 4
    %v422 = vrot.slane %v70, 5
    %v423 = vrot.slane %v70, 6
    %v424 = vrot.slane %v71, 1
    %v425 = vrot.slane %v71, 2
    %v426 = vrot.slane %v71, 3
    %v427 = vrot.slane %v71, 4
    %v428 = vrot.slane %v71, 5
    %v429 = vrot.slane %v71, 6
    %v430 = vrot.slane %v71, 7
    %v431 = vrot.slane %v72, 1
    %v432 = vrot.slane %v72, 2
    %v433 = vrot.slane %v72, 3
    %v434 = vrot.slane %v72, 4
    %v435 = vrot.slane %v72, 5
    %v436 = vrot.slane %v72, 6
    %v437 = vrot.slane %v73, 1
    %v438 = vrot.slane %v73, 2
    %v439 = vrot.slane %v73, 3
    %v440 = vrot.slane %v73, 4
    %v441 = vrot.slane %v73, 5
    %v442 = vrot.slane %v73, 6
    %v443 = vrot.slane %v73, 7
    %v444 = vrot.slane %v74, 1
    %v445 = vrot.slane %v74, 2
    %v446 = vrot.slane %v74, 3
    %v447 = vrot.slane %v74, 4
    %v448 = vrot.slane %v74, 5
    %v449 = vrot.slane %v74, 6
    %v450 = vrot.slane %v75, 1
    %v451 = vrot.slane %v75, 2
    %v452 = vrot.slane %v75, 3
    %v453 = vrot.slane %v75, 4
    %v454 = vrot.slane %v75, 5
    %v455 = vrot.slane %v75, 6
    %v456 = vrot.slane %v75, 7
    %v457 = vrot.slane %v76, 1
    %v458 = vrot.slane %v76, 2
    %v459 = vrot.slane %v76, 3
    %v460 = vrot.slane %v76, 4
    %v461 = vrot.slane %v76, 5
    %v462 = vrot.slane %v76, 6
    %v463 = vrot.slane %v77, 1
    %v464 = vrot.slane %v77, 2
    %v465 = vrot.slane %v77, 3
    %v466 = vrot.slane %v77, 4
    %v467 = vrot.slane %v77, 5
    %v468 = vrot.slane %v77, 6
    %v469 = vrot.slane %v77, 7
    %v470 = vrot.slane %v78, 1
    %v471 = vrot.slane %v78, 2
    %v472 = vrot.slane %v78, 3
    %v473 = vrot.slane %v78, 4
    %v474 = vrot.slane %v78, 5
    %v475 = vrot.slane %v78, 6
    %v476 = vrot.slane %v79, 1
    %v477 = vrot.slane %v79, 2
    %v478 = vrot.slane %v79, 3
    %v479 = vrot.slane %v79, 4
    %v480 = vrot.slane %v79, 5
    %v481 = vrot.slane %v79, 6
    %v482 = vrot.slane %v79, 7
    %v483 = vrot.slane %v80, 1
    %v484 = vrot.slane %v80, 2
    %v485 = vrot.slane %v80, 3
    %v486 = vrot.slane %v80, 4
    %v487 = vrot.slane %v80, 5
    %v488 = vrot.slane %v80, 6
    %v489 = vrot.slane %v81, 1
    %v490 = vrot.slane %v81, 2
    %v491 = vrot.slane %v81, 3
    %v492 = vrot.slane %v81, 4
    %v493 = vrot.slane %v81, 5
    %v494 = vrot.slane %v81, 6
    %v495 = vrot.slane %v81, 7
    %v496 = vrot.slane %v82, 1
    %v497 = vrot.slane %v82, 2
    %v498 = vrot.slane %v82, 3
    %v499 = vrot.slane %v82, 4
    %v500 = vrot.slane %v82, 5
    %v501 = vrot.slane %v82, 6
    %v502 = vrot.slane %v83, 1
    %v503 = vrot.slane %v83, 2
    %v504 = vrot.slane %v83, 3
    %v505 = vrot.slane %v83, 4
    %v506 = vrot.slane %v83, 5
    %v507 = vrot.slane %v83, 6
    %v508 = vrot.slane %v83, 7
    %v509 = vrot.slane %v84, 1
    %v510 = vrot.slane %v84, 2
    %v511 = vrot.slane %v84, 3
    %v512 = vrot.slane %v84, 4
    %v513 = vrot.slane %v84, 5
    %v514 = vrot.slane %v84, 6
    %v515 = vrot.slane %v85, 1
    %v516 = vrot.slane %v85, 2
    %v517 = vrot.slane %v85, 3
    %v518 = vrot.slane %v85, 4
    %v519 = vrot.slane %v85, 5
    %v520 = vrot.slane %v85, 6
    %v521 = vrot.slane %v85, 7
    %v522 = vrot.slane %v86, 1
    %v523 = vrot.slane %v86, 2
    %v524 = vrot.slane %v86, 3
    %v525 = vrot.slane %v86, 4
    %v526 = vrot.slane %v86, 5
    %v527 = vrot.slane %v86, 6
    %v528 = vrot.slane %v87, 1
    %v529 = vrot.slane %v87, 2
    %v530 = vrot.slane %v87, 3
    %v531 = vrot.slane %v87, 4
    %v532 = vrot.slane %v87, 5
    %v533 = vrot.slane %v87, 6
    %v534 = vrot.slane %v87, 7
    %v535 = vrot.slane %v88, 1
    %v536 = vrot.slane %v88, 2
    %v537 = vrot.slane %v88, 3
    %v538 = vrot.slane %v88, 4
    %v539 = vrot.slane %v88, 5
    %v540 = vrot.slane %v88, 6
    %541 = vst [vmem:[#allocation1] ss:$9 sm:$0xff] %v27
    %s542 = scalar_lea.vmem [#allocation1], 1
    %543 = vst [vmem:[%s542] ss:$9 sm:$0xff] %v151
    %s544 = scalar_lea.vmem [#allocation1], 2
    %545 = vst [vmem:[%s544] ss:$9 sm:$0xff] %v152
    %s546 = scalar_lea.vmem [#allocation1], 3
    %547 = vst [vmem:[%s546] ss:$9 sm:$0xff] %v153
    %s548 = scalar_lea.vmem [#allocation1], 4
    %549 = vst [vmem:[%s548] ss:$9 sm:$0xff] %v154
    %s550 = scalar_lea.vmem [#allocation1], 5
    %551 = vst [vmem:[%s550] ss:$9 sm:$0xff] %v155
    %s552 = scalar_lea.vmem [#allocation1], 6
    %553 = vst [vmem:[%s552] ss:$9 sm:$0xff] %v156
    %s554 = scalar_lea.vmem [#allocation1], 7
    %555 = vst [vmem:[%s554] ss:$9 sm:$0xff] %v157
    %v556 = vld [vmem:[#allocation1] sm:$0xff]
    %557 = vst [vmem:[#allocation1] ss:$9 sm:$0xff] %v28
    %558 = vst [vmem:[%s542] ss:$9 sm:$0xff] %v158
    %559 = vst [vmem:[%s544] ss:$9 sm:$0xff] %v159
    %560 = vst [vmem:[%s546] ss:$9 sm:$0xff] %v160
    %561 = vst [vmem:[%s548] ss:$9 sm:$0xff] %v161
    %562 = vst [vmem:[%s550] ss:$9 sm:$0xff] %v162
    %563 = vst [vmem:[%s552] ss:$9 sm:$0xff] %v163
    %564 = vst [vmem:[%s554] ss:$9 sm:$0xff] %v29
    %v565 = vld [vmem:[#allocation1] sm:$0xff]
    %566 = vst [vmem:[#allocation1] ss:$9 sm:$0xff] %v164
    %567 = vst [vmem:[%s542] ss:$9 sm:$0xff] %v165
    %568 = vst [vmem:[%s544] ss:$9 sm:$0xff] %v166
    %569 = vst [vmem:[%s546] ss:$9 sm:$0xff] %v167
    %570 = vst [vmem:[%s548] ss:$9 sm:$0xff] %v168
    %571 = vst [vmem:[%s550] ss:$9 sm:$0xff] %v169
    %572 = vst [vmem:[%s552] ss:$9 sm:$0xff] %v170
    %573 = vst [vmem:[%s554] ss:$9 sm:$0xff] %v30
    %v574 = vld [vmem:[#allocation1] sm:$0xff]
    %575 = vst [vmem:[#allocation1] ss:$9 sm:$0xff] %v171
    %576 = vst [vmem:[%s542] ss:$9 sm:$0xff] %v172
    %577 = vst [vmem:[%s544] ss:$9 sm:$0xff] %v173
    %578 = vst [vmem:[%s546] ss:$9 sm:$0xff] %v174
    %579 = vst [vmem:[%s548] ss:$9 sm:$0xff] %v175
    %580 = vst [vmem:[%s550] ss:$9 sm:$0xff] %v176
    %581 = vst [vmem:[%s552] ss:$9 sm:$0xff] %v31
    %582 = vst [vmem:[%s554] ss:$9 sm:$0xff] %v177
    %v583 = vld [vmem:[#allocation1] sm:$0xff]
    %584 = vst [vmem:[#allocation1] ss:$9 sm:$0xff] %v178
    %585 = vst [vmem:[%s542] ss:$9 sm:$0xff] %v179
    %586 = vst [vmem:[%s544] ss:$9 sm:$0xff] %v180
    %587 = vst [vmem:[%s546] ss:$9 sm:$0xff] %v181
    %588 = vst [vmem:[%s548] ss:$9 sm:$0xff] %v182
    %589 = vst [vmem:[%s550] ss:$9 sm:$0xff] %v183
    %590 = vst [vmem:[%s552] ss:$9 sm:$0xff] %v32
    %591 = vst [vmem:[%s554] ss:$9 sm:$0xff] %v184
    %v592 = vld [vmem:[#allocation1] sm:$0xff]
    %593 = vst [vmem:[#allocation1] ss:$9 sm:$0xff] %v185
    %594 = vst [vmem:[%s542] ss:$9 sm:$0xff] %v186
    %595 = vst [vmem:[%s544] ss:$9 sm:$0xff] %v187
    %596 = vst [vmem:[%s546] ss:$9 sm:$0xff] %v188
    %597 = vst [vmem:[%s548] ss:$9 sm:$0xff] %v189
    %598 = vst [vmem:[%s550] ss:$9 sm:$0xff] %v33
    %599 = vst [vmem:[%s552] ss:$9 sm:$0xff] %v190
    %600 = vst [vmem:[%s554] ss:$9 sm:$0xff] %v191
    %v601 = vld [vmem:[#allocation1] sm:$0xff]
    %602 = vst [vmem:[#allocation1] ss:$9 sm:$0xff] %v192
    %603 = vst [vmem:[%s542] ss:$9 sm:$0xff] %v193
    %604 = vst [vmem:[%s544] ss:$9 sm:$0xff] %v194
    %605 = vst [vmem:[%s546] ss:$9 sm:$0xff] %v195
    %606 = vst [vmem:[%s548] ss:$9 sm:$0xff] %v196
    %607 = vst [vmem:[%s550] ss:$9 sm:$0xff] %v34
    %608 = vst [vmem:[%s552] ss:$9 sm:$0xff] %v197
    %609 = vst [vmem:[%s554] ss:$9 sm:$0xff] %v198
    %v610 = vld [vmem:[#allocation1] sm:$0xff]
    %611 = vst [vmem:[#allocation1] ss:$9 sm:$0xff] %v199
    %612 = vst [vmem:[%s542] ss:$9 sm:$0xff] %v200
    %613 = vst [vmem:[%s544] ss:$9 sm:$0xff] %v201
    %614 = vst [vmem:[%s546] ss:$9 sm:$0xff] %v202
    %615 = vst [vmem:[%s548] ss:$9 sm:$0xff] %v35
    %616 = vst [vmem:[%s550] ss:$9 sm:$0xff] %v203
    %617 = vst [vmem:[%s552] ss:$9 sm:$0xff] %v204
    %618 = vst [vmem:[%s554] ss:$9 sm:$0xff] %v205
    %v619 = vld [vmem:[#allocation1] sm:$0xff]
    %620 = vst [vmem:[#allocation1] ss:$9 sm:$0xff] %v206
    %621 = vst [vmem:[%s542] ss:$9 sm:$0xff] %v207
    %622 = vst [vmem:[%s544] ss:$9 sm:$0xff] %v208
    %623 = vst [vmem:[%s546] ss:$9 sm:$0xff] %v209
    %624 = vst [vmem:[%s548] ss:$9 sm:$0xff] %v36
    %625 = vst [vmem:[%s550] ss:$9 sm:$0xff] %v210
    %626 = vst [vmem:[%s552] ss:$9 sm:$0xff] %v211
    %627 = vst [vmem:[%s554] ss:$9 sm:$0xff] %v212
    %v628 = vld [vmem:[#allocation1] sm:$0xff]
    %629 = vst [vmem:[#allocation1] ss:$9 sm:$0xff] %v213
    %630 = vst [vmem:[%s542] ss:$9 sm:$0xff] %v214
    %631 = vst [vmem:[%s544] ss:$9 sm:$0xff] %v215
    %632 = vst [vmem:[%s546] ss:$9 sm:$0xff] %v37
    %633 = vst [vmem:[%s548] ss:$9 sm:$0xff] %v216
    %634 = vst [vmem:[%s550] ss:$9 sm:$0xff] %v217
    %635 = vst [vmem:[%s552] ss:$9 sm:$0xff] %v218
    %636 = vst [vmem:[%s554] ss:$9 sm:$0xff] %v219
    %v637 = vld [vmem:[#allocation1] sm:$0xff]
    %638 = vst [vmem:[#allocation1] ss:$9 sm:$0xff] %v220
    %639 = vst [vmem:[%s542] ss:$9 sm:$0xff] %v221
    %640 = vst [vmem:[%s544] ss:$9 sm:$0xff] %v222
    %641 = vst [vmem:[%s546] ss:$9 sm:$0xff] %v38
    %642 = vst [vmem:[%s548] ss:$9 sm:$0xff] %v223
    %643 = vst [vmem:[%s550] ss:$9 sm:$0xff] %v224
    %644 = vst [vmem:[%s552] ss:$9 sm:$0xff] %v225
    %645 = vst [vmem:[%s554] ss:$9 sm:$0xff] %v226
    %v646 = vld [vmem:[#allocation1] sm:$0xff]
    %647 = vst [vmem:[#allocation1] ss:$9 sm:$0xff] %v227
    %648 = vst [vmem:[%s542] ss:$9 sm:$0xff] %v228
    %649 = vst [vmem:[%s544] ss:$9 sm:$0xff] %v39
    %650 = vst [vmem:[%s546] ss:$9 sm:$0xff] %v229
    %651 = vst [vmem:[%s548] ss:$9 sm:$0xff] %v230
    %652 = vst [vmem:[%s550] ss:$9 sm:$0xff] %v231
    %653 = vst [vmem:[%s552] ss:$9 sm:$0xff] %v232
    %654 = vst [vmem:[%s554] ss:$9 sm:$0xff] %v233
    %v655 = vld [vmem:[#allocation1] sm:$0xff]
    %656 = vst [vmem:[#allocation1] ss:$9 sm:$0xff] %v234
    %657 = vst [vmem:[%s542] ss:$9 sm:$0xff] %v235
    %658 = vst [vmem:[%s544] ss:$9 sm:$0xff] %v40
    %659 = vst [vmem:[%s546] ss:$9 sm:$0xff] %v236
    %660 = vst [vmem:[%s548] ss:$9 sm:$0xff] %v237
    %661 = vst [vmem:[%s550] ss:$9 sm:$0xff] %v238
    %662 = vst [vmem:[%s552] ss:$9 sm:$0xff] %v239
    %663 = vst [vmem:[%s554] ss:$9 sm:$0xff] %v240
    %v664 = vld [vmem:[#allocation1] sm:$0xff]
    %665 = vst [vmem:[#allocation1] ss:$9 sm:$0xff] %v241
    %666 = vst [vmem:[%s542] ss:$9 sm:$0xff] %v41
    %667 = vst [vmem:[%s544] ss:$9 sm:$0xff] %v242
    %668 = vst [vmem:[%s546] ss:$9 sm:$0xff] %v243
    %669 = vst [vmem:[%s548] ss:$9 sm:$0xff] %v244
    %670 = vst [vmem:[%s550] ss:$9 sm:$0xff] %v245
    %671 = vst [vmem:[%s552] ss:$9 sm:$0xff] %v246
    %672 = vst [vmem:[%s554] ss:$9 sm:$0xff] %v247
    %v673 = vld [vmem:[#allocation1] sm:$0xff]
    %674 = vst [vmem:[#allocation1] ss:$9 sm:$0xff] %v248
    %675 = vst [vmem:[%s542] ss:$9 sm:$0xff] %v42
    %676 = vst [vmem:[%s544] ss:$9 sm:$0xff] %v249
    %677 = vst [vmem:[%s546] ss:$9 sm:$0xff] %v250
    %678 = vst [vmem:[%s548] ss:$9 sm:$0xff] %v251
    %679 = vst [vmem:[%s550] ss:$9 sm:$0xff] %v252
    %680 = vst [vmem:[%s552] ss:$9 sm:$0xff] %v253
    %681 = vst [vmem:[%s554] ss:$9 sm:$0xff] %v254
    %v682 = vld [vmem:[#allocation1] sm:$0xff]
    %683 = vst [vmem:[#allocation1] ss:$9 sm:$0xff] %v43
    %684 = vst [vmem:[%s542] ss:$9 sm:$0xff] %v255
    %685 = vst [vmem:[%s544] ss:$9 sm:$0xff] %v256
    %686 = vst [vmem:[%s546] ss:$9 sm:$0xff] %v257
    %687 = vst [vmem:[%s548] ss:$9 sm:$0xff] %v258
    %688 = vst [vmem:[%s550] ss:$9 sm:$0xff] %v259
    %689 = vst [vmem:[%s552] ss:$9 sm:$0xff] %v260
    %690 = vst [vmem:[%s554] ss:$9 sm:$0xff] %v261
    %v691 = vld [vmem:[#allocation1] sm:$0xff]
    %692 = vst [vmem:[#allocation1] ss:$9 sm:$0xff] %v44
    %693 = vst [vmem:[%s542] ss:$9 sm:$0xff] %v262
    %694 = vst [vmem:[%s544] ss:$9 sm:$0xff] %v263
    %695 = vst [vmem:[%s546] ss:$9 sm:$0xff] %v264
    %696 = vst [vmem:[%s548] ss:$9 sm:$0xff] %v265
    %697 = vst [vmem:[%s550] ss:$9 sm:$0xff] %v266
    %698 = vst [vmem:[%s552] ss:$9 sm:$0xff] %v267
    %699 = vst [vmem:[%s554] ss:$9 sm:$0xff] %v45
    %v700 = vld [vmem:[#allocation1] sm:$0xff]
    %701 = vst [vmem:[#allocation1] ss:$9 sm:$0xff] %v268
    %702 = vst [vmem:[%s542] ss:$9 sm:$0xff] %v269
    %703 = vst [vmem:[%s544] ss:$9 sm:$0xff] %v270
    %704 = vst [vmem:[%s546] ss:$9 sm:$0xff] %v271
    %705 = vst [vmem:[%s548] ss:$9 sm:$0xff] %v272
    %706 = vst [vmem:[%s550] ss:$9 sm:$0xff] %v273
    %707 = vst [vmem:[%s552] ss:$9 sm:$0xff] %v274
    %708 = vst [vmem:[%s554] ss:$9 sm:$0xff] %v46
    %v709 = vld [vmem:[#allocation1] sm:$0xff]
    %710 = vst [vmem:[#allocation1] ss:$9 sm:$0xff] %v275
    %711 = vst [vmem:[%s542] ss:$9 sm:$0xff] %v276
    %712 = vst [vmem:[%s544] ss:$9 sm:$0xff] %v277
    %713 = vst [vmem:[%s546] ss:$9 sm:$0xff] %v278
    %714 = vst [vmem:[%s548] ss:$9 sm:$0xff] %v279
    %715 = vst [vmem:[%s550] ss:$9 sm:$0xff] %v280
    %716 = vst [vmem:[%s552] ss:$9 sm:$0xff] %v47
    %717 = vst [vmem:[%s554] ss:$9 sm:$0xff] %v281
    %v718 = vld [vmem:[#allocation1] sm:$0xff]
    %719 = vst [vmem:[#allocation1] ss:$9 sm:$0xff] %v282
    %720 = vst [vmem:[%s542] ss:$9 sm:$0xff] %v283
    %721 = vst [vmem:[%s544] ss:$9 sm:$0xff] %v284
    %722 = vst [vmem:[%s546] ss:$9 sm:$0xff] %v285
    %723 = vst [vmem:[%s548] ss:$9 sm:$0xff] %v286
    %724 = vst [vmem:[%s550] ss:$9 sm:$0xff] %v287
    %725 = vst [vmem:[%s552] ss:$9 sm:$0xff] %v48
    %726 = vst [vmem:[%s554] ss:$9 sm:$0xff] %v288
    %v727 = vld [vmem:[#allocation1] sm:$0xff]
    %728 = vst [vmem:[#allocation1] ss:$9 sm:$0xff] %v289
    %729 = vst [vmem:[%s542] ss:$9 sm:$0xff] %v290
    %730 = vst [vmem:[%s544] ss:$9 sm:$0xff] %v291
    %731 = vst [vmem:[%s546] ss:$9 sm:$0xff] %v292
    %732 = vst [vmem:[%s548] ss:$9 sm:$0xff] %v293
    %733 = vst [vmem:[%s550] ss:$9 sm:$0xff] %v49
    %734 = vst [vmem:[%s552] ss:$9 sm:$0xff] %v294
    %735 = vst [vmem:[%s554] ss:$9 sm:$0xff] %v295
    %v736 = vld [vmem:[#allocation1] sm:$0xff]
    %737 = vst [vmem:[#allocation1] ss:$9 sm:$0xff] %v296
    %738 = vst [vmem:[%s542] ss:$9 sm:$0xff] %v297
    %739 = vst [vmem:[%s544] ss:$9 sm:$0xff] %v298
    %740 = vst [vmem:[%s546] ss:$9 sm:$0xff] %v299
    %741 = vst [vmem:[%s548] ss:$9 sm:$0xff] %v300
    %742 = vst [vmem:[%s550] ss:$9 sm:$0xff] %v50
    %743 = vst [vmem:[%s552] ss:$9 sm:$0xff] %v301
    %744 = vst [vmem:[%s554] ss:$9 sm:$0xff] %v302
    %v745 = vld [vmem:[#allocation1] sm:$0xff]
    %746 = vst [vmem:[#allocation1] ss:$9 sm:$0xff] %v303
    %747 = vst [vmem:[%s542] ss:$9 sm:$0xff] %v304
    %748 = vst [vmem:[%s544] ss:$9 sm:$0xff] %v305
    %749 = vst [vmem:[%s546] ss:$9 sm:$0xff] %v306
    %750 = vst [vmem:[%s548] ss:$9 sm:$0xff] %v51
    %751 = vst [vmem:[%s550] ss:$9 sm:$0xff] %v307
    %752 = vst [vmem:[%s552] ss:$9 sm:$0xff] %v308
    %753 = vst [vmem:[%s554] ss:$9 sm:$0xff] %v309
    %v754 = vld [vmem:[#allocation1] sm:$0xff]
    %755 = vst [vmem:[#allocation1] ss:$9 sm:$0xff] %v310
    %756 = vst [vmem:[%s542] ss:$9 sm:$0xff] %v311
    %757 = vst [vmem:[%s544] ss:$9 sm:$0xff] %v312
    %758 = vst [vmem:[%s546] ss:$9 sm:$0xff] %v313
    %759 = vst [vmem:[%s548] ss:$9 sm:$0xff] %v52
    %760 = vst [vmem:[%s550] ss:$9 sm:$0xff] %v314
    %761 = vst [vmem:[%s552] ss:$9 sm:$0xff] %v315
    %762 = vst [vmem:[%s554] ss:$9 sm:$0xff] %v316
    %v763 = vld [vmem:[#allocation1] sm:$0xff]
    %764 = vst [vmem:[#allocation1] ss:$9 sm:$0xff] %v317
    %765 = vst [vmem:[%s542] ss:$9 sm:$0xff] %v318
    %766 = vst [vmem:[%s544] ss:$9 sm:$0xff] %v319
    %767 = vst [vmem:[%s546] ss:$9 sm:$0xff] %v53
    %768 = vst [vmem:[%s548] ss:$9 sm:$0xff] %v320
    %769 = vst [vmem:[%s550] ss:$9 sm:$0xff] %v321
    %770 = vst [vmem:[%s552] ss:$9 sm:$0xff] %v322
    %771 = vst [vmem:[%s554] ss:$9 sm:$0xff] %v323
    %v772 = vld [vmem:[#allocation1] sm:$0xff]
    %773 = vst [vmem:[#allocation1] ss:$9 sm:$0xff] %v324
    %774 = vst [vmem:[%s542] ss:$9 sm:$0xff] %v325
    %775 = vst [vmem:[%s544] ss:$9 sm:$0xff] %v326
    %776 = vst [vmem:[%s546] ss:$9 sm:$0xff] %v54
    %777 = vst [vmem:[%s548] ss:$9 sm:$0xff] %v327
    %778 = vst [vmem:[%s550] ss:$9 sm:$0xff] %v328
    %779 = vst [vmem:[%s552] ss:$9 sm:$0xff] %v329
    %780 = vst [vmem:[%s554] ss:$9 sm:$0xff] %v330
    %v781 = vld [vmem:[#allocation1] sm:$0xff]
    %782 = vst [vmem:[#allocation1] ss:$9 sm:$0xff] %v331
    %783 = vst [vmem:[%s542] ss:$9 sm:$0xff] %v332
    %784 = vst [vmem:[%s544] ss:$9 sm:$0xff] %v55
    %785 = vst [vmem:[%s546] ss:$9 sm:$0xff] %v333
    %786 = vst [vmem:[%s548] ss:$9 sm:$0xff] %v334
    %787 = vst [vmem:[%s550] ss:$9 sm:$0xff] %v335
    %788 = vst [vmem:[%s552] ss:$9 sm:$0xff] %v336
    %789 = vst [vmem:[%s554] ss:$9 sm:$0xff] %v337
    %v790 = vld [vmem:[#allocation1] sm:$0xff]
    %791 = vst [vmem:[#allocation1] ss:$9 sm:$0xff] %v338
    %792 = vst [vmem:[%s542] ss:$9 sm:$0xff] %v339
    %793 = vst [vmem:[%s544] ss:$9 sm:$0xff] %v56
    %794 = vst [vmem:[%s546] ss:$9 sm:$0xff] %v340
    %795 = vst [vmem:[%s548] ss:$9 sm:$0xff] %v341
    %796 = vst [vmem:[%s550] ss:$9 sm:$0xff] %v342
    %797 = vst [vmem:[%s552] ss:$9 sm:$0xff] %v343
    %798 = vst [vmem:[%s554] ss:$9 sm:$0xff] %v344
    %v799 = vld [vmem:[#allocation1] sm:$0xff]
    %800 = vst [vmem:[#allocation1] ss:$9 sm:$0xff] %v345
    %801 = vst [vmem:[%s542] ss:$9 sm:$0xff] %v59
    %802 = vst [vmem:[%s544] ss:$9 sm:$0xff] %v346
    %803 = vst [vmem:[%s546] ss:$9 sm:$0xff] %v347
    %804 = vst [vmem:[%s548] ss:$9 sm:$0xff] %v348
    %805 = vst [vmem:[%s550] ss:$9 sm:$0xff] %v349
    %806 = vst [vmem:[%s552] ss:$9 sm:$0xff] %v350
    %807 = vst [vmem:[%s554] ss:$9 sm:$0xff] %v351
    %v808 = vld [vmem:[#allocation1] sm:$0xff]
    %809 = vst [vmem:[#allocation1] ss:$9 sm:$0xff] %v352
    %810 = vst [vmem:[%s542] ss:$9 sm:$0xff] %v60
    %811 = vst [vmem:[%s544] ss:$9 sm:$0xff] %v353
    %812 = vst [vmem:[%s546] ss:$9 sm:$0xff] %v354
    %813 = vst [vmem:[%s548] ss:$9 sm:$0xff] %v355
    %814 = vst [vmem:[%s550] ss:$9 sm:$0xff] %v356
    %815 = vst [vmem:[%s552] ss:$9 sm:$0xff] %v357
    %816 = vst [vmem:[%s554] ss:$9 sm:$0xff] %v358
    %v817 = vld [vmem:[#allocation1] sm:$0xff]
    %818 = vst [vmem:[#allocation1] ss:$9 sm:$0xff] %v61
    %819 = vst [vmem:[%s542] ss:$9 sm:$0xff] %v359
    %820 = vst [vmem:[%s544] ss:$9 sm:$0xff] %v360
    %821 = vst [vmem:[%s546] ss:$9 sm:$0xff] %v361
    %822 = vst [vmem:[%s548] ss:$9 sm:$0xff] %v362
    %823 = vst [vmem:[%s550] ss:$9 sm:$0xff] %v363
    %824 = vst [vmem:[%s552] ss:$9 sm:$0xff] %v364
    %825 = vst [vmem:[%s554] ss:$9 sm:$0xff] %v365
    %v826 = vld [vmem:[#allocation1] sm:$0xff]
    %827 = vst [vmem:[#allocation1] ss:$9 sm:$0xff] %v62
    %828 = vst [vmem:[%s542] ss:$9 sm:$0xff] %v366
    %829 = vst [vmem:[%s544] ss:$9 sm:$0xff] %v367
    %830 = vst [vmem:[%s546] ss:$9 sm:$0xff] %v368
    %831 = vst [vmem:[%s548] ss:$9 sm:$0xff] %v369
    %832 = vst [vmem:[%s550] ss:$9 sm:$0xff] %v370
    %833 = vst [vmem:[%s552] ss:$9 sm:$0xff] %v371
    %834 = vst [vmem:[%s554] ss:$9 sm:$0xff] %v63
    %v835 = vld [vmem:[#allocation1] sm:$0xff]
    %836 = vst [vmem:[#allocation1] ss:$9 sm:$0xff] %v372
    %837 = vst [vmem:[%s542] ss:$9 sm:$0xff] %v373
    %838 = vst [vmem:[%s544] ss:$9 sm:$0xff] %v374
    %839 = vst [vmem:[%s546] ss:$9 sm:$0xff] %v375
    %840 = vst [vmem:[%s548] ss:$9 sm:$0xff] %v376
    %841 = vst [vmem:[%s550] ss:$9 sm:$0xff] %v377
    %842 = vst [vmem:[%s552] ss:$9 sm:$0xff] %v378
    %843 = vst [vmem:[%s554] ss:$9 sm:$0xff] %v64
    %v844 = vld [vmem:[#allocation1] sm:$0xff]
    %845 = vst [vmem:[#allocation1] ss:$9 sm:$0xff] %v379
    %846 = vst [vmem:[%s542] ss:$9 sm:$0xff] %v380
    %847 = vst [vmem:[%s544] ss:$9 sm:$0xff] %v381
    %848 = vst [vmem:[%s546] ss:$9 sm:$0xff] %v382
    %849 = vst [vmem:[%s548] ss:$9 sm:$0xff] %v383
    %850 = vst [vmem:[%s550] ss:$9 sm:$0xff] %v384
    %851 = vst [vmem:[%s552] ss:$9 sm:$0xff] %v65
    %852 = vst [vmem:[%s554] ss:$9 sm:$0xff] %v385
    %v853 = vld [vmem:[#allocation1] sm:$0xff]
    %854 = vst [vmem:[#allocation1] ss:$9 sm:$0xff] %v386
    %855 = vst [vmem:[%s542] ss:$9 sm:$0xff] %v387
    %856 = vst [vmem:[%s544] ss:$9 sm:$0xff] %v388
    %857 = vst [vmem:[%s546] ss:$9 sm:$0xff] %v389
    %858 = vst [vmem:[%s548] ss:$9 sm:$0xff] %v390
    %859 = vst [vmem:[%s550] ss:$9 sm:$0xff] %v391
    %860 = vst [vmem:[%s552] ss:$9 sm:$0xff] %v66
    %861 = vst [vmem:[%s554] ss:$9 sm:$0xff] %v392
    %v862 = vld [vmem:[#allocation1] sm:$0xff]
    %863 = vst [vmem:[#allocation1] ss:$9 sm:$0xff] %v393
    %864 = vst [vmem:[%s542] ss:$9 sm:$0xff] %v394
    %865 = vst [vmem:[%s544] ss:$9 sm:$0xff] %v395
    %866 = vst [vmem:[%s546] ss:$9 sm:$0xff] %v396
    %867 = vst [vmem:[%s548] ss:$9 sm:$0xff] %v397
    %868 = vst [vmem:[%s550] ss:$9 sm:$0xff] %v67
    %869 = vst [vmem:[%s552] ss:$9 sm:$0xff] %v398
    %870 = vst [vmem:[%s554] ss:$9 sm:$0xff] %v399
    %v871 = vld [vmem:[#allocation1] sm:$0xff]
    %872 = vst [vmem:[#allocation1] ss:$9 sm:$0xff] %v400
    %873 = vst [vmem:[%s542] ss:$9 sm:$0xff] %v401
    %874 = vst [vmem:[%s544] ss:$9 sm:$0xff] %v402
    %875 = vst [vmem:[%s546] ss:$9 sm:$0xff] %v403
    %876 = vst [vmem:[%s548] ss:$9 sm:$0xff] %v404
    %877 = vst [vmem:[%s550] ss:$9 sm:$0xff] %v68
    %878 = vst [vmem:[%s552] ss:$9 sm:$0xff] %v405
    %879 = vst [vmem:[%s554] ss:$9 sm:$0xff] %v406
    %v880 = vld [vmem:[#allocation1] sm:$0xff]
    %881 = vst [vmem:[#allocation1] ss:$9 sm:$0xff] %v407
    %882 = vst [vmem:[%s542] ss:$9 sm:$0xff] %v408
    %883 = vst [vmem:[%s544] ss:$9 sm:$0xff] %v409
    %884 = vst [vmem:[%s546] ss:$9 sm:$0xff] %v410
    %885 = vst [vmem:[%s548] ss:$9 sm:$0xff] %v69
    %886 = vst [vmem:[%s550] ss:$9 sm:$0xff] %v411
    %887 = vst [vmem:[%s552] ss:$9 sm:$0xff] %v412
    %888 = vst [vmem:[%s554] ss:$9 sm:$0xff] %v413
    %v889 = vld [vmem:[#allocation1] sm:$0xff]
    %890 = vst [vmem:[#allocation1] ss:$9 sm:$0xff] %v414
    %891 = vst [vmem:[%s542] ss:$9 sm:$0xff] %v415
    %892 = vst [vmem:[%s544] ss:$9 sm:$0xff] %v416
    %893 = vst [vmem:[%s546] ss:$9 sm:$0xff] %v417
    %894 = vst [vmem:[%s548] ss:$9 sm:$0xff] %v70
    %895 = vst [vmem:[%s550] ss:$9 sm:$0xff] %v418
    %896 = vst [vmem:[%s552] ss:$9 sm:$0xff] %v419
    %897 = vst [vmem:[%s554] ss:$9 sm:$0xff] %v420
    %v898 = vld [vmem:[#allocation1] sm:$0xff]
    %899 = vst [vmem:[#allocation1] ss:$9 sm:$0xff] %v421
    %900 = vst [vmem:[%s542] ss:$9 sm:$0xff] %v422
    %901 = vst [vmem:[%s544] ss:$9 sm:$0xff] %v423
    %902 = vst [vmem:[%s546] ss:$9 sm:$0xff] %v71
    %903 = vst [vmem:[%s548] ss:$9 sm:$0xff] %v424
    %904 = vst [vmem:[%s550] ss:$9 sm:$0xff] %v425
    %905 = vst [vmem:[%s552] ss:$9 sm:$0xff] %v426
    %906 = vst [vmem:[%s554] ss:$9 sm:$0xff] %v427
    %v907 = vld [vmem:[#allocation1] sm:$0xff]
    %908 = vst [vmem:[#allocation1] ss:$9 sm:$0xff] %v428
    %909 = vst [vmem:[%s542] ss:$9 sm:$0xff] %v429
    %910 = vst [vmem:[%s544] ss:$9 sm:$0xff] %v430
    %911 = vst [vmem:[%s546] ss:$9 sm:$0xff] %v72
    %912 = vst [vmem:[%s548] ss:$9 sm:$0xff] %v431
    %913 = vst [vmem:[%s550] ss:$9 sm:$0xff] %v432
    %914 = vst [vmem:[%s552] ss:$9 sm:$0xff] %v433
    %915 = vst [vmem:[%s554] ss:$9 sm:$0xff] %v434
    %v916 = vld [vmem:[#allocation1] sm:$0xff]
    %917 = vst [vmem:[#allocation1] ss:$9 sm:$0xff] %v435
    %918 = vst [vmem:[%s542] ss:$9 sm:$0xff] %v436
    %919 = vst [vmem:[%s544] ss:$9 sm:$0xff] %v73
    %920 = vst [vmem:[%s546] ss:$9 sm:$0xff] %v437
    %921 = vst [vmem:[%s548] ss:$9 sm:$0xff] %v438
    %922 = vst [vmem:[%s550] ss:$9 sm:$0xff] %v439
    %923 = vst [vmem:[%s552] ss:$9 sm:$0xff] %v440
    %924 = vst [vmem:[%s554] ss:$9 sm:$0xff] %v441
    %v925 = vld [vmem:[#allocation1] sm:$0xff]
    %926 = vst [vmem:[#allocation1] ss:$9 sm:$0xff] %v442
    %927 = vst [vmem:[%s542] ss:$9 sm:$0xff] %v443
    %928 = vst [vmem:[%s544] ss:$9 sm:$0xff] %v74
    %929 = vst [vmem:[%s546] ss:$9 sm:$0xff] %v444
    %930 = vst [vmem:[%s548] ss:$9 sm:$0xff] %v445
    %931 = vst [vmem:[%s550] ss:$9 sm:$0xff] %v446
    %932 = vst [vmem:[%s552] ss:$9 sm:$0xff] %v447
    %933 = vst [vmem:[%s554] ss:$9 sm:$0xff] %v448
    %v934 = vld [vmem:[#allocation1] sm:$0xff]
    %935 = vst [vmem:[#allocation1] ss:$9 sm:$0xff] %v449
    %936 = vst [vmem:[%s542] ss:$9 sm:$0xff] %v75
    %937 = vst [vmem:[%s544] ss:$9 sm:$0xff] %v450
    %938 = vst [vmem:[%s546] ss:$9 sm:$0xff] %v451
    %939 = vst [vmem:[%s548] ss:$9 sm:$0xff] %v452
    %940 = vst [vmem:[%s550] ss:$9 sm:$0xff] %v453
    %941 = vst [vmem:[%s552] ss:$9 sm:$0xff] %v454
    %942 = vst [vmem:[%s554] ss:$9 sm:$0xff] %v455
    %v943 = vld [vmem:[#allocation1] sm:$0xff]
    %944 = vst [vmem:[#allocation1] ss:$9 sm:$0xff] %v456
    %945 = vst [vmem:[%s542] ss:$9 sm:$0xff] %v76
    %946 = vst [vmem:[%s544] ss:$9 sm:$0xff] %v457
    %947 = vst [vmem:[%s546] ss:$9 sm:$0xff] %v458
    %948 = vst [vmem:[%s548] ss:$9 sm:$0xff] %v459
    %949 = vst [vmem:[%s550] ss:$9 sm:$0xff] %v460
    %950 = vst [vmem:[%s552] ss:$9 sm:$0xff] %v461
    %951 = vst [vmem:[%s554] ss:$9 sm:$0xff] %v462
    %v952 = vld [vmem:[#allocation1] sm:$0xff]
    %953 = vst [vmem:[#allocation1] ss:$9 sm:$0xff] %v77
    %954 = vst [vmem:[%s542] ss:$9 sm:$0xff] %v463
    %955 = vst [vmem:[%s544] ss:$9 sm:$0xff] %v464
    %956 = vst [vmem:[%s546] ss:$9 sm:$0xff] %v465
    %957 = vst [vmem:[%s548] ss:$9 sm:$0xff] %v466
    %958 = vst [vmem:[%s550] ss:$9 sm:$0xff] %v467
    %959 = vst [vmem:[%s552] ss:$9 sm:$0xff] %v468
    %960 = vst [vmem:[%s554] ss:$9 sm:$0xff] %v469
    %v961 = vld [vmem:[#allocation1] sm:$0xff]
    %962 = vst [vmem:[#allocation1] ss:$9 sm:$0xff] %v78
    %963 = vst [vmem:[%s542] ss:$9 sm:$0xff] %v470
    %964 = vst [vmem:[%s544] ss:$9 sm:$0xff] %v471
    %965 = vst [vmem:[%s546] ss:$9 sm:$0xff] %v472
    %966 = vst [vmem:[%s548] ss:$9 sm:$0xff] %v473
    %967 = vst [vmem:[%s550] ss:$9 sm:$0xff] %v474
    %968 = vst [vmem:[%s552] ss:$9 sm:$0xff] %v475
    %969 = vst [vmem:[%s554] ss:$9 sm:$0xff] %v79
    %v970 = vld [vmem:[#allocation1] sm:$0xff]
    %971 = vst [vmem:[#allocation1] ss:$9 sm:$0xff] %v476
    %972 = vst [vmem:[%s542] ss:$9 sm:$0xff] %v477
    %973 = vst [vmem:[%s544] ss:$9 sm:$0xff] %v478
    %974 = vst [vmem:[%s546] ss:$9 sm:$0xff] %v479
    %975 = vst [vmem:[%s548] ss:$9 sm:$0xff] %v480
    %976 = vst [vmem:[%s550] ss:$9 sm:$0xff] %v481
    %977 = vst [vmem:[%s552] ss:$9 sm:$0xff] %v482
    %978 = vst [vmem:[%s554] ss:$9 sm:$0xff] %v80
    %v979 = vld [vmem:[#allocation1] sm:$0xff]
    %980 = vst [vmem:[#allocation1] ss:$9 sm:$0xff] %v483
    %981 = vst [vmem:[%s542] ss:$9 sm:$0xff] %v484
    %982 = vst [vmem:[%s544] ss:$9 sm:$0xff] %v485
    %983 = vst [vmem:[%s546] ss:$9 sm:$0xff] %v486
    %984 = vst [vmem:[%s548] ss:$9 sm:$0xff] %v487
    %985 = vst [vmem:[%s550] ss:$9 sm:$0xff] %v488
    %986 = vst [vmem:[%s552] ss:$9 sm:$0xff] %v81
    %987 = vst [vmem:[%s554] ss:$9 sm:$0xff] %v489
    %v988 = vld [vmem:[#allocation1] sm:$0xff]
    %989 = vst [vmem:[#allocation1] ss:$9 sm:$0xff] %v490
    %990 = vst [vmem:[%s542] ss:$9 sm:$0xff] %v491
    %991 = vst [vmem:[%s544] ss:$9 sm:$0xff] %v492
    %992 = vst [vmem:[%s546] ss:$9 sm:$0xff] %v493
    %993 = vst [vmem:[%s548] ss:$9 sm:$0xff] %v494
    %994 = vst [vmem:[%s550] ss:$9 sm:$0xff] %v495
    %995 = vst [vmem:[%s552] ss:$9 sm:$0xff] %v82
    %996 = vst [vmem:[%s554] ss:$9 sm:$0xff] %v496
    %v997 = vld [vmem:[#allocation1] sm:$0xff]
    %998 = vst [vmem:[#allocation1] ss:$9 sm:$0xff] %v497
    %999 = vst [vmem:[%s542] ss:$9 sm:$0xff] %v498
    %1000 = vst [vmem:[%s544] ss:$9 sm:$0xff] %v499
    %1001 = vst [vmem:[%s546] ss:$9 sm:$0xff] %v500
    %1002 = vst [vmem:[%s548] ss:$9 sm:$0xff] %v501
    %1003 = vst [vmem:[%s550] ss:$9 sm:$0xff] %v83
    %1004 = vst [vmem:[%s552] ss:$9 sm:$0xff] %v502
    %1005 = vst [vmem:[%s554] ss:$9 sm:$0xff] %v503
    %v1006 = vld [vmem:[#allocation1] sm:$0xff]
    %1007 = vst [vmem:[#allocation1] ss:$9 sm:$0xff] %v504
    %1008 = vst [vmem:[%s542] ss:$9 sm:$0xff] %v505
    %1009 = vst [vmem:[%s544] ss:$9 sm:$0xff] %v506
    %1010 = vst [vmem:[%s546] ss:$9 sm:$0xff] %v507
    %1011 = vst [vmem:[%s548] ss:$9 sm:$0xff] %v508
    %1012 = vst [vmem:[%s550] ss:$9 sm:$0xff] %v84
    %1013 = vst [vmem:[%s552] ss:$9 sm:$0xff] %v509
    %1014 = vst [vmem:[%s554] ss:$9 sm:$0xff] %v510
    %v1015 = vld [vmem:[#allocation1] sm:$0xff]
    %1016 = vst [vmem:[#allocation1] ss:$9 sm:$0xff] %v511
    %1017 = vst [vmem:[%s542] ss:$9 sm:$0xff] %v512
    %1018 = vst [vmem:[%s544] ss:$9 sm:$0xff] %v513
    %1019 = vst [vmem:[%s546] ss:$9 sm:$0xff] %v514
    %1020 = vst [vmem:[%s548] ss:$9 sm:$0xff] %v85
    %1021 = vst [vmem:[%s550] ss:$9 sm:$0xff] %v515
    %1022 = vst [vmem:[%s552] ss:$9 sm:$0xff] %v516
    %1023 = vst [vmem:[%s554] ss:$9 sm:$0xff] %v517
    %v1024 = vld [vmem:[#allocation1] sm:$0xff]
    %1025 = vst [vmem:[#allocation1] ss:$9 sm:$0xff] %v518
    %1026 = vst [vmem:[%s542] ss:$9 sm:$0xff] %v519
    %1027 = vst [vmem:[%s544] ss:$9 sm:$0xff] %v520
    %1028 = vst [vmem:[%s546] ss:$9 sm:$0xff] %v521
    %1029 = vst [vmem:[%s548] ss:$9 sm:$0xff] %v86
    %1030 = vst [vmem:[%s550] ss:$9 sm:$0xff] %v522
    %1031 = vst [vmem:[%s552] ss:$9 sm:$0xff] %v523
    %1032 = vst [vmem:[%s554] ss:$9 sm:$0xff] %v524
    %v1033 = vld [vmem:[#allocation1] sm:$0xff]
    %1034 = vst [vmem:[#allocation1] ss:$9 sm:$0xff] %v525
    %1035 = vst [vmem:[%s542] ss:$9 sm:$0xff] %v526
    %1036 = vst [vmem:[%s544] ss:$9 sm:$0xff] %v527
    %1037 = vst [vmem:[%s546] ss:$9 sm:$0xff] %v87
    %1038 = vst [vmem:[%s548] ss:$9 sm:$0xff] %v528
    %1039 = vst [vmem:[%s550] ss:$9 sm:$0xff] %v529
    %1040 = vst [vmem:[%s552] ss:$9 sm:$0xff] %v530
    %1041 = vst [vmem:[%s554] ss:$9 sm:$0xff] %v531
    %v1042 = vld [vmem:[#allocation1] sm:$0xff]
    %1043 = vst [vmem:[#allocation1] ss:$9 sm:$0xff] %v532
    %1044 = vst [vmem:[%s542] ss:$9 sm:$0xff] %v533
    %1045 = vst [vmem:[%s544] ss:$9 sm:$0xff] %v534
    %1046 = vst [vmem:[%s546] ss:$9 sm:$0xff] %v88
    %1047 = vst [vmem:[%s548] ss:$9 sm:$0xff] %v535
    %1048 = vst [vmem:[%s550] ss:$9 sm:$0xff] %v536
    %1049 = vst [vmem:[%s552] ss:$9 sm:$0xff] %v537
    %1050 = vst [vmem:[%s554] ss:$9 sm:$0xff] %v538
    %v1051 = vld [vmem:[#allocation1] sm:$0xff]
    %1052 = vst [vmem:[#allocation1] ss:$9 sm:$0xff] %v539
    %1053 = vst [vmem:[%s542] ss:$9 sm:$0xff] %v540
    %v1054 = vld [vmem:[#allocation1] sm:$0xff]
    %vm1112 = vcmask 31744
    %1113 = vst.msk [vmem:[#allocation2] sm:$0xff] %vm1112, %v556
    %1114 = vst.msk [vmem:[#allocation2 + $0x8] sm:$0xff] %vm1112, %v565
    %1115 = vst.msk [vmem:[#allocation2 + $0x10] sm:$0xff] %vm1112, %v574
    %1116 = vst.msk [vmem:[#allocation2 + $0x18] sm:$0xff] %vm1112, %v583
    %1117 = vst.msk [vmem:[#allocation2 + $0x20] sm:$0xff] %vm1112, %v592
    %1118 = vst.msk [vmem:[#allocation2 + $0x28] sm:$0xff] %vm1112, %v601
    %1119 = vst.msk [vmem:[#allocation2 + $0x30] sm:$0xff] %vm1112, %v610
    %1120 = vst.msk [vmem:[#allocation2 + $0x38] sm:$0xff] %vm1112, %v619
    %1121 = vst.msk [vmem:[#allocation2 + $0x40] sm:$0xff] %vm1112, %v628
    %1122 = vst.msk [vmem:[#allocation2 + $0x48] sm:$0xff] %vm1112, %v637
    %1123 = vst.msk [vmem:[#allocation2 + $0x50] sm:$0xff] %vm1112, %v646
    %1124 = vst.msk [vmem:[#allocation2 + $0x58] sm:$0xff] %vm1112, %v655
    %1125 = vst.msk [vmem:[#allocation2 + $0x60] sm:$0xff] %vm1112, %v664
    %1126 = vst.msk [vmem:[#allocation2 + $0x68] sm:$0xff] %vm1112, %v673
    %1127 = vst.msk [vmem:[#allocation2 + $0x70] sm:$0xff] %vm1112, %v682
    %1128 = vst.msk [vmem:[#allocation2 + $0x78] sm:$0xff] %vm1112, %v691
    %1129 = vst.msk [vmem:[#allocation2 + $0x80] sm:$0xff] %vm1112, %v700
    %1130 = vst.msk [vmem:[#allocation2 + $0x88] sm:$0xff] %vm1112, %v709
    %1131 = vst.msk [vmem:[#allocation2 + $0x90] sm:$0xff] %vm1112, %v718
    %1132 = vst.msk [vmem:[#allocation2 + $0x98] sm:$0xff] %vm1112, %v727
    %1133 = vst.msk [vmem:[#allocation2 + $0xa0] sm:$0xff] %vm1112, %v736
    %1134 = vst.msk [vmem:[#allocation2 + $0xa8] sm:$0xff] %vm1112, %v745
    %1135 = vst.msk [vmem:[#allocation2 + $0xb0] sm:$0xff] %vm1112, %v754
    %1136 = vst.msk [vmem:[#allocation2 + $0xb8] sm:$0xff] %vm1112, %v763
    %1137 = vst.msk [vmem:[#allocation2 + $0xc0] sm:$0xff] %vm1112, %v772
    %1138 = vst.msk [vmem:[#allocation2 + $0xc8] sm:$0xff] %vm1112, %v781
    %1139 = vst.msk [vmem:[#allocation2 + $0xd0] sm:$0xff] %vm1112, %v790
    %1140 = vst.msk [vmem:[#allocation2 + $0xd8] sm:$0xff] %vm1112, %v799
    %1141 = vst.msk [vmem:[#allocation2 + $0xe0] sm:$0xff] %vm1112, %v808
    %1142 = vst.msk [vmem:[#allocation2 + $0xe8] sm:$0xff] %vm1112, %v817
    %1143 = vst.msk [vmem:[#allocation2 + $0xf0] sm:$0xff] %vm1112, %v826
    %1144 = vst.msk [vmem:[#allocation2 + $0xf8] sm:$0xff] %vm1112, %v835
    %1145 = vst.msk [vmem:[#allocation2 + $0x100] sm:$0xff] %vm1112, %v844
    %1146 = vst.msk [vmem:[#allocation2 + $0x108] sm:$0xff] %vm1112, %v853
    %1147 = vst.msk [vmem:[#allocation2 + $0x110] sm:$0xff] %vm1112, %v862
    %1148 = vst.msk [vmem:[#allocation2 + $0x118] sm:$0xff] %vm1112, %v871
    %1149 = vst.msk [vmem:[#allocation2 + $0x120] sm:$0xff] %vm1112, %v880
    %1150 = vst.msk [vmem:[#allocation2 + $0x128] sm:$0xff] %vm1112, %v889
    %1151 = vst.msk [vmem:[#allocation2 + $0x130] sm:$0xff] %vm1112, %v898
    %1152 = vst.msk [vmem:[#allocation2 + $0x138] sm:$0xff] %vm1112, %v907
    %1153 = vst.msk [vmem:[#allocation2 + $0x140] sm:$0xff] %vm1112, %v916
    %1154 = vst.msk [vmem:[#allocation2 + $0x148] sm:$0xff] %vm1112, %v925
    %1155 = vst.msk [vmem:[#allocation2 + $0x150] sm:$0xff] %vm1112, %v934
    %1156 = vst.msk [vmem:[#allocation2 + $0x158] sm:$0xff] %vm1112, %v943
    %1157 = vst.msk [vmem:[#allocation2 + $0x160] sm:$0xff] %vm1112, %v952
    %1158 = vst.msk [vmem:[#allocation2 + $0x168] sm:$0xff] %vm1112, %v961
    %1159 = vst.msk [vmem:[#allocation2 + $0x170] sm:$0xff] %vm1112, %v970
    %1160 = vst.msk [vmem:[#allocation2 + $0x178] sm:$0xff] %vm1112, %v979
    %1161 = vst.msk [vmem:[#allocation2 + $0x180] sm:$0xff] %vm1112, %v988
    %1162 = vst.msk [vmem:[#allocation2 + $0x188] sm:$0xff] %vm1112, %v997
    %1163 = vst.msk [vmem:[#allocation2 + $0x190] sm:$0xff] %vm1112, %v1006
    %1164 = vst.msk [vmem:[#allocation2 + $0x198] sm:$0xff] %vm1112, %v1015
    %1165 = vst.msk [vmem:[#allocation2 + $0x1a0] sm:$0xff] %vm1112, %v1024
    %1166 = vst.msk [vmem:[#allocation2 + $0x1a8] sm:$0xff] %vm1112, %v1033
    %1167 = vst.msk [vmem:[#allocation2 + $0x1b0] sm:$0xff] %vm1112, %v1042
    %1168 = vst.msk [vmem:[#allocation2 + $0x1b8] sm:$0xff] %vm1112, %v1051
    %vm1169 = vcmask 25600
    %1170 = vst.msk [vmem:[#allocation2 + $0x1c0] sm:$0x3] %vm1169, %v1054
    %1171 = vst [vmem:[#allocation1] sm:$0xff] %v27
    %s1172 = scalar_lea.vmem [#allocation1], 1
    %v1173 = vld [vmem:[%s1172] ss:$9 sm:$0xff]
    %s1174 = scalar_lea.vmem [#allocation1], 2
    %v1175 = vld [vmem:[%s1174] ss:$9 sm:$0xff]
    %s1176 = scalar_lea.vmem [#allocation1], 3
    %v1177 = vld [vmem:[%s1176] ss:$9 sm:$0xff]
    %s1178 = scalar_lea.vmem [#allocation1], 4
    %v1179 = vld [vmem:[%s1178] ss:$9 sm:$0xff]
    %s1180 = scalar_lea.vmem [#allocation1], 5
    %v1181 = vld [vmem:[%s1180] ss:$9 sm:$0xff]
    %s1182 = scalar_lea.vmem [#allocation1], 6
    %v1183 = vld [vmem:[%s1182] ss:$9 sm:$0xff]
    %s1184 = scalar_lea.vmem [#allocation1], 7
    %v1185 = vld [vmem:[%s1184] ss:$9 sm:$0xff]
    %1186 = vst [vmem:[#allocation1] sm:$0xff] %v28
    %v1187 = vld [vmem:[#allocation1] ss:$9 sm:$0xff]
    %v1188 = vld [vmem:[%s1172] ss:$9 sm:$0xff]
    %v1189 = vld [vmem:[%s1174] ss:$9 sm:$0xff]
    %v1190 = vld [vmem:[%s1176] ss:$9 sm:$0xff]
    %v1191 = vld [vmem:[%s1178] ss:$9 sm:$0xff]
    %v1192 = vld [vmem:[%s1180] ss:$9 sm:$0xff]
    %v1193 = vld [vmem:[%s1182] ss:$9 sm:$0xff]
    %v1194 = vld [vmem:[%s1184] ss:$9 sm:$0xff]
    %1195 = vst [vmem:[#allocation1] sm:$0xff] %v29
    %v1196 = vld [vmem:[%s1172] ss:$9 sm:$0xff]
    %v1197 = vld [vmem:[%s1174] ss:$9 sm:$0xff]
    %v1198 = vld [vmem:[%s1176] ss:$9 sm:$0xff]
    %v1199 = vld [vmem:[%s1178] ss:$9 sm:$0xff]
    %v1200 = vld [vmem:[%s1180] ss:$9 sm:$0xff]
    %v1201 = vld [vmem:[%s1182] ss:$9 sm:$0xff]
    %v1202 = vld [vmem:[%s1184] ss:$9 sm:$0xff]
    %1203 = vst [vmem:[#allocation1] sm:$0xff] %v30
    %v1204 = vld [vmem:[#allocation1] ss:$9 sm:$0xff]
    %v1205 = vld [vmem:[%s1172] ss:$9 sm:$0xff]
    %v1206 = vld [vmem:[%s1174] ss:$9 sm:$0xff]
    %v1207 = vld [vmem:[%s1176] ss:$9 sm:$0xff]
    %v1208 = vld [vmem:[%s1178] ss:$9 sm:$0xff]
    %v1209 = vld [vmem:[%s1180] ss:$9 sm:$0xff]
    %v1210 = vld [vmem:[%s1182] ss:$9 sm:$0xff]
    %v1211 = vld [vmem:[%s1184] ss:$9 sm:$0xff]
    %1212 = vst [vmem:[#allocation1] sm:$0xff] %v31
    %v1213 = vld [vmem:[%s1172] ss:$9 sm:$0xff]
    %v1214 = vld [vmem:[%s1174] ss:$9 sm:$0xff]
    %v1215 = vld [vmem:[%s1176] ss:$9 sm:$0xff]
    %v1216 = vld [vmem:[%s1178] ss:$9 sm:$0xff]
    %v1217 = vld [vmem:[%s1180] ss:$9 sm:$0xff]
    %v1218 = vld [vmem:[%s1182] ss:$9 sm:$0xff]
    %v1219 = vld [vmem:[%s1184] ss:$9 sm:$0xff]
    %1220 = vst [vmem:[#allocation1] sm:$0xff] %v32
    %v1221 = vld [vmem:[#allocation1] ss:$9 sm:$0xff]
    %v1222 = vld [vmem:[%s1172] ss:$9 sm:$0xff]
    %v1223 = vld [vmem:[%s1174] ss:$9 sm:$0xff]
    %v1224 = vld [vmem:[%s1176] ss:$9 sm:$0xff]
    %v1225 = vld [vmem:[%s1178] ss:$9 sm:$0xff]
    %v1226 = vld [vmem:[%s1180] ss:$9 sm:$0xff]
    %v1227 = vld [vmem:[%s1182] ss:$9 sm:$0xff]
    %v1228 = vld [vmem:[%s1184] ss:$9 sm:$0xff]
    %1229 = vst [vmem:[#allocation1] sm:$0xff] %v33
    %v1230 = vld [vmem:[%s1172] ss:$9 sm:$0xff]
    %v1231 = vld [vmem:[%s1174] ss:$9 sm:$0xff]
    %v1232 = vld [vmem:[%s1176] ss:$9 sm:$0xff]
    %v1233 = vld [vmem:[%s1178] ss:$9 sm:$0xff]
    %v1234 = vld [vmem:[%s1180] ss:$9 sm:$0xff]
    %v1235 = vld [vmem:[%s1182] ss:$9 sm:$0xff]
    %v1236 = vld [vmem:[%s1184] ss:$9 sm:$0xff]
    %1237 = vst [vmem:[#allocation1] sm:$0xff] %v34
    %v1238 = vld [vmem:[#allocation1] ss:$9 sm:$0xff]
    %v1239 = vld [vmem:[%s1172] ss:$9 sm:$0xff]
    %v1240 = vld [vmem:[%s1174] ss:$9 sm:$0xff]
    %v1241 = vld [vmem:[%s1176] ss:$9 sm:$0xff]
    %v1242 = vld [vmem:[%s1178] ss:$9 sm:$0xff]
    %v1243 = vld [vmem:[%s1180] ss:$9 sm:$0xff]
    %v1244 = vld [vmem:[%s1182] ss:$9 sm:$0xff]
    %v1245 = vld [vmem:[%s1184] ss:$9 sm:$0xff]
    %1246 = vst [vmem:[#allocation1] sm:$0xff] %v35
    %v1247 = vld [vmem:[%s1172] ss:$9 sm:$0xff]
    %v1248 = vld [vmem:[%s1174] ss:$9 sm:$0xff]
    %v1249 = vld [vmem:[%s1176] ss:$9 sm:$0xff]
    %v1250 = vld [vmem:[%s1178] ss:$9 sm:$0xff]
    %v1251 = vld [vmem:[%s1180] ss:$9 sm:$0xff]
    %v1252 = vld [vmem:[%s1182] ss:$9 sm:$0xff]
    %v1253 = vld [vmem:[%s1184] ss:$9 sm:$0xff]
    %1254 = vst [vmem:[#allocation1] sm:$0xff] %v36
    %v1255 = vld [vmem:[#allocation1] ss:$9 sm:$0xff]
    %v1256 = vld [vmem:[%s1172] ss:$9 sm:$0xff]
    %v1257 = vld [vmem:[%s1174] ss:$9 sm:$0xff]
    %v1258 = vld [vmem:[%s1176] ss:$9 sm:$0xff]
    %v1259 = vld [vmem:[%s1178] ss:$9 sm:$0xff]
    %v1260 = vld [vmem:[%s1180] ss:$9 sm:$0xff]
    %v1261 = vld [vmem:[%s1182] ss:$9 sm:$0xff]
    %v1262 = vld [vmem:[%s1184] ss:$9 sm:$0xff]
    %1263 = vst [vmem:[#allocation1] sm:$0xff] %v37
    %v1264 = vld [vmem:[%s1172] ss:$9 sm:$0xff]
    %v1265 = vld [vmem:[%s1174] ss:$9 sm:$0xff]
    %v1266 = vld [vmem:[%s1176] ss:$9 sm:$0xff]
    %v1267 = vld [vmem:[%s1178] ss:$9 sm:$0xff]
    %v1268 = vld [vmem:[%s1180] ss:$9 sm:$0xff]
    %v1269 = vld [vmem:[%s1182] ss:$9 sm:$0xff]
    %v1270 = vld [vmem:[%s1184] ss:$9 sm:$0xff]
    %1271 = vst [vmem:[#allocation1] sm:$0xff] %v38
    %v1272 = vld [vmem:[#allocation1] ss:$9 sm:$0xff]
    %v1273 = vld [vmem:[%s1172] ss:$9 sm:$0xff]
    %v1274 = vld [vmem:[%s1174] ss:$9 sm:$0xff]
    %v1275 = vld [vmem:[%s1176] ss:$9 sm:$0xff]
    %v1276 = vld [vmem:[%s1178] ss:$9 sm:$0xff]
    %v1277 = vld [vmem:[%s1180] ss:$9 sm:$0xff]
    %v1278 = vld [vmem:[%s1182] ss:$9 sm:$0xff]
    %v1279 = vld [vmem:[%s1184] ss:$9 sm:$0xff]
    %1280 = vst [vmem:[#allocation1] sm:$0xff] %v39
    %v1281 = vld [vmem:[%s1172] ss:$9 sm:$0xff]
    %v1282 = vld [vmem:[%s1174] ss:$9 sm:$0xff]
    %v1283 = vld [vmem:[%s1176] ss:$9 sm:$0xff]
    %v1284 = vld [vmem:[%s1178] ss:$9 sm:$0xff]
    %v1285 = vld [vmem:[%s1180] ss:$9 sm:$0xff]
    %v1286 = vld [vmem:[%s1182] ss:$9 sm:$0xff]
    %v1287 = vld [vmem:[%s1184] ss:$9 sm:$0xff]
    %1288 = vst [vmem:[#allocation1] sm:$0xff] %v40
    %v1289 = vld [vmem:[#allocation1] ss:$9 sm:$0xff]
    %v1290 = vld [vmem:[%s1172] ss:$9 sm:$0xff]
    %v1291 = vld [vmem:[%s1174] ss:$9 sm:$0xff]
    %v1292 = vld [vmem:[%s1176] ss:$9 sm:$0xff]
    %v1293 = vld [vmem:[%s1178] ss:$9 sm:$0xff]
    %v1294 = vld [vmem:[%s1180] ss:$9 sm:$0xff]
    %v1295 = vld [vmem:[%s1182] ss:$9 sm:$0xff]
    %v1296 = vld [vmem:[%s1184] ss:$9 sm:$0xff]
    %1297 = vst [vmem:[#allocation1] sm:$0xff] %v41
    %v1298 = vld [vmem:[%s1172] ss:$9 sm:$0xff]
    %v1299 = vld [vmem:[%s1174] ss:$9 sm:$0xff]
    %v1300 = vld [vmem:[%s1176] ss:$9 sm:$0xff]
    %v1301 = vld [vmem:[%s1178] ss:$9 sm:$0xff]
    %v1302 = vld [vmem:[%s1180] ss:$9 sm:$0xff]
    %v1303 = vld [vmem:[%s1182] ss:$9 sm:$0xff]
    %v1304 = vld [vmem:[%s1184] ss:$9 sm:$0xff]
    %1305 = vst [vmem:[#allocation1] sm:$0xff] %v42
    %v1306 = vld [vmem:[#allocation1] ss:$9 sm:$0xff]
    %v1307 = vld [vmem:[%s1172] ss:$9 sm:$0xff]
    %v1308 = vld [vmem:[%s1174] ss:$9 sm:$0xff]
    %v1309 = vld [vmem:[%s1176] ss:$9 sm:$0xff]
    %v1310 = vld [vmem:[%s1178] ss:$9 sm:$0xff]
    %v1311 = vld [vmem:[%s1180] ss:$9 sm:$0xff]
    %v1312 = vld [vmem:[%s1182] ss:$9 sm:$0xff]
    %v1313 = vld [vmem:[%s1184] ss:$9 sm:$0xff]
    %1314 = vst [vmem:[#allocation1] sm:$0xff] %v43
    %v1315 = vld [vmem:[%s1172] ss:$9 sm:$0xff]
    %v1316 = vld [vmem:[%s1174] ss:$9 sm:$0xff]
    %v1317 = vld [vmem:[%s1176] ss:$9 sm:$0xff]
    %v1318 = vld [vmem:[%s1178] ss:$9 sm:$0xff]
    %v1319 = vld [vmem:[%s1180] ss:$9 sm:$0xff]
    %v1320 = vld [vmem:[%s1182] ss:$9 sm:$0xff]
    %v1321 = vld [vmem:[%s1184] ss:$9 sm:$0xff]
    %1322 = vst [vmem:[#allocation1] sm:$0xff] %v44
    %v1323 = vld [vmem:[#allocation1] ss:$9 sm:$0xff]
    %v1324 = vld [vmem:[%s1172] ss:$9 sm:$0xff]
    %v1325 = vld [vmem:[%s1174] ss:$9 sm:$0xff]
    %v1326 = vld [vmem:[%s1176] ss:$9 sm:$0xff]
    %v1327 = vld [vmem:[%s1178] ss:$9 sm:$0xff]
    %v1328 = vld [vmem:[%s1180] ss:$9 sm:$0xff]
    %v1329 = vld [vmem:[%s1182] ss:$9 sm:$0xff]
    %v1330 = vld [vmem:[%s1184] ss:$9 sm:$0xff]
    %1331 = vst [vmem:[#allocation1] sm:$0xff] %v45
    %v1332 = vld [vmem:[%s1172] ss:$9 sm:$0xff]
    %v1333 = vld [vmem:[%s1174] ss:$9 sm:$0xff]
    %v1334 = vld [vmem:[%s1176] ss:$9 sm:$0xff]
    %v1335 = vld [vmem:[%s1178] ss:$9 sm:$0xff]
    %v1336 = vld [vmem:[%s1180] ss:$9 sm:$0xff]
    %v1337 = vld [vmem:[%s1182] ss:$9 sm:$0xff]
    %v1338 = vld [vmem:[%s1184] ss:$9 sm:$0xff]
    %1339 = vst [vmem:[#allocation1] sm:$0xff] %v46
    %v1340 = vld [vmem:[#allocation1] ss:$9 sm:$0xff]
    %v1341 = vld [vmem:[%s1172] ss:$9 sm:$0xff]
    %v1342 = vld [vmem:[%s1174] ss:$9 sm:$0xff]
    %v1343 = vld [vmem:[%s1176] ss:$9 sm:$0xff]
    %v1344 = vld [vmem:[%s1178] ss:$9 sm:$0xff]
    %v1345 = vld [vmem:[%s1180] ss:$9 sm:$0xff]
    %v1346 = vld [vmem:[%s1182] ss:$9 sm:$0xff]
    %v1347 = vld [vmem:[%s1184] ss:$9 sm:$0xff]
    %1348 = vst [vmem:[#allocation1] sm:$0xff] %v47
    %v1349 = vld [vmem:[%s1172] ss:$9 sm:$0xff]
    %v1350 = vld [vmem:[%s1174] ss:$9 sm:$0xff]
    %v1351 = vld [vmem:[%s1176] ss:$9 sm:$0xff]
    %v1352 = vld [vmem:[%s1178] ss:$9 sm:$0xff]
    %v1353 = vld [vmem:[%s1180] ss:$9 sm:$0xff]
    %v1354 = vld [vmem:[%s1182] ss:$9 sm:$0xff]
    %v1355 = vld [vmem:[%s1184] ss:$9 sm:$0xff]
    %1356 = vst [vmem:[#allocation1] sm:$0xff] %v48
    %v1357 = vld [vmem:[#allocation1] ss:$9 sm:$0xff]
    %v1358 = vld [vmem:[%s1172] ss:$9 sm:$0xff]
    %v1359 = vld [vmem:[%s1174] ss:$9 sm:$0xff]
    %v1360 = vld [vmem:[%s1176] ss:$9 sm:$0xff]
    %v1361 = vld [vmem:[%s1178] ss:$9 sm:$0xff]
    %v1362 = vld [vmem:[%s1180] ss:$9 sm:$0xff]
    %v1363 = vld [vmem:[%s1182] ss:$9 sm:$0xff]
    %v1364 = vld [vmem:[%s1184] ss:$9 sm:$0xff]
    %1365 = vst [vmem:[#allocation1] sm:$0xff] %v49
    %v1366 = vld [vmem:[%s1172] ss:$9 sm:$0xff]
    %v1367 = vld [vmem:[%s1174] ss:$9 sm:$0xff]
    %v1368 = vld [vmem:[%s1176] ss:$9 sm:$0xff]
    %v1369 = vld [vmem:[%s1178] ss:$9 sm:$0xff]
    %v1370 = vld [vmem:[%s1180] ss:$9 sm:$0xff]
    %v1371 = vld [vmem:[%s1182] ss:$9 sm:$0xff]
    %v1372 = vld [vmem:[%s1184] ss:$9 sm:$0xff]
    %1373 = vst [vmem:[#allocation1] sm:$0xff] %v50
    %v1374 = vld [vmem:[#allocation1] ss:$9 sm:$0xff]
    %v1375 = vld [vmem:[%s1172] ss:$9 sm:$0xff]
    %v1376 = vld [vmem:[%s1174] ss:$9 sm:$0xff]
    %v1377 = vld [vmem:[%s1176] ss:$9 sm:$0xff]
    %v1378 = vld [vmem:[%s1178] ss:$9 sm:$0xff]
    %v1379 = vld [vmem:[%s1180] ss:$9 sm:$0xff]
    %v1380 = vld [vmem:[%s1182] ss:$9 sm:$0xff]
    %v1381 = vld [vmem:[%s1184] ss:$9 sm:$0xff]
    %1382 = vst [vmem:[#allocation1] sm:$0xff] %v51
    %v1383 = vld [vmem:[%s1172] ss:$9 sm:$0xff]
    %v1384 = vld [vmem:[%s1174] ss:$9 sm:$0xff]
    %v1385 = vld [vmem:[%s1176] ss:$9 sm:$0xff]
    %v1386 = vld [vmem:[%s1178] ss:$9 sm:$0xff]
    %v1387 = vld [vmem:[%s1180] ss:$9 sm:$0xff]
    %v1388 = vld [vmem:[%s1182] ss:$9 sm:$0xff]
    %v1389 = vld [vmem:[%s1184] ss:$9 sm:$0xff]
    %1390 = vst [vmem:[#allocation1] sm:$0xff] %v52
    %v1391 = vld [vmem:[#allocation1] ss:$9 sm:$0xff]
    %v1392 = vld [vmem:[%s1172] ss:$9 sm:$0xff]
    %v1393 = vld [vmem:[%s1174] ss:$9 sm:$0xff]
    %v1394 = vld [vmem:[%s1176] ss:$9 sm:$0xff]
    %v1395 = vld [vmem:[%s1178] ss:$9 sm:$0xff]
    %v1396 = vld [vmem:[%s1180] ss:$9 sm:$0xff]
    %v1397 = vld [vmem:[%s1182] ss:$9 sm:$0xff]
    %v1398 = vld [vmem:[%s1184] ss:$9 sm:$0xff]
    %1399 = vst [vmem:[#allocation1] sm:$0xff] %v53
    %v1400 = vld [vmem:[%s1172] ss:$9 sm:$0xff]
    %v1401 = vld [vmem:[%s1174] ss:$9 sm:$0xff]
    %v1402 = vld [vmem:[%s1176] ss:$9 sm:$0xff]
    %v1403 = vld [vmem:[%s1178] ss:$9 sm:$0xff]
    %v1404 = vld [vmem:[%s1180] ss:$9 sm:$0xff]
    %v1405 = vld [vmem:[%s1182] ss:$9 sm:$0xff]
    %v1406 = vld [vmem:[%s1184] ss:$9 sm:$0xff]
    %1407 = vst [vmem:[#allocation1] sm:$0xff] %v54
    %v1408 = vld [vmem:[#allocation1] ss:$9 sm:$0xff]
    %v1409 = vld [vmem:[%s1172] ss:$9 sm:$0xff]
    %v1410 = vld [vmem:[%s1174] ss:$9 sm:$0xff]
    %v1411 = vld [vmem:[%s1176] ss:$9 sm:$0xff]
    %v1412 = vld [vmem:[%s1178] ss:$9 sm:$0xff]
    %v1413 = vld [vmem:[%s1180] ss:$9 sm:$0xff]
    %v1414 = vld [vmem:[%s1182] ss:$9 sm:$0xff]
    %v1415 = vld [vmem:[%s1184] ss:$9 sm:$0xff]
    %1416 = vst [vmem:[#allocation1] sm:$0xff] %v55
    %v1417 = vld [vmem:[%s1172] ss:$9 sm:$0xff]
    %v1418 = vld [vmem:[%s1174] ss:$9 sm:$0xff]
    %v1419 = vld [vmem:[%s1176] ss:$9 sm:$0xff]
    %v1420 = vld [vmem:[%s1178] ss:$9 sm:$0xff]
    %v1421 = vld [vmem:[%s1180] ss:$9 sm:$0xff]
    %v1422 = vld [vmem:[%s1182] ss:$9 sm:$0xff]
    %v1423 = vld [vmem:[%s1184] ss:$9 sm:$0xff]
    %1424 = vst [vmem:[#allocation1] sm:$0xff] %v56
    %v1425 = vld [vmem:[#allocation1] ss:$9 sm:$0xff]
    %v1426 = vld [vmem:[%s1172] ss:$9 sm:$0xff]
    %v1427 = vld [vmem:[%s1174] ss:$9 sm:$0xff]
    %v1428 = vld [vmem:[%s1176] ss:$9 sm:$0xff]
    %v1429 = vld [vmem:[%s1178] ss:$9 sm:$0xff]
    %v1430 = vld [vmem:[%s1180] ss:$9 sm:$0xff]
    %v1431 = vld [vmem:[%s1182] ss:$9 sm:$0xff]
    %v1432 = vld [vmem:[%s1184] ss:$9 sm:$0xff]
    %1433 = vst [vmem:[#allocation1] sm:$0xff] %v59
    %v1434 = vld [vmem:[%s1172] ss:$9 sm:$0xff]
    %v1435 = vld [vmem:[%s1174] ss:$9 sm:$0xff]
    %v1436 = vld [vmem:[%s1176] ss:$9 sm:$0xff]
    %v1437 = vld [vmem:[%s1178] ss:$9 sm:$0xff]
    %v1438 = vld [vmem:[%s1180] ss:$9 sm:$0xff]
    %v1439 = vld [vmem:[%s1182] ss:$9 sm:$0xff]
    %v1440 = vld [vmem:[%s1184] ss:$9 sm:$0xff]
    %1441 = vst [vmem:[#allocation1] sm:$0xff] %v60
    %v1442 = vld [vmem:[#allocation1] ss:$9 sm:$0xff]
    %v1443 = vld [vmem:[%s1172] ss:$9 sm:$0xff]
    %v1444 = vld [vmem:[%s1174] ss:$9 sm:$0xff]
    %v1445 = vld [vmem:[%s1176] ss:$9 sm:$0xff]
    %v1446 = vld [vmem:[%s1178] ss:$9 sm:$0xff]
    %v1447 = vld [vmem:[%s1180] ss:$9 sm:$0xff]
    %v1448 = vld [vmem:[%s1182] ss:$9 sm:$0xff]
    %v1449 = vld [vmem:[%s1184] ss:$9 sm:$0xff]
    %1450 = vst [vmem:[#allocation1] sm:$0xff] %v61
    %v1451 = vld [vmem:[%s1172] ss:$9 sm:$0xff]
    %v1452 = vld [vmem:[%s1174] ss:$9 sm:$0xff]
    %v1453 = vld [vmem:[%s1176] ss:$9 sm:$0xff]
    %v1454 = vld [vmem:[%s1178] ss:$9 sm:$0xff]
    %v1455 = vld [vmem:[%s1180] ss:$9 sm:$0xff]
    %v1456 = vld [vmem:[%s1182] ss:$9 sm:$0xff]
    %v1457 = vld [vmem:[%s1184] ss:$9 sm:$0xff]
    %1458 = vst [vmem:[#allocation1] sm:$0xff] %v62
    %v1459 = vld [vmem:[#allocation1] ss:$9 sm:$0xff]
    %v1460 = vld [vmem:[%s1172] ss:$9 sm:$0xff]
    %v1461 = vld [vmem:[%s1174] ss:$9 sm:$0xff]
    %v1462 = vld [vmem:[%s1176] ss:$9 sm:$0xff]
    %v1463 = vld [vmem:[%s1178] ss:$9 sm:$0xff]
    %v1464 = vld [vmem:[%s1180] ss:$9 sm:$0xff]
    %v1465 = vld [vmem:[%s1182] ss:$9 sm:$0xff]
    %v1466 = vld [vmem:[%s1184] ss:$9 sm:$0xff]
    %1467 = vst [vmem:[#allocation1] sm:$0xff] %v63
    %v1468 = vld [vmem:[%s1172] ss:$9 sm:$0xff]
    %v1469 = vld [vmem:[%s1174] ss:$9 sm:$0xff]
    %v1470 = vld [vmem:[%s1176] ss:$9 sm:$0xff]
    %v1471 = vld [vmem:[%s1178] ss:$9 sm:$0xff]
    %v1472 = vld [vmem:[%s1180] ss:$9 sm:$0xff]
    %v1473 = vld [vmem:[%s1182] ss:$9 sm:$0xff]
    %v1474 = vld [vmem:[%s1184] ss:$9 sm:$0xff]
    %1475 = vst [vmem:[#allocation1] sm:$0xff] %v64
    %v1476 = vld [vmem:[#allocation1] ss:$9 sm:$0xff]
    %v1477 = vld [vmem:[%s1172] ss:$9 sm:$0xff]
    %v1478 = vld [vmem:[%s1174] ss:$9 sm:$0xff]
    %v1479 = vld [vmem:[%s1176] ss:$9 sm:$0xff]
    %v1480 = vld [vmem:[%s1178] ss:$9 sm:$0xff]
    %v1481 = vld [vmem:[%s1180] ss:$9 sm:$0xff]
    %v1482 = vld [vmem:[%s1182] ss:$9 sm:$0xff]
    %v1483 = vld [vmem:[%s1184] ss:$9 sm:$0xff]
    %1484 = vst [vmem:[#allocation1] sm:$0xff] %v65
    %v1485 = vld [vmem:[%s1172] ss:$9 sm:$0xff]
    %v1486 = vld [vmem:[%s1174] ss:$9 sm:$0xff]
    %v1487 = vld [vmem:[%s1176] ss:$9 sm:$0xff]
    %v1488 = vld [vmem:[%s1178] ss:$9 sm:$0xff]
    %v1489 = vld [vmem:[%s1180] ss:$9 sm:$0xff]
    %v1490 = vld [vmem:[%s1182] ss:$9 sm:$0xff]
    %v1491 = vld [vmem:[%s1184] ss:$9 sm:$0xff]
    %1492 = vst [vmem:[#allocation1] sm:$0xff] %v66
    %v1493 = vld [vmem:[#allocation1] ss:$9 sm:$0xff]
    %v1494 = vld [vmem:[%s1172] ss:$9 sm:$0xff]
    %v1495 = vld [vmem:[%s1174] ss:$9 sm:$0xff]
    %v1496 = vld [vmem:[%s1176] ss:$9 sm:$0xff]
    %v1497 = vld [vmem:[%s1178] ss:$9 sm:$0xff]
    %v1498 = vld [vmem:[%s1180] ss:$9 sm:$0xff]
    %v1499 = vld [vmem:[%s1182] ss:$9 sm:$0xff]
    %v1500 = vld [vmem:[%s1184] ss:$9 sm:$0xff]
    %1501 = vst [vmem:[#allocation1] sm:$0xff] %v67
    %v1502 = vld [vmem:[%s1172] ss:$9 sm:$0xff]
    %v1503 = vld [vmem:[%s1174] ss:$9 sm:$0xff]
    %v1504 = vld [vmem:[%s1176] ss:$9 sm:$0xff]
    %v1505 = vld [vmem:[%s1178] ss:$9 sm:$0xff]
    %v1506 = vld [vmem:[%s1180] ss:$9 sm:$0xff]
    %v1507 = vld [vmem:[%s1182] ss:$9 sm:$0xff]
    %v1508 = vld [vmem:[%s1184] ss:$9 sm:$0xff]
    %1509 = vst [vmem:[#allocation1] sm:$0xff] %v68
    %v1510 = vld [vmem:[#allocation1] ss:$9 sm:$0xff]
    %v1511 = vld [vmem:[%s1172] ss:$9 sm:$0xff]
    %v1512 = vld [vmem:[%s1174] ss:$9 sm:$0xff]
    %v1513 = vld [vmem:[%s1176] ss:$9 sm:$0xff]
    %v1514 = vld [vmem:[%s1178] ss:$9 sm:$0xff]
    %v1515 = vld [vmem:[%s1180] ss:$9 sm:$0xff]
    %v1516 = vld [vmem:[%s1182] ss:$9 sm:$0xff]
    %v1517 = vld [vmem:[%s1184] ss:$9 sm:$0xff]
    %1518 = vst [vmem:[#allocation1] sm:$0xff] %v69
    %v1519 = vld [vmem:[%s1172] ss:$9 sm:$0xff]
    %v1520 = vld [vmem:[%s1174] ss:$9 sm:$0xff]
    %v1521 = vld [vmem:[%s1176] ss:$9 sm:$0xff]
    %v1522 = vld [vmem:[%s1178] ss:$9 sm:$0xff]
    %v1523 = vld [vmem:[%s1180] ss:$9 sm:$0xff]
    %v1524 = vld [vmem:[%s1182] ss:$9 sm:$0xff]
    %v1525 = vld [vmem:[%s1184] ss:$9 sm:$0xff]
    %1526 = vst [vmem:[#allocation1] sm:$0xff] %v70
    %v1527 = vld [vmem:[#allocation1] ss:$9 sm:$0xff]
    %v1528 = vld [vmem:[%s1172] ss:$9 sm:$0xff]
    %v1529 = vld [vmem:[%s1174] ss:$9 sm:$0xff]
    %v1530 = vld [vmem:[%s1176] ss:$9 sm:$0xff]
    %v1531 = vld [vmem:[%s1178] ss:$9 sm:$0xff]
    %v1532 = vld [vmem:[%s1180] ss:$9 sm:$0xff]
    %v1533 = vld [vmem:[%s1182] ss:$9 sm:$0xff]
    %v1534 = vld [vmem:[%s1184] ss:$9 sm:$0xff]
    %1535 = vst [vmem:[#allocation1] sm:$0xff] %v71
    %v1536 = vld [vmem:[%s1172] ss:$9 sm:$0xff]
    %v1537 = vld [vmem:[%s1174] ss:$9 sm:$0xff]
    %v1538 = vld [vmem:[%s1176] ss:$9 sm:$0xff]
    %v1539 = vld [vmem:[%s1178] ss:$9 sm:$0xff]
    %v1540 = vld [vmem:[%s1180] ss:$9 sm:$0xff]
    %v1541 = vld [vmem:[%s1182] ss:$9 sm:$0xff]
    %v1542 = vld [vmem:[%s1184] ss:$9 sm:$0xff]
    %1543 = vst [vmem:[#allocation1] sm:$0xff] %v72
    %v1544 = vld [vmem:[#allocation1] ss:$9 sm:$0xff]
    %v1545 = vld [vmem:[%s1172] ss:$9 sm:$0xff]
    %v1546 = vld [vmem:[%s1174] ss:$9 sm:$0xff]
    %v1547 = vld [vmem:[%s1176] ss:$9 sm:$0xff]
    %v1548 = vld [vmem:[%s1178] ss:$9 sm:$0xff]
    %v1549 = vld [vmem:[%s1180] ss:$9 sm:$0xff]
    %v1550 = vld [vmem:[%s1182] ss:$9 sm:$0xff]
    %v1551 = vld [vmem:[%s1184] ss:$9 sm:$0xff]
    %1552 = vst [vmem:[#allocation1] sm:$0xff] %v73
    %v1553 = vld [vmem:[%s1172] ss:$9 sm:$0xff]
    %v1554 = vld [vmem:[%s1174] ss:$9 sm:$0xff]
    %v1555 = vld [vmem:[%s1176] ss:$9 sm:$0xff]
    %v1556 = vld [vmem:[%s1178] ss:$9 sm:$0xff]
    %v1557 = vld [vmem:[%s1180] ss:$9 sm:$0xff]
    %v1558 = vld [vmem:[%s1182] ss:$9 sm:$0xff]
    %v1559 = vld [vmem:[%s1184] ss:$9 sm:$0xff]
    %1560 = vst [vmem:[#allocation1] sm:$0xff] %v74
    %v1561 = vld [vmem:[#allocation1] ss:$9 sm:$0xff]
    %v1562 = vld [vmem:[%s1172] ss:$9 sm:$0xff]
    %v1563 = vld [vmem:[%s1174] ss:$9 sm:$0xff]
    %v1564 = vld [vmem:[%s1176] ss:$9 sm:$0xff]
    %v1565 = vld [vmem:[%s1178] ss:$9 sm:$0xff]
    %v1566 = vld [vmem:[%s1180] ss:$9 sm:$0xff]
    %v1567 = vld [vmem:[%s1182] ss:$9 sm:$0xff]
    %v1568 = vld [vmem:[%s1184] ss:$9 sm:$0xff]
    %1569 = vst [vmem:[#allocation1] sm:$0xff] %v75
    %v1570 = vld [vmem:[%s1172] ss:$9 sm:$0xff]
    %v1571 = vld [vmem:[%s1174] ss:$9 sm:$0xff]
    %v1572 = vld [vmem:[%s1176] ss:$9 sm:$0xff]
    %v1573 = vld [vmem:[%s1178] ss:$9 sm:$0xff]
    %v1574 = vld [vmem:[%s1180] ss:$9 sm:$0xff]
    %v1575 = vld [vmem:[%s1182] ss:$9 sm:$0xff]
    %v1576 = vld [vmem:[%s1184] ss:$9 sm:$0xff]
    %1577 = vst [vmem:[#allocation1] sm:$0xff] %v76
    %v1578 = vld [vmem:[#allocation1] ss:$9 sm:$0xff]
    %v1579 = vld [vmem:[%s1172] ss:$9 sm:$0xff]
    %v1580 = vld [vmem:[%s1174] ss:$9 sm:$0xff]
    %v1581 = vld [vmem:[%s1176] ss:$9 sm:$0xff]
    %v1582 = vld [vmem:[%s1178] ss:$9 sm:$0xff]
    %v1583 = vld [vmem:[%s1180] ss:$9 sm:$0xff]
    %v1584 = vld [vmem:[%s1182] ss:$9 sm:$0xff]
    %v1585 = vld [vmem:[%s1184] ss:$9 sm:$0xff]
    %1586 = vst [vmem:[#allocation1] sm:$0xff] %v77
    %v1587 = vld [vmem:[%s1172] ss:$9 sm:$0xff]
    %v1588 = vld [vmem:[%s1174] ss:$9 sm:$0xff]
    %v1589 = vld [vmem:[%s1176] ss:$9 sm:$0xff]
    %v1590 = vld [vmem:[%s1178] ss:$9 sm:$0xff]
    %v1591 = vld [vmem:[%s1180] ss:$9 sm:$0xff]
    %v1592 = vld [vmem:[%s1182] ss:$9 sm:$0xff]
    %v1593 = vld [vmem:[%s1184] ss:$9 sm:$0xff]
    %1594 = vst [vmem:[#allocation1] sm:$0xff] %v78
    %v1595 = vld [vmem:[#allocation1] ss:$9 sm:$0xff]
    %v1596 = vld [vmem:[%s1172] ss:$9 sm:$0xff]
    %v1597 = vld [vmem:[%s1174] ss:$9 sm:$0xff]
    %v1598 = vld [vmem:[%s1176] ss:$9 sm:$0xff]
    %v1599 = vld [vmem:[%s1178] ss:$9 sm:$0xff]
    %v1600 = vld [vmem:[%s1180] ss:$9 sm:$0xff]
    %v1601 = vld [vmem:[%s1182] ss:$9 sm:$0xff]
    %v1602 = vld [vmem:[%s1184] ss:$9 sm:$0xff]
    %1603 = vst [vmem:[#allocation1] sm:$0xff] %v79
    %v1604 = vld [vmem:[%s1172] ss:$9 sm:$0xff]
    %v1605 = vld [vmem:[%s1174] ss:$9 sm:$0xff]
    %v1606 = vld [vmem:[%s1176] ss:$9 sm:$0xff]
    %v1607 = vld [vmem:[%s1178] ss:$9 sm:$0xff]
    %v1608 = vld [vmem:[%s1180] ss:$9 sm:$0xff]
    %v1609 = vld [vmem:[%s1182] ss:$9 sm:$0xff]
    %v1610 = vld [vmem:[%s1184] ss:$9 sm:$0xff]
    %1611 = vst [vmem:[#allocation1] sm:$0xff] %v80
    %v1612 = vld [vmem:[#allocation1] ss:$9 sm:$0xff]
    %v1613 = vld [vmem:[%s1172] ss:$9 sm:$0xff]
    %v1614 = vld [vmem:[%s1174] ss:$9 sm:$0xff]
    %v1615 = vld [vmem:[%s1176] ss:$9 sm:$0xff]
    %v1616 = vld [vmem:[%s1178] ss:$9 sm:$0xff]
    %v1617 = vld [vmem:[%s1180] ss:$9 sm:$0xff]
    %v1618 = vld [vmem:[%s1182] ss:$9 sm:$0xff]
    %v1619 = vld [vmem:[%s1184] ss:$9 sm:$0xff]
    %1620 = vst [vmem:[#allocation1] sm:$0xff] %v81
    %v1621 = vld [vmem:[%s1172] ss:$9 sm:$0xff]
    %v1622 = vld [vmem:[%s1174] ss:$9 sm:$0xff]
    %v1623 = vld [vmem:[%s1176] ss:$9 sm:$0xff]
    %v1624 = vld [vmem:[%s1178] ss:$9 sm:$0xff]
    %v1625 = vld [vmem:[%s1180] ss:$9 sm:$0xff]
    %v1626 = vld [vmem:[%s1182] ss:$9 sm:$0xff]
    %v1627 = vld [vmem:[%s1184] ss:$9 sm:$0xff]
    %1628 = vst [vmem:[#allocation1] sm:$0xff] %v82
    %v1629 = vld [vmem:[#allocation1] ss:$9 sm:$0xff]
    %v1630 = vld [vmem:[%s1172] ss:$9 sm:$0xff]
    %v1631 = vld [vmem:[%s1174] ss:$9 sm:$0xff]
    %v1632 = vld [vmem:[%s1176] ss:$9 sm:$0xff]
    %v1633 = vld [vmem:[%s1178] ss:$9 sm:$0xff]
    %v1634 = vld [vmem:[%s1180] ss:$9 sm:$0xff]
    %v1635 = vld [vmem:[%s1182] ss:$9 sm:$0xff]
    %v1636 = vld [vmem:[%s1184] ss:$9 sm:$0xff]
    %1637 = vst [vmem:[#allocation1] sm:$0xff] %v83
    %v1638 = vld [vmem:[%s1172] ss:$9 sm:$0xff]
    %v1639 = vld [vmem:[%s1174] ss:$9 sm:$0xff]
    %v1640 = vld [vmem:[%s1176] ss:$9 sm:$0xff]
    %v1641 = vld [vmem:[%s1178] ss:$9 sm:$0xff]
    %v1642 = vld [vmem:[%s1180] ss:$9 sm:$0xff]
    %v1643 = vld [vmem:[%s1182] ss:$9 sm:$0xff]
    %v1644 = vld [vmem:[%s1184] ss:$9 sm:$0xff]
    %1645 = vst [vmem:[#allocation1] sm:$0xff] %v84
    %v1646 = vld [vmem:[#allocation1] ss:$9 sm:$0xff]
    %v1647 = vld [vmem:[%s1172] ss:$9 sm:$0xff]
    %v1648 = vld [vmem:[%s1174] ss:$9 sm:$0xff]
    %v1649 = vld [vmem:[%s1176] ss:$9 sm:$0xff]
    %v1650 = vld [vmem:[%s1178] ss:$9 sm:$0xff]
    %v1651 = vld [vmem:[%s1180] ss:$9 sm:$0xff]
    %v1652 = vld [vmem:[%s1182] ss:$9 sm:$0xff]
    %v1653 = vld [vmem:[%s1184] ss:$9 sm:$0xff]
    %1654 = vst [vmem:[#allocation1] sm:$0xff] %v85
    %v1655 = vld [vmem:[%s1172] ss:$9 sm:$0xff]
    %v1656 = vld [vmem:[%s1174] ss:$9 sm:$0xff]
    %v1657 = vld [vmem:[%s1176] ss:$9 sm:$0xff]
    %v1658 = vld [vmem:[%s1178] ss:$9 sm:$0xff]
    %v1659 = vld [vmem:[%s1180] ss:$9 sm:$0xff]
    %v1660 = vld [vmem:[%s1182] ss:$9 sm:$0xff]
    %v1661 = vld [vmem:[%s1184] ss:$9 sm:$0xff]
    %1662 = vst [vmem:[#allocation1] sm:$0xff] %v86
    %v1663 = vld [vmem:[#allocation1] ss:$9 sm:$0xff]
    %v1664 = vld [vmem:[%s1172] ss:$9 sm:$0xff]
    %v1665 = vld [vmem:[%s1174] ss:$9 sm:$0xff]
    %v1666 = vld [vmem:[%s1176] ss:$9 sm:$0xff]
    %v1667 = vld [vmem:[%s1178] ss:$9 sm:$0xff]
    %v1668 = vld [vmem:[%s1180] ss:$9 sm:$0xff]
    %v1669 = vld [vmem:[%s1182] ss:$9 sm:$0xff]
    %v1670 = vld [vmem:[%s1184] ss:$9 sm:$0xff]
    %1671 = vst [vmem:[#allocation1] sm:$0xff] %v87
    %v1672 = vld [vmem:[%s1172] ss:$9 sm:$0xff]
    %v1673 = vld [vmem:[%s1174] ss:$9 sm:$0xff]
    %v1674 = vld [vmem:[%s1176] ss:$9 sm:$0xff]
    %v1675 = vld [vmem:[%s1178] ss:$9 sm:$0xff]
    %v1676 = vld [vmem:[%s1180] ss:$9 sm:$0xff]
    %v1677 = vld [vmem:[%s1182] ss:$9 sm:$0xff]
    %v1678 = vld [vmem:[%s1184] ss:$9 sm:$0xff]
    %1679 = vst [vmem:[#allocation1] sm:$0xff] %v88
    %v1680 = vld [vmem:[#allocation1] ss:$9 sm:$0xff]
    %v1681 = vld [vmem:[%s1172] ss:$9 sm:$0xff]
    %v1682 = vld [vmem:[%s1174] ss:$9 sm:$0xff]
    %v1683 = vld [vmem:[%s1176] ss:$9 sm:$0xff]
    %v1684 = vld [vmem:[%s1178] ss:$9 sm:$0xff]
    %v1685 = vld [vmem:[%s1180] ss:$9 sm:$0xff]
    %v1686 = vld [vmem:[%s1182] ss:$9 sm:$0xff]
    %v1687 = vld [vmem:[%s1184] ss:$9 sm:$0xff]
    %1688 = vst [vmem:[#allocation1] ss:$9 sm:$0xff] %v1173
    %s1689 = scalar_lea.vmem [#allocation1], 1
    %1690 = vst [vmem:[%s1689] ss:$9 sm:$0xff] %v1175
    %s1691 = scalar_lea.vmem [#allocation1], 2
    %1692 = vst [vmem:[%s1691] ss:$9 sm:$0xff] %v1177
    %s1693 = scalar_lea.vmem [#allocation1], 3
    %1694 = vst [vmem:[%s1693] ss:$9 sm:$0xff] %v1179
    %s1695 = scalar_lea.vmem [#allocation1], 4
    %1696 = vst [vmem:[%s1695] ss:$9 sm:$0xff] %v1181
    %s1697 = scalar_lea.vmem [#allocation1], 5
    %1698 = vst [vmem:[%s1697] ss:$9 sm:$0xff] %v1183
    %s1699 = scalar_lea.vmem [#allocation1], 6
    %1700 = vst [vmem:[%s1699] ss:$9 sm:$0xff] %v1185
    %s1701 = scalar_lea.vmem [#allocation1], 7
    %1702 = vst [vmem:[%s1701] ss:$9 sm:$0xff] %v1187
    %v1703 = vld [vmem:[#allocation1] sm:$0xff]
    %1704 = vst [vmem:[#allocation1] ss:$9 sm:$0xff] %v1188
    %1705 = vst [vmem:[%s1689] ss:$9 sm:$0xff] %v1189
    %1706 = vst [vmem:[%s1691] ss:$9 sm:$0xff] %v1190
    %1707 = vst [vmem:[%s1693] ss:$9 sm:$0xff] %v1191
    %1708 = vst [vmem:[%s1695] ss:$9 sm:$0xff] %v1192
    %1709 = vst [vmem:[%s1697] ss:$9 sm:$0xff] %v1193
    %1710 = vst [vmem:[%s1699] ss:$9 sm:$0xff] %v1194
    %1711 = vst [vmem:[%s1701] ss:$9 sm:$0xff] %v1196
    %v1712 = vld [vmem:[#allocation1] sm:$0xff]
    %1713 = vst [vmem:[#allocation1] ss:$9 sm:$0xff] %v1197
    %1714 = vst [vmem:[%s1689] ss:$9 sm:$0xff] %v1198
    %1715 = vst [vmem:[%s1691] ss:$9 sm:$0xff] %v1199
    %1716 = vst [vmem:[%s1693] ss:$9 sm:$0xff] %v1200
    %1717 = vst [vmem:[%s1695] ss:$9 sm:$0xff] %v1201
    %1718 = vst [vmem:[%s1697] ss:$9 sm:$0xff] %v1202
    %1719 = vst [vmem:[%s1699] ss:$9 sm:$0xff] %v1204
    %1720 = vst [vmem:[%s1701] ss:$9 sm:$0xff] %v1205
    %v1721 = vld [vmem:[#allocation1] sm:$0xff]
    %1722 = vst [vmem:[#allocation1] ss:$9 sm:$0xff] %v1206
    %1723 = vst [vmem:[%s1689] ss:$9 sm:$0xff] %v1207
    %1724 = vst [vmem:[%s1691] ss:$9 sm:$0xff] %v1208
    %1725 = vst [vmem:[%s1693] ss:$9 sm:$0xff] %v1209
    %1726 = vst [vmem:[%s1695] ss:$9 sm:$0xff] %v1210
    %1727 = vst [vmem:[%s1697] ss:$9 sm:$0xff] %v1211
    %1728 = vst [vmem:[%s1699] ss:$9 sm:$0xff] %v1213
    %1729 = vst [vmem:[%s1701] ss:$9 sm:$0xff] %v1214
    %v1730 = vld [vmem:[#allocation1] sm:$0xff]
    %1731 = vst [vmem:[#allocation1] ss:$9 sm:$0xff] %v1215
    %1732 = vst [vmem:[%s1689] ss:$9 sm:$0xff] %v1216
    %1733 = vst [vmem:[%s1691] ss:$9 sm:$0xff] %v1217
    %1734 = vst [vmem:[%s1693] ss:$9 sm:$0xff] %v1218
    %1735 = vst [vmem:[%s1695] ss:$9 sm:$0xff] %v1219
    %1736 = vst [vmem:[%s1697] ss:$9 sm:$0xff] %v1221
    %1737 = vst [vmem:[%s1699] ss:$9 sm:$0xff] %v1222
    %1738 = vst [vmem:[%s1701] ss:$9 sm:$0xff] %v1223
    %v1739 = vld [vmem:[#allocation1] sm:$0xff]
    %1740 = vst [vmem:[#allocation1] ss:$9 sm:$0xff] %v1224
    %1741 = vst [vmem:[%s1689] ss:$9 sm:$0xff] %v1225
    %1742 = vst [vmem:[%s1691] ss:$9 sm:$0xff] %v1226
    %1743 = vst [vmem:[%s1693] ss:$9 sm:$0xff] %v1227
    %1744 = vst [vmem:[%s1695] ss:$9 sm:$0xff] %v1228
    %1745 = vst [vmem:[%s1697] ss:$9 sm:$0xff] %v1230
    %1746 = vst [vmem:[%s1699] ss:$9 sm:$0xff] %v1231
    %1747 = vst [vmem:[%s1701] ss:$9 sm:$0xff] %v1232
    %v1748 = vld [vmem:[#allocation1] sm:$0xff]
    %1749 = vst [vmem:[#allocation1] ss:$9 sm:$0xff] %v1233
    %1750 = vst [vmem:[%s1689] ss:$9 sm:$0xff] %v1234
    %1751 = vst [vmem:[%s1691] ss:$9 sm:$0xff] %v1235
    %1752 = vst [vmem:[%s1693] ss:$9 sm:$0xff] %v1236
    %1753 = vst [vmem:[%s1695] ss:$9 sm:$0xff] %v1238
    %1754 = vst [vmem:[%s1697] ss:$9 sm:$0xff] %v1239
    %1755 = vst [vmem:[%s1699] ss:$9 sm:$0xff] %v1240
    %1756 = vst [vmem:[%s1701] ss:$9 sm:$0xff] %v1241
    %v1757 = vld [vmem:[#allocation1] sm:$0xff]
    %1758 = vst [vmem:[#allocation1] ss:$9 sm:$0xff] %v1242
    %1759 = vst [vmem:[%s1689] ss:$9 sm:$0xff] %v1243
    %1760 = vst [vmem:[%s1691] ss:$9 sm:$0xff] %v1244
    %1761 = vst [vmem:[%s1693] ss:$9 sm:$0xff] %v1245
    %1762 = vst [vmem:[%s1695] ss:$9 sm:$0xff] %v1247
    %1763 = vst [vmem:[%s1697] ss:$9 sm:$0xff] %v1248
    %1764 = vst [vmem:[%s1699] ss:$9 sm:$0xff] %v1249
    %1765 = vst [vmem:[%s1701] ss:$9 sm:$0xff] %v1250
    %v1766 = vld [vmem:[#allocation1] sm:$0xff]
    %1767 = vst [vmem:[#allocation1] ss:$9 sm:$0xff] %v1251
    %1768 = vst [vmem:[%s1689] ss:$9 sm:$0xff] %v1252
    %1769 = vst [vmem:[%s1691] ss:$9 sm:$0xff] %v1253
    %1770 = vst [vmem:[%s1693] ss:$9 sm:$0xff] %v1255
    %1771 = vst [vmem:[%s1695] ss:$9 sm:$0xff] %v1256
    %1772 = vst [vmem:[%s1697] ss:$9 sm:$0xff] %v1257
    %1773 = vst [vmem:[%s1699] ss:$9 sm:$0xff] %v1258
    %1774 = vst [vmem:[%s1701] ss:$9 sm:$0xff] %v1259
    %v1775 = vld [vmem:[#allocation1] sm:$0xff]
    %1776 = vst [vmem:[#allocation1] ss:$9 sm:$0xff] %v1260
    %1777 = vst [vmem:[%s1689] ss:$9 sm:$0xff] %v1261
    %1778 = vst [vmem:[%s1691] ss:$9 sm:$0xff] %v1262
    %1779 = vst [vmem:[%s1693] ss:$9 sm:$0xff] %v1264
    %1780 = vst [vmem:[%s1695] ss:$9 sm:$0xff] %v1265
    %1781 = vst [vmem:[%s1697] ss:$9 sm:$0xff] %v1266
    %1782 = vst [vmem:[%s1699] ss:$9 sm:$0xff] %v1267
    %1783 = vst [vmem:[%s1701] ss:$9 sm:$0xff] %v1268
    %v1784 = vld [vmem:[#allocation1] sm:$0xff]
    %1785 = vst [vmem:[#allocation1] ss:$9 sm:$0xff] %v1269
    %1786 = vst [vmem:[%s1689] ss:$9 sm:$0xff] %v1270
    %1787 = vst [vmem:[%s1691] ss:$9 sm:$0xff] %v1272
    %1788 = vst [vmem:[%s1693] ss:$9 sm:$0xff] %v1273
    %1789 = vst [vmem:[%s1695] ss:$9 sm:$0xff] %v1274
    %1790 = vst [vmem:[%s1697] ss:$9 sm:$0xff] %v1275
    %1791 = vst [vmem:[%s1699] ss:$9 sm:$0xff] %v1276
    %1792 = vst [vmem:[%s1701] ss:$9 sm:$0xff] %v1277
    %v1793 = vld [vmem:[#allocation1] sm:$0xff]
    %1794 = vst [vmem:[#allocation1] ss:$9 sm:$0xff] %v1278
    %1795 = vst [vmem:[%s1689] ss:$9 sm:$0xff] %v1279
    %1796 = vst [vmem:[%s1691] ss:$9 sm:$0xff] %v1281
    %1797 = vst [vmem:[%s1693] ss:$9 sm:$0xff] %v1282
    %1798 = vst [vmem:[%s1695] ss:$9 sm:$0xff] %v1283
    %1799 = vst [vmem:[%s1697] ss:$9 sm:$0xff] %v1284
    %1800 = vst [vmem:[%s1699] ss:$9 sm:$0xff] %v1285
    %1801 = vst [vmem:[%s1701] ss:$9 sm:$0xff] %v1286
    %v1802 = vld [vmem:[#allocation1] sm:$0xff]
    %1803 = vst [vmem:[#allocation1] ss:$9 sm:$0xff] %v1287
    %1804 = vst [vmem:[%s1689] ss:$9 sm:$0xff] %v1289
    %1805 = vst [vmem:[%s1691] ss:$9 sm:$0xff] %v1290
    %1806 = vst [vmem:[%s1693] ss:$9 sm:$0xff] %v1291
    %1807 = vst [vmem:[%s1695] ss:$9 sm:$0xff] %v1292
    %1808 = vst [vmem:[%s1697] ss:$9 sm:$0xff] %v1293
    %1809 = vst [vmem:[%s1699] ss:$9 sm:$0xff] %v1294
    %1810 = vst [vmem:[%s1701] ss:$9 sm:$0xff] %v1295
    %v1811 = vld [vmem:[#allocation1] sm:$0xff]
    %1812 = vst [vmem:[#allocation1] ss:$9 sm:$0xff] %v1296
    %1813 = vst [vmem:[%s1689] ss:$9 sm:$0xff] %v1298
    %1814 = vst [vmem:[%s1691] ss:$9 sm:$0xff] %v1299
    %1815 = vst [vmem:[%s1693] ss:$9 sm:$0xff] %v1300
    %1816 = vst [vmem:[%s1695] ss:$9 sm:$0xff] %v1301
    %1817 = vst [vmem:[%s1697] ss:$9 sm:$0xff] %v1302
    %1818 = vst [vmem:[%s1699] ss:$9 sm:$0xff] %v1303
    %1819 = vst [vmem:[%s1701] ss:$9 sm:$0xff] %v1304
    %v1820 = vld [vmem:[#allocation1] sm:$0xff]
    %1821 = vst [vmem:[#allocation1] ss:$9 sm:$0xff] %v1306
    %1822 = vst [vmem:[%s1689] ss:$9 sm:$0xff] %v1307
    %1823 = vst [vmem:[%s1691] ss:$9 sm:$0xff] %v1308
    %1824 = vst [vmem:[%s1693] ss:$9 sm:$0xff] %v1309
    %1825 = vst [vmem:[%s1695] ss:$9 sm:$0xff] %v1310
    %1826 = vst [vmem:[%s1697] ss:$9 sm:$0xff] %v1311
    %1827 = vst [vmem:[%s1699] ss:$9 sm:$0xff] %v1312
    %1828 = vst [vmem:[%s1701] ss:$9 sm:$0xff] %v1313
    %v1829 = vld [vmem:[#allocation1] sm:$0xff]
    %1830 = vst [vmem:[#allocation1] ss:$9 sm:$0xff] %v1315
    %1831 = vst [vmem:[%s1689] ss:$9 sm:$0xff] %v1316
    %1832 = vst [vmem:[%s1691] ss:$9 sm:$0xff] %v1317
    %1833 = vst [vmem:[%s1693] ss:$9 sm:$0xff] %v1318
    %1834 = vst [vmem:[%s1695] ss:$9 sm:$0xff] %v1319
    %1835 = vst [vmem:[%s1697] ss:$9 sm:$0xff] %v1320
    %1836 = vst [vmem:[%s1699] ss:$9 sm:$0xff] %v1321
    %1837 = vst [vmem:[%s1701] ss:$9 sm:$0xff] %v1323
    %v1838 = vld [vmem:[#allocation1] sm:$0xff]
    %1839 = vst [vmem:[#allocation1] ss:$9 sm:$0xff] %v1324
    %1840 = vst [vmem:[%s1689] ss:$9 sm:$0xff] %v1325
    %1841 = vst [vmem:[%s1691] ss:$9 sm:$0xff] %v1326
    %1842 = vst [vmem:[%s1693] ss:$9 sm:$0xff] %v1327
    %1843 = vst [vmem:[%s1695] ss:$9 sm:$0xff] %v1328
    %1844 = vst [vmem:[%s1697] ss:$9 sm:$0xff] %v1329
    %1845 = vst [vmem:[%s1699] ss:$9 sm:$0xff] %v1330
    %1846 = vst [vmem:[%s1701] ss:$9 sm:$0xff] %v1332
    %v1847 = vld [vmem:[#allocation1] sm:$0xff]
    %1848 = vst [vmem:[#allocation1] ss:$9 sm:$0xff] %v1333
    %1849 = vst [vmem:[%s1689] ss:$9 sm:$0xff] %v1334
    %1850 = vst [vmem:[%s1691] ss:$9 sm:$0xff] %v1335
    %1851 = vst [vmem:[%s1693] ss:$9 sm:$0xff] %v1336
    %1852 = vst [vmem:[%s1695] ss:$9 sm:$0xff] %v1337
    %1853 = vst [vmem:[%s1697] ss:$9 sm:$0xff] %v1338
    %1854 = vst [vmem:[%s1699] ss:$9 sm:$0xff] %v1340
    %1855 = vst [vmem:[%s1701] ss:$9 sm:$0xff] %v1341
    %v1856 = vld [vmem:[#allocation1] sm:$0xff]
    %1857 = vst [vmem:[#allocation1] ss:$9 sm:$0xff] %v1342
    %1858 = vst [vmem:[%s1689] ss:$9 sm:$0xff] %v1343
    %1859 = vst [vmem:[%s1691] ss:$9 sm:$0xff] %v1344
    %1860 = vst [vmem:[%s1693] ss:$9 sm:$0xff] %v1345
    %1861 = vst [vmem:[%s1695] ss:$9 sm:$0xff] %v1346
    %1862 = vst [vmem:[%s1697] ss:$9 sm:$0xff] %v1347
    %1863 = vst [vmem:[%s1699] ss:$9 sm:$0xff] %v1349
    %1864 = vst [vmem:[%s1701] ss:$9 sm:$0xff] %v1350
    %v1865 = vld [vmem:[#allocation1] sm:$0xff]
    %1866 = vst [vmem:[#allocation1] ss:$9 sm:$0xff] %v1351
    %1867 = vst [vmem:[%s1689] ss:$9 sm:$0xff] %v1352
    %1868 = vst [vmem:[%s1691] ss:$9 sm:$0xff] %v1353
    %1869 = vst [vmem:[%s1693] ss:$9 sm:$0xff] %v1354
    %1870 = vst [vmem:[%s1695] ss:$9 sm:$0xff] %v1355
    %1871 = vst [vmem:[%s1697] ss:$9 sm:$0xff] %v1357
    %1872 = vst [vmem:[%s1699] ss:$9 sm:$0xff] %v1358
    %1873 = vst [vmem:[%s1701] ss:$9 sm:$0xff] %v1359
    %v1874 = vld [vmem:[#allocation1] sm:$0xff]
    %1875 = vst [vmem:[#allocation1] ss:$9 sm:$0xff] %v1360
    %1876 = vst [vmem:[%s1689] ss:$9 sm:$0xff] %v1361
    %1877 = vst [vmem:[%s1691] ss:$9 sm:$0xff] %v1362
    %1878 = vst [vmem:[%s1693] ss:$9 sm:$0xff] %v1363
    %1879 = vst [vmem:[%s1695] ss:$9 sm:$0xff] %v1364
    %1880 = vst [vmem:[%s1697] ss:$9 sm:$0xff] %v1366
    %1881 = vst [vmem:[%s1699] ss:$9 sm:$0xff] %v1367
    %1882 = vst [vmem:[%s1701] ss:$9 sm:$0xff] %v1368
    %v1883 = vld [vmem:[#allocation1] sm:$0xff]
    %1884 = vst [vmem:[#allocation1] ss:$9 sm:$0xff] %v1369
    %1885 = vst [vmem:[%s1689] ss:$9 sm:$0xff] %v1370
    %1886 = vst [vmem:[%s1691] ss:$9 sm:$0xff] %v1371
    %1887 = vst [vmem:[%s1693] ss:$9 sm:$0xff] %v1372
    %1888 = vst [vmem:[%s1695] ss:$9 sm:$0xff] %v1374
    %1889 = vst [vmem:[%s1697] ss:$9 sm:$0xff] %v1375
    %1890 = vst [vmem:[%s1699] ss:$9 sm:$0xff] %v1376
    %1891 = vst [vmem:[%s1701] ss:$9 sm:$0xff] %v1377
    %v1892 = vld [vmem:[#allocation1] sm:$0xff]
    %1893 = vst [vmem:[#allocation1] ss:$9 sm:$0xff] %v1378
    %1894 = vst [vmem:[%s1689] ss:$9 sm:$0xff] %v1379
    %1895 = vst [vmem:[%s1691] ss:$9 sm:$0xff] %v1380
    %1896 = vst [vmem:[%s1693] ss:$9 sm:$0xff] %v1381
    %1897 = vst [vmem:[%s1695] ss:$9 sm:$0xff] %v1383
    %1898 = vst [vmem:[%s1697] ss:$9 sm:$0xff] %v1384
    %1899 = vst [vmem:[%s1699] ss:$9 sm:$0xff] %v1385
    %1900 = vst [vmem:[%s1701] ss:$9 sm:$0xff] %v1386
    %v1901 = vld [vmem:[#allocation1] sm:$0xff]
    %1902 = vst [vmem:[#allocation1] ss:$9 sm:$0xff] %v1387
    %1903 = vst [vmem:[%s1689] ss:$9 sm:$0xff] %v1388
    %1904 = vst [vmem:[%s1691] ss:$9 sm:$0xff] %v1389
    %1905 = vst [vmem:[%s1693] ss:$9 sm:$0xff] %v1391
    %1906 = vst [vmem:[%s1695] ss:$9 sm:$0xff] %v1392
    %1907 = vst [vmem:[%s1697] ss:$9 sm:$0xff] %v1393
    %1908 = vst [vmem:[%s1699] ss:$9 sm:$0xff] %v1394
    %1909 = vst [vmem:[%s1701] ss:$9 sm:$0xff] %v1395
    %v1910 = vld [vmem:[#allocation1] sm:$0xff]
    %1911 = vst [vmem:[#allocation1] ss:$9 sm:$0xff] %v1396
    %1912 = vst [vmem:[%s1689] ss:$9 sm:$0xff] %v1397
    %1913 = vst [vmem:[%s1691] ss:$9 sm:$0xff] %v1398
    %1914 = vst [vmem:[%s1693] ss:$9 sm:$0xff] %v1400
    %1915 = vst [vmem:[%s1695] ss:$9 sm:$0xff] %v1401
    %1916 = vst [vmem:[%s1697] ss:$9 sm:$0xff] %v1402
    %1917 = vst [vmem:[%s1699] ss:$9 sm:$0xff] %v1403
    %1918 = vst [vmem:[%s1701] ss:$9 sm:$0xff] %v1404
    %v1919 = vld [vmem:[#allocation1] sm:$0xff]
    %1920 = vst [vmem:[#allocation1] ss:$9 sm:$0xff] %v1405
    %1921 = vst [vmem:[%s1689] ss:$9 sm:$0xff] %v1406
    %1922 = vst [vmem:[%s1691] ss:$9 sm:$0xff] %v1408
    %1923 = vst [vmem:[%s1693] ss:$9 sm:$0xff] %v1409
    %1924 = vst [vmem:[%s1695] ss:$9 sm:$0xff] %v1410
    %1925 = vst [vmem:[%s1697] ss:$9 sm:$0xff] %v1411
    %1926 = vst [vmem:[%s1699] ss:$9 sm:$0xff] %v1412
    %1927 = vst [vmem:[%s1701] ss:$9 sm:$0xff] %v1413
    %v1928 = vld [vmem:[#allocation1] sm:$0xff]
    %1929 = vst [vmem:[#allocation1] ss:$9 sm:$0xff] %v1414
    %1930 = vst [vmem:[%s1689] ss:$9 sm:$0xff] %v1415
    %1931 = vst [vmem:[%s1691] ss:$9 sm:$0xff] %v1417
    %1932 = vst [vmem:[%s1693] ss:$9 sm:$0xff] %v1418
    %1933 = vst [vmem:[%s1695] ss:$9 sm:$0xff] %v1419
    %1934 = vst [vmem:[%s1697] ss:$9 sm:$0xff] %v1420
    %1935 = vst [vmem:[%s1699] ss:$9 sm:$0xff] %v1421
    %1936 = vst [vmem:[%s1701] ss:$9 sm:$0xff] %v1422
    %v1937 = vld [vmem:[#allocation1] sm:$0xff]
    %1938 = vst [vmem:[#allocation1] ss:$9 sm:$0xff] %v1423
    %1939 = vst [vmem:[%s1689] ss:$9 sm:$0xff] %v1425
    %1940 = vst [vmem:[%s1691] ss:$9 sm:$0xff] %v1426
    %1941 = vst [vmem:[%s1693] ss:$9 sm:$0xff] %v1427
    %1942 = vst [vmem:[%s1695] ss:$9 sm:$0xff] %v1428
    %1943 = vst [vmem:[%s1697] ss:$9 sm:$0xff] %v1429
    %1944 = vst [vmem:[%s1699] ss:$9 sm:$0xff] %v1430
    %1945 = vst [vmem:[%s1701] ss:$9 sm:$0xff] %v1431
    %v1946 = vld [vmem:[#allocation1] sm:$0xff]
    %1947 = vst [vmem:[#allocation1] ss:$9 sm:$0xff] %v1432
    %1948 = vst [vmem:[%s1689] ss:$9 sm:$0xff] %v1434
    %1949 = vst [vmem:[%s1691] ss:$9 sm:$0xff] %v1435
    %1950 = vst [vmem:[%s1693] ss:$9 sm:$0xff] %v1436
    %1951 = vst [vmem:[%s1695] ss:$9 sm:$0xff] %v1437
    %1952 = vst [vmem:[%s1697] ss:$9 sm:$0xff] %v1438
    %1953 = vst [vmem:[%s1699] ss:$9 sm:$0xff] %v1439
    %1954 = vst [vmem:[%s1701] ss:$9 sm:$0xff] %v1440
    %v1955 = vld [vmem:[#allocation1] sm:$0xff]
    %1956 = vst [vmem:[#allocation1] ss:$9 sm:$0xff] %v1442
    %1957 = vst [vmem:[%s1689] ss:$9 sm:$0xff] %v1443
    %1958 = vst [vmem:[%s1691] ss:$9 sm:$0xff] %v1444
    %1959 = vst [vmem:[%s1693] ss:$9 sm:$0xff] %v1445
    %1960 = vst [vmem:[%s1695] ss:$9 sm:$0xff] %v1446
    %1961 = vst [vmem:[%s1697] ss:$9 sm:$0xff] %v1447
    %1962 = vst [vmem:[%s1699] ss:$9 sm:$0xff] %v1448
    %1963 = vst [vmem:[%s1701] ss:$9 sm:$0xff] %v1449
    %v1964 = vld [vmem:[#allocation1] sm:$0xff]
    %1965 = vst [vmem:[#allocation1] ss:$9 sm:$0xff] %v1451
    %1966 = vst [vmem:[%s1689] ss:$9 sm:$0xff] %v1452
    %1967 = vst [vmem:[%s1691] ss:$9 sm:$0xff] %v1453
    %1968 = vst [vmem:[%s1693] ss:$9 sm:$0xff] %v1454
    %1969 = vst [vmem:[%s1695] ss:$9 sm:$0xff] %v1455
    %1970 = vst [vmem:[%s1697] ss:$9 sm:$0xff] %v1456
    %1971 = vst [vmem:[%s1699] ss:$9 sm:$0xff] %v1457
    %1972 = vst [vmem:[%s1701] ss:$9 sm:$0xff] %v1459
    %v1973 = vld [vmem:[#allocation1] sm:$0xff]
    %1974 = vst [vmem:[#allocation1] ss:$9 sm:$0xff] %v1460
    %1975 = vst [vmem:[%s1689] ss:$9 sm:$0xff] %v1461
    %1976 = vst [vmem:[%s1691] ss:$9 sm:$0xff] %v1462
    %1977 = vst [vmem:[%s1693] ss:$9 sm:$0xff] %v1463
    %1978 = vst [vmem:[%s1695] ss:$9 sm:$0xff] %v1464
    %1979 = vst [vmem:[%s1697] ss:$9 sm:$0xff] %v1465
    %1980 = vst [vmem:[%s1699] ss:$9 sm:$0xff] %v1466
    %1981 = vst [vmem:[%s1701] ss:$9 sm:$0xff] %v1468
    %v1982 = vld [vmem:[#allocation1] sm:$0xff]
    %1983 = vst [vmem:[#allocation1] ss:$9 sm:$0xff] %v1469
    %1984 = vst [vmem:[%s1689] ss:$9 sm:$0xff] %v1470
    %1985 = vst [vmem:[%s1691] ss:$9 sm:$0xff] %v1471
    %1986 = vst [vmem:[%s1693] ss:$9 sm:$0xff] %v1472
    %1987 = vst [vmem:[%s1695] ss:$9 sm:$0xff] %v1473
    %1988 = vst [vmem:[%s1697] ss:$9 sm:$0xff] %v1474
    %1989 = vst [vmem:[%s1699] ss:$9 sm:$0xff] %v1476
    %1990 = vst [vmem:[%s1701] ss:$9 sm:$0xff] %v1477
    %v1991 = vld [vmem:[#allocation1] sm:$0xff]
    %1992 = vst [vmem:[#allocation1] ss:$9 sm:$0xff] %v1478
    %1993 = vst [vmem:[%s1689] ss:$9 sm:$0xff] %v1479
    %1994 = vst [vmem:[%s1691] ss:$9 sm:$0xff] %v1480
    %1995 = vst [vmem:[%s1693] ss:$9 sm:$0xff] %v1481
    %1996 = vst [vmem:[%s1695] ss:$9 sm:$0xff] %v1482
    %1997 = vst [vmem:[%s1697] ss:$9 sm:$0xff] %v1483
    %1998 = vst [vmem:[%s1699] ss:$9 sm:$0xff] %v1485
    %1999 = vst [vmem:[%s1701] ss:$9 sm:$0xff] %v1486
    %v2000 = vld [vmem:[#allocation1] sm:$0xff]
    %2001 = vst [vmem:[#allocation1] ss:$9 sm:$0xff] %v1487
    %2002 = vst [vmem:[%s1689] ss:$9 sm:$0xff] %v1488
    %2003 = vst [vmem:[%s1691] ss:$9 sm:$0xff] %v1489
    %2004 = vst [vmem:[%s1693] ss:$9 sm:$0xff] %v1490
    %2005 = vst [vmem:[%s1695] ss:$9 sm:$0xff] %v1491
    %2006 = vst [vmem:[%s1697] ss:$9 sm:$0xff] %v1493
    %2007 = vst [vmem:[%s1699] ss:$9 sm:$0xff] %v1494
    %2008 = vst [vmem:[%s1701] ss:$9 sm:$0xff] %v1495
    %v2009 = vld [vmem:[#allocation1] sm:$0xff]
    %2010 = vst [vmem:[#allocation1] ss:$9 sm:$0xff] %v1496
    %2011 = vst [vmem:[%s1689] ss:$9 sm:$0xff] %v1497
    %2012 = vst [vmem:[%s1691] ss:$9 sm:$0xff] %v1498
    %2013 = vst [vmem:[%s1693] ss:$9 sm:$0xff] %v1499
    %2014 = vst [vmem:[%s1695] ss:$9 sm:$0xff] %v1500
    %2015 = vst [vmem:[%s1697] ss:$9 sm:$0xff] %v1502
    %2016 = vst [vmem:[%s1699] ss:$9 sm:$0xff] %v1503
    %2017 = vst [vmem:[%s1701] ss:$9 sm:$0xff] %v1504
    %v2018 = vld [vmem:[#allocation1] sm:$0xff]
    %2019 = vst [vmem:[#allocation1] ss:$9 sm:$0xff] %v1505
    %2020 = vst [vmem:[%s1689] ss:$9 sm:$0xff] %v1506
    %2021 = vst [vmem:[%s1691] ss:$9 sm:$0xff] %v1507
    %2022 = vst [vmem:[%s1693] ss:$9 sm:$0xff] %v1508
    %2023 = vst [vmem:[%s1695] ss:$9 sm:$0xff] %v1510
    %2024 = vst [vmem:[%s1697] ss:$9 sm:$0xff] %v1511
    %2025 = vst [vmem:[%s1699] ss:$9 sm:$0xff] %v1512
    %2026 = vst [vmem:[%s1701] ss:$9 sm:$0xff] %v1513
    %v2027 = vld [vmem:[#allocation1] sm:$0xff]
    %2028 = vst [vmem:[#allocation1] ss:$9 sm:$0xff] %v1514
    %2029 = vst [vmem:[%s1689] ss:$9 sm:$0xff] %v1515
    %2030 = vst [vmem:[%s1691] ss:$9 sm:$0xff] %v1516
    %2031 = vst [vmem:[%s1693] ss:$9 sm:$0xff] %v1517
    %2032 = vst [vmem:[%s1695] ss:$9 sm:$0xff] %v1519
    %2033 = vst [vmem:[%s1697] ss:$9 sm:$0xff] %v1520
    %2034 = vst [vmem:[%s1699] ss:$9 sm:$0xff] %v1521
    %2035 = vst [vmem:[%s1701] ss:$9 sm:$0xff] %v1522
    %v2036 = vld [vmem:[#allocation1] sm:$0xff]
    %2037 = vst [vmem:[#allocation1] ss:$9 sm:$0xff] %v1523
    %2038 = vst [vmem:[%s1689] ss:$9 sm:$0xff] %v1524
    %2039 = vst [vmem:[%s1691] ss:$9 sm:$0xff] %v1525
    %2040 = vst [vmem:[%s1693] ss:$9 sm:$0xff] %v1527
    %2041 = vst [vmem:[%s1695] ss:$9 sm:$0xff] %v1528
    %2042 = vst [vmem:[%s1697] ss:$9 sm:$0xff] %v1529
    %2043 = vst [vmem:[%s1699] ss:$9 sm:$0xff] %v1530
    %2044 = vst [vmem:[%s1701] ss:$9 sm:$0xff] %v1531
    %v2045 = vld [vmem:[#allocation1] sm:$0xff]
    %2046 = vst [vmem:[#allocation1] ss:$9 sm:$0xff] %v1532
    %2047 = vst [vmem:[%s1689] ss:$9 sm:$0xff] %v1533
    %2048 = vst [vmem:[%s1691] ss:$9 sm:$0xff] %v1534
    %2049 = vst [vmem:[%s1693] ss:$9 sm:$0xff] %v1536
    %2050 = vst [vmem:[%s1695] ss:$9 sm:$0xff] %v1537
    %2051 = vst [vmem:[%s1697] ss:$9 sm:$0xff] %v1538
    %2052 = vst [vmem:[%s1699] ss:$9 sm:$0xff] %v1539
    %2053 = vst [vmem:[%s1701] ss:$9 sm:$0xff] %v1540
    %v2054 = vld [vmem:[#allocation1] sm:$0xff]
    %2055 = vst [vmem:[#allocation1] ss:$9 sm:$0xff] %v1541
    %2056 = vst [vmem:[%s1689] ss:$9 sm:$0xff] %v1542
    %2057 = vst [vmem:[%s1691] ss:$9 sm:$0xff] %v1544
    %2058 = vst [vmem:[%s1693] ss:$9 sm:$0xff] %v1545
    %2059 = vst [vmem:[%s1695] ss:$9 sm:$0xff] %v1546
    %2060 = vst [vmem:[%s1697] ss:$9 sm:$0xff] %v1547
    %2061 = vst [vmem:[%s1699] ss:$9 sm:$0xff] %v1548
    %2062 = vst [vmem:[%s1701] ss:$9 sm:$0xff] %v1549
    %v2063 = vld [vmem:[#allocation1] sm:$0xff]
    %2064 = vst [vmem:[#allocation1] ss:$9 sm:$0xff] %v1550
    %2065 = vst [vmem:[%s1689] ss:$9 sm:$0xff] %v1551
    %2066 = vst [vmem:[%s1691] ss:$9 sm:$0xff] %v1553
    %2067 = vst [vmem:[%s1693] ss:$9 sm:$0xff] %v1554
    %2068 = vst [vmem:[%s1695] ss:$9 sm:$0xff] %v1555
    %2069 = vst [vmem:[%s1697] ss:$9 sm:$0xff] %v1556
    %2070 = vst [vmem:[%s1699] ss:$9 sm:$0xff] %v1557
    %2071 = vst [vmem:[%s1701] ss:$9 sm:$0xff] %v1558
    %v2072 = vld [vmem:[#allocation1] sm:$0xff]
    %2073 = vst [vmem:[#allocation1] ss:$9 sm:$0xff] %v1559
    %2074 = vst [vmem:[%s1689] ss:$9 sm:$0xff] %v1561
    %2075 = vst [vmem:[%s1691] ss:$9 sm:$0xff] %v1562
    %2076 = vst [vmem:[%s1693] ss:$9 sm:$0xff] %v1563
    %2077 = vst [vmem:[%s1695] ss:$9 sm:$0xff] %v1564
    %2078 = vst [vmem:[%s1697] ss:$9 sm:$0xff] %v1565
    %2079 = vst [vmem:[%s1699] ss:$9 sm:$0xff] %v1566
    %2080 = vst [vmem:[%s1701] ss:$9 sm:$0xff] %v1567
    %v2081 = vld [vmem:[#allocation1] sm:$0xff]
    %2082 = vst [vmem:[#allocation1] ss:$9 sm:$0xff] %v1568
    %2083 = vst [vmem:[%s1689] ss:$9 sm:$0xff] %v1570
    %2084 = vst [vmem:[%s1691] ss:$9 sm:$0xff] %v1571
    %2085 = vst [vmem:[%s1693] ss:$9 sm:$0xff] %v1572
    %2086 = vst [vmem:[%s1695] ss:$9 sm:$0xff] %v1573
    %2087 = vst [vmem:[%s1697] ss:$9 sm:$0xff] %v1574
    %2088 = vst [vmem:[%s1699] ss:$9 sm:$0xff] %v1575
    %2089 = vst [vmem:[%s1701] ss:$9 sm:$0xff] %v1576
    %v2090 = vld [vmem:[#allocation1] sm:$0xff]
    %2091 = vst [vmem:[#allocation1] ss:$9 sm:$0xff] %v1578
    %2092 = vst [vmem:[%s1689] ss:$9 sm:$0xff] %v1579
    %2093 = vst [vmem:[%s1691] ss:$9 sm:$0xff] %v1580
    %2094 = vst [vmem:[%s1693] ss:$9 sm:$0xff] %v1581
    %2095 = vst [vmem:[%s1695] ss:$9 sm:$0xff] %v1582
    %2096 = vst [vmem:[%s1697] ss:$9 sm:$0xff] %v1583
    %2097 = vst [vmem:[%s1699] ss:$9 sm:$0xff] %v1584
    %2098 = vst [vmem:[%s1701] ss:$9 sm:$0xff] %v1585
    %v2099 = vld [vmem:[#allocation1] sm:$0xff]
    %2100 = vst [vmem:[#allocation1] ss:$9 sm:$0xff] %v1587
    %2101 = vst [vmem:[%s1689] ss:$9 sm:$0xff] %v1588
    %2102 = vst [vmem:[%s1691] ss:$9 sm:$0xff] %v1589
    %2103 = vst [vmem:[%s1693] ss:$9 sm:$0xff] %v1590
    %2104 = vst [vmem:[%s1695] ss:$9 sm:$0xff] %v1591
    %2105 = vst [vmem:[%s1697] ss:$9 sm:$0xff] %v1592
    %2106 = vst [vmem:[%s1699] ss:$9 sm:$0xff] %v1593
    %2107 = vst [vmem:[%s1701] ss:$9 sm:$0xff] %v1595
    %v2108 = vld [vmem:[#allocation1] sm:$0xff]
    %2109 = vst [vmem:[#allocation1] ss:$9 sm:$0xff] %v1596
    %2110 = vst [vmem:[%s1689] ss:$9 sm:$0xff] %v1597
    %2111 = vst [vmem:[%s1691] ss:$9 sm:$0xff] %v1598
    %2112 = vst [vmem:[%s1693] ss:$9 sm:$0xff] %v1599
    %2113 = vst [vmem:[%s1695] ss:$9 sm:$0xff] %v1600
    %2114 = vst [vmem:[%s1697] ss:$9 sm:$0xff] %v1601
    %2115 = vst [vmem:[%s1699] ss:$9 sm:$0xff] %v1602
    %2116 = vst [vmem:[%s1701] ss:$9 sm:$0xff] %v1604
    %v2117 = vld [vmem:[#allocation1] sm:$0xff]
    %2118 = vst [vmem:[#allocation1] ss:$9 sm:$0xff] %v1605
    %2119 = vst [vmem:[%s1689] ss:$9 sm:$0xff] %v1606
    %2120 = vst [vmem:[%s1691] ss:$9 sm:$0xff] %v1607
    %2121 = vst [vmem:[%s1693] ss:$9 sm:$0xff] %v1608
    %2122 = vst [vmem:[%s1695] ss:$9 sm:$0xff] %v1609
    %2123 = vst [vmem:[%s1697] ss:$9 sm:$0xff] %v1610
    %2124 = vst [vmem:[%s1699] ss:$9 sm:$0xff] %v1612
    %2125 = vst [vmem:[%s1701] ss:$9 sm:$0xff] %v1613
    %v2126 = vld [vmem:[#allocation1] sm:$0xff]
    %2127 = vst [vmem:[#allocation1] ss:$9 sm:$0xff] %v1614
    %2128 = vst [vmem:[%s1689] ss:$9 sm:$0xff] %v1615
    %2129 = vst [vmem:[%s1691] ss:$9 sm:$0xff] %v1616
    %2130 = vst [vmem:[%s1693] ss:$9 sm:$0xff] %v1617
    %2131 = vst [vmem:[%s1695] ss:$9 sm:$0xff] %v1618
    %2132 = vst [vmem:[%s1697] ss:$9 sm:$0xff] %v1619
    %2133 = vst [vmem:[%s1699] ss:$9 sm:$0xff] %v1621
    %2134 = vst [vmem:[%s1701] ss:$9 sm:$0xff] %v1622
    %v2135 = vld [vmem:[#allocation1] sm:$0xff]
    %2136 = vst [vmem:[#allocation1] ss:$9 sm:$0xff] %v1623
    %2137 = vst [vmem:[%s1689] ss:$9 sm:$0xff] %v1624
    %2138 = vst [vmem:[%s1691] ss:$9 sm:$0xff] %v1625
    %2139 = vst [vmem:[%s1693] ss:$9 sm:$0xff] %v1626
    %2140 = vst [vmem:[%s1695] ss:$9 sm:$0xff] %v1627
    %2141 = vst [vmem:[%s1697] ss:$9 sm:$0xff] %v1629
    %2142 = vst [vmem:[%s1699] ss:$9 sm:$0xff] %v1630
    %2143 = vst [vmem:[%s1701] ss:$9 sm:$0xff] %v1631
    %v2144 = vld [vmem:[#allocation1] sm:$0xff]
    %2145 = vst [vmem:[#allocation1] ss:$9 sm:$0xff] %v1632
    %2146 = vst [vmem:[%s1689] ss:$9 sm:$0xff] %v1633
    %2147 = vst [vmem:[%s1691] ss:$9 sm:$0xff] %v1634
    %2148 = vst [vmem:[%s1693] ss:$9 sm:$0xff] %v1635
    %2149 = vst [vmem:[%s1695] ss:$9 sm:$0xff] %v1636
    %2150 = vst [vmem:[%s1697] ss:$9 sm:$0xff] %v1638
    %2151 = vst [vmem:[%s1699] ss:$9 sm:$0xff] %v1639
    %2152 = vst [vmem:[%s1701] ss:$9 sm:$0xff] %v1640
    %v2153 = vld [vmem:[#allocation1] sm:$0xff]
    %2154 = vst [vmem:[#allocation1] ss:$9 sm:$0xff] %v1641
    %2155 = vst [vmem:[%s1689] ss:$9 sm:$0xff] %v1642
    %2156 = vst [vmem:[%s1691] ss:$9 sm:$0xff] %v1643
    %2157 = vst [vmem:[%s1693] ss:$9 sm:$0xff] %v1644
    %2158 = vst [vmem:[%s1695] ss:$9 sm:$0xff] %v1646
    %2159 = vst [vmem:[%s1697] ss:$9 sm:$0xff] %v1647
    %2160 = vst [vmem:[%s1699] ss:$9 sm:$0xff] %v1648
    %2161 = vst [vmem:[%s1701] ss:$9 sm:$0xff] %v1649
    %v2162 = vld [vmem:[#allocation1] sm:$0xff]
    %2163 = vst [vmem:[#allocation1] ss:$9 sm:$0xff] %v1650
    %2164 = vst [vmem:[%s1689] ss:$9 sm:$0xff] %v1651
    %2165 = vst [vmem:[%s1691] ss:$9 sm:$0xff] %v1652
    %2166 = vst [vmem:[%s1693] ss:$9 sm:$0xff] %v1653
    %2167 = vst [vmem:[%s1695] ss:$9 sm:$0xff] %v1655
    %2168 = vst [vmem:[%s1697] ss:$9 sm:$0xff] %v1656
    %2169 = vst [vmem:[%s1699] ss:$9 sm:$0xff] %v1657
    %2170 = vst [vmem:[%s1701] ss:$9 sm:$0xff] %v1658
    %v2171 = vld [vmem:[#allocation1] sm:$0xff]
    %2172 = vst [vmem:[#allocation1] ss:$9 sm:$0xff] %v1659
    %2173 = vst [vmem:[%s1689] ss:$9 sm:$0xff] %v1660
    %2174 = vst [vmem:[%s1691] ss:$9 sm:$0xff] %v1661
    %2175 = vst [vmem:[%s1693] ss:$9 sm:$0xff] %v1663
    %2176 = vst [vmem:[%s1695] ss:$9 sm:$0xff] %v1664
    %2177 = vst [vmem:[%s1697] ss:$9 sm:$0xff] %v1665
    %2178 = vst [vmem:[%s1699] ss:$9 sm:$0xff] %v1666
    %2179 = vst [vmem:[%s1701] ss:$9 sm:$0xff] %v1667
    %v2180 = vld [vmem:[#allocation1] sm:$0xff]
    %2181 = vst [vmem:[#allocation1] ss:$9 sm:$0xff] %v1668
    %2182 = vst [vmem:[%s1689] ss:$9 sm:$0xff] %v1669
    %2183 = vst [vmem:[%s1691] ss:$9 sm:$0xff] %v1670
    %2184 = vst [vmem:[%s1693] ss:$9 sm:$0xff] %v1672
    %2185 = vst [vmem:[%s1695] ss:$9 sm:$0xff] %v1673
    %2186 = vst [vmem:[%s1697] ss:$9 sm:$0xff] %v1674
    %2187 = vst [vmem:[%s1699] ss:$9 sm:$0xff] %v1675
    %2188 = vst [vmem:[%s1701] ss:$9 sm:$0xff] %v1676
    %v2189 = vld [vmem:[#allocation1] sm:$0xff]
    %2190 = vst [vmem:[#allocation1] ss:$9 sm:$0xff] %v1677
    %2191 = vst [vmem:[%s1689] ss:$9 sm:$0xff] %v1678
    %2192 = vst [vmem:[%s1691] ss:$9 sm:$0xff] %v1680
    %2193 = vst [vmem:[%s1693] ss:$9 sm:$0xff] %v1681
    %2194 = vst [vmem:[%s1695] ss:$9 sm:$0xff] %v1682
    %2195 = vst [vmem:[%s1697] ss:$9 sm:$0xff] %v1683
    %2196 = vst [vmem:[%s1699] ss:$9 sm:$0xff] %v1684
    %2197 = vst [vmem:[%s1701] ss:$9 sm:$0xff] %v1685
    %v2198 = vld [vmem:[#allocation1] sm:$0xff]
    %2199 = vst [vmem:[#allocation1] ss:$9 sm:$0xff] %v1686
    %2200 = vst [vmem:[%s1689] ss:$9 sm:$0xff] %v1687
    %v2201 = vld [vmem:[#allocation1] sm:$0xff]
    %2202 = vrot.lane.b32.xlu0 %v1703, 4
    %v2203 = vpop.permute.xlu0 %2202
    %2204 = vrot.lane.b32.xlu0 %v1712, 4
    %v2205 = vpop.permute.xlu0 %2204
    %2206 = vrot.lane.b32.xlu0 %v1721, 4
    %v2207 = vpop.permute.xlu0 %2206
    %2208 = vrot.lane.b32.xlu0 %v1730, 4
    %v2209 = vpop.permute.xlu0 %2208
    %2210 = vrot.lane.b32.xlu0 %v1739, 4
    %v2211 = vpop.permute.xlu0 %2210
    %2212 = vrot.lane.b32.xlu0 %v1748, 4
    %v2213 = vpop.permute.xlu0 %2212
    %2214 = vrot.lane.b32.xlu0 %v1757, 4
    %v2215 = vpop.permute.xlu0 %2214
    %2216 = vrot.lane.b32.xlu0 %v1766, 4
    %v2217 = vpop.permute.xlu0 %2216
    %2218 = vrot.lane.b32.xlu0 %v1775, 4
    %v2219 = vpop.permute.xlu0 %2218
    %2220 = vrot.lane.b32.xlu0 %v1784, 4
    %v2221 = vpop.permute.xlu0 %2220
    %2222 = vrot.lane.b32.xlu0 %v1793, 4
    %v2223 = vpop.permute.xlu0 %2222
    %2224 = vrot.lane.b32.xlu0 %v1802, 4
    %v2225 = vpop.permute.xlu0 %2224
    %2226 = vrot.lane.b32.xlu0 %v1811, 4
    %v2227 = vpop.permute.xlu0 %2226
    %2228 = vrot.lane.b32.xlu0 %v1820, 4
    %v2229 = vpop.permute.xlu0 %2228
    %2230 = vrot.lane.b32.xlu0 %v1829, 4
    %v2231 = vpop.permute.xlu0 %2230
    %2232 = vrot.lane.b32.xlu0 %v1838, 4
    %v2233 = vpop.permute.xlu0 %2232
    %2234 = vrot.lane.b32.xlu0 %v1847, 4
    %v2235 = vpop.permute.xlu0 %2234
    %2236 = vrot.lane.b32.xlu0 %v1856, 4
    %v2237 = vpop.permute.xlu0 %2236
    %2238 = vrot.lane.b32.xlu0 %v1865, 4
    %v2239 = vpop.permute.xlu0 %2238
    %2240 = vrot.lane.b32.xlu0 %v1874, 4
    %v2241 = vpop.permute.xlu0 %2240
    %2242 = vrot.lane.b32.xlu0 %v1883, 4
    %v2243 = vpop.permute.xlu0 %2242
    %2244 = vrot.lane.b32.xlu0 %v1892, 4
    %v2245 = vpop.permute.xlu0 %2244
    %2246 = vrot.lane.b32.xlu0 %v1901, 4
    %v2247 = vpop.permute.xlu0 %2246
    %2248 = vrot.lane.b32.xlu0 %v1910, 4
    %v2249 = vpop.permute.xlu0 %2248
    %2250 = vrot.lane.b32.xlu0 %v1919, 4
    %v2251 = vpop.permute.xlu0 %2250
    %2252 = vrot.lane.b32.xlu0 %v1928, 4
    %v2253 = vpop.permute.xlu0 %2252
    %2254 = vrot.lane.b32.xlu0 %v1937, 4
    %v2255 = vpop.permute.xlu0 %2254
    %2256 = vrot.lane.b32.xlu0 %v1946, 4
    %v2257 = vpop.permute.xlu0 %2256
    %2258 = vrot.lane.b32.xlu0 %v1955, 4
    %v2259 = vpop.permute.xlu0 %2258
    %2260 = vrot.lane.b32.xlu0 %v1964, 4
    %v2261 = vpop.permute.xlu0 %2260
    %2262 = vrot.lane.b32.xlu0 %v1973, 4
    %v2263 = vpop.permute.xlu0 %2262
    %2264 = vrot.lane.b32.xlu0 %v1982, 4
    %v2265 = vpop.permute.xlu0 %2264
    %2266 = vrot.lane.b32.xlu0 %v1991, 4
    %v2267 = vpop.permute.xlu0 %2266
    %2268 = vrot.lane.b32.xlu0 %v2000, 4
    %v2269 = vpop.permute.xlu0 %2268
    %2270 = vrot.lane.b32.xlu0 %v2009, 4
    %v2271 = vpop.permute.xlu0 %2270
    %2272 = vrot.lane.b32.xlu0 %v2018, 4
    %v2273 = vpop.permute.xlu0 %2272
    %2274 = vrot.lane.b32.xlu0 %v2027, 4
    %v2275 = vpop.permute.xlu0 %2274
    %2276 = vrot.lane.b32.xlu0 %v2036, 4
    %v2277 = vpop.permute.xlu0 %2276
    %2278 = vrot.lane.b32.xlu0 %v2045, 4
    %v2279 = vpop.permute.xlu0 %2278
    %2280 = vrot.lane.b32.xlu0 %v2054, 4
    %v2281 = vpop.permute.xlu0 %2280
    %2282 = vrot.lane.b32.xlu0 %v2063, 4
    %v2283 = vpop.permute.xlu0 %2282
    %2284 = vrot.lane.b32.xlu0 %v2072, 4
    %v2285 = vpop.permute.xlu0 %2284
    %2286 = vrot.lane.b32.xlu0 %v2081, 4
    %v2287 = vpop.permute.xlu0 %2286
    %2288 = vrot.lane.b32.xlu0 %v2090, 4
    %v2289 = vpop.permute.xlu0 %2288
    %2290 = vrot.lane.b32.xlu0 %v2099, 4
    %v2291 = vpop.permute.xlu0 %2290
    %2292 = vrot.lane.b32.xlu0 %v2108, 4
    %v2293 = vpop.permute.xlu0 %2292
    %2294 = vrot.lane.b32.xlu0 %v2117, 4
    %v2295 = vpop.permute.xlu0 %2294
    %2296 = vrot.lane.b32.xlu0 %v2126, 4
    %v2297 = vpop.permute.xlu0 %2296
    %2298 = vrot.lane.b32.xlu0 %v2135, 4
    %v2299 = vpop.permute.xlu0 %2298
    %2300 = vrot.lane.b32.xlu0 %v2144, 4
    %v2301 = vpop.permute.xlu0 %2300
    %2302 = vrot.lane.b32.xlu0 %v2153, 4
    %v2303 = vpop.permute.xlu0 %2302
    %2304 = vrot.lane.b32.xlu0 %v2162, 4
    %v2305 = vpop.permute.xlu0 %2304
    %2306 = vrot.lane.b32.xlu0 %v2171, 4
    %v2307 = vpop.permute.xlu0 %2306
    %2308 = vrot.lane.b32.xlu0 %v2180, 4
    %v2309 = vpop.permute.xlu0 %2308
    %2310 = vrot.lane.b32.xlu0 %v2189, 4
    %v2311 = vpop.permute.xlu0 %2310
    %2312 = vrot.lane.b32.xlu0 %v2198, 4
    %v2313 = vpop.permute.xlu0 %2312
    %2314 = vrot.lane.b32.xlu0 %v2201, 4
    %v2315 = vpop.permute.xlu0 %2314
    %vm2373 = vcmask 64544
    %2374 = vst.msk [vmem:[#allocation2] sm:$0xff] %vm2373, %v2203
    %2375 = vst.msk [vmem:[#allocation2 + $0x8] sm:$0xff] %vm2373, %v2205
    %2376 = vst.msk [vmem:[#allocation2 + $0x10] sm:$0xff] %vm2373, %v2207
    %2377 = vst.msk [vmem:[#allocation2 + $0x18] sm:$0xff] %vm2373, %v2209
    %2378 = vst.msk [vmem:[#allocation2 + $0x20] sm:$0xff] %vm2373, %v2211
    %2379 = vst.msk [vmem:[#allocation2 + $0x28] sm:$0xff] %vm2373, %v2213
    %2380 = vst.msk [vmem:[#allocation2 + $0x30] sm:$0xff] %vm2373, %v2215
    %2381 = vst.msk [vmem:[#allocation2 + $0x38] sm:$0xff] %vm2373, %v2217
    %2382 = vst.msk [vmem:[#allocation2 + $0x40] sm:$0xff] %vm2373, %v2219
    %2383 = vst.msk [vmem:[#allocation2 + $0x48] sm:$0xff] %vm2373, %v2221
    %2384 = vst.msk [vmem:[#allocation2 + $0x50] sm:$0xff] %vm2373, %v2223
    %2385 = vst.msk [vmem:[#allocation2 + $0x58] sm:$0xff] %vm2373, %v2225
    %2386 = vst.msk [vmem:[#allocation2 + $0x60] sm:$0xff] %vm2373, %v2227
    %2387 = vst.msk [vmem:[#allocation2 + $0x68] sm:$0xff] %vm2373, %v2229
    %2388 = vst.msk [vmem:[#allocation2 + $0x70] sm:$0xff] %vm2373, %v2231
    %2389 = vst.msk [vmem:[#allocation2 + $0x78] sm:$0xff] %vm2373, %v2233
    %2390 = vst.msk [vmem:[#allocation2 + $0x80] sm:$0xff] %vm2373, %v2235
    %2391 = vst.msk [vmem:[#allocation2 + $0x88] sm:$0xff] %vm2373, %v2237
    %2392 = vst.msk [vmem:[#allocation2 + $0x90] sm:$0xff] %vm2373, %v2239
    %2393 = vst.msk [vmem:[#allocation2 + $0x98] sm:$0xff] %vm2373, %v2241
    %2394 = vst.msk [vmem:[#allocation2 + $0xa0] sm:$0xff] %vm2373, %v2243
    %2395 = vst.msk [vmem:[#allocation2 + $0xa8] sm:$0xff] %vm2373, %v2245
    %2396 = vst.msk [vmem:[#allocation2 + $0xb0] sm:$0xff] %vm2373, %v2247
    %2397 = vst.msk [vmem:[#allocation2 + $0xb8] sm:$0xff] %vm2373, %v2249
    %2398 = vst.msk [vmem:[#allocation2 + $0xc0] sm:$0xff] %vm2373, %v2251
    %2399 = vst.msk [vmem:[#allocation2 + $0xc8] sm:$0xff] %vm2373, %v2253
    %2400 = vst.msk [vmem:[#allocation2 + $0xd0] sm:$0xff] %vm2373, %v2255
    %2401 = vst.msk [vmem:[#allocation2 + $0xd8] sm:$0xff] %vm2373, %v2257
    %2402 = vst.msk [vmem:[#allocation2 + $0xe0] sm:$0xff] %vm2373, %v2259
    %2403 = vst.msk [vmem:[#allocation2 + $0xe8] sm:$0xff] %vm2373, %v2261
    %2404 = vst.msk [vmem:[#allocation2 + $0xf0] sm:$0xff] %vm2373, %v2263
    %2405 = vst.msk [vmem:[#allocation2 + $0xf8] sm:$0xff] %vm2373, %v2265
    %2406 = vst.msk [vmem:[#allocation2 + $0x100] sm:$0xff] %vm2373, %v2267
    %2407 = vst.msk [vmem:[#allocation2 + $0x108] sm:$0xff] %vm2373, %v2269
    %2408 = vst.msk [vmem:[#allocation2 + $0x110] sm:$0xff] %vm2373, %v2271
    %2409 = vst.msk [vmem:[#allocation2 + $0x118] sm:$0xff] %vm2373, %v2273
    %2410 = vst.msk [vmem:[#allocation2 + $0x120] sm:$0xff] %vm2373, %v2275
    %2411 = vst.msk [vmem:[#allocation2 + $0x128] sm:$0xff] %vm2373, %v2277
    %2412 = vst.msk [vmem:[#allocation2 + $0x130] sm:$0xff] %vm2373, %v2279
    %2413 = vst.msk [vmem:[#allocation2 + $0x138] sm:$0xff] %vm2373, %v2281
    %2414 = vst.msk [vmem:[#allocation2 + $0x140] sm:$0xff] %vm2373, %v2283
    %2415 = vst.msk [vmem:[#allocation2 + $0x148] sm:$0xff] %vm2373, %v2285
    %2416 = vst.msk [vmem:[#allocation2 + $0x150] sm:$0xff] %vm2373, %v2287
    %2417 = vst.msk [vmem:[#allocation2 + $0x158] sm:$0xff] %vm2373, %v2289
    %2418 = vst.msk [vmem:[#allocation2 + $0x160] sm:$0xff] %vm2373, %v2291
    %2419 = vst.msk [vmem:[#allocation2 + $0x168] sm:$0xff] %vm2373, %v2293
    %2420 = vst.msk [vmem:[#allocation2 + $0x170] sm:$0xff] %vm2373, %v2295
    %2421 = vst.msk [vmem:[#allocation2 + $0x178] sm:$0xff] %vm2373, %v2297
    %2422 = vst.msk [vmem:[#allocation2 + $0x180] sm:$0xff] %vm2373, %v2299
    %2423 = vst.msk [vmem:[#allocation2 + $0x188] sm:$0xff] %vm2373, %v2301
    %2424 = vst.msk [vmem:[#allocation2 + $0x190] sm:$0xff] %vm2373, %v2303
    %2425 = vst.msk [vmem:[#allocation2 + $0x198] sm:$0xff] %vm2373, %v2305
    %2426 = vst.msk [vmem:[#allocation2 + $0x1a0] sm:$0xff] %vm2373, %v2307
    %2427 = vst.msk [vmem:[#allocation2 + $0x1a8] sm:$0xff] %vm2373, %v2309
    %2428 = vst.msk [vmem:[#allocation2 + $0x1b0] sm:$0xff] %vm2373, %v2311
    %2429 = vst.msk [vmem:[#allocation2 + $0x1b8] sm:$0xff] %vm2373, %v2313
    %vm2430 = vcmask 58400
    %2431 = vst.msk [vmem:[#allocation2 + $0x1c0] sm:$0x3] %vm2430, %v2315
    %v2436 = vrot.slane %v57, 1
    %v2437 = vrot.slane %v57, 2
    %v2438 = vrot.slane %v57, 3
    %v2439 = vrot.slane %v57, 4
    %v2440 = vrot.slane %v57, 5
    %v2441 = vrot.slane %v57, 6
    %v2442 = vrot.slane %v57, 7
    %v2443 = vrot.slane %v58, 1
    %v2444 = vrot.slane %v58, 2
    %v2445 = vrot.slane %v58, 3
    %v2446 = vrot.slane %v58, 4
    %v2447 = vrot.slane %v58, 5
    %v2448 = vrot.slane %v58, 6
    %v2449 = vrot.slane %v89, 1
    %v2450 = vrot.slane %v89, 2
    %v2451 = vrot.slane %v89, 3
    %v2452 = vrot.slane %v89, 4
    %v2453 = vrot.slane %v89, 5
    %v2454 = vrot.slane %v89, 6
    %v2455 = vrot.slane %v89, 7
    %v2456 = vrot.slane %v90, 1
    %v2457 = vrot.slane %v90, 2
    %v2458 = vrot.slane %v90, 3
    %v2459 = vrot.slane %v90, 4
    %v2460 = vrot.slane %v90, 5
    %v2461 = vrot.slane %v90, 6
    %2462 = vst [vmem:[#allocation1] ss:$9 sm:$0xff] %v29
    %s2463 = scalar_lea.vmem [#allocation1], 1
    %2464 = vst [vmem:[%s2463] ss:$9 sm:$0xff] %v164
    %s2465 = scalar_lea.vmem [#allocation1], 2
    %2466 = vst [vmem:[%s2465] ss:$9 sm:$0xff] %v165
    %s2467 = scalar_lea.vmem [#allocation1], 3
    %2468 = vst [vmem:[%s2467] ss:$9 sm:$0xff] %v166
    %s2469 = scalar_lea.vmem [#allocation1], 4
    %2470 = vst [vmem:[%s2469] ss:$9 sm:$0xff] %v167
    %s2471 = scalar_lea.vmem [#allocation1], 5
    %2472 = vst [vmem:[%s2471] ss:$9 sm:$0xff] %v168
    %s2473 = scalar_lea.vmem [#allocation1], 6
    %2474 = vst [vmem:[%s2473] ss:$9 sm:$0xff] %v169
    %s2475 = scalar_lea.vmem [#allocation1], 7
    %2476 = vst [vmem:[%s2475] ss:$9 sm:$0xff] %v170
    %v2477 = vld [vmem:[#allocation1] sm:$0xff]
    %2478 = vst [vmem:[#allocation1] ss:$9 sm:$0xff] %v30
    %2479 = vst [vmem:[%s2463] ss:$9 sm:$0xff] %v171
    %2480 = vst [vmem:[%s2465] ss:$9 sm:$0xff] %v172
    %2481 = vst [vmem:[%s2467] ss:$9 sm:$0xff] %v173
    %2482 = vst [vmem:[%s2469] ss:$9 sm:$0xff] %v174
    %2483 = vst [vmem:[%s2471] ss:$9 sm:$0xff] %v175
    %2484 = vst [vmem:[%s2473] ss:$9 sm:$0xff] %v176
    %2485 = vst [vmem:[%s2475] ss:$9 sm:$0xff] %v31
    %v2486 = vld [vmem:[#allocation1] sm:$0xff]
    %2487 = vst [vmem:[#allocation1] ss:$9 sm:$0xff] %v177
    %2488 = vst [vmem:[%s2463] ss:$9 sm:$0xff] %v178
    %2489 = vst [vmem:[%s2465] ss:$9 sm:$0xff] %v179
    %2490 = vst [vmem:[%s2467] ss:$9 sm:$0xff] %v180
    %2491 = vst [vmem:[%s2469] ss:$9 sm:$0xff] %v181
    %2492 = vst [vmem:[%s2471] ss:$9 sm:$0xff] %v182
    %2493 = vst [vmem:[%s2473] ss:$9 sm:$0xff] %v183
    %2494 = vst [vmem:[%s2475] ss:$9 sm:$0xff] %v32
    %v2495 = vld [vmem:[#allocation1] sm:$0xff]
    %2496 = vst [vmem:[#allocation1] ss:$9 sm:$0xff] %v184
    %2497 = vst [vmem:[%s2463] ss:$9 sm:$0xff] %v185
    %2498 = vst [vmem:[%s2465] ss:$9 sm:$0xff] %v186
    %2499 = vst [vmem:[%s2467] ss:$9 sm:$0xff] %v187
    %2500 = vst [vmem:[%s2469] ss:$9 sm:$0xff] %v188
    %2501 = vst [vmem:[%s2471] ss:$9 sm:$0xff] %v189
    %2502 = vst [vmem:[%s2473] ss:$9 sm:$0xff] %v33
    %2503 = vst [vmem:[%s2475] ss:$9 sm:$0xff] %v190
    %v2504 = vld [vmem:[#allocation1] sm:$0xff]
    %2505 = vst [vmem:[#allocation1] ss:$9 sm:$0xff] %v191
    %2506 = vst [vmem:[%s2463] ss:$9 sm:$0xff] %v192
    %2507 = vst [vmem:[%s2465] ss:$9 sm:$0xff] %v193
    %2508 = vst [vmem:[%s2467] ss:$9 sm:$0xff] %v194
    %2509 = vst [vmem:[%s2469] ss:$9 sm:$0xff] %v195
    %2510 = vst [vmem:[%s2471] ss:$9 sm:$0xff] %v196
    %2511 = vst [vmem:[%s2473] ss:$9 sm:$0xff] %v34
    %2512 = vst [vmem:[%s2475] ss:$9 sm:$0xff] %v197
    %v2513 = vld [vmem:[#allocation1] sm:$0xff]
    %2514 = vst [vmem:[#allocation1] ss:$9 sm:$0xff] %v198
    %2515 = vst [vmem:[%s2463] ss:$9 sm:$0xff] %v199
    %2516 = vst [vmem:[%s2465] ss:$9 sm:$0xff] %v200
    %2517 = vst [vmem:[%s2467] ss:$9 sm:$0xff] %v201
    %2518 = vst [vmem:[%s2469] ss:$9 sm:$0xff] %v202
    %2519 = vst [vmem:[%s2471] ss:$9 sm:$0xff] %v35
    %2520 = vst [vmem:[%s2473] ss:$9 sm:$0xff] %v203
    %2521 = vst [vmem:[%s2475] ss:$9 sm:$0xff] %v204
    %v2522 = vld [vmem:[#allocation1] sm:$0xff]
    %2523 = vst [vmem:[#allocation1] ss:$9 sm:$0xff] %v205
    %2524 = vst [vmem:[%s2463] ss:$9 sm:$0xff] %v206
    %2525 = vst [vmem:[%s2465] ss:$9 sm:$0xff] %v207
    %2526 = vst [vmem:[%s2467] ss:$9 sm:$0xff] %v208
    %2527 = vst [vmem:[%s2469] ss:$9 sm:$0xff] %v209
    %2528 = vst [vmem:[%s2471] ss:$9 sm:$0xff] %v36
    %2529 = vst [vmem:[%s2473] ss:$9 sm:$0xff] %v210
    %2530 = vst [vmem:[%s2475] ss:$9 sm:$0xff] %v211
    %v2531 = vld [vmem:[#allocation1] sm:$0xff]
    %2532 = vst [vmem:[#allocation1] ss:$9 sm:$0xff] %v212
    %2533 = vst [vmem:[%s2463] ss:$9 sm:$0xff] %v213
    %2534 = vst [vmem:[%s2465] ss:$9 sm:$0xff] %v214
    %2535 = vst [vmem:[%s2467] ss:$9 sm:$0xff] %v215
    %2536 = vst [vmem:[%s2469] ss:$9 sm:$0xff] %v37
    %2537 = vst [vmem:[%s2471] ss:$9 sm:$0xff] %v216
    %2538 = vst [vmem:[%s2473] ss:$9 sm:$0xff] %v217
    %2539 = vst [vmem:[%s2475] ss:$9 sm:$0xff] %v218
    %v2540 = vld [vmem:[#allocation1] sm:$0xff]
    %2541 = vst [vmem:[#allocation1] ss:$9 sm:$0xff] %v219
    %2542 = vst [vmem:[%s2463] ss:$9 sm:$0xff] %v220
    %2543 = vst [vmem:[%s2465] ss:$9 sm:$0xff] %v221
    %2544 = vst [vmem:[%s2467] ss:$9 sm:$0xff] %v222
    %2545 = vst [vmem:[%s2469] ss:$9 sm:$0xff] %v38
    %2546 = vst [vmem:[%s2471] ss:$9 sm:$0xff] %v223
    %2547 = vst [vmem:[%s2473] ss:$9 sm:$0xff] %v224
    %2548 = vst [vmem:[%s2475] ss:$9 sm:$0xff] %v225
    %v2549 = vld [vmem:[#allocation1] sm:$0xff]
    %2550 = vst [vmem:[#allocation1] ss:$9 sm:$0xff] %v226
    %2551 = vst [vmem:[%s2463] ss:$9 sm:$0xff] %v227
    %2552 = vst [vmem:[%s2465] ss:$9 sm:$0xff] %v228
    %2553 = vst [vmem:[%s2467] ss:$9 sm:$0xff] %v39
    %2554 = vst [vmem:[%s2469] ss:$9 sm:$0xff] %v229
    %2555 = vst [vmem:[%s2471] ss:$9 sm:$0xff] %v230
    %2556 = vst [vmem:[%s2473] ss:$9 sm:$0xff] %v231
    %2557 = vst [vmem:[%s2475] ss:$9 sm:$0xff] %v232
    %v2558 = vld [vmem:[#allocation1] sm:$0xff]
    %2559 = vst [vmem:[#allocation1] ss:$9 sm:$0xff] %v233
    %2560 = vst [vmem:[%s2463] ss:$9 sm:$0xff] %v234
    %2561 = vst [vmem:[%s2465] ss:$9 sm:$0xff] %v235
    %2562 = vst [vmem:[%s2467] ss:$9 sm:$0xff] %v40
    %2563 = vst [vmem:[%s2469] ss:$9 sm:$0xff] %v236
    %2564 = vst [vmem:[%s2471] ss:$9 sm:$0xff] %v237
    %2565 = vst [vmem:[%s2473] ss:$9 sm:$0xff] %v238
    %2566 = vst [vmem:[%s2475] ss:$9 sm:$0xff] %v239
    %v2567 = vld [vmem:[#allocation1] sm:$0xff]
    %2568 = vst [vmem:[#allocation1] ss:$9 sm:$0xff] %v240
    %2569 = vst [vmem:[%s2463] ss:$9 sm:$0xff] %v241
    %2570 = vst [vmem:[%s2465] ss:$9 sm:$0xff] %v41
    %2571 = vst [vmem:[%s2467] ss:$9 sm:$0xff] %v242
    %2572 = vst [vmem:[%s2469] ss:$9 sm:$0xff] %v243
    %2573 = vst [vmem:[%s2471] ss:$9 sm:$0xff] %v244
    %2574 = vst [vmem:[%s2473] ss:$9 sm:$0xff] %v245
    %2575 = vst [vmem:[%s2475] ss:$9 sm:$0xff] %v246
    %v2576 = vld [vmem:[#allocation1] sm:$0xff]
    %2577 = vst [vmem:[#allocation1] ss:$9 sm:$0xff] %v247
    %2578 = vst [vmem:[%s2463] ss:$9 sm:$0xff] %v248
    %2579 = vst [vmem:[%s2465] ss:$9 sm:$0xff] %v42
    %2580 = vst [vmem:[%s2467] ss:$9 sm:$0xff] %v249
    %2581 = vst [vmem:[%s2469] ss:$9 sm:$0xff] %v250
    %2582 = vst [vmem:[%s2471] ss:$9 sm:$0xff] %v251
    %2583 = vst [vmem:[%s2473] ss:$9 sm:$0xff] %v252
    %2584 = vst [vmem:[%s2475] ss:$9 sm:$0xff] %v253
    %v2585 = vld [vmem:[#allocation1] sm:$0xff]
    %2586 = vst [vmem:[#allocation1] ss:$9 sm:$0xff] %v254
    %2587 = vst [vmem:[%s2463] ss:$9 sm:$0xff] %v43
    %2588 = vst [vmem:[%s2465] ss:$9 sm:$0xff] %v255
    %2589 = vst [vmem:[%s2467] ss:$9 sm:$0xff] %v256
    %2590 = vst [vmem:[%s2469] ss:$9 sm:$0xff] %v257
    %2591 = vst [vmem:[%s2471] ss:$9 sm:$0xff] %v258
    %2592 = vst [vmem:[%s2473] ss:$9 sm:$0xff] %v259
    %2593 = vst [vmem:[%s2475] ss:$9 sm:$0xff] %v260
    %v2594 = vld [vmem:[#allocation1] sm:$0xff]
    %2595 = vst [vmem:[#allocation1] ss:$9 sm:$0xff] %v261
    %2596 = vst [vmem:[%s2463] ss:$9 sm:$0xff] %v44
    %2597 = vst [vmem:[%s2465] ss:$9 sm:$0xff] %v262
    %2598 = vst [vmem:[%s2467] ss:$9 sm:$0xff] %v263
    %2599 = vst [vmem:[%s2469] ss:$9 sm:$0xff] %v264
    %2600 = vst [vmem:[%s2471] ss:$9 sm:$0xff] %v265
    %2601 = vst [vmem:[%s2473] ss:$9 sm:$0xff] %v266
    %2602 = vst [vmem:[%s2475] ss:$9 sm:$0xff] %v267
    %v2603 = vld [vmem:[#allocation1] sm:$0xff]
    %2604 = vst [vmem:[#allocation1] ss:$9 sm:$0xff] %v45
    %2605 = vst [vmem:[%s2463] ss:$9 sm:$0xff] %v268
    %2606 = vst [vmem:[%s2465] ss:$9 sm:$0xff] %v269
    %2607 = vst [vmem:[%s2467] ss:$9 sm:$0xff] %v270
    %2608 = vst [vmem:[%s2469] ss:$9 sm:$0xff] %v271
    %2609 = vst [vmem:[%s2471] ss:$9 sm:$0xff] %v272
    %2610 = vst [vmem:[%s2473] ss:$9 sm:$0xff] %v273
    %2611 = vst [vmem:[%s2475] ss:$9 sm:$0xff] %v274
    %v2612 = vld [vmem:[#allocation1] sm:$0xff]
    %2613 = vst [vmem:[#allocation1] ss:$9 sm:$0xff] %v46
    %2614 = vst [vmem:[%s2463] ss:$9 sm:$0xff] %v275
    %2615 = vst [vmem:[%s2465] ss:$9 sm:$0xff] %v276
    %2616 = vst [vmem:[%s2467] ss:$9 sm:$0xff] %v277
    %2617 = vst [vmem:[%s2469] ss:$9 sm:$0xff] %v278
    %2618 = vst [vmem:[%s2471] ss:$9 sm:$0xff] %v279
    %2619 = vst [vmem:[%s2473] ss:$9 sm:$0xff] %v280
    %2620 = vst [vmem:[%s2475] ss:$9 sm:$0xff] %v47
    %v2621 = vld [vmem:[#allocation1] sm:$0xff]
    %2622 = vst [vmem:[#allocation1] ss:$9 sm:$0xff] %v281
    %2623 = vst [vmem:[%s2463] ss:$9 sm:$0xff] %v282
    %2624 = vst [vmem:[%s2465] ss:$9 sm:$0xff] %v283
    %2625 = vst [vmem:[%s2467] ss:$9 sm:$0xff] %v284
    %2626 = vst [vmem:[%s2469] ss:$9 sm:$0xff] %v285
    %2627 = vst [vmem:[%s2471] ss:$9 sm:$0xff] %v286
    %2628 = vst [vmem:[%s2473] ss:$9 sm:$0xff] %v287
    %2629 = vst [vmem:[%s2475] ss:$9 sm:$0xff] %v48
    %v2630 = vld [vmem:[#allocation1] sm:$0xff]
    %2631 = vst [vmem:[#allocation1] ss:$9 sm:$0xff] %v288
    %2632 = vst [vmem:[%s2463] ss:$9 sm:$0xff] %v289
    %2633 = vst [vmem:[%s2465] ss:$9 sm:$0xff] %v290
    %2634 = vst [vmem:[%s2467] ss:$9 sm:$0xff] %v291
    %2635 = vst [vmem:[%s2469] ss:$9 sm:$0xff] %v292
    %2636 = vst [vmem:[%s2471] ss:$9 sm:$0xff] %v293
    %2637 = vst [vmem:[%s2473] ss:$9 sm:$0xff] %v49
    %2638 = vst [vmem:[%s2475] ss:$9 sm:$0xff] %v294
    %v2639 = vld [vmem:[#allocation1] sm:$0xff]
    %2640 = vst [vmem:[#allocation1] ss:$9 sm:$0xff] %v295
    %2641 = vst [vmem:[%s2463] ss:$9 sm:$0xff] %v296
    %2642 = vst [vmem:[%s2465] ss:$9 sm:$0xff] %v297
    %2643 = vst [vmem:[%s2467] ss:$9 sm:$0xff] %v298
    %2644 = vst [vmem:[%s2469] ss:$9 sm:$0xff] %v299
    %2645 = vst [vmem:[%s2471] ss:$9 sm:$0xff] %v300
    %2646 = vst [vmem:[%s2473] ss:$9 sm:$0xff] %v50
    %2647 = vst [vmem:[%s2475] ss:$9 sm:$0xff] %v301
    %v2648 = vld [vmem:[#allocation1] sm:$0xff]
    %2649 = vst [vmem:[#allocation1] ss:$9 sm:$0xff] %v302
    %2650 = vst [vmem:[%s2463] ss:$9 sm:$0xff] %v303
    %2651 = vst [vmem:[%s2465] ss:$9 sm:$0xff] %v304
    %2652 = vst [vmem:[%s2467] ss:$9 sm:$0xff] %v305
    %2653 = vst [vmem:[%s2469] ss:$9 sm:$0xff] %v306
    %2654 = vst [vmem:[%s2471] ss:$9 sm:$0xff] %v51
    %2655 = vst [vmem:[%s2473] ss:$9 sm:$0xff] %v307
    %2656 = vst [vmem:[%s2475] ss:$9 sm:$0xff] %v308
    %v2657 = vld [vmem:[#allocation1] sm:$0xff]
    %2658 = vst [vmem:[#allocation1] ss:$9 sm:$0xff] %v309
    %2659 = vst [vmem:[%s2463] ss:$9 sm:$0xff] %v310
    %2660 = vst [vmem:[%s2465] ss:$9 sm:$0xff] %v311
    %2661 = vst [vmem:[%s2467] ss:$9 sm:$0xff] %v312
    %2662 = vst [vmem:[%s2469] ss:$9 sm:$0xff] %v313
    %2663 = vst [vmem:[%s2471] ss:$9 sm:$0xff] %v52
    %2664 = vst [vmem:[%s2473] ss:$9 sm:$0xff] %v314
    %2665 = vst [vmem:[%s2475] ss:$9 sm:$0xff] %v315
    %v2666 = vld [vmem:[#allocation1] sm:$0xff]
    %2667 = vst [vmem:[#allocation1] ss:$9 sm:$0xff] %v316
    %2668 = vst [vmem:[%s2463] ss:$9 sm:$0xff] %v317
    %2669 = vst [vmem:[%s2465] ss:$9 sm:$0xff] %v318
    %2670 = vst [vmem:[%s2467] ss:$9 sm:$0xff] %v319
    %2671 = vst [vmem:[%s2469] ss:$9 sm:$0xff] %v53
    %2672 = vst [vmem:[%s2471] ss:$9 sm:$0xff] %v320
    %2673 = vst [vmem:[%s2473] ss:$9 sm:$0xff] %v321
    %2674 = vst [vmem:[%s2475] ss:$9 sm:$0xff] %v322
    %v2675 = vld [vmem:[#allocation1] sm:$0xff]
    %2676 = vst [vmem:[#allocation1] ss:$9 sm:$0xff] %v323
    %2677 = vst [vmem:[%s2463] ss:$9 sm:$0xff] %v324
    %2678 = vst [vmem:[%s2465] ss:$9 sm:$0xff] %v325
    %2679 = vst [vmem:[%s2467] ss:$9 sm:$0xff] %v326
    %2680 = vst [vmem:[%s2469] ss:$9 sm:$0xff] %v54
    %2681 = vst [vmem:[%s2471] ss:$9 sm:$0xff] %v327
    %2682 = vst [vmem:[%s2473] ss:$9 sm:$0xff] %v328
    %2683 = vst [vmem:[%s2475] ss:$9 sm:$0xff] %v329
    %v2684 = vld [vmem:[#allocation1] sm:$0xff]
    %2685 = vst [vmem:[#allocation1] ss:$9 sm:$0xff] %v330
    %2686 = vst [vmem:[%s2463] ss:$9 sm:$0xff] %v331
    %2687 = vst [vmem:[%s2465] ss:$9 sm:$0xff] %v332
    %2688 = vst [vmem:[%s2467] ss:$9 sm:$0xff] %v55
    %2689 = vst [vmem:[%s2469] ss:$9 sm:$0xff] %v333
    %2690 = vst [vmem:[%s2471] ss:$9 sm:$0xff] %v334
    %2691 = vst [vmem:[%s2473] ss:$9 sm:$0xff] %v335
    %2692 = vst [vmem:[%s2475] ss:$9 sm:$0xff] %v336
    %v2693 = vld [vmem:[#allocation1] sm:$0xff]
    %2694 = vst [vmem:[#allocation1] ss:$9 sm:$0xff] %v337
    %2695 = vst [vmem:[%s2463] ss:$9 sm:$0xff] %v338
    %2696 = vst [vmem:[%s2465] ss:$9 sm:$0xff] %v339
    %2697 = vst [vmem:[%s2467] ss:$9 sm:$0xff] %v56
    %2698 = vst [vmem:[%s2469] ss:$9 sm:$0xff] %v340
    %2699 = vst [vmem:[%s2471] ss:$9 sm:$0xff] %v341
    %2700 = vst [vmem:[%s2473] ss:$9 sm:$0xff] %v342
    %2701 = vst [vmem:[%s2475] ss:$9 sm:$0xff] %v343
    %v2702 = vld [vmem:[#allocation1] sm:$0xff]
    %2703 = vst [vmem:[#allocation1] ss:$9 sm:$0xff] %v344
    %2704 = vst [vmem:[%s2463] ss:$9 sm:$0xff] %v345
    %2705 = vst [vmem:[%s2465] ss:$9 sm:$0xff] %v57
    %2706 = vst [vmem:[%s2467] ss:$9 sm:$0xff] %v2436
    %2707 = vst [vmem:[%s2469] ss:$9 sm:$0xff] %v2437
    %2708 = vst [vmem:[%s2471] ss:$9 sm:$0xff] %v2438
    %2709 = vst [vmem:[%s2473] ss:$9 sm:$0xff] %v2439
    %2710 = vst [vmem:[%s2475] ss:$9 sm:$0xff] %v2440
    %v2711 = vld [vmem:[#allocation1] sm:$0xff]
    %2712 = vst [vmem:[#allocation1] ss:$9 sm:$0xff] %v2441
    %2713 = vst [vmem:[%s2463] ss:$9 sm:$0xff] %v2442
    %2714 = vst [vmem:[%s2465] ss:$9 sm:$0xff] %v58
    %2715 = vst [vmem:[%s2467] ss:$9 sm:$0xff] %v2443
    %2716 = vst [vmem:[%s2469] ss:$9 sm:$0xff] %v2444
    %2717 = vst [vmem:[%s2471] ss:$9 sm:$0xff] %v2445
    %2718 = vst [vmem:[%s2473] ss:$9 sm:$0xff] %v2446
    %2719 = vst [vmem:[%s2475] ss:$9 sm:$0xff] %v2447
    %v2720 = vld [vmem:[#allocation1] sm:$0xff]
    %2721 = vst [vmem:[#allocation1] ss:$9 sm:$0xff] %v2448
    %2722 = vst [vmem:[%s2463] ss:$9 sm:$0xff] %v61
    %2723 = vst [vmem:[%s2465] ss:$9 sm:$0xff] %v359
    %2724 = vst [vmem:[%s2467] ss:$9 sm:$0xff] %v360
    %2725 = vst [vmem:[%s2469] ss:$9 sm:$0xff] %v361
    %2726 = vst [vmem:[%s2471] ss:$9 sm:$0xff] %v362
    %2727 = vst [vmem:[%s2473] ss:$9 sm:$0xff] %v363
    %2728 = vst [vmem:[%s2475] ss:$9 sm:$0xff] %v364
    %v2729 = vld [vmem:[#allocation1] sm:$0xff]
    %2730 = vst [vmem:[#allocation1] ss:$9 sm:$0xff] %v365
    %2731 = vst [vmem:[%s2463] ss:$9 sm:$0xff] %v62
    %2732 = vst [vmem:[%s2465] ss:$9 sm:$0xff] %v366
    %2733 = vst [vmem:[%s2467] ss:$9 sm:$0xff] %v367
    %2734 = vst [vmem:[%s2469] ss:$9 sm:$0xff] %v368
    %2735 = vst [vmem:[%s2471] ss:$9 sm:$0xff] %v369
    %2736 = vst [vmem:[%s2473] ss:$9 sm:$0xff] %v370
    %2737 = vst [vmem:[%s2475] ss:$9 sm:$0xff] %v371
    %v2738 = vld [vmem:[#allocation1] sm:$0xff]
    %2739 = vst [vmem:[#allocation1] ss:$9 sm:$0xff] %v63
    %2740 = vst [vmem:[%s2463] ss:$9 sm:$0xff] %v372
    %2741 = vst [vmem:[%s2465] ss:$9 sm:$0xff] %v373
    %2742 = vst [vmem:[%s2467] ss:$9 sm:$0xff] %v374
    %2743 = vst [vmem:[%s2469] ss:$9 sm:$0xff] %v375
    %2744 = vst [vmem:[%s2471] ss:$9 sm:$0xff] %v376
    %2745 = vst [vmem:[%s2473] ss:$9 sm:$0xff] %v377
    %2746 = vst [vmem:[%s2475] ss:$9 sm:$0xff] %v378
    %v2747 = vld [vmem:[#allocation1] sm:$0xff]
    %2748 = vst [vmem:[#allocation1] ss:$9 sm:$0xff] %v64
    %2749 = vst [vmem:[%s2463] ss:$9 sm:$0xff] %v379
    %2750 = vst [vmem:[%s2465] ss:$9 sm:$0xff] %v380
    %2751 = vst [vmem:[%s2467] ss:$9 sm:$0xff] %v381
    %2752 = vst [vmem:[%s2469] ss:$9 sm:$0xff] %v382
    %2753 = vst [vmem:[%s2471] ss:$9 sm:$0xff] %v383
    %2754 = vst [vmem:[%s2473] ss:$9 sm:$0xff] %v384
    %2755 = vst [vmem:[%s2475] ss:$9 sm:$0xff] %v65
    %v2756 = vld [vmem:[#allocation1] sm:$0xff]
    %2757 = vst [vmem:[#allocation1] ss:$9 sm:$0xff] %v385
    %2758 = vst [vmem:[%s2463] ss:$9 sm:$0xff] %v386
    %2759 = vst [vmem:[%s2465] ss:$9 sm:$0xff] %v387
    %2760 = vst [vmem:[%s2467] ss:$9 sm:$0xff] %v388
    %2761 = vst [vmem:[%s2469] ss:$9 sm:$0xff] %v389
    %2762 = vst [vmem:[%s2471] ss:$9 sm:$0xff] %v390
    %2763 = vst [vmem:[%s2473] ss:$9 sm:$0xff] %v391
    %2764 = vst [vmem:[%s2475] ss:$9 sm:$0xff] %v66
    %v2765 = vld [vmem:[#allocation1] sm:$0xff]
    %2766 = vst [vmem:[#allocation1] ss:$9 sm:$0xff] %v392
    %2767 = vst [vmem:[%s2463] ss:$9 sm:$0xff] %v393
    %2768 = vst [vmem:[%s2465] ss:$9 sm:$0xff] %v394
    %2769 = vst [vmem:[%s2467] ss:$9 sm:$0xff] %v395
    %2770 = vst [vmem:[%s2469] ss:$9 sm:$0xff] %v396
    %2771 = vst [vmem:[%s2471] ss:$9 sm:$0xff] %v397
    %2772 = vst [vmem:[%s2473] ss:$9 sm:$0xff] %v67
    %2773 = vst [vmem:[%s2475] ss:$9 sm:$0xff] %v398
    %v2774 = vld [vmem:[#allocation1] sm:$0xff]
    %2775 = vst [vmem:[#allocation1] ss:$9 sm:$0xff] %v399
    %2776 = vst [vmem:[%s2463] ss:$9 sm:$0xff] %v400
    %2777 = vst [vmem:[%s2465] ss:$9 sm:$0xff] %v401
    %2778 = vst [vmem:[%s2467] ss:$9 sm:$0xff] %v402
    %2779 = vst [vmem:[%s2469] ss:$9 sm:$0xff] %v403
    %2780 = vst [vmem:[%s2471] ss:$9 sm:$0xff] %v404
    %2781 = vst [vmem:[%s2473] ss:$9 sm:$0xff] %v68
    %2782 = vst [vmem:[%s2475] ss:$9 sm:$0xff] %v405
    %v2783 = vld [vmem:[#allocation1] sm:$0xff]
    %2784 = vst [vmem:[#allocation1] ss:$9 sm:$0xff] %v406
    %2785 = vst [vmem:[%s2463] ss:$9 sm:$0xff] %v407
    %2786 = vst [vmem:[%s2465] ss:$9 sm:$0xff] %v408
    %2787 = vst [vmem:[%s2467] ss:$9 sm:$0xff] %v409
    %2788 = vst [vmem:[%s2469] ss:$9 sm:$0xff] %v410
    %2789 = vst [vmem:[%s2471] ss:$9 sm:$0xff] %v69
    %2790 = vst [vmem:[%s2473] ss:$9 sm:$0xff] %v411
    %2791 = vst [vmem:[%s2475] ss:$9 sm:$0xff] %v412
    %v2792 = vld [vmem:[#allocation1] sm:$0xff]
    %2793 = vst [vmem:[#allocation1] ss:$9 sm:$0xff] %v413
    %2794 = vst [vmem:[%s2463] ss:$9 sm:$0xff] %v414
    %2795 = vst [vmem:[%s2465] ss:$9 sm:$0xff] %v415
    %2796 = vst [vmem:[%s2467] ss:$9 sm:$0xff] %v416
    %2797 = vst [vmem:[%s2469] ss:$9 sm:$0xff] %v417
    %2798 = vst [vmem:[%s2471] ss:$9 sm:$0xff] %v70
    %2799 = vst [vmem:[%s2473] ss:$9 sm:$0xff] %v418
    %2800 = vst [vmem:[%s2475] ss:$9 sm:$0xff] %v419
    %v2801 = vld [vmem:[#allocation1] sm:$0xff]
    %2802 = vst [vmem:[#allocation1] ss:$9 sm:$0xff] %v420
    %2803 = vst [vmem:[%s2463] ss:$9 sm:$0xff] %v421
    %2804 = vst [vmem:[%s2465] ss:$9 sm:$0xff] %v422
    %2805 = vst [vmem:[%s2467] ss:$9 sm:$0xff] %v423
    %2806 = vst [vmem:[%s2469] ss:$9 sm:$0xff] %v71
    %2807 = vst [vmem:[%s2471] ss:$9 sm:$0xff] %v424
    %2808 = vst [vmem:[%s2473] ss:$9 sm:$0xff] %v425
    %2809 = vst [vmem:[%s2475] ss:$9 sm:$0xff] %v426
    %v2810 = vld [vmem:[#allocation1] sm:$0xff]
    %2811 = vst [vmem:[#allocation1] ss:$9 sm:$0xff] %v427
    %2812 = vst [vmem:[%s2463] ss:$9 sm:$0xff] %v428
    %2813 = vst [vmem:[%s2465] ss:$9 sm:$0xff] %v429
    %2814 = vst [vmem:[%s2467] ss:$9 sm:$0xff] %v430
    %2815 = vst [vmem:[%s2469] ss:$9 sm:$0xff] %v72
    %2816 = vst [vmem:[%s2471] ss:$9 sm:$0xff] %v431
    %2817 = vst [vmem:[%s2473] ss:$9 sm:$0xff] %v432
    %2818 = vst [vmem:[%s2475] ss:$9 sm:$0xff] %v433
    %v2819 = vld [vmem:[#allocation1] sm:$0xff]
    %2820 = vst [vmem:[#allocation1] ss:$9 sm:$0xff] %v434
    %2821 = vst [vmem:[%s2463] ss:$9 sm:$0xff] %v435
    %2822 = vst [vmem:[%s2465] ss:$9 sm:$0xff] %v436
    %2823 = vst [vmem:[%s2467] ss:$9 sm:$0xff] %v73
    %2824 = vst [vmem:[%s2469] ss:$9 sm:$0xff] %v437
    %2825 = vst [vmem:[%s2471] ss:$9 sm:$0xff] %v438
    %2826 = vst [vmem:[%s2473] ss:$9 sm:$0xff] %v439
    %2827 = vst [vmem:[%s2475] ss:$9 sm:$0xff] %v440
    %v2828 = vld [vmem:[#allocation1] sm:$0xff]
    %2829 = vst [vmem:[#allocation1] ss:$9 sm:$0xff] %v441
    %2830 = vst [vmem:[%s2463] ss:$9 sm:$0xff] %v442
    %2831 = vst [vmem:[%s2465] ss:$9 sm:$0xff] %v443
    %2832 = vst [vmem:[%s2467] ss:$9 sm:$0xff] %v74
    %2833 = vst [vmem:[%s2469] ss:$9 sm:$0xff] %v444
    %2834 = vst [vmem:[%s2471] ss:$9 sm:$0xff] %v445
    %2835 = vst [vmem:[%s2473] ss:$9 sm:$0xff] %v446
    %2836 = vst [vmem:[%s2475] ss:$9 sm:$0xff] %v447
    %v2837 = vld [vmem:[#allocation1] sm:$0xff]
    %2838 = vst [vmem:[#allocation1] ss:$9 sm:$0xff] %v448
    %2839 = vst [vmem:[%s2463] ss:$9 sm:$0xff] %v449
    %2840 = vst [vmem:[%s2465] ss:$9 sm:$0xff] %v75
    %2841 = vst [vmem:[%s2467] ss:$9 sm:$0xff] %v450
    %2842 = vst [vmem:[%s2469] ss:$9 sm:$0xff] %v451
    %2843 = vst [vmem:[%s2471] ss:$9 sm:$0xff] %v452
    %2844 = vst [vmem:[%s2473] ss:$9 sm:$0xff] %v453
    %2845 = vst [vmem:[%s2475] ss:$9 sm:$0xff] %v454
    %v2846 = vld [vmem:[#allocation1] sm:$0xff]
    %2847 = vst [vmem:[#allocation1] ss:$9 sm:$0xff] %v455
    %2848 = vst [vmem:[%s2463] ss:$9 sm:$0xff] %v456
    %2849 = vst [vmem:[%s2465] ss:$9 sm:$0xff] %v76
    %2850 = vst [vmem:[%s2467] ss:$9 sm:$0xff] %v457
    %2851 = vst [vmem:[%s2469] ss:$9 sm:$0xff] %v458
    %2852 = vst [vmem:[%s2471] ss:$9 sm:$0xff] %v459
    %2853 = vst [vmem:[%s2473] ss:$9 sm:$0xff] %v460
    %2854 = vst [vmem:[%s2475] ss:$9 sm:$0xff] %v461
    %v2855 = vld [vmem:[#allocation1] sm:$0xff]
    %2856 = vst [vmem:[#allocation1] ss:$9 sm:$0xff] %v462
    %2857 = vst [vmem:[%s2463] ss:$9 sm:$0xff] %v77
    %2858 = vst [vmem:[%s2465] ss:$9 sm:$0xff] %v463
    %2859 = vst [vmem:[%s2467] ss:$9 sm:$0xff] %v464
    %2860 = vst [vmem:[%s2469] ss:$9 sm:$0xff] %v465
    %2861 = vst [vmem:[%s2471] ss:$9 sm:$0xff] %v466
    %2862 = vst [vmem:[%s2473] ss:$9 sm:$0xff] %v467
    %2863 = vst [vmem:[%s2475] ss:$9 sm:$0xff] %v468
    %v2864 = vld [vmem:[#allocation1] sm:$0xff]
    %2865 = vst [vmem:[#allocation1] ss:$9 sm:$0xff] %v469
    %2866 = vst [vmem:[%s2463] ss:$9 sm:$0xff] %v78
    %2867 = vst [vmem:[%s2465] ss:$9 sm:$0xff] %v470
    %2868 = vst [vmem:[%s2467] ss:$9 sm:$0xff] %v471
    %2869 = vst [vmem:[%s2469] ss:$9 sm:$0xff] %v472
    %2870 = vst [vmem:[%s2471] ss:$9 sm:$0xff] %v473
    %2871 = vst [vmem:[%s2473] ss:$9 sm:$0xff] %v474
    %2872 = vst [vmem:[%s2475] ss:$9 sm:$0xff] %v475
    %v2873 = vld [vmem:[#allocation1] sm:$0xff]
    %2874 = vst [vmem:[#allocation1] ss:$9 sm:$0xff] %v79
    %2875 = vst [vmem:[%s2463] ss:$9 sm:$0xff] %v476
    %2876 = vst [vmem:[%s2465] ss:$9 sm:$0xff] %v477
    %2877 = vst [vmem:[%s2467] ss:$9 sm:$0xff] %v478
    %2878 = vst [vmem:[%s2469] ss:$9 sm:$0xff] %v479
    %2879 = vst [vmem:[%s2471] ss:$9 sm:$0xff] %v480
    %2880 = vst [vmem:[%s2473] ss:$9 sm:$0xff] %v481
    %2881 = vst [vmem:[%s2475] ss:$9 sm:$0xff] %v482
    %v2882 = vld [vmem:[#allocation1] sm:$0xff]
    %2883 = vst [vmem:[#allocation1] ss:$9 sm:$0xff] %v80
    %2884 = vst [vmem:[%s2463] ss:$9 sm:$0xff] %v483
    %2885 = vst [vmem:[%s2465] ss:$9 sm:$0xff] %v484
    %2886 = vst [vmem:[%s2467] ss:$9 sm:$0xff] %v485
    %2887 = vst [vmem:[%s2469] ss:$9 sm:$0xff] %v486
    %2888 = vst [vmem:[%s2471] ss:$9 sm:$0xff] %v487
    %2889 = vst [vmem:[%s2473] ss:$9 sm:$0xff] %v488
    %2890 = vst [vmem:[%s2475] ss:$9 sm:$0xff] %v81
    %v2891 = vld [vmem:[#allocation1] sm:$0xff]
    %2892 = vst [vmem:[#allocation1] ss:$9 sm:$0xff] %v489
    %2893 = vst [vmem:[%s2463] ss:$9 sm:$0xff] %v490
    %2894 = vst [vmem:[%s2465] ss:$9 sm:$0xff] %v491
    %2895 = vst [vmem:[%s2467] ss:$9 sm:$0xff] %v492
    %2896 = vst [vmem:[%s2469] ss:$9 sm:$0xff] %v493
    %2897 = vst [vmem:[%s2471] ss:$9 sm:$0xff] %v494
    %2898 = vst [vmem:[%s2473] ss:$9 sm:$0xff] %v495
    %2899 = vst [vmem:[%s2475] ss:$9 sm:$0xff] %v82
    %v2900 = vld [vmem:[#allocation1] sm:$0xff]
    %2901 = vst [vmem:[#allocation1] ss:$9 sm:$0xff] %v496
    %2902 = vst [vmem:[%s2463] ss:$9 sm:$0xff] %v497
    %2903 = vst [vmem:[%s2465] ss:$9 sm:$0xff] %v498
    %2904 = vst [vmem:[%s2467] ss:$9 sm:$0xff] %v499
    %2905 = vst [vmem:[%s2469] ss:$9 sm:$0xff] %v500
    %2906 = vst [vmem:[%s2471] ss:$9 sm:$0xff] %v501
    %2907 = vst [vmem:[%s2473] ss:$9 sm:$0xff] %v83
    %2908 = vst [vmem:[%s2475] ss:$9 sm:$0xff] %v502
    %v2909 = vld [vmem:[#allocation1] sm:$0xff]
    %2910 = vst [vmem:[#allocation1] ss:$9 sm:$0xff] %v503
    %2911 = vst [vmem:[%s2463] ss:$9 sm:$0xff] %v504
    %2912 = vst [vmem:[%s2465] ss:$9 sm:$0xff] %v505
    %2913 = vst [vmem:[%s2467] ss:$9 sm:$0xff] %v506
    %2914 = vst [vmem:[%s2469] ss:$9 sm:$0xff] %v507
    %2915 = vst [vmem:[%s2471] ss:$9 sm:$0xff] %v508
    %2916 = vst [vmem:[%s2473] ss:$9 sm:$0xff] %v84
    %2917 = vst [vmem:[%s2475] ss:$9 sm:$0xff] %v509
    %v2918 = vld [vmem:[#allocation1] sm:$0xff]
    %2919 = vst [vmem:[#allocation1] ss:$9 sm:$0xff] %v510
    %2920 = vst [vmem:[%s2463] ss:$9 sm:$0xff] %v511
    %2921 = vst [vmem:[%s2465] ss:$9 sm:$0xff] %v512
    %2922 = vst [vmem:[%s2467] ss:$9 sm:$0xff] %v513
    %2923 = vst [vmem:[%s2469] ss:$9 sm:$0xff] %v514
    %2924 = vst [vmem:[%s2471] ss:$9 sm:$0xff] %v85
    %2925 = vst [vmem:[%s2473] ss:$9 sm:$0xff] %v515
    %2926 = vst [vmem:[%s2475] ss:$9 sm:$0xff] %v516
    %v2927 = vld [vmem:[#allocation1] sm:$0xff]
    %2928 = vst [vmem:[#allocation1] ss:$9 sm:$0xff] %v517
    %2929 = vst [vmem:[%s2463] ss:$9 sm:$0xff] %v518
    %2930 = vst [vmem:[%s2465] ss:$9 sm:$0xff] %v519
    %2931 = vst [vmem:[%s2467] ss:$9 sm:$0xff] %v520
    %2932 = vst [vmem:[%s2469] ss:$9 sm:$0xff] %v521
    %2933 = vst [vmem:[%s2471] ss:$9 sm:$0xff] %v86
    %2934 = vst [vmem:[%s2473] ss:$9 sm:$0xff] %v522
    %2935 = vst [vmem:[%s2475] ss:$9 sm:$0xff] %v523
    %v2936 = vld [vmem:[#allocation1] sm:$0xff]
    %2937 = vst [vmem:[#allocation1] ss:$9 sm:$0xff] %v524
    %2938 = vst [vmem:[%s2463] ss:$9 sm:$0xff] %v525
    %2939 = vst [vmem:[%s2465] ss:$9 sm:$0xff] %v526
    %2940 = vst [vmem:[%s2467] ss:$9 sm:$0xff] %v527
    %2941 = vst [vmem:[%s2469] ss:$9 sm:$0xff] %v87
    %2942 = vst [vmem:[%s2471] ss:$9 sm:$0xff] %v528
    %2943 = vst [vmem:[%s2473] ss:$9 sm:$0xff] %v529
    %2944 = vst [vmem:[%s2475] ss:$9 sm:$0xff] %v530
    %v2945 = vld [vmem:[#allocation1] sm:$0xff]
    %2946 = vst [vmem:[#allocation1] ss:$9 sm:$0xff] %v531
    %2947 = vst [vmem:[%s2463] ss:$9 sm:$0xff] %v532
    %2948 = vst [vmem:[%s2465] ss:$9 sm:$0xff] %v533
    %2949 = vst [vmem:[%s2467] ss:$9 sm:$0xff] %v534
    %2950 = vst [vmem:[%s2469] ss:$9 sm:$0xff] %v88
    %2951 = vst [vmem:[%s2471] ss:$9 sm:$0xff] %v535
    %2952 = vst [vmem:[%s2473] ss:$9 sm:$0xff] %v536
    %2953 = vst [vmem:[%s2475] ss:$9 sm:$0xff] %v537
    %v2954 = vld [vmem:[#allocation1] sm:$0xff]
    %2955 = vst [vmem:[#allocation1] ss:$9 sm:$0xff] %v538
    %2956 = vst [vmem:[%s2463] ss:$9 sm:$0xff] %v539
    %2957 = vst [vmem:[%s2465] ss:$9 sm:$0xff] %v540
    %2958 = vst [vmem:[%s2467] ss:$9 sm:$0xff] %v89
    %2959 = vst [vmem:[%s2469] ss:$9 sm:$0xff] %v2449
    %2960 = vst [vmem:[%s2471] ss:$9 sm:$0xff] %v2450
    %2961 = vst [vmem:[%s2473] ss:$9 sm:$0xff] %v2451
    %2962 = vst [vmem:[%s2475] ss:$9 sm:$0xff] %v2452
    %v2963 = vld [vmem:[#allocation1] sm:$0xff]
    %2964 = vst [vmem:[#allocation1] ss:$9 sm:$0xff] %v2453
    %2965 = vst [vmem:[%s2463] ss:$9 sm:$0xff] %v2454
    %2966 = vst [vmem:[%s2465] ss:$9 sm:$0xff] %v2455
    %2967 = vst [vmem:[%s2467] ss:$9 sm:$0xff] %v90
    %2968 = vst [vmem:[%s2469] ss:$9 sm:$0xff] %v2456
    %2969 = vst [vmem:[%s2471] ss:$9 sm:$0xff] %v2457
    %2970 = vst [vmem:[%s2473] ss:$9 sm:$0xff] %v2458
    %2971 = vst [vmem:[%s2475] ss:$9 sm:$0xff] %v2459
    %v2972 = vld [vmem:[#allocation1] sm:$0xff]
    %2973 = vst [vmem:[#allocation1] ss:$9 sm:$0xff] %v2460
    %2974 = vst [vmem:[%s2463] ss:$9 sm:$0xff] %v2461
    %v2975 = vld [vmem:[#allocation1] sm:$0xff]
    %2976 = vrot.lane.b32.xlu0 %v2477, 8
    %v2977 = vpop.permute.xlu0 %2976
    %2978 = vrot.lane.b32.xlu0 %v2486, 8
    %v2979 = vpop.permute.xlu0 %2978
    %2980 = vrot.lane.b32.xlu0 %v2495, 8
    %v2981 = vpop.permute.xlu0 %2980
    %2982 = vrot.lane.b32.xlu0 %v2504, 8
    %v2983 = vpop.permute.xlu0 %2982
    %2984 = vrot.lane.b32.xlu0 %v2513, 8
    %v2985 = vpop.permute.xlu0 %2984
    %2986 = vrot.lane.b32.xlu0 %v2522, 8
    %v2987 = vpop.permute.xlu0 %2986
    %2988 = vrot.lane.b32.xlu0 %v2531, 8
    %v2989 = vpop.permute.xlu0 %2988
    %2990 = vrot.lane.b32.xlu0 %v2540, 8
    %v2991 = vpop.permute.xlu0 %2990
    %2992 = vrot.lane.b32.xlu0 %v2549, 8
    %v2993 = vpop.permute.xlu0 %2992
    %2994 = vrot.lane.b32.xlu0 %v2558, 8
    %v2995 = vpop.permute.xlu0 %2994
    %2996 = vrot.lane.b32.xlu0 %v2567, 8
    %v2997 = vpop.permute.xlu0 %2996
    %2998 = vrot.lane.b32.xlu0 %v2576, 8
    %v2999 = vpop.permute.xlu0 %2998
    %3000 = vrot.lane.b32.xlu0 %v2585, 8
    %v3001 = vpop.permute.xlu0 %3000
    %3002 = vrot.lane.b32.xlu0 %v2594, 8
    %v3003 = vpop.permute.xlu0 %3002
    %3004 = vrot.lane.b32.xlu0 %v2603, 8
    %v3005 = vpop.permute.xlu0 %3004
    %3006 = vrot.lane.b32.xlu0 %v2612, 8
    %v3007 = vpop.permute.xlu0 %3006
    %3008 = vrot.lane.b32.xlu0 %v2621, 8
    %v3009 = vpop.permute.xlu0 %3008
    %3010 = vrot.lane.b32.xlu0 %v2630, 8
    %v3011 = vpop.permute.xlu0 %3010
    %3012 = vrot.lane.b32.xlu0 %v2639, 8
    %v3013 = vpop.permute.xlu0 %3012
    %3014 = vrot.lane.b32.xlu0 %v2648, 8
    %v3015 = vpop.permute.xlu0 %3014
    %3016 = vrot.lane.b32.xlu0 %v2657, 8
    %v3017 = vpop.permute.xlu0 %3016
    %3018 = vrot.lane.b32.xlu0 %v2666, 8
    %v3019 = vpop.permute.xlu0 %3018
    %3020 = vrot.lane.b32.xlu0 %v2675, 8
    %v3021 = vpop.permute.xlu0 %3020
    %3022 = vrot.lane.b32.xlu0 %v2684, 8
    %v3023 = vpop.permute.xlu0 %3022
    %3024 = vrot.lane.b32.xlu0 %v2693, 8
    %v3025 = vpop.permute.xlu0 %3024
    %3026 = vrot.lane.b32.xlu0 %v2702, 8
    %v3027 = vpop.permute.xlu0 %3026
    %3028 = vrot.lane.b32.xlu0 %v2711, 8
    %v3029 = vpop.permute.xlu0 %3028
    %3030 = vrot.lane.b32.xlu0 %v2720, 8
    %v3031 = vpop.permute.xlu0 %3030
    %3032 = vrot.lane.b32.xlu0 %v2729, 8
    %v3033 = vpop.permute.xlu0 %3032
    %3034 = vrot.lane.b32.xlu0 %v2738, 8
    %v3035 = vpop.permute.xlu0 %3034
    %3036 = vrot.lane.b32.xlu0 %v2747, 8
    %v3037 = vpop.permute.xlu0 %3036
    %3038 = vrot.lane.b32.xlu0 %v2756, 8
    %v3039 = vpop.permute.xlu0 %3038
    %3040 = vrot.lane.b32.xlu0 %v2765, 8
    %v3041 = vpop.permute.xlu0 %3040
    %3042 = vrot.lane.b32.xlu0 %v2774, 8
    %v3043 = vpop.permute.xlu0 %3042
    %3044 = vrot.lane.b32.xlu0 %v2783, 8
    %v3045 = vpop.permute.xlu0 %3044
    %3046 = vrot.lane.b32.xlu0 %v2792, 8
    %v3047 = vpop.permute.xlu0 %3046
    %3048 = vrot.lane.b32.xlu0 %v2801, 8
    %v3049 = vpop.permute.xlu0 %3048
    %3050 = vrot.lane.b32.xlu0 %v2810, 8
    %v3051 = vpop.permute.xlu0 %3050
    %3052 = vrot.lane.b32.xlu0 %v2819, 8
    %v3053 = vpop.permute.xlu0 %3052
    %3054 = vrot.lane.b32.xlu0 %v2828, 8
    %v3055 = vpop.permute.xlu0 %3054
    %3056 = vrot.lane.b32.xlu0 %v2837, 8
    %v3057 = vpop.permute.xlu0 %3056
    %3058 = vrot.lane.b32.xlu0 %v2846, 8
    %v3059 = vpop.permute.xlu0 %3058
    %3060 = vrot.lane.b32.xlu0 %v2855, 8
    %v3061 = vpop.permute.xlu0 %3060
    %3062 = vrot.lane.b32.xlu0 %v2864, 8
    %v3063 = vpop.permute.xlu0 %3062
    %3064 = vrot.lane.b32.xlu0 %v2873, 8
    %v3065 = vpop.permute.xlu0 %3064
    %3066 = vrot.lane.b32.xlu0 %v2882, 8
    %v3067 = vpop.permute.xlu0 %3066
    %3068 = vrot.lane.b32.xlu0 %v2891, 8
    %v3069 = vpop.permute.xlu0 %3068
    %3070 = vrot.lane.b32.xlu0 %v2900, 8
    %v3071 = vpop.permute.xlu0 %3070
    %3072 = vrot.lane.b32.xlu0 %v2909, 8
    %v3073 = vpop.permute.xlu0 %3072
    %3074 = vrot.lane.b32.xlu0 %v2918, 8
    %v3075 = vpop.permute.xlu0 %3074
    %3076 = vrot.lane.b32.xlu0 %v2927, 8
    %v3077 = vpop.permute.xlu0 %3076
    %3078 = vrot.lane.b32.xlu0 %v2936, 8
    %v3079 = vpop.permute.xlu0 %3078
    %3080 = vrot.lane.b32.xlu0 %v2945, 8
    %v3081 = vpop.permute.xlu0 %3080
    %3082 = vrot.lane.b32.xlu0 %v2954, 8
    %v3083 = vpop.permute.xlu0 %3082
    %3084 = vrot.lane.b32.xlu0 %v2963, 8
    %v3085 = vpop.permute.xlu0 %3084
    %3086 = vrot.lane.b32.xlu0 %v2972, 8
    %v3087 = vpop.permute.xlu0 %3086
    %3088 = vrot.lane.b32.xlu0 %v2975, 8
    %v3089 = vpop.permute.xlu0 %3088
    %vm3147 = vcmask 97344
    %3148 = vst.msk [vmem:[#allocation2] sm:$0xff] %vm3147, %v2977
    %3149 = vst.msk [vmem:[#allocation2 + $0x8] sm:$0xff] %vm3147, %v2979
    %3150 = vst.msk [vmem:[#allocation2 + $0x10] sm:$0xff] %vm3147, %v2981
    %3151 = vst.msk [vmem:[#allocation2 + $0x18] sm:$0xff] %vm3147, %v2983
    %3152 = vst.msk [vmem:[#allocation2 + $0x20] sm:$0xff] %vm3147, %v2985
    %3153 = vst.msk [vmem:[#allocation2 + $0x28] sm:$0xff] %vm3147, %v2987
    %3154 = vst.msk [vmem:[#allocation2 + $0x30] sm:$0xff] %vm3147, %v2989
    %3155 = vst.msk [vmem:[#allocation2 + $0x38] sm:$0xff] %vm3147, %v2991
    %3156 = vst.msk [vmem:[#allocation2 + $0x40] sm:$0xff] %vm3147, %v2993
    %3157 = vst.msk [vmem:[#allocation2 + $0x48] sm:$0xff] %vm3147, %v2995
    %3158 = vst.msk [vmem:[#allocation2 + $0x50] sm:$0xff] %vm3147, %v2997
    %3159 = vst.msk [vmem:[#allocation2 + $0x58] sm:$0xff] %vm3147, %v2999
    %3160 = vst.msk [vmem:[#allocation2 + $0x60] sm:$0xff] %vm3147, %v3001
    %3161 = vst.msk [vmem:[#allocation2 + $0x68] sm:$0xff] %vm3147, %v3003
    %3162 = vst.msk [vmem:[#allocation2 + $0x70] sm:$0xff] %vm3147, %v3005
    %3163 = vst.msk [vmem:[#allocation2 + $0x78] sm:$0xff] %vm3147, %v3007
    %3164 = vst.msk [vmem:[#allocation2 + $0x80] sm:$0xff] %vm3147, %v3009
    %3165 = vst.msk [vmem:[#allocation2 + $0x88] sm:$0xff] %vm3147, %v3011
    %3166 = vst.msk [vmem:[#allocation2 + $0x90] sm:$0xff] %vm3147, %v3013
    %3167 = vst.msk [vmem:[#allocation2 + $0x98] sm:$0xff] %vm3147, %v3015
    %3168 = vst.msk [vmem:[#allocation2 + $0xa0] sm:$0xff] %vm3147, %v3017
    %3169 = vst.msk [vmem:[#allocation2 + $0xa8] sm:$0xff] %vm3147, %v3019
    %3170 = vst.msk [vmem:[#allocation2 + $0xb0] sm:$0xff] %vm3147, %v3021
    %3171 = vst.msk [vmem:[#allocation2 + $0xb8] sm:$0xff] %vm3147, %v3023
    %3172 = vst.msk [vmem:[#allocation2 + $0xc0] sm:$0xff] %vm3147, %v3025
    %3173 = vst.msk [vmem:[#allocation2 + $0xc8] sm:$0xff] %vm3147, %v3027
    %3174 = vst.msk [vmem:[#allocation2 + $0xd0] sm:$0xff] %vm3147, %v3029
    %3175 = vst.msk [vmem:[#allocation2 + $0xd8] sm:$0xff] %vm3147, %v3031
    %3176 = vst.msk [vmem:[#allocation2 + $0xe0] sm:$0xff] %vm3147, %v3033
    %3177 = vst.msk [vmem:[#allocation2 + $0xe8] sm:$0xff] %vm3147, %v3035
    %3178 = vst.msk [vmem:[#allocation2 + $0xf0] sm:$0xff] %vm3147, %v3037
    %3179 = vst.msk [vmem:[#allocation2 + $0xf8] sm:$0xff] %vm3147, %v3039
    %3180 = vst.msk [vmem:[#allocation2 + $0x100] sm:$0xff] %vm3147, %v3041
    %3181 = vst.msk [vmem:[#allocation2 + $0x108] sm:$0xff] %vm3147, %v3043
    %3182 = vst.msk [vmem:[#allocation2 + $0x110] sm:$0xff] %vm3147, %v3045
    %3183 = vst.msk [vmem:[#allocation2 + $0x118] sm:$0xff] %vm3147, %v3047
    %3184 = vst.msk [vmem:[#allocation2 + $0x120] sm:$0xff] %vm3147, %v3049
    %3185 = vst.msk [vmem:[#allocation2 + $0x128] sm:$0xff] %vm3147, %v3051
    %3186 = vst.msk [vmem:[#allocation2 + $0x130] sm:$0xff] %vm3147, %v3053
    %3187 = vst.msk [vmem:[#allocation2 + $0x138] sm:$0xff] %vm3147, %v3055
    %3188 = vst.msk [vmem:[#allocation2 + $0x140] sm:$0xff] %vm3147, %v3057
    %3189 = vst.msk [vmem:[#allocation2 + $0x148] sm:$0xff] %vm3147, %v3059
    %3190 = vst.msk [vmem:[#allocation2 + $0x150] sm:$0xff] %vm3147, %v3061
    %3191 = vst.msk [vmem:[#allocation2 + $0x158] sm:$0xff] %vm3147, %v3063
    %3192 = vst.msk [vmem:[#allocation2 + $0x160] sm:$0xff] %vm3147, %v3065
    %3193 = vst.msk [vmem:[#allocation2 + $0x168] sm:$0xff] %vm3147, %v3067
    %3194 = vst.msk [vmem:[#allocation2 + $0x170] sm:$0xff] %vm3147, %v3069
    %3195 = vst.msk [vmem:[#allocation2 + $0x178] sm:$0xff] %vm3147, %v3071
    %3196 = vst.msk [vmem:[#allocation2 + $0x180] sm:$0xff] %vm3147, %v3073
    %3197 = vst.msk [vmem:[#allocation2 + $0x188] sm:$0xff] %vm3147, %v3075
    %3198 = vst.msk [vmem:[#allocation2 + $0x190] sm:$0xff] %vm3147, %v3077
    %3199 = vst.msk [vmem:[#allocation2 + $0x198] sm:$0xff] %vm3147, %v3079
    %3200 = vst.msk [vmem:[#allocation2 + $0x1a0] sm:$0xff] %vm3147, %v3081
    %3201 = vst.msk [vmem:[#allocation2 + $0x1a8] sm:$0xff] %vm3147, %v3083
    %3202 = vst.msk [vmem:[#allocation2 + $0x1b0] sm:$0xff] %vm3147, %v3085
    %3203 = vst.msk [vmem:[#allocation2 + $0x1b8] sm:$0xff] %vm3147, %v3087
    %vm3204 = vcmask 91200
    %3205 = vst.msk [vmem:[#allocation2 + $0x1c0] sm:$0x3] %vm3204, %v3089
    %3206 = vst [vmem:[#allocation1] sm:$0xff] %v29
    %s3207 = scalar_lea.vmem [#allocation1], 1
    %v3208 = vld [vmem:[%s3207] ss:$9 sm:$0xff]
    %s3209 = scalar_lea.vmem [#allocation1], 2
    %v3210 = vld [vmem:[%s3209] ss:$9 sm:$0xff]
    %s3211 = scalar_lea.vmem [#allocation1], 3
    %v3212 = vld [vmem:[%s3211] ss:$9 sm:$0xff]
    %s3213 = scalar_lea.vmem [#allocation1], 4
    %v3214 = vld [vmem:[%s3213] ss:$9 sm:$0xff]
    %s3215 = scalar_lea.vmem [#allocation1], 5
    %v3216 = vld [vmem:[%s3215] ss:$9 sm:$0xff]
    %s3217 = scalar_lea.vmem [#allocation1], 6
    %v3218 = vld [vmem:[%s3217] ss:$9 sm:$0xff]
    %s3219 = scalar_lea.vmem [#allocation1], 7
    %v3220 = vld [vmem:[%s3219] ss:$9 sm:$0xff]
    %3221 = vst [vmem:[#allocation1] sm:$0xff] %v30
    %v3222 = vld [vmem:[#allocation1] ss:$9 sm:$0xff]
    %v3223 = vld [vmem:[%s3207] ss:$9 sm:$0xff]
    %v3224 = vld [vmem:[%s3209] ss:$9 sm:$0xff]
    %v3225 = vld [vmem:[%s3211] ss:$9 sm:$0xff]
    %v3226 = vld [vmem:[%s3213] ss:$9 sm:$0xff]
    %v3227 = vld [vmem:[%s3215] ss:$9 sm:$0xff]
    %v3228 = vld [vmem:[%s3217] ss:$9 sm:$0xff]
    %v3229 = vld [vmem:[%s3219] ss:$9 sm:$0xff]
    %3230 = vst [vmem:[#allocation1] sm:$0xff] %v31
    %v3231 = vld [vmem:[%s3207] ss:$9 sm:$0xff]
    %v3232 = vld [vmem:[%s3209] ss:$9 sm:$0xff]
    %v3233 = vld [vmem:[%s3211] ss:$9 sm:$0xff]
    %v3234 = vld [vmem:[%s3213] ss:$9 sm:$0xff]
    %v3235 = vld [vmem:[%s3215] ss:$9 sm:$0xff]
    %v3236 = vld [vmem:[%s3217] ss:$9 sm:$0xff]
    %v3237 = vld [vmem:[%s3219] ss:$9 sm:$0xff]
    %3238 = vst [vmem:[#allocation1] sm:$0xff] %v32
    %v3239 = vld [vmem:[#allocation1] ss:$9 sm:$0xff]
    %v3240 = vld [vmem:[%s3207] ss:$9 sm:$0xff]
    %v3241 = vld [vmem:[%s3209] ss:$9 sm:$0xff]
    %v3242 = vld [vmem:[%s3211] ss:$9 sm:$0xff]
    %v3243 = vld [vmem:[%s3213] ss:$9 sm:$0xff]
    %v3244 = vld [vmem:[%s3215] ss:$9 sm:$0xff]
    %v3245 = vld [vmem:[%s3217] ss:$9 sm:$0xff]
    %v3246 = vld [vmem:[%s3219] ss:$9 sm:$0xff]
    %3247 = vst [vmem:[#allocation1] sm:$0xff] %v33
    %v3248 = vld [vmem:[%s3207] ss:$9 sm:$0xff]
    %v3249 = vld [vmem:[%s3209] ss:$9 sm:$0xff]
    %v3250 = vld [vmem:[%s3211] ss:$9 sm:$0xff]
    %v3251 = vld [vmem:[%s3213] ss:$9 sm:$0xff]
    %v3252 = vld [vmem:[%s3215] ss:$9 sm:$0xff]
    %v3253 = vld [vmem:[%s3217] ss:$9 sm:$0xff]
    %v3254 = vld [vmem:[%s3219] ss:$9 sm:$0xff]
    %3255 = vst [vmem:[#allocation1] sm:$0xff] %v34
    %v3256 = vld [vmem:[#allocation1] ss:$9 sm:$0xff]
    %v3257 = vld [vmem:[%s3207] ss:$9 sm:$0xff]
    %v3258 = vld [vmem:[%s3209] ss:$9 sm:$0xff]
    %v3259 = vld [vmem:[%s3211] ss:$9 sm:$0xff]
    %v3260 = vld [vmem:[%s3213] ss:$9 sm:$0xff]
    %v3261 = vld [vmem:[%s3215] ss:$9 sm:$0xff]
    %v3262 = vld [vmem:[%s3217] ss:$9 sm:$0xff]
    %v3263 = vld [vmem:[%s3219] ss:$9 sm:$0xff]
    %3264 = vst [vmem:[#allocation1] sm:$0xff] %v35
    %v3265 = vld [vmem:[%s3207] ss:$9 sm:$0xff]
    %v3266 = vld [vmem:[%s3209] ss:$9 sm:$0xff]
    %v3267 = vld [vmem:[%s3211] ss:$9 sm:$0xff]
    %v3268 = vld [vmem:[%s3213] ss:$9 sm:$0xff]
    %v3269 = vld [vmem:[%s3215] ss:$9 sm:$0xff]
    %v3270 = vld [vmem:[%s3217] ss:$9 sm:$0xff]
    %v3271 = vld [vmem:[%s3219] ss:$9 sm:$0xff]
    %3272 = vst [vmem:[#allocation1] sm:$0xff] %v36
    %v3273 = vld [vmem:[#allocation1] ss:$9 sm:$0xff]
    %v3274 = vld [vmem:[%s3207] ss:$9 sm:$0xff]
    %v3275 = vld [vmem:[%s3209] ss:$9 sm:$0xff]
    %v3276 = vld [vmem:[%s3211] ss:$9 sm:$0xff]
    %v3277 = vld [vmem:[%s3213] ss:$9 sm:$0xff]
    %v3278 = vld [vmem:[%s3215] ss:$9 sm:$0xff]
    %v3279 = vld [vmem:[%s3217] ss:$9 sm:$0xff]
    %v3280 = vld [vmem:[%s3219] ss:$9 sm:$0xff]
    %3281 = vst [vmem:[#allocation1] sm:$0xff] %v37
    %v3282 = vld [vmem:[%s3207] ss:$9 sm:$0xff]
    %v3283 = vld [vmem:[%s3209] ss:$9 sm:$0xff]
    %v3284 = vld [vmem:[%s3211] ss:$9 sm:$0xff]
    %v3285 = vld [vmem:[%s3213] ss:$9 sm:$0xff]
    %v3286 = vld [vmem:[%s3215] ss:$9 sm:$0xff]
    %v3287 = vld [vmem:[%s3217] ss:$9 sm:$0xff]
    %v3288 = vld [vmem:[%s3219] ss:$9 sm:$0xff]
    %3289 = vst [vmem:[#allocation1] sm:$0xff] %v38
    %v3290 = vld [vmem:[#allocation1] ss:$9 sm:$0xff]
    %v3291 = vld [vmem:[%s3207] ss:$9 sm:$0xff]
    %v3292 = vld [vmem:[%s3209] ss:$9 sm:$0xff]
    %v3293 = vld [vmem:[%s3211] ss:$9 sm:$0xff]
    %v3294 = vld [vmem:[%s3213] ss:$9 sm:$0xff]
    %v3295 = vld [vmem:[%s3215] ss:$9 sm:$0xff]
    %v3296 = vld [vmem:[%s3217] ss:$9 sm:$0xff]
    %v3297 = vld [vmem:[%s3219] ss:$9 sm:$0xff]
    %3298 = vst [vmem:[#allocation1] sm:$0xff] %v39
    %v3299 = vld [vmem:[%s3207] ss:$9 sm:$0xff]
    %v3300 = vld [vmem:[%s3209] ss:$9 sm:$0xff]
    %v3301 = vld [vmem:[%s3211] ss:$9 sm:$0xff]
    %v3302 = vld [vmem:[%s3213] ss:$9 sm:$0xff]
    %v3303 = vld [vmem:[%s3215] ss:$9 sm:$0xff]
    %v3304 = vld [vmem:[%s3217] ss:$9 sm:$0xff]
    %v3305 = vld [vmem:[%s3219] ss:$9 sm:$0xff]
    %3306 = vst [vmem:[#allocation1] sm:$0xff] %v40
    %v3307 = vld [vmem:[#allocation1] ss:$9 sm:$0xff]
    %v3308 = vld [vmem:[%s3207] ss:$9 sm:$0xff]
    %v3309 = vld [vmem:[%s3209] ss:$9 sm:$0xff]
    %v3310 = vld [vmem:[%s3211] ss:$9 sm:$0xff]
    %v3311 = vld [vmem:[%s3213] ss:$9 sm:$0xff]
    %v3312 = vld [vmem:[%s3215] ss:$9 sm:$0xff]
    %v3313 = vld [vmem:[%s3217] ss:$9 sm:$0xff]
    %v3314 = vld [vmem:[%s3219] ss:$9 sm:$0xff]
    %3315 = vst [vmem:[#allocation1] sm:$0xff] %v41
    %v3316 = vld [vmem:[%s3207] ss:$9 sm:$0xff]
    %v3317 = vld [vmem:[%s3209] ss:$9 sm:$0xff]
    %v3318 = vld [vmem:[%s3211] ss:$9 sm:$0xff]
    %v3319 = vld [vmem:[%s3213] ss:$9 sm:$0xff]
    %v3320 = vld [vmem:[%s3215] ss:$9 sm:$0xff]
    %v3321 = vld [vmem:[%s3217] ss:$9 sm:$0xff]
    %v3322 = vld [vmem:[%s3219] ss:$9 sm:$0xff]
    %3323 = vst [vmem:[#allocation1] sm:$0xff] %v42
    %v3324 = vld [vmem:[#allocation1] ss:$9 sm:$0xff]
    %v3325 = vld [vmem:[%s3207] ss:$9 sm:$0xff]
    %v3326 = vld [vmem:[%s3209] ss:$9 sm:$0xff]
    %v3327 = vld [vmem:[%s3211] ss:$9 sm:$0xff]
    %v3328 = vld [vmem:[%s3213] ss:$9 sm:$0xff]
    %v3329 = vld [vmem:[%s3215] ss:$9 sm:$0xff]
    %v3330 = vld [vmem:[%s3217] ss:$9 sm:$0xff]
    %v3331 = vld [vmem:[%s3219] ss:$9 sm:$0xff]
    %3332 = vst [vmem:[#allocation1] sm:$0xff] %v43
    %v3333 = vld [vmem:[%s3207] ss:$9 sm:$0xff]
    %v3334 = vld [vmem:[%s3209] ss:$9 sm:$0xff]
    %v3335 = vld [vmem:[%s3211] ss:$9 sm:$0xff]
    %v3336 = vld [vmem:[%s3213] ss:$9 sm:$0xff]
    %v3337 = vld [vmem:[%s3215] ss:$9 sm:$0xff]
    %v3338 = vld [vmem:[%s3217] ss:$9 sm:$0xff]
    %v3339 = vld [vmem:[%s3219] ss:$9 sm:$0xff]
    %3340 = vst [vmem:[#allocation1] sm:$0xff] %v44
    %v3341 = vld [vmem:[#allocation1] ss:$9 sm:$0xff]
    %v3342 = vld [vmem:[%s3207] ss:$9 sm:$0xff]
    %v3343 = vld [vmem:[%s3209] ss:$9 sm:$0xff]
    %v3344 = vld [vmem:[%s3211] ss:$9 sm:$0xff]
    %v3345 = vld [vmem:[%s3213] ss:$9 sm:$0xff]
    %v3346 = vld [vmem:[%s3215] ss:$9 sm:$0xff]
    %v3347 = vld [vmem:[%s3217] ss:$9 sm:$0xff]
    %v3348 = vld [vmem:[%s3219] ss:$9 sm:$0xff]
    %3349 = vst [vmem:[#allocation1] sm:$0xff] %v45
    %v3350 = vld [vmem:[%s3207] ss:$9 sm:$0xff]
    %v3351 = vld [vmem:[%s3209] ss:$9 sm:$0xff]
    %v3352 = vld [vmem:[%s3211] ss:$9 sm:$0xff]
    %v3353 = vld [vmem:[%s3213] ss:$9 sm:$0xff]
    %v3354 = vld [vmem:[%s3215] ss:$9 sm:$0xff]
    %v3355 = vld [vmem:[%s3217] ss:$9 sm:$0xff]
    %v3356 = vld [vmem:[%s3219] ss:$9 sm:$0xff]
    %3357 = vst [vmem:[#allocation1] sm:$0xff] %v46
    %v3358 = vld [vmem:[#allocation1] ss:$9 sm:$0xff]
    %v3359 = vld [vmem:[%s3207] ss:$9 sm:$0xff]
    %v3360 = vld [vmem:[%s3209] ss:$9 sm:$0xff]
    %v3361 = vld [vmem:[%s3211] ss:$9 sm:$0xff]
    %v3362 = vld [vmem:[%s3213] ss:$9 sm:$0xff]
    %v3363 = vld [vmem:[%s3215] ss:$9 sm:$0xff]
    %v3364 = vld [vmem:[%s3217] ss:$9 sm:$0xff]
    %v3365 = vld [vmem:[%s3219] ss:$9 sm:$0xff]
    %3366 = vst [vmem:[#allocation1] sm:$0xff] %v47
    %v3367 = vld [vmem:[%s3207] ss:$9 sm:$0xff]
    %v3368 = vld [vmem:[%s3209] ss:$9 sm:$0xff]
    %v3369 = vld [vmem:[%s3211] ss:$9 sm:$0xff]
    %v3370 = vld [vmem:[%s3213] ss:$9 sm:$0xff]
    %v3371 = vld [vmem:[%s3215] ss:$9 sm:$0xff]
    %v3372 = vld [vmem:[%s3217] ss:$9 sm:$0xff]
    %v3373 = vld [vmem:[%s3219] ss:$9 sm:$0xff]
    %3374 = vst [vmem:[#allocation1] sm:$0xff] %v48
    %v3375 = vld [vmem:[#allocation1] ss:$9 sm:$0xff]
    %v3376 = vld [vmem:[%s3207] ss:$9 sm:$0xff]
    %v3377 = vld [vmem:[%s3209] ss:$9 sm:$0xff]
    %v3378 = vld [vmem:[%s3211] ss:$9 sm:$0xff]
    %v3379 = vld [vmem:[%s3213] ss:$9 sm:$0xff]
    %v3380 = vld [vmem:[%s3215] ss:$9 sm:$0xff]
    %v3381 = vld [vmem:[%s3217] ss:$9 sm:$0xff]
    %v3382 = vld [vmem:[%s3219] ss:$9 sm:$0xff]
    %3383 = vst [vmem:[#allocation1] sm:$0xff] %v49
    %v3384 = vld [vmem:[%s3207] ss:$9 sm:$0xff]
    %v3385 = vld [vmem:[%s3209] ss:$9 sm:$0xff]
    %v3386 = vld [vmem:[%s3211] ss:$9 sm:$0xff]
    %v3387 = vld [vmem:[%s3213] ss:$9 sm:$0xff]
    %v3388 = vld [vmem:[%s3215] ss:$9 sm:$0xff]
    %v3389 = vld [vmem:[%s3217] ss:$9 sm:$0xff]
    %v3390 = vld [vmem:[%s3219] ss:$9 sm:$0xff]
    %3391 = vst [vmem:[#allocation1] sm:$0xff] %v50
    %v3392 = vld [vmem:[#allocation1] ss:$9 sm:$0xff]
    %v3393 = vld [vmem:[%s3207] ss:$9 sm:$0xff]
    %v3394 = vld [vmem:[%s3209] ss:$9 sm:$0xff]
    %v3395 = vld [vmem:[%s3211] ss:$9 sm:$0xff]
    %v3396 = vld [vmem:[%s3213] ss:$9 sm:$0xff]
    %v3397 = vld [vmem:[%s3215] ss:$9 sm:$0xff]
    %v3398 = vld [vmem:[%s3217] ss:$9 sm:$0xff]
    %v3399 = vld [vmem:[%s3219] ss:$9 sm:$0xff]
    %3400 = vst [vmem:[#allocation1] sm:$0xff] %v51
    %v3401 = vld [vmem:[%s3207] ss:$9 sm:$0xff]
    %v3402 = vld [vmem:[%s3209] ss:$9 sm:$0xff]
    %v3403 = vld [vmem:[%s3211] ss:$9 sm:$0xff]
    %v3404 = vld [vmem:[%s3213] ss:$9 sm:$0xff]
    %v3405 = vld [vmem:[%s3215] ss:$9 sm:$0xff]
    %v3406 = vld [vmem:[%s3217] ss:$9 sm:$0xff]
    %v3407 = vld [vmem:[%s3219] ss:$9 sm:$0xff]
    %3408 = vst [vmem:[#allocation1] sm:$0xff] %v52
    %v3409 = vld [vmem:[#allocation1] ss:$9 sm:$0xff]
    %v3410 = vld [vmem:[%s3207] ss:$9 sm:$0xff]
    %v3411 = vld [vmem:[%s3209] ss:$9 sm:$0xff]
    %v3412 = vld [vmem:[%s3211] ss:$9 sm:$0xff]
    %v3413 = vld [vmem:[%s3213] ss:$9 sm:$0xff]
    %v3414 = vld [vmem:[%s3215] ss:$9 sm:$0xff]
    %v3415 = vld [vmem:[%s3217] ss:$9 sm:$0xff]
    %v3416 = vld [vmem:[%s3219] ss:$9 sm:$0xff]
    %3417 = vst [vmem:[#allocation1] sm:$0xff] %v53
    %v3418 = vld [vmem:[%s3207] ss:$9 sm:$0xff]
    %v3419 = vld [vmem:[%s3209] ss:$9 sm:$0xff]
    %v3420 = vld [vmem:[%s3211] ss:$9 sm:$0xff]
    %v3421 = vld [vmem:[%s3213] ss:$9 sm:$0xff]
    %v3422 = vld [vmem:[%s3215] ss:$9 sm:$0xff]
    %v3423 = vld [vmem:[%s3217] ss:$9 sm:$0xff]
    %v3424 = vld [vmem:[%s3219] ss:$9 sm:$0xff]
    %3425 = vst [vmem:[#allocation1] sm:$0xff] %v54
    %v3426 = vld [vmem:[#allocation1] ss:$9 sm:$0xff]
    %v3427 = vld [vmem:[%s3207] ss:$9 sm:$0xff]
    %v3428 = vld [vmem:[%s3209] ss:$9 sm:$0xff]
    %v3429 = vld [vmem:[%s3211] ss:$9 sm:$0xff]
    %v3430 = vld [vmem:[%s3213] ss:$9 sm:$0xff]
    %v3431 = vld [vmem:[%s3215] ss:$9 sm:$0xff]
    %v3432 = vld [vmem:[%s3217] ss:$9 sm:$0xff]
    %v3433 = vld [vmem:[%s3219] ss:$9 sm:$0xff]
    %3434 = vst [vmem:[#allocation1] sm:$0xff] %v55
    %v3435 = vld [vmem:[%s3207] ss:$9 sm:$0xff]
    %v3436 = vld [vmem:[%s3209] ss:$9 sm:$0xff]
    %v3437 = vld [vmem:[%s3211] ss:$9 sm:$0xff]
    %v3438 = vld [vmem:[%s3213] ss:$9 sm:$0xff]
    %v3439 = vld [vmem:[%s3215] ss:$9 sm:$0xff]
    %v3440 = vld [vmem:[%s3217] ss:$9 sm:$0xff]
    %v3441 = vld [vmem:[%s3219] ss:$9 sm:$0xff]
    %3442 = vst [vmem:[#allocation1] sm:$0xff] %v56
    %v3443 = vld [vmem:[#allocation1] ss:$9 sm:$0xff]
    %v3444 = vld [vmem:[%s3207] ss:$9 sm:$0xff]
    %v3445 = vld [vmem:[%s3209] ss:$9 sm:$0xff]
    %v3446 = vld [vmem:[%s3211] ss:$9 sm:$0xff]
    %v3447 = vld [vmem:[%s3213] ss:$9 sm:$0xff]
    %v3448 = vld [vmem:[%s3215] ss:$9 sm:$0xff]
    %v3449 = vld [vmem:[%s3217] ss:$9 sm:$0xff]
    %v3450 = vld [vmem:[%s3219] ss:$9 sm:$0xff]
    %3451 = vst [vmem:[#allocation1] sm:$0xff] %v57
    %v3452 = vld [vmem:[%s3207] ss:$9 sm:$0xff]
    %v3453 = vld [vmem:[%s3209] ss:$9 sm:$0xff]
    %v3454 = vld [vmem:[%s3211] ss:$9 sm:$0xff]
    %v3455 = vld [vmem:[%s3213] ss:$9 sm:$0xff]
    %v3456 = vld [vmem:[%s3215] ss:$9 sm:$0xff]
    %v3457 = vld [vmem:[%s3217] ss:$9 sm:$0xff]
    %v3458 = vld [vmem:[%s3219] ss:$9 sm:$0xff]
    %3459 = vst [vmem:[#allocation1] sm:$0xff] %v58
    %v3460 = vld [vmem:[#allocation1] ss:$9 sm:$0xff]
    %v3461 = vld [vmem:[%s3207] ss:$9 sm:$0xff]
    %v3462 = vld [vmem:[%s3209] ss:$9 sm:$0xff]
    %v3463 = vld [vmem:[%s3211] ss:$9 sm:$0xff]
    %v3464 = vld [vmem:[%s3213] ss:$9 sm:$0xff]
    %v3465 = vld [vmem:[%s3215] ss:$9 sm:$0xff]
    %v3466 = vld [vmem:[%s3217] ss:$9 sm:$0xff]
    %v3467 = vld [vmem:[%s3219] ss:$9 sm:$0xff]
    %3468 = vst [vmem:[#allocation1] sm:$0xff] %v61
    %v3469 = vld [vmem:[%s3207] ss:$9 sm:$0xff]
    %v3470 = vld [vmem:[%s3209] ss:$9 sm:$0xff]
    %v3471 = vld [vmem:[%s3211] ss:$9 sm:$0xff]
    %v3472 = vld [vmem:[%s3213] ss:$9 sm:$0xff]
    %v3473 = vld [vmem:[%s3215] ss:$9 sm:$0xff]
    %v3474 = vld [vmem:[%s3217] ss:$9 sm:$0xff]
    %v3475 = vld [vmem:[%s3219] ss:$9 sm:$0xff]
    %3476 = vst [vmem:[#allocation1] sm:$0xff] %v62
    %v3477 = vld [vmem:[#allocation1] ss:$9 sm:$0xff]
    %v3478 = vld [vmem:[%s3207] ss:$9 sm:$0xff]
    %v3479 = vld [vmem:[%s3209] ss:$9 sm:$0xff]
    %v3480 = vld [vmem:[%s3211] ss:$9 sm:$0xff]
    %v3481 = vld [vmem:[%s3213] ss:$9 sm:$0xff]
    %v3482 = vld [vmem:[%s3215] ss:$9 sm:$0xff]
    %v3483 = vld [vmem:[%s3217] ss:$9 sm:$0xff]
    %v3484 = vld [vmem:[%s3219] ss:$9 sm:$0xff]
    %3485 = vst [vmem:[#allocation1] sm:$0xff] %v63
    %v3486 = vld [vmem:[%s3207] ss:$9 sm:$0xff]
    %v3487 = vld [vmem:[%s3209] ss:$9 sm:$0xff]
    %v3488 = vld [vmem:[%s3211] ss:$9 sm:$0xff]
    %v3489 = vld [vmem:[%s3213] ss:$9 sm:$0xff]
    %v3490 = vld [vmem:[%s3215] ss:$9 sm:$0xff]
    %v3491 = vld [vmem:[%s3217] ss:$9 sm:$0xff]
    %v3492 = vld [vmem:[%s3219] ss:$9 sm:$0xff]
    %3493 = vst [vmem:[#allocation1] sm:$0xff] %v64
    %v3494 = vld [vmem:[#allocation1] ss:$9 sm:$0xff]
    %v3495 = vld [vmem:[%s3207] ss:$9 sm:$0xff]
    %v3496 = vld [vmem:[%s3209] ss:$9 sm:$0xff]
    %v3497 = vld [vmem:[%s3211] ss:$9 sm:$0xff]
    %v3498 = vld [vmem:[%s3213] ss:$9 sm:$0xff]
    %v3499 = vld [vmem:[%s3215] ss:$9 sm:$0xff]
    %v3500 = vld [vmem:[%s3217] ss:$9 sm:$0xff]
    %v3501 = vld [vmem:[%s3219] ss:$9 sm:$0xff]
    %3502 = vst [vmem:[#allocation1] sm:$0xff] %v65
    %v3503 = vld [vmem:[%s3207] ss:$9 sm:$0xff]
    %v3504 = vld [vmem:[%s3209] ss:$9 sm:$0xff]
    %v3505 = vld [vmem:[%s3211] ss:$9 sm:$0xff]
    %v3506 = vld [vmem:[%s3213] ss:$9 sm:$0xff]
    %v3507 = vld [vmem:[%s3215] ss:$9 sm:$0xff]
    %v3508 = vld [vmem:[%s3217] ss:$9 sm:$0xff]
    %v3509 = vld [vmem:[%s3219] ss:$9 sm:$0xff]
    %3510 = vst [vmem:[#allocation1] sm:$0xff] %v66
    %v3511 = vld [vmem:[#allocation1] ss:$9 sm:$0xff]
    %v3512 = vld [vmem:[%s3207] ss:$9 sm:$0xff]
    %v3513 = vld [vmem:[%s3209] ss:$9 sm:$0xff]
    %v3514 = vld [vmem:[%s3211] ss:$9 sm:$0xff]
    %v3515 = vld [vmem:[%s3213] ss:$9 sm:$0xff]
    %v3516 = vld [vmem:[%s3215] ss:$9 sm:$0xff]
    %v3517 = vld [vmem:[%s3217] ss:$9 sm:$0xff]
    %v3518 = vld [vmem:[%s3219] ss:$9 sm:$0xff]
    %3519 = vst [vmem:[#allocation1] sm:$0xff] %v67
    %v3520 = vld [vmem:[%s3207] ss:$9 sm:$0xff]
    %v3521 = vld [vmem:[%s3209] ss:$9 sm:$0xff]
    %v3522 = vld [vmem:[%s3211] ss:$9 sm:$0xff]
    %v3523 = vld [vmem:[%s3213] ss:$9 sm:$0xff]
    %v3524 = vld [vmem:[%s3215] ss:$9 sm:$0xff]
    %v3525 = vld [vmem:[%s3217] ss:$9 sm:$0xff]
    %v3526 = vld [vmem:[%s3219] ss:$9 sm:$0xff]
    %3527 = vst [vmem:[#allocation1] sm:$0xff] %v68
    %v3528 = vld [vmem:[#allocation1] ss:$9 sm:$0xff]
    %v3529 = vld [vmem:[%s3207] ss:$9 sm:$0xff]
    %v3530 = vld [vmem:[%s3209] ss:$9 sm:$0xff]
    %v3531 = vld [vmem:[%s3211] ss:$9 sm:$0xff]
    %v3532 = vld [vmem:[%s3213] ss:$9 sm:$0xff]
    %v3533 = vld [vmem:[%s3215] ss:$9 sm:$0xff]
    %v3534 = vld [vmem:[%s3217] ss:$9 sm:$0xff]
    %v3535 = vld [vmem:[%s3219] ss:$9 sm:$0xff]
    %3536 = vst [vmem:[#allocation1] sm:$0xff] %v69
    %v3537 = vld [vmem:[%s3207] ss:$9 sm:$0xff]
    %v3538 = vld [vmem:[%s3209] ss:$9 sm:$0xff]
    %v3539 = vld [vmem:[%s3211] ss:$9 sm:$0xff]
    %v3540 = vld [vmem:[%s3213] ss:$9 sm:$0xff]
    %v3541 = vld [vmem:[%s3215] ss:$9 sm:$0xff]
    %v3542 = vld [vmem:[%s3217] ss:$9 sm:$0xff]
    %v3543 = vld [vmem:[%s3219] ss:$9 sm:$0xff]
    %3544 = vst [vmem:[#allocation1] sm:$0xff] %v70
    %v3545 = vld [vmem:[#allocation1] ss:$9 sm:$0xff]
    %v3546 = vld [vmem:[%s3207] ss:$9 sm:$0xff]
    %v3547 = vld [vmem:[%s3209] ss:$9 sm:$0xff]
    %v3548 = vld [vmem:[%s3211] ss:$9 sm:$0xff]
    %v3549 = vld [vmem:[%s3213] ss:$9 sm:$0xff]
    %v3550 = vld [vmem:[%s3215] ss:$9 sm:$0xff]
    %v3551 = vld [vmem:[%s3217] ss:$9 sm:$0xff]
    %v3552 = vld [vmem:[%s3219] ss:$9 sm:$0xff]
    %3553 = vst [vmem:[#allocation1] sm:$0xff] %v71
    %v3554 = vld [vmem:[%s3207] ss:$9 sm:$0xff]
    %v3555 = vld [vmem:[%s3209] ss:$9 sm:$0xff]
    %v3556 = vld [vmem:[%s3211] ss:$9 sm:$0xff]
    %v3557 = vld [vmem:[%s3213] ss:$9 sm:$0xff]
    %v3558 = vld [vmem:[%s3215] ss:$9 sm:$0xff]
    %v3559 = vld [vmem:[%s3217] ss:$9 sm:$0xff]
    %v3560 = vld [vmem:[%s3219] ss:$9 sm:$0xff]
    %3561 = vst [vmem:[#allocation1] sm:$0xff] %v72
    %v3562 = vld [vmem:[#allocation1] ss:$9 sm:$0xff]
    %v3563 = vld [vmem:[%s3207] ss:$9 sm:$0xff]
    %v3564 = vld [vmem:[%s3209] ss:$9 sm:$0xff]
    %v3565 = vld [vmem:[%s3211] ss:$9 sm:$0xff]
    %v3566 = vld [vmem:[%s3213] ss:$9 sm:$0xff]
    %v3567 = vld [vmem:[%s3215] ss:$9 sm:$0xff]
    %v3568 = vld [vmem:[%s3217] ss:$9 sm:$0xff]
    %v3569 = vld [vmem:[%s3219] ss:$9 sm:$0xff]
    %3570 = vst [vmem:[#allocation1] sm:$0xff] %v73
    %v3571 = vld [vmem:[%s3207] ss:$9 sm:$0xff]
    %v3572 = vld [vmem:[%s3209] ss:$9 sm:$0xff]
    %v3573 = vld [vmem:[%s3211] ss:$9 sm:$0xff]
    %v3574 = vld [vmem:[%s3213] ss:$9 sm:$0xff]
    %v3575 = vld [vmem:[%s3215] ss:$9 sm:$0xff]
    %v3576 = vld [vmem:[%s3217] ss:$9 sm:$0xff]
    %v3577 = vld [vmem:[%s3219] ss:$9 sm:$0xff]
    %3578 = vst [vmem:[#allocation1] sm:$0xff] %v74
    %v3579 = vld [vmem:[#allocation1] ss:$9 sm:$0xff]
    %v3580 = vld [vmem:[%s3207] ss:$9 sm:$0xff]
    %v3581 = vld [vmem:[%s3209] ss:$9 sm:$0xff]
    %v3582 = vld [vmem:[%s3211] ss:$9 sm:$0xff]
    %v3583 = vld [vmem:[%s3213] ss:$9 sm:$0xff]
    %v3584 = vld [vmem:[%s3215] ss:$9 sm:$0xff]
    %v3585 = vld [vmem:[%s3217] ss:$9 sm:$0xff]
    %v3586 = vld [vmem:[%s3219] ss:$9 sm:$0xff]
    %3587 = vst [vmem:[#allocation1] sm:$0xff] %v75
    %v3588 = vld [vmem:[%s3207] ss:$9 sm:$0xff]
    %v3589 = vld [vmem:[%s3209] ss:$9 sm:$0xff]
    %v3590 = vld [vmem:[%s3211] ss:$9 sm:$0xff]
    %v3591 = vld [vmem:[%s3213] ss:$9 sm:$0xff]
    %v3592 = vld [vmem:[%s3215] ss:$9 sm:$0xff]
    %v3593 = vld [vmem:[%s3217] ss:$9 sm:$0xff]
    %v3594 = vld [vmem:[%s3219] ss:$9 sm:$0xff]
    %3595 = vst [vmem:[#allocation1] sm:$0xff] %v76
    %v3596 = vld [vmem:[#allocation1] ss:$9 sm:$0xff]
    %v3597 = vld [vmem:[%s3207] ss:$9 sm:$0xff]
    %v3598 = vld [vmem:[%s3209] ss:$9 sm:$0xff]
    %v3599 = vld [vmem:[%s3211] ss:$9 sm:$0xff]
    %v3600 = vld [vmem:[%s3213] ss:$9 sm:$0xff]
    %v3601 = vld [vmem:[%s3215] ss:$9 sm:$0xff]
    %v3602 = vld [vmem:[%s3217] ss:$9 sm:$0xff]
    %v3603 = vld [vmem:[%s3219] ss:$9 sm:$0xff]
    %3604 = vst [vmem:[#allocation1] sm:$0xff] %v77
    %v3605 = vld [vmem:[%s3207] ss:$9 sm:$0xff]
    %v3606 = vld [vmem:[%s3209] ss:$9 sm:$0xff]
    %v3607 = vld [vmem:[%s3211] ss:$9 sm:$0xff]
    %v3608 = vld [vmem:[%s3213] ss:$9 sm:$0xff]
    %v3609 = vld [vmem:[%s3215] ss:$9 sm:$0xff]
    %v3610 = vld [vmem:[%s3217] ss:$9 sm:$0xff]
    %v3611 = vld [vmem:[%s3219] ss:$9 sm:$0xff]
    %3612 = vst [vmem:[#allocation1] sm:$0xff] %v78
    %v3613 = vld [vmem:[#allocation1] ss:$9 sm:$0xff]
    %v3614 = vld [vmem:[%s3207] ss:$9 sm:$0xff]
    %v3615 = vld [vmem:[%s3209] ss:$9 sm:$0xff]
    %v3616 = vld [vmem:[%s3211] ss:$9 sm:$0xff]
    %v3617 = vld [vmem:[%s3213] ss:$9 sm:$0xff]
    %v3618 = vld [vmem:[%s3215] ss:$9 sm:$0xff]
    %v3619 = vld [vmem:[%s3217] ss:$9 sm:$0xff]
    %v3620 = vld [vmem:[%s3219] ss:$9 sm:$0xff]
    %3621 = vst [vmem:[#allocation1] sm:$0xff] %v79
    %v3622 = vld [vmem:[%s3207] ss:$9 sm:$0xff]
    %v3623 = vld [vmem:[%s3209] ss:$9 sm:$0xff]
    %v3624 = vld [vmem:[%s3211] ss:$9 sm:$0xff]
    %v3625 = vld [vmem:[%s3213] ss:$9 sm:$0xff]
    %v3626 = vld [vmem:[%s3215] ss:$9 sm:$0xff]
    %v3627 = vld [vmem:[%s3217] ss:$9 sm:$0xff]
    %v3628 = vld [vmem:[%s3219] ss:$9 sm:$0xff]
    %3629 = vst [vmem:[#allocation1] sm:$0xff] %v80
    %v3630 = vld [vmem:[#allocation1] ss:$9 sm:$0xff]
    %v3631 = vld [vmem:[%s3207] ss:$9 sm:$0xff]
    %v3632 = vld [vmem:[%s3209] ss:$9 sm:$0xff]
    %v3633 = vld [vmem:[%s3211] ss:$9 sm:$0xff]
    %v3634 = vld [vmem:[%s3213] ss:$9 sm:$0xff]
    %v3635 = vld [vmem:[%s3215] ss:$9 sm:$0xff]
    %v3636 = vld [vmem:[%s3217] ss:$9 sm:$0xff]
    %v3637 = vld [vmem:[%s3219] ss:$9 sm:$0xff]
    %3638 = vst [vmem:[#allocation1] sm:$0xff] %v81
    %v3639 = vld [vmem:[%s3207] ss:$9 sm:$0xff]
    %v3640 = vld [vmem:[%s3209] ss:$9 sm:$0xff]
    %v3641 = vld [vmem:[%s3211] ss:$9 sm:$0xff]
    %v3642 = vld [vmem:[%s3213] ss:$9 sm:$0xff]
    %v3643 = vld [vmem:[%s3215] ss:$9 sm:$0xff]
    %v3644 = vld [vmem:[%s3217] ss:$9 sm:$0xff]
    %v3645 = vld [vmem:[%s3219] ss:$9 sm:$0xff]
    %3646 = vst [vmem:[#allocation1] sm:$0xff] %v82
    %v3647 = vld [vmem:[#allocation1] ss:$9 sm:$0xff]
    %v3648 = vld [vmem:[%s3207] ss:$9 sm:$0xff]
    %v3649 = vld [vmem:[%s3209] ss:$9 sm:$0xff]
    %v3650 = vld [vmem:[%s3211] ss:$9 sm:$0xff]
    %v3651 = vld [vmem:[%s3213] ss:$9 sm:$0xff]
    %v3652 = vld [vmem:[%s3215] ss:$9 sm:$0xff]
    %v3653 = vld [vmem:[%s3217] ss:$9 sm:$0xff]
    %v3654 = vld [vmem:[%s3219] ss:$9 sm:$0xff]
    %3655 = vst [vmem:[#allocation1] sm:$0xff] %v83
    %v3656 = vld [vmem:[%s3207] ss:$9 sm:$0xff]
    %v3657 = vld [vmem:[%s3209] ss:$9 sm:$0xff]
    %v3658 = vld [vmem:[%s3211] ss:$9 sm:$0xff]
    %v3659 = vld [vmem:[%s3213] ss:$9 sm:$0xff]
    %v3660 = vld [vmem:[%s3215] ss:$9 sm:$0xff]
    %v3661 = vld [vmem:[%s3217] ss:$9 sm:$0xff]
    %v3662 = vld [vmem:[%s3219] ss:$9 sm:$0xff]
    %3663 = vst [vmem:[#allocation1] sm:$0xff] %v84
    %v3664 = vld [vmem:[#allocation1] ss:$9 sm:$0xff]
    %v3665 = vld [vmem:[%s3207] ss:$9 sm:$0xff]
    %v3666 = vld [vmem:[%s3209] ss:$9 sm:$0xff]
    %v3667 = vld [vmem:[%s3211] ss:$9 sm:$0xff]
    %v3668 = vld [vmem:[%s3213] ss:$9 sm:$0xff]
    %v3669 = vld [vmem:[%s3215] ss:$9 sm:$0xff]
    %v3670 = vld [vmem:[%s3217] ss:$9 sm:$0xff]
    %v3671 = vld [vmem:[%s3219] ss:$9 sm:$0xff]
    %3672 = vst [vmem:[#allocation1] sm:$0xff] %v85
    %v3673 = vld [vmem:[%s3207] ss:$9 sm:$0xff]
    %v3674 = vld [vmem:[%s3209] ss:$9 sm:$0xff]
    %v3675 = vld [vmem:[%s3211] ss:$9 sm:$0xff]
    %v3676 = vld [vmem:[%s3213] ss:$9 sm:$0xff]
    %v3677 = vld [vmem:[%s3215] ss:$9 sm:$0xff]
    %v3678 = vld [vmem:[%s3217] ss:$9 sm:$0xff]
    %v3679 = vld [vmem:[%s3219] ss:$9 sm:$0xff]
    %3680 = vst [vmem:[#allocation1] sm:$0xff] %v86
    %v3681 = vld [vmem:[#allocation1] ss:$9 sm:$0xff]
    %v3682 = vld [vmem:[%s3207] ss:$9 sm:$0xff]
    %v3683 = vld [vmem:[%s3209] ss:$9 sm:$0xff]
    %v3684 = vld [vmem:[%s3211] ss:$9 sm:$0xff]
    %v3685 = vld [vmem:[%s3213] ss:$9 sm:$0xff]
    %v3686 = vld [vmem:[%s3215] ss:$9 sm:$0xff]
    %v3687 = vld [vmem:[%s3217] ss:$9 sm:$0xff]
    %v3688 = vld [vmem:[%s3219] ss:$9 sm:$0xff]
    %3689 = vst [vmem:[#allocation1] sm:$0xff] %v87
    %v3690 = vld [vmem:[%s3207] ss:$9 sm:$0xff]
    %v3691 = vld [vmem:[%s3209] ss:$9 sm:$0xff]
    %v3692 = vld [vmem:[%s3211] ss:$9 sm:$0xff]
    %v3693 = vld [vmem:[%s3213] ss:$9 sm:$0xff]
    %v3694 = vld [vmem:[%s3215] ss:$9 sm:$0xff]
    %v3695 = vld [vmem:[%s3217] ss:$9 sm:$0xff]
    %v3696 = vld [vmem:[%s3219] ss:$9 sm:$0xff]
    %3697 = vst [vmem:[#allocation1] sm:$0xff] %v88
    %v3698 = vld [vmem:[#allocation1] ss:$9 sm:$0xff]
    %v3699 = vld [vmem:[%s3207] ss:$9 sm:$0xff]
    %v3700 = vld [vmem:[%s3209] ss:$9 sm:$0xff]
    %v3701 = vld [vmem:[%s3211] ss:$9 sm:$0xff]
    %v3702 = vld [vmem:[%s3213] ss:$9 sm:$0xff]
    %v3703 = vld [vmem:[%s3215] ss:$9 sm:$0xff]
    %v3704 = vld [vmem:[%s3217] ss:$9 sm:$0xff]
    %v3705 = vld [vmem:[%s3219] ss:$9 sm:$0xff]
    %3706 = vst [vmem:[#allocation1] sm:$0xff] %v89
    %v3707 = vld [vmem:[%s3207] ss:$9 sm:$0xff]
    %v3708 = vld [vmem:[%s3209] ss:$9 sm:$0xff]
    %v3709 = vld [vmem:[%s3211] ss:$9 sm:$0xff]
    %v3710 = vld [vmem:[%s3213] ss:$9 sm:$0xff]
    %v3711 = vld [vmem:[%s3215] ss:$9 sm:$0xff]
    %v3712 = vld [vmem:[%s3217] ss:$9 sm:$0xff]
    %v3713 = vld [vmem:[%s3219] ss:$9 sm:$0xff]
    %3714 = vst [vmem:[#allocation1] sm:$0xff] %v90
    %v3715 = vld [vmem:[#allocation1] ss:$9 sm:$0xff]
    %v3716 = vld [vmem:[%s3207] ss:$9 sm:$0xff]
    %v3717 = vld [vmem:[%s3209] ss:$9 sm:$0xff]
    %v3718 = vld [vmem:[%s3211] ss:$9 sm:$0xff]
    %v3719 = vld [vmem:[%s3213] ss:$9 sm:$0xff]
    %v3720 = vld [vmem:[%s3215] ss:$9 sm:$0xff]
    %v3721 = vld [vmem:[%s3217] ss:$9 sm:$0xff]
    %v3722 = vld [vmem:[%s3219] ss:$9 sm:$0xff]
    %3723 = vst [vmem:[#allocation1] ss:$9 sm:$0xff] %v3208
    %s3724 = scalar_lea.vmem [#allocation1], 1
    %3725 = vst [vmem:[%s3724] ss:$9 sm:$0xff] %v3210
    %s3726 = scalar_lea.vmem [#allocation1], 2
    %3727 = vst [vmem:[%s3726] ss:$9 sm:$0xff] %v3212
    %s3728 = scalar_lea.vmem [#allocation1], 3
    %3729 = vst [vmem:[%s3728] ss:$9 sm:$0xff] %v3214
    %s3730 = scalar_lea.vmem [#allocation1], 4
    %3731 = vst [vmem:[%s3730] ss:$9 sm:$0xff] %v3216
    %s3732 = scalar_lea.vmem [#allocation1], 5
    %3733 = vst [vmem:[%s3732] ss:$9 sm:$0xff] %v3218
    %s3734 = scalar_lea.vmem [#allocation1], 6
    %3735 = vst [vmem:[%s3734] ss:$9 sm:$0xff] %v3220
    %s3736 = scalar_lea.vmem [#allocation1], 7
    %3737 = vst [vmem:[%s3736] ss:$9 sm:$0xff] %v3222
    %v3738 = vld [vmem:[#allocation1] sm:$0xff]
    %3739 = vst [vmem:[#allocation1] ss:$9 sm:$0xff] %v3223
    %3740 = vst [vmem:[%s3724] ss:$9 sm:$0xff] %v3224
    %3741 = vst [vmem:[%s3726] ss:$9 sm:$0xff] %v3225
    %3742 = vst [vmem:[%s3728] ss:$9 sm:$0xff] %v3226
    %3743 = vst [vmem:[%s3730] ss:$9 sm:$0xff] %v3227
    %3744 = vst [vmem:[%s3732] ss:$9 sm:$0xff] %v3228
    %3745 = vst [vmem:[%s3734] ss:$9 sm:$0xff] %v3229
    %3746 = vst [vmem:[%s3736] ss:$9 sm:$0xff] %v3231
    %v3747 = vld [vmem:[#allocation1] sm:$0xff]
    %3748 = vst [vmem:[#allocation1] ss:$9 sm:$0xff] %v3232
    %3749 = vst [vmem:[%s3724] ss:$9 sm:$0xff] %v3233
    %3750 = vst [vmem:[%s3726] ss:$9 sm:$0xff] %v3234
    %3751 = vst [vmem:[%s3728] ss:$9 sm:$0xff] %v3235
    %3752 = vst [vmem:[%s3730] ss:$9 sm:$0xff] %v3236
    %3753 = vst [vmem:[%s3732] ss:$9 sm:$0xff] %v3237
    %3754 = vst [vmem:[%s3734] ss:$9 sm:$0xff] %v3239
    %3755 = vst [vmem:[%s3736] ss:$9 sm:$0xff] %v3240
    %v3756 = vld [vmem:[#allocation1] sm:$0xff]
    %3757 = vst [vmem:[#allocation1] ss:$9 sm:$0xff] %v3241
    %3758 = vst [vmem:[%s3724] ss:$9 sm:$0xff] %v3242
    %3759 = vst [vmem:[%s3726] ss:$9 sm:$0xff] %v3243
    %3760 = vst [vmem:[%s3728] ss:$9 sm:$0xff] %v3244
    %3761 = vst [vmem:[%s3730] ss:$9 sm:$0xff] %v3245
    %3762 = vst [vmem:[%s3732] ss:$9 sm:$0xff] %v3246
    %3763 = vst [vmem:[%s3734] ss:$9 sm:$0xff] %v3248
    %3764 = vst [vmem:[%s3736] ss:$9 sm:$0xff] %v3249
    %v3765 = vld [vmem:[#allocation1] sm:$0xff]
    %3766 = vst [vmem:[#allocation1] ss:$9 sm:$0xff] %v3250
    %3767 = vst [vmem:[%s3724] ss:$9 sm:$0xff] %v3251
    %3768 = vst [vmem:[%s3726] ss:$9 sm:$0xff] %v3252
    %3769 = vst [vmem:[%s3728] ss:$9 sm:$0xff] %v3253
    %3770 = vst [vmem:[%s3730] ss:$9 sm:$0xff] %v3254
    %3771 = vst [vmem:[%s3732] ss:$9 sm:$0xff] %v3256
    %3772 = vst [vmem:[%s3734] ss:$9 sm:$0xff] %v3257
    %3773 = vst [vmem:[%s3736] ss:$9 sm:$0xff] %v3258
    %v3774 = vld [vmem:[#allocation1] sm:$0xff]
    %3775 = vst [vmem:[#allocation1] ss:$9 sm:$0xff] %v3259
    %3776 = vst [vmem:[%s3724] ss:$9 sm:$0xff] %v3260
    %3777 = vst [vmem:[%s3726] ss:$9 sm:$0xff] %v3261
    %3778 = vst [vmem:[%s3728] ss:$9 sm:$0xff] %v3262
    %3779 = vst [vmem:[%s3730] ss:$9 sm:$0xff] %v3263
    %3780 = vst [vmem:[%s3732] ss:$9 sm:$0xff] %v3265
    %3781 = vst [vmem:[%s3734] ss:$9 sm:$0xff] %v3266
    %3782 = vst [vmem:[%s3736] ss:$9 sm:$0xff] %v3267
    %v3783 = vld [vmem:[#allocation1] sm:$0xff]
    %3784 = vst [vmem:[#allocation1] ss:$9 sm:$0xff] %v3268
    %3785 = vst [vmem:[%s3724] ss:$9 sm:$0xff] %v3269
    %3786 = vst [vmem:[%s3726] ss:$9 sm:$0xff] %v3270
    %3787 = vst [vmem:[%s3728] ss:$9 sm:$0xff] %v3271
    %3788 = vst [vmem:[%s3730] ss:$9 sm:$0xff] %v3273
    %3789 = vst [vmem:[%s3732] ss:$9 sm:$0xff] %v3274
    %3790 = vst [vmem:[%s3734] ss:$9 sm:$0xff] %v3275
    %3791 = vst [vmem:[%s3736] ss:$9 sm:$0xff] %v3276
    %v3792 = vld [vmem:[#allocation1] sm:$0xff]
    %3793 = vst [vmem:[#allocation1] ss:$9 sm:$0xff] %v3277
    %3794 = vst [vmem:[%s3724] ss:$9 sm:$0xff] %v3278
    %3795 = vst [vmem:[%s3726] ss:$9 sm:$0xff] %v3279
    %3796 = vst [vmem:[%s3728] ss:$9 sm:$0xff] %v3280
    %3797 = vst [vmem:[%s3730] ss:$9 sm:$0xff] %v3282
    %3798 = vst [vmem:[%s3732] ss:$9 sm:$0xff] %v3283
    %3799 = vst [vmem:[%s3734] ss:$9 sm:$0xff] %v3284
    %3800 = vst [vmem:[%s3736] ss:$9 sm:$0xff] %v3285
    %v3801 = vld [vmem:[#allocation1] sm:$0xff]
    %3802 = vst [vmem:[#allocation1] ss:$9 sm:$0xff] %v3286
    %3803 = vst [vmem:[%s3724] ss:$9 sm:$0xff] %v3287
    %3804 = vst [vmem:[%s3726] ss:$9 sm:$0xff] %v3288
    %3805 = vst [vmem:[%s3728] ss:$9 sm:$0xff] %v3290
    %3806 = vst [vmem:[%s3730] ss:$9 sm:$0xff] %v3291
    %3807 = vst [vmem:[%s3732] ss:$9 sm:$0xff] %v3292
    %3808 = vst [vmem:[%s3734] ss:$9 sm:$0xff] %v3293
    %3809 = vst [vmem:[%s3736] ss:$9 sm:$0xff] %v3294
    %v3810 = vld [vmem:[#allocation1] sm:$0xff]
    %3811 = vst [vmem:[#allocation1] ss:$9 sm:$0xff] %v3295
    %3812 = vst [vmem:[%s3724] ss:$9 sm:$0xff] %v3296
    %3813 = vst [vmem:[%s3726] ss:$9 sm:$0xff] %v3297
    %3814 = vst [vmem:[%s3728] ss:$9 sm:$0xff] %v3299
    %3815 = vst [vmem:[%s3730] ss:$9 sm:$0xff] %v3300
    %3816 = vst [vmem:[%s3732] ss:$9 sm:$0xff] %v3301
    %3817 = vst [vmem:[%s3734] ss:$9 sm:$0xff] %v3302
    %3818 = vst [vmem:[%s3736] ss:$9 sm:$0xff] %v3303
    %v3819 = vld [vmem:[#allocation1] sm:$0xff]
    %3820 = vst [vmem:[#allocation1] ss:$9 sm:$0xff] %v3304
    %3821 = vst [vmem:[%s3724] ss:$9 sm:$0xff] %v3305
    %3822 = vst [vmem:[%s3726] ss:$9 sm:$0xff] %v3307
    %3823 = vst [vmem:[%s3728] ss:$9 sm:$0xff] %v3308
    %3824 = vst [vmem:[%s3730] ss:$9 sm:$0xff] %v3309
    %3825 = vst [vmem:[%s3732] ss:$9 sm:$0xff] %v3310
    %3826 = vst [vmem:[%s3734] ss:$9 sm:$0xff] %v3311
    %3827 = vst [vmem:[%s3736] ss:$9 sm:$0xff] %v3312
    %v3828 = vld [vmem:[#allocation1] sm:$0xff]
    %3829 = vst [vmem:[#allocation1] ss:$9 sm:$0xff] %v3313
    %3830 = vst [vmem:[%s3724] ss:$9 sm:$0xff] %v3314
    %3831 = vst [vmem:[%s3726] ss:$9 sm:$0xff] %v3316
    %3832 = vst [vmem:[%s3728] ss:$9 sm:$0xff] %v3317
    %3833 = vst [vmem:[%s3730] ss:$9 sm:$0xff] %v3318
    %3834 = vst [vmem:[%s3732] ss:$9 sm:$0xff] %v3319
    %3835 = vst [vmem:[%s3734] ss:$9 sm:$0xff] %v3320
    %3836 = vst [vmem:[%s3736] ss:$9 sm:$0xff] %v3321
    %v3837 = vld [vmem:[#allocation1] sm:$0xff]
    %3838 = vst [vmem:[#allocation1] ss:$9 sm:$0xff] %v3322
    %3839 = vst [vmem:[%s3724] ss:$9 sm:$0xff] %v3324
    %3840 = vst [vmem:[%s3726] ss:$9 sm:$0xff] %v3325
    %3841 = vst [vmem:[%s3728] ss:$9 sm:$0xff] %v3326
    %3842 = vst [vmem:[%s3730] ss:$9 sm:$0xff] %v3327
    %3843 = vst [vmem:[%s3732] ss:$9 sm:$0xff] %v3328
    %3844 = vst [vmem:[%s3734] ss:$9 sm:$0xff] %v3329
    %3845 = vst [vmem:[%s3736] ss:$9 sm:$0xff] %v3330
    %v3846 = vld [vmem:[#allocation1] sm:$0xff]
    %3847 = vst [vmem:[#allocation1] ss:$9 sm:$0xff] %v3331
    %3848 = vst [vmem:[%s3724] ss:$9 sm:$0xff] %v3333
    %3849 = vst [vmem:[%s3726] ss:$9 sm:$0xff] %v3334
    %3850 = vst [vmem:[%s3728] ss:$9 sm:$0xff] %v3335
    %3851 = vst [vmem:[%s3730] ss:$9 sm:$0xff] %v3336
    %3852 = vst [vmem:[%s3732] ss:$9 sm:$0xff] %v3337
    %3853 = vst [vmem:[%s3734] ss:$9 sm:$0xff] %v3338
    %3854 = vst [vmem:[%s3736] ss:$9 sm:$0xff] %v3339
    %v3855 = vld [vmem:[#allocation1] sm:$0xff]
    %3856 = vst [vmem:[#allocation1] ss:$9 sm:$0xff] %v3341
    %3857 = vst [vmem:[%s3724] ss:$9 sm:$0xff] %v3342
    %3858 = vst [vmem:[%s3726] ss:$9 sm:$0xff] %v3343
    %3859 = vst [vmem:[%s3728] ss:$9 sm:$0xff] %v3344
    %3860 = vst [vmem:[%s3730] ss:$9 sm:$0xff] %v3345
    %3861 = vst [vmem:[%s3732] ss:$9 sm:$0xff] %v3346
    %3862 = vst [vmem:[%s3734] ss:$9 sm:$0xff] %v3347
    %3863 = vst [vmem:[%s3736] ss:$9 sm:$0xff] %v3348
    %v3864 = vld [vmem:[#allocation1] sm:$0xff]
    %3865 = vst [vmem:[#allocation1] ss:$9 sm:$0xff] %v3350
    %3866 = vst [vmem:[%s3724] ss:$9 sm:$0xff] %v3351
    %3867 = vst [vmem:[%s3726] ss:$9 sm:$0xff] %v3352
    %3868 = vst [vmem:[%s3728] ss:$9 sm:$0xff] %v3353
    %3869 = vst [vmem:[%s3730] ss:$9 sm:$0xff] %v3354
    %3870 = vst [vmem:[%s3732] ss:$9 sm:$0xff] %v3355
    %3871 = vst [vmem:[%s3734] ss:$9 sm:$0xff] %v3356
    %3872 = vst [vmem:[%s3736] ss:$9 sm:$0xff] %v3358
    %v3873 = vld [vmem:[#allocation1] sm:$0xff]
    %3874 = vst [vmem:[#allocation1] ss:$9 sm:$0xff] %v3359
    %3875 = vst [vmem:[%s3724] ss:$9 sm:$0xff] %v3360
    %3876 = vst [vmem:[%s3726] ss:$9 sm:$0xff] %v3361
    %3877 = vst [vmem:[%s3728] ss:$9 sm:$0xff] %v3362
    %3878 = vst [vmem:[%s3730] ss:$9 sm:$0xff] %v3363
    %3879 = vst [vmem:[%s3732] ss:$9 sm:$0xff] %v3364
    %3880 = vst [vmem:[%s3734] ss:$9 sm:$0xff] %v3365
    %3881 = vst [vmem:[%s3736] ss:$9 sm:$0xff] %v3367
    %v3882 = vld [vmem:[#allocation1] sm:$0xff]
    %3883 = vst [vmem:[#allocation1] ss:$9 sm:$0xff] %v3368
    %3884 = vst [vmem:[%s3724] ss:$9 sm:$0xff] %v3369
    %3885 = vst [vmem:[%s3726] ss:$9 sm:$0xff] %v3370
    %3886 = vst [vmem:[%s3728] ss:$9 sm:$0xff] %v3371
    %3887 = vst [vmem:[%s3730] ss:$9 sm:$0xff] %v3372
    %3888 = vst [vmem:[%s3732] ss:$9 sm:$0xff] %v3373
    %3889 = vst [vmem:[%s3734] ss:$9 sm:$0xff] %v3375
    %3890 = vst [vmem:[%s3736] ss:$9 sm:$0xff] %v3376
    %v3891 = vld [vmem:[#allocation1] sm:$0xff]
    %3892 = vst [vmem:[#allocation1] ss:$9 sm:$0xff] %v3377
    %3893 = vst [vmem:[%s3724] ss:$9 sm:$0xff] %v3378
    %3894 = vst [vmem:[%s3726] ss:$9 sm:$0xff] %v3379
    %3895 = vst [vmem:[%s3728] ss:$9 sm:$0xff] %v3380
    %3896 = vst [vmem:[%s3730] ss:$9 sm:$0xff] %v3381
    %3897 = vst [vmem:[%s3732] ss:$9 sm:$0xff] %v3382
    %3898 = vst [vmem:[%s3734] ss:$9 sm:$0xff] %v3384
    %3899 = vst [vmem:[%s3736] ss:$9 sm:$0xff] %v3385
    %v3900 = vld [vmem:[#allocation1] sm:$0xff]
    %3901 = vst [vmem:[#allocation1] ss:$9 sm:$0xff] %v3386
    %3902 = vst [vmem:[%s3724] ss:$9 sm:$0xff] %v3387
    %3903 = vst [vmem:[%s3726] ss:$9 sm:$0xff] %v3388
    %3904 = vst [vmem:[%s3728] ss:$9 sm:$0xff] %v3389
    %3905 = vst [vmem:[%s3730] ss:$9 sm:$0xff] %v3390
    %3906 = vst [vmem:[%s3732] ss:$9 sm:$0xff] %v3392
    %3907 = vst [vmem:[%s3734] ss:$9 sm:$0xff] %v3393
    %3908 = vst [vmem:[%s3736] ss:$9 sm:$0xff] %v3394
    %v3909 = vld [vmem:[#allocation1] sm:$0xff]
    %3910 = vst [vmem:[#allocation1] ss:$9 sm:$0xff] %v3395
    %3911 = vst [vmem:[%s3724] ss:$9 sm:$0xff] %v3396
    %3912 = vst [vmem:[%s3726] ss:$9 sm:$0xff] %v3397
    %3913 = vst [vmem:[%s3728] ss:$9 sm:$0xff] %v3398
    %3914 = vst [vmem:[%s3730] ss:$9 sm:$0xff] %v3399
    %3915 = vst [vmem:[%s3732] ss:$9 sm:$0xff] %v3401
    %3916 = vst [vmem:[%s3734] ss:$9 sm:$0xff] %v3402
    %3917 = vst [vmem:[%s3736] ss:$9 sm:$0xff] %v3403
    %v3918 = vld [vmem:[#allocation1] sm:$0xff]
    %3919 = vst [vmem:[#allocation1] ss:$9 sm:$0xff] %v3404
    %3920 = vst [vmem:[%s3724] ss:$9 sm:$0xff] %v3405
    %3921 = vst [vmem:[%s3726] ss:$9 sm:$0xff] %v3406
    %3922 = vst [vmem:[%s3728] ss:$9 sm:$0xff] %v3407
    %3923 = vst [vmem:[%s3730] ss:$9 sm:$0xff] %v3409
    %3924 = vst [vmem:[%s3732] ss:$9 sm:$0xff] %v3410
    %3925 = vst [vmem:[%s3734] ss:$9 sm:$0xff] %v3411
    %3926 = vst [vmem:[%s3736] ss:$9 sm:$0xff] %v3412
    %v3927 = vld [vmem:[#allocation1] sm:$0xff]
    %3928 = vst [vmem:[#allocation1] ss:$9 sm:$0xff] %v3413
    %3929 = vst [vmem:[%s3724] ss:$9 sm:$0xff] %v3414
    %3930 = vst [vmem:[%s3726] ss:$9 sm:$0xff] %v3415
    %3931 = vst [vmem:[%s3728] ss:$9 sm:$0xff] %v3416
    %3932 = vst [vmem:[%s3730] ss:$9 sm:$0xff] %v3418
    %3933 = vst [vmem:[%s3732] ss:$9 sm:$0xff] %v3419
    %3934 = vst [vmem:[%s3734] ss:$9 sm:$0xff] %v3420
    %3935 = vst [vmem:[%s3736] ss:$9 sm:$0xff] %v3421
    %v3936 = vld [vmem:[#allocation1] sm:$0xff]
    %3937 = vst [vmem:[#allocation1] ss:$9 sm:$0xff] %v3422
    %3938 = vst [vmem:[%s3724] ss:$9 sm:$0xff] %v3423
    %3939 = vst [vmem:[%s3726] ss:$9 sm:$0xff] %v3424
    %3940 = vst [vmem:[%s3728] ss:$9 sm:$0xff] %v3426
    %3941 = vst [vmem:[%s3730] ss:$9 sm:$0xff] %v3427
    %3942 = vst [vmem:[%s3732] ss:$9 sm:$0xff] %v3428
    %3943 = vst [vmem:[%s3734] ss:$9 sm:$0xff] %v3429
    %3944 = vst [vmem:[%s3736] ss:$9 sm:$0xff] %v3430
    %v3945 = vld [vmem:[#allocation1] sm:$0xff]
    %3946 = vst [vmem:[#allocation1] ss:$9 sm:$0xff] %v3431
    %3947 = vst [vmem:[%s3724] ss:$9 sm:$0xff] %v3432
    %3948 = vst [vmem:[%s3726] ss:$9 sm:$0xff] %v3433
    %3949 = vst [vmem:[%s3728] ss:$9 sm:$0xff] %v3435
    %3950 = vst [vmem:[%s3730] ss:$9 sm:$0xff] %v3436
    %3951 = vst [vmem:[%s3732] ss:$9 sm:$0xff] %v3437
    %3952 = vst [vmem:[%s3734] ss:$9 sm:$0xff] %v3438
    %3953 = vst [vmem:[%s3736] ss:$9 sm:$0xff] %v3439
    %v3954 = vld [vmem:[#allocation1] sm:$0xff]
    %3955 = vst [vmem:[#allocation1] ss:$9 sm:$0xff] %v3440
    %3956 = vst [vmem:[%s3724] ss:$9 sm:$0xff] %v3441
    %3957 = vst [vmem:[%s3726] ss:$9 sm:$0xff] %v3443
    %3958 = vst [vmem:[%s3728] ss:$9 sm:$0xff] %v3444
    %3959 = vst [vmem:[%s3730] ss:$9 sm:$0xff] %v3445
    %3960 = vst [vmem:[%s3732] ss:$9 sm:$0xff] %v3446
    %3961 = vst [vmem:[%s3734] ss:$9 sm:$0xff] %v3447
    %3962 = vst [vmem:[%s3736] ss:$9 sm:$0xff] %v3448
    %v3963 = vld [vmem:[#allocation1] sm:$0xff]
    %3964 = vst [vmem:[#allocation1] ss:$9 sm:$0xff] %v3449
    %3965 = vst [vmem:[%s3724] ss:$9 sm:$0xff] %v3450
    %3966 = vst [vmem:[%s3726] ss:$9 sm:$0xff] %v3452
    %3967 = vst [vmem:[%s3728] ss:$9 sm:$0xff] %v3453
    %3968 = vst [vmem:[%s3730] ss:$9 sm:$0xff] %v3454
    %3969 = vst [vmem:[%s3732] ss:$9 sm:$0xff] %v3455
    %3970 = vst [vmem:[%s3734] ss:$9 sm:$0xff] %v3456
    %3971 = vst [vmem:[%s3736] ss:$9 sm:$0xff] %v3457
    %v3972 = vld [vmem:[#allocation1] sm:$0xff]
    %3973 = vst [vmem:[#allocation1] ss:$9 sm:$0xff] %v3458
    %3974 = vst [vmem:[%s3724] ss:$9 sm:$0xff] %v3460
    %3975 = vst [vmem:[%s3726] ss:$9 sm:$0xff] %v3461
    %3976 = vst [vmem:[%s3728] ss:$9 sm:$0xff] %v3462
    %3977 = vst [vmem:[%s3730] ss:$9 sm:$0xff] %v3463
    %3978 = vst [vmem:[%s3732] ss:$9 sm:$0xff] %v3464
    %3979 = vst [vmem:[%s3734] ss:$9 sm:$0xff] %v3465
    %3980 = vst [vmem:[%s3736] ss:$9 sm:$0xff] %v3466
    %v3981 = vld [vmem:[#allocation1] sm:$0xff]
    %3982 = vst [vmem:[#allocation1] ss:$9 sm:$0xff] %v3467
    %3983 = vst [vmem:[%s3724] ss:$9 sm:$0xff] %v3469
    %3984 = vst [vmem:[%s3726] ss:$9 sm:$0xff] %v3470
    %3985 = vst [vmem:[%s3728] ss:$9 sm:$0xff] %v3471
    %3986 = vst [vmem:[%s3730] ss:$9 sm:$0xff] %v3472
    %3987 = vst [vmem:[%s3732] ss:$9 sm:$0xff] %v3473
    %3988 = vst [vmem:[%s3734] ss:$9 sm:$0xff] %v3474
    %3989 = vst [vmem:[%s3736] ss:$9 sm:$0xff] %v3475
    %v3990 = vld [vmem:[#allocation1] sm:$0xff]
    %3991 = vst [vmem:[#allocation1] ss:$9 sm:$0xff] %v3477
    %3992 = vst [vmem:[%s3724] ss:$9 sm:$0xff] %v3478
    %3993 = vst [vmem:[%s3726] ss:$9 sm:$0xff] %v3479
    %3994 = vst [vmem:[%s3728] ss:$9 sm:$0xff] %v3480
    %3995 = vst [vmem:[%s3730] ss:$9 sm:$0xff] %v3481
    %3996 = vst [vmem:[%s3732] ss:$9 sm:$0xff] %v3482
    %3997 = vst [vmem:[%s3734] ss:$9 sm:$0xff] %v3483
    %3998 = vst [vmem:[%s3736] ss:$9 sm:$0xff] %v3484
    %v3999 = vld [vmem:[#allocation1] sm:$0xff]
    %4000 = vst [vmem:[#allocation1] ss:$9 sm:$0xff] %v3486
    %4001 = vst [vmem:[%s3724] ss:$9 sm:$0xff] %v3487
    %4002 = vst [vmem:[%s3726] ss:$9 sm:$0xff] %v3488
    %4003 = vst [vmem:[%s3728] ss:$9 sm:$0xff] %v3489
    %4004 = vst [vmem:[%s3730] ss:$9 sm:$0xff] %v3490
    %4005 = vst [vmem:[%s3732] ss:$9 sm:$0xff] %v3491
    %4006 = vst [vmem:[%s3734] ss:$9 sm:$0xff] %v3492
    %4007 = vst [vmem:[%s3736] ss:$9 sm:$0xff] %v3494
    %v4008 = vld [vmem:[#allocation1] sm:$0xff]
    %4009 = vst [vmem:[#allocation1] ss:$9 sm:$0xff] %v3495
    %4010 = vst [vmem:[%s3724] ss:$9 sm:$0xff] %v3496
    %4011 = vst [vmem:[%s3726] ss:$9 sm:$0xff] %v3497
    %4012 = vst [vmem:[%s3728] ss:$9 sm:$0xff] %v3498
    %4013 = vst [vmem:[%s3730] ss:$9 sm:$0xff] %v3499
    %4014 = vst [vmem:[%s3732] ss:$9 sm:$0xff] %v3500
    %4015 = vst [vmem:[%s3734] ss:$9 sm:$0xff] %v3501
    %4016 = vst [vmem:[%s3736] ss:$9 sm:$0xff] %v3503
    %v4017 = vld [vmem:[#allocation1] sm:$0xff]
    %4018 = vst [vmem:[#allocation1] ss:$9 sm:$0xff] %v3504
    %4019 = vst [vmem:[%s3724] ss:$9 sm:$0xff] %v3505
    %4020 = vst [vmem:[%s3726] ss:$9 sm:$0xff] %v3506
    %4021 = vst [vmem:[%s3728] ss:$9 sm:$0xff] %v3507
    %4022 = vst [vmem:[%s3730] ss:$9 sm:$0xff] %v3508
    %4023 = vst [vmem:[%s3732] ss:$9 sm:$0xff] %v3509
    %4024 = vst [vmem:[%s3734] ss:$9 sm:$0xff] %v3511
    %4025 = vst [vmem:[%s3736] ss:$9 sm:$0xff] %v3512
    %v4026 = vld [vmem:[#allocation1] sm:$0xff]
    %4027 = vst [vmem:[#allocation1] ss:$9 sm:$0xff] %v3513
    %4028 = vst [vmem:[%s3724] ss:$9 sm:$0xff] %v3514
    %4029 = vst [vmem:[%s3726] ss:$9 sm:$0xff] %v3515
    %4030 = vst [vmem:[%s3728] ss:$9 sm:$0xff] %v3516
    %4031 = vst [vmem:[%s3730] ss:$9 sm:$0xff] %v3517
    %4032 = vst [vmem:[%s3732] ss:$9 sm:$0xff] %v3518
    %4033 = vst [vmem:[%s3734] ss:$9 sm:$0xff] %v3520
    %4034 = vst [vmem:[%s3736] ss:$9 sm:$0xff] %v3521
    %v4035 = vld [vmem:[#allocation1] sm:$0xff]
    %4036 = vst [vmem:[#allocation1] ss:$9 sm:$0xff] %v3522
    %4037 = vst [vmem:[%s3724] ss:$9 sm:$0xff] %v3523
    %4038 = vst [vmem:[%s3726] ss:$9 sm:$0xff] %v3524
    %4039 = vst [vmem:[%s3728] ss:$9 sm:$0xff] %v3525
    %4040 = vst [vmem:[%s3730] ss:$9 sm:$0xff] %v3526
    %4041 = vst [vmem:[%s3732] ss:$9 sm:$0xff] %v3528
    %4042 = vst [vmem:[%s3734] ss:$9 sm:$0xff] %v3529
    %4043 = vst [vmem:[%s3736] ss:$9 sm:$0xff] %v3530
    %v4044 = vld [vmem:[#allocation1] sm:$0xff]
    %4045 = vst [vmem:[#allocation1] ss:$9 sm:$0xff] %v3531
    %4046 = vst [vmem:[%s3724] ss:$9 sm:$0xff] %v3532
    %4047 = vst [vmem:[%s3726] ss:$9 sm:$0xff] %v3533
    %4048 = vst [vmem:[%s3728] ss:$9 sm:$0xff] %v3534
    %4049 = vst [vmem:[%s3730] ss:$9 sm:$0xff] %v3535
    %4050 = vst [vmem:[%s3732] ss:$9 sm:$0xff] %v3537
    %4051 = vst [vmem:[%s3734] ss:$9 sm:$0xff] %v3538
    %4052 = vst [vmem:[%s3736] ss:$9 sm:$0xff] %v3539
    %v4053 = vld [vmem:[#allocation1] sm:$0xff]
    %4054 = vst [vmem:[#allocation1] ss:$9 sm:$0xff] %v3540
    %4055 = vst [vmem:[%s3724] ss:$9 sm:$0xff] %v3541
    %4056 = vst [vmem:[%s3726] ss:$9 sm:$0xff] %v3542
    %4057 = vst [vmem:[%s3728] ss:$9 sm:$0xff] %v3543
    %4058 = vst [vmem:[%s3730] ss:$9 sm:$0xff] %v3545
    %4059 = vst [vmem:[%s3732] ss:$9 sm:$0xff] %v3546
    %4060 = vst [vmem:[%s3734] ss:$9 sm:$0xff] %v3547
    %4061 = vst [vmem:[%s3736] ss:$9 sm:$0xff] %v3548
    %v4062 = vld [vmem:[#allocation1] sm:$0xff]
    %4063 = vst [vmem:[#allocation1] ss:$9 sm:$0xff] %v3549
    %4064 = vst [vmem:[%s3724] ss:$9 sm:$0xff] %v3550
    %4065 = vst [vmem:[%s3726] ss:$9 sm:$0xff] %v3551
    %4066 = vst [vmem:[%s3728] ss:$9 sm:$0xff] %v3552
    %4067 = vst [vmem:[%s3730] ss:$9 sm:$0xff] %v3554
    %4068 = vst [vmem:[%s3732] ss:$9 sm:$0xff] %v3555
    %4069 = vst [vmem:[%s3734] ss:$9 sm:$0xff] %v3556
    %4070 = vst [vmem:[%s3736] ss:$9 sm:$0xff] %v3557
    %v4071 = vld [vmem:[#allocation1] sm:$0xff]
    %4072 = vst [vmem:[#allocation1] ss:$9 sm:$0xff] %v3558
    %4073 = vst [vmem:[%s3724] ss:$9 sm:$0xff] %v3559
    %4074 = vst [vmem:[%s3726] ss:$9 sm:$0xff] %v3560
    %4075 = vst [vmem:[%s3728] ss:$9 sm:$0xff] %v3562
    %4076 = vst [vmem:[%s3730] ss:$9 sm:$0xff] %v3563
    %4077 = vst [vmem:[%s3732] ss:$9 sm:$0xff] %v3564
    %4078 = vst [vmem:[%s3734] ss:$9 sm:$0xff] %v3565
    %4079 = vst [vmem:[%s3736] ss:$9 sm:$0xff] %v3566
    %v4080 = vld [vmem:[#allocation1] sm:$0xff]
    %4081 = vst [vmem:[#allocation1] ss:$9 sm:$0xff] %v3567
    %4082 = vst [vmem:[%s3724] ss:$9 sm:$0xff] %v3568
    %4083 = vst [vmem:[%s3726] ss:$9 sm:$0xff] %v3569
    %4084 = vst [vmem:[%s3728] ss:$9 sm:$0xff] %v3571
    %4085 = vst [vmem:[%s3730] ss:$9 sm:$0xff] %v3572
    %4086 = vst [vmem:[%s3732] ss:$9 sm:$0xff] %v3573
    %4087 = vst [vmem:[%s3734] ss:$9 sm:$0xff] %v3574
    %4088 = vst [vmem:[%s3736] ss:$9 sm:$0xff] %v3575
    %v4089 = vld [vmem:[#allocation1] sm:$0xff]
    %4090 = vst [vmem:[#allocation1] ss:$9 sm:$0xff] %v3576
    %4091 = vst [vmem:[%s3724] ss:$9 sm:$0xff] %v3577
    %4092 = vst [vmem:[%s3726] ss:$9 sm:$0xff] %v3579
    %4093 = vst [vmem:[%s3728] ss:$9 sm:$0xff] %v3580
    %4094 = vst [vmem:[%s3730] ss:$9 sm:$0xff] %v3581
    %4095 = vst [vmem:[%s3732] ss:$9 sm:$0xff] %v3582
    %4096 = vst [vmem:[%s3734] ss:$9 sm:$0xff] %v3583
    %4097 = vst [vmem:[%s3736] ss:$9 sm:$0xff] %v3584
    %v4098 = vld [vmem:[#allocation1] sm:$0xff]
    %4099 = vst [vmem:[#allocation1] ss:$9 sm:$0xff] %v3585
    %4100 = vst [vmem:[%s3724] ss:$9 sm:$0xff] %v3586
    %4101 = vst [vmem:[%s3726] ss:$9 sm:$0xff] %v3588
    %4102 = vst [vmem:[%s3728] ss:$9 sm:$0xff] %v3589
    %4103 = vst [vmem:[%s3730] ss:$9 sm:$0xff] %v3590
    %4104 = vst [vmem:[%s3732] ss:$9 sm:$0xff] %v3591
    %4105 = vst [vmem:[%s3734] ss:$9 sm:$0xff] %v3592
    %4106 = vst [vmem:[%s3736] ss:$9 sm:$0xff] %v3593
    %v4107 = vld [vmem:[#allocation1] sm:$0xff]
    %4108 = vst [vmem:[#allocation1] ss:$9 sm:$0xff] %v3594
    %4109 = vst [vmem:[%s3724] ss:$9 sm:$0xff] %v3596
    %4110 = vst [vmem:[%s3726] ss:$9 sm:$0xff] %v3597
    %4111 = vst [vmem:[%s3728] ss:$9 sm:$0xff] %v3598
    %4112 = vst [vmem:[%s3730] ss:$9 sm:$0xff] %v3599
    %4113 = vst [vmem:[%s3732] ss:$9 sm:$0xff] %v3600
    %4114 = vst [vmem:[%s3734] ss:$9 sm:$0xff] %v3601
    %4115 = vst [vmem:[%s3736] ss:$9 sm:$0xff] %v3602
    %v4116 = vld [vmem:[#allocation1] sm:$0xff]
    %4117 = vst [vmem:[#allocation1] ss:$9 sm:$0xff] %v3603
    %4118 = vst [vmem:[%s3724] ss:$9 sm:$0xff] %v3605
    %4119 = vst [vmem:[%s3726] ss:$9 sm:$0xff] %v3606
    %4120 = vst [vmem:[%s3728] ss:$9 sm:$0xff] %v3607
    %4121 = vst [vmem:[%s3730] ss:$9 sm:$0xff] %v3608
    %4122 = vst [vmem:[%s3732] ss:$9 sm:$0xff] %v3609
    %4123 = vst [vmem:[%s3734] ss:$9 sm:$0xff] %v3610
    %4124 = vst [vmem:[%s3736] ss:$9 sm:$0xff] %v3611
    %v4125 = vld [vmem:[#allocation1] sm:$0xff]
    %4126 = vst [vmem:[#allocation1] ss:$9 sm:$0xff] %v3613
    %4127 = vst [vmem:[%s3724] ss:$9 sm:$0xff] %v3614
    %4128 = vst [vmem:[%s3726] ss:$9 sm:$0xff] %v3615
    %4129 = vst [vmem:[%s3728] ss:$9 sm:$0xff] %v3616
    %4130 = vst [vmem:[%s3730] ss:$9 sm:$0xff] %v3617
    %4131 = vst [vmem:[%s3732] ss:$9 sm:$0xff] %v3618
    %4132 = vst [vmem:[%s3734] ss:$9 sm:$0xff] %v3619
    %4133 = vst [vmem:[%s3736] ss:$9 sm:$0xff] %v3620
    %v4134 = vld [vmem:[#allocation1] sm:$0xff]
    %4135 = vst [vmem:[#allocation1] ss:$9 sm:$0xff] %v3622
    %4136 = vst [vmem:[%s3724] ss:$9 sm:$0xff] %v3623
    %4137 = vst [vmem:[%s3726] ss:$9 sm:$0xff] %v3624
    %4138 = vst [vmem:[%s3728] ss:$9 sm:$0xff] %v3625
    %4139 = vst [vmem:[%s3730] ss:$9 sm:$0xff] %v3626
    %4140 = vst [vmem:[%s3732] ss:$9 sm:$0xff] %v3627
    %4141 = vst [vmem:[%s3734] ss:$9 sm:$0xff] %v3628
    %4142 = vst [vmem:[%s3736] ss:$9 sm:$0xff] %v3630
    %v4143 = vld [vmem:[#allocation1] sm:$0xff]
    %4144 = vst [vmem:[#allocation1] ss:$9 sm:$0xff] %v3631
    %4145 = vst [vmem:[%s3724] ss:$9 sm:$0xff] %v3632
    %4146 = vst [vmem:[%s3726] ss:$9 sm:$0xff] %v3633
    %4147 = vst [vmem:[%s3728] ss:$9 sm:$0xff] %v3634
    %4148 = vst [vmem:[%s3730] ss:$9 sm:$0xff] %v3635
    %4149 = vst [vmem:[%s3732] ss:$9 sm:$0xff] %v3636
    %4150 = vst [vmem:[%s3734] ss:$9 sm:$0xff] %v3637
    %4151 = vst [vmem:[%s3736] ss:$9 sm:$0xff] %v3639
    %v4152 = vld [vmem:[#allocation1] sm:$0xff]
    %4153 = vst [vmem:[#allocation1] ss:$9 sm:$0xff] %v3640
    %4154 = vst [vmem:[%s3724] ss:$9 sm:$0xff] %v3641
    %4155 = vst [vmem:[%s3726] ss:$9 sm:$0xff] %v3642
    %4156 = vst [vmem:[%s3728] ss:$9 sm:$0xff] %v3643
    %4157 = vst [vmem:[%s3730] ss:$9 sm:$0xff] %v3644
    %4158 = vst [vmem:[%s3732] ss:$9 sm:$0xff] %v3645
    %4159 = vst [vmem:[%s3734] ss:$9 sm:$0xff] %v3647
    %4160 = vst [vmem:[%s3736] ss:$9 sm:$0xff] %v3648
    %v4161 = vld [vmem:[#allocation1] sm:$0xff]
    %4162 = vst [vmem:[#allocation1] ss:$9 sm:$0xff] %v3649
    %4163 = vst [vmem:[%s3724] ss:$9 sm:$0xff] %v3650
    %4164 = vst [vmem:[%s3726] ss:$9 sm:$0xff] %v3651
    %4165 = vst [vmem:[%s3728] ss:$9 sm:$0xff] %v3652
    %4166 = vst [vmem:[%s3730] ss:$9 sm:$0xff] %v3653
    %4167 = vst [vmem:[%s3732] ss:$9 sm:$0xff] %v3654
    %4168 = vst [vmem:[%s3734] ss:$9 sm:$0xff] %v3656
    %4169 = vst [vmem:[%s3736] ss:$9 sm:$0xff] %v3657
    %v4170 = vld [vmem:[#allocation1] sm:$0xff]
    %4171 = vst [vmem:[#allocation1] ss:$9 sm:$0xff] %v3658
    %4172 = vst [vmem:[%s3724] ss:$9 sm:$0xff] %v3659
    %4173 = vst [vmem:[%s3726] ss:$9 sm:$0xff] %v3660
    %4174 = vst [vmem:[%s3728] ss:$9 sm:$0xff] %v3661
    %4175 = vst [vmem:[%s3730] ss:$9 sm:$0xff] %v3662
    %4176 = vst [vmem:[%s3732] ss:$9 sm:$0xff] %v3664
    %4177 = vst [vmem:[%s3734] ss:$9 sm:$0xff] %v3665
    %4178 = vst [vmem:[%s3736] ss:$9 sm:$0xff] %v3666
    %v4179 = vld [vmem:[#allocation1] sm:$0xff]
    %4180 = vst [vmem:[#allocation1] ss:$9 sm:$0xff] %v3667
    %4181 = vst [vmem:[%s3724] ss:$9 sm:$0xff] %v3668
    %4182 = vst [vmem:[%s3726] ss:$9 sm:$0xff] %v3669
    %4183 = vst [vmem:[%s3728] ss:$9 sm:$0xff] %v3670
    %4184 = vst [vmem:[%s3730] ss:$9 sm:$0xff] %v3671
    %4185 = vst [vmem:[%s3732] ss:$9 sm:$0xff] %v3673
    %4186 = vst [vmem:[%s3734] ss:$9 sm:$0xff] %v3674
    %4187 = vst [vmem:[%s3736] ss:$9 sm:$0xff] %v3675
    %v4188 = vld [vmem:[#allocation1] sm:$0xff]
    %4189 = vst [vmem:[#allocation1] ss:$9 sm:$0xff] %v3676
    %4190 = vst [vmem:[%s3724] ss:$9 sm:$0xff] %v3677
    %4191 = vst [vmem:[%s3726] ss:$9 sm:$0xff] %v3678
    %4192 = vst [vmem:[%s3728] ss:$9 sm:$0xff] %v3679
    %4193 = vst [vmem:[%s3730] ss:$9 sm:$0xff] %v3681
    %4194 = vst [vmem:[%s3732] ss:$9 sm:$0xff] %v3682
    %4195 = vst [vmem:[%s3734] ss:$9 sm:$0xff] %v3683
    %4196 = vst [vmem:[%s3736] ss:$9 sm:$0xff] %v3684
    %v4197 = vld [vmem:[#allocation1] sm:$0xff]
    %4198 = vst [vmem:[#allocation1] ss:$9 sm:$0xff] %v3685
    %4199 = vst [vmem:[%s3724] ss:$9 sm:$0xff] %v3686
    %4200 = vst [vmem:[%s3726] ss:$9 sm:$0xff] %v3687
    %4201 = vst [vmem:[%s3728] ss:$9 sm:$0xff] %v3688
    %4202 = vst [vmem:[%s3730] ss:$9 sm:$0xff] %v3690
    %4203 = vst [vmem:[%s3732] ss:$9 sm:$0xff] %v3691
    %4204 = vst [vmem:[%s3734] ss:$9 sm:$0xff] %v3692
    %4205 = vst [vmem:[%s3736] ss:$9 sm:$0xff] %v3693
    %v4206 = vld [vmem:[#allocation1] sm:$0xff]
    %4207 = vst [vmem:[#allocation1] ss:$9 sm:$0xff] %v3694
    %4208 = vst [vmem:[%s3724] ss:$9 sm:$0xff] %v3695
    %4209 = vst [vmem:[%s3726] ss:$9 sm:$0xff] %v3696
    %4210 = vst [vmem:[%s3728] ss:$9 sm:$0xff] %v3698
    %4211 = vst [vmem:[%s3730] ss:$9 sm:$0xff] %v3699
    %4212 = vst [vmem:[%s3732] ss:$9 sm:$0xff] %v3700
    %4213 = vst [vmem:[%s3734] ss:$9 sm:$0xff] %v3701
    %4214 = vst [vmem:[%s3736] ss:$9 sm:$0xff] %v3702
    %v4215 = vld [vmem:[#allocation1] sm:$0xff]
    %4216 = vst [vmem:[#allocation1] ss:$9 sm:$0xff] %v3703
    %4217 = vst [vmem:[%s3724] ss:$9 sm:$0xff] %v3704
    %4218 = vst [vmem:[%s3726] ss:$9 sm:$0xff] %v3705
    %4219 = vst [vmem:[%s3728] ss:$9 sm:$0xff] %v3707
    %4220 = vst [vmem:[%s3730] ss:$9 sm:$0xff] %v3708
    %4221 = vst [vmem:[%s3732] ss:$9 sm:$0xff] %v3709
    %4222 = vst [vmem:[%s3734] ss:$9 sm:$0xff] %v3710
    %4223 = vst [vmem:[%s3736] ss:$9 sm:$0xff] %v3711
    %v4224 = vld [vmem:[#allocation1] sm:$0xff]
    %4225 = vst [vmem:[#allocation1] ss:$9 sm:$0xff] %v3712
    %4226 = vst [vmem:[%s3724] ss:$9 sm:$0xff] %v3713
    %4227 = vst [vmem:[%s3726] ss:$9 sm:$0xff] %v3715
    %4228 = vst [vmem:[%s3728] ss:$9 sm:$0xff] %v3716
    %4229 = vst [vmem:[%s3730] ss:$9 sm:$0xff] %v3717
    %4230 = vst [vmem:[%s3732] ss:$9 sm:$0xff] %v3718
    %4231 = vst [vmem:[%s3734] ss:$9 sm:$0xff] %v3719
    %4232 = vst [vmem:[%s3736] ss:$9 sm:$0xff] %v3720
    %v4233 = vld [vmem:[#allocation1] sm:$0xff]
    %4234 = vst [vmem:[#allocation1] ss:$9 sm:$0xff] %v3721
    %4235 = vst [vmem:[%s3724] ss:$9 sm:$0xff] %v3722
    %v4236 = vld [vmem:[#allocation1] sm:$0xff]
    %4237 = vrot.lane.b32.xlu0 %v3738, 12
    %v4238 = vpop.permute.xlu0 %4237
    %4239 = vrot.lane.b32.xlu0 %v3747, 12
    %v4240 = vpop.permute.xlu0 %4239
    %4241 = vrot.lane.b32.xlu0 %v3756, 12
    %v4242 = vpop.permute.xlu0 %4241
    %4243 = vrot.lane.b32.xlu0 %v3765, 12
    %v4244 = vpop.permute.xlu0 %4243
    %4245 = vrot.lane.b32.xlu0 %v3774, 12
    %v4246 = vpop.permute.xlu0 %4245
    %4247 = vrot.lane.b32.xlu0 %v3783, 12
    %v4248 = vpop.permute.xlu0 %4247
    %4249 = vrot.lane.b32.xlu0 %v3792, 12
    %v4250 = vpop.permute.xlu0 %4249
    %4251 = vrot.lane.b32.xlu0 %v3801, 12
    %v4252 = vpop.permute.xlu0 %4251
    %4253 = vrot.lane.b32.xlu0 %v3810, 12
    %v4254 = vpop.permute.xlu0 %4253
    %4255 = vrot.lane.b32.xlu0 %v3819, 12
    %v4256 = vpop.permute.xlu0 %4255
    %4257 = vrot.lane.b32.xlu0 %v3828, 12
    %v4258 = vpop.permute.xlu0 %4257
    %4259 = vrot.lane.b32.xlu0 %v3837, 12
    %v4260 = vpop.permute.xlu0 %4259
    %4261 = vrot.lane.b32.xlu0 %v3846, 12
    %v4262 = vpop.permute.xlu0 %4261
    %4263 = vrot.lane.b32.xlu0 %v3855, 12
    %v4264 = vpop.permute.xlu0 %4263
    %4265 = vrot.lane.b32.xlu0 %v3864, 12
    %v4266 = vpop.permute.xlu0 %4265
    %4267 = vrot.lane.b32.xlu0 %v3873, 12
    %v4268 = vpop.permute.xlu0 %4267
    %4269 = vrot.lane.b32.xlu0 %v3882, 12
    %v4270 = vpop.permute.xlu0 %4269
    %4271 = vrot.lane.b32.xlu0 %v3891, 12
    %v4272 = vpop.permute.xlu0 %4271
    %4273 = vrot.lane.b32.xlu0 %v3900, 12
    %v4274 = vpop.permute.xlu0 %4273
    %4275 = vrot.lane.b32.xlu0 %v3909, 12
    %v4276 = vpop.permute.xlu0 %4275
    %4277 = vrot.lane.b32.xlu0 %v3918, 12
    %v4278 = vpop.permute.xlu0 %4277
    %4279 = vrot.lane.b32.xlu0 %v3927, 12
    %v4280 = vpop.permute.xlu0 %4279
    %4281 = vrot.lane.b32.xlu0 %v3936, 12
    %v4282 = vpop.permute.xlu0 %4281
    %4283 = vrot.lane.b32.xlu0 %v3945, 12
    %v4284 = vpop.permute.xlu0 %4283
    %4285 = vrot.lane.b32.xlu0 %v3954, 12
    %v4286 = vpop.permute.xlu0 %4285
    %4287 = vrot.lane.b32.xlu0 %v3963, 12
    %v4288 = vpop.permute.xlu0 %4287
    %4289 = vrot.lane.b32.xlu0 %v3972, 12
    %v4290 = vpop.permute.xlu0 %4289
    %4291 = vrot.lane.b32.xlu0 %v3981, 12
    %v4292 = vpop.permute.xlu0 %4291
    %4293 = vrot.lane.b32.xlu0 %v3990, 12
    %v4294 = vpop.permute.xlu0 %4293
    %4295 = vrot.lane.b32.xlu0 %v3999, 12
    %v4296 = vpop.permute.xlu0 %4295
    %4297 = vrot.lane.b32.xlu0 %v4008, 12
    %v4298 = vpop.permute.xlu0 %4297
    %4299 = vrot.lane.b32.xlu0 %v4017, 12
    %v4300 = vpop.permute.xlu0 %4299
    %4301 = vrot.lane.b32.xlu0 %v4026, 12
    %v4302 = vpop.permute.xlu0 %4301
    %4303 = vrot.lane.b32.xlu0 %v4035, 12
    %v4304 = vpop.permute.xlu0 %4303
    %4305 = vrot.lane.b32.xlu0 %v4044, 12
    %v4306 = vpop.permute.xlu0 %4305
    %4307 = vrot.lane.b32.xlu0 %v4053, 12
    %v4308 = vpop.permute.xlu0 %4307
    %4309 = vrot.lane.b32.xlu0 %v4062, 12
    %v4310 = vpop.permute.xlu0 %4309
    %4311 = vrot.lane.b32.xlu0 %v4071, 12
    %v4312 = vpop.permute.xlu0 %4311
    %4313 = vrot.lane.b32.xlu0 %v4080, 12
    %v4314 = vpop.permute.xlu0 %4313
    %4315 = vrot.lane.b32.xlu0 %v4089, 12
    %v4316 = vpop.permute.xlu0 %4315
    %4317 = vrot.lane.b32.xlu0 %v4098, 12
    %v4318 = vpop.permute.xlu0 %4317
    %4319 = vrot.lane.b32.xlu0 %v4107, 12
    %v4320 = vpop.permute.xlu0 %4319
    %4321 = vrot.lane.b32.xlu0 %v4116, 12
    %v4322 = vpop.permute.xlu0 %4321
    %4323 = vrot.lane.b32.xlu0 %v4125, 12
    %v4324 = vpop.permute.xlu0 %4323
    %4325 = vrot.lane.b32.xlu0 %v4134, 12
    %v4326 = vpop.permute.xlu0 %4325
    %4327 = vrot.lane.b32.xlu0 %v4143, 12
    %v4328 = vpop.permute.xlu0 %4327
    %4329 = vrot.lane.b32.xlu0 %v4152, 12
    %v4330 = vpop.permute.xlu0 %4329
    %4331 = vrot.lane.b32.xlu0 %v4161, 12
    %v4332 = vpop.permute.xlu0 %4331
    %4333 = vrot.lane.b32.xlu0 %v4170, 12
    %v4334 = vpop.permute.xlu0 %4333
    %4335 = vrot.lane.b32.xlu0 %v4179, 12
    %v4336 = vpop.permute.xlu0 %4335
    %4337 = vrot.lane.b32.xlu0 %v4188, 12
    %v4338 = vpop.permute.xlu0 %4337
    %4339 = vrot.lane.b32.xlu0 %v4197, 12
    %v4340 = vpop.permute.xlu0 %4339
    %4341 = vrot.lane.b32.xlu0 %v4206, 12
    %v4342 = vpop.permute.xlu0 %4341
    %4343 = vrot.lane.b32.xlu0 %v4215, 12
    %v4344 = vpop.permute.xlu0 %4343
    %4345 = vrot.lane.b32.xlu0 %v4224, 12
    %v4346 = vpop.permute.xlu0 %4345
    %4347 = vrot.lane.b32.xlu0 %v4233, 12
    %v4348 = vpop.permute.xlu0 %4347
    %4349 = vrot.lane.b32.xlu0 %v4236, 12
    %v4350 = vpop.permute.xlu0 %4349
    %vm4408 = vcmask 130144
    %4409 = vst.msk [vmem:[#allocation2] sm:$0xff] %vm4408, %v4238
    %4410 = vst.msk [vmem:[#allocation2 + $0x8] sm:$0xff] %vm4408, %v4240
    %4411 = vst.msk [vmem:[#allocation2 + $0x10] sm:$0xff] %vm4408, %v4242
    %4412 = vst.msk [vmem:[#allocation2 + $0x18] sm:$0xff] %vm4408, %v4244
    %4413 = vst.msk [vmem:[#allocation2 + $0x20] sm:$0xff] %vm4408, %v4246
    %4414 = vst.msk [vmem:[#allocation2 + $0x28] sm:$0xff] %vm4408, %v4248
    %4415 = vst.msk [vmem:[#allocation2 + $0x30] sm:$0xff] %vm4408, %v4250
    %4416 = vst.msk [vmem:[#allocation2 + $0x38] sm:$0xff] %vm4408, %v4252
    %4417 = vst.msk [vmem:[#allocation2 + $0x40] sm:$0xff] %vm4408, %v4254
    %4418 = vst.msk [vmem:[#allocation2 + $0x48] sm:$0xff] %vm4408, %v4256
    %4419 = vst.msk [vmem:[#allocation2 + $0x50] sm:$0xff] %vm4408, %v4258
    %4420 = vst.msk [vmem:[#allocation2 + $0x58] sm:$0xff] %vm4408, %v4260
    %4421 = vst.msk [vmem:[#allocation2 + $0x60] sm:$0xff] %vm4408, %v4262
    %4422 = vst.msk [vmem:[#allocation2 + $0x68] sm:$0xff] %vm4408, %v4264
    %4423 = vst.msk [vmem:[#allocation2 + $0x70] sm:$0xff] %vm4408, %v4266
    %4424 = vst.msk [vmem:[#allocation2 + $0x78] sm:$0xff] %vm4408, %v4268
    %4425 = vst.msk [vmem:[#allocation2 + $0x80] sm:$0xff] %vm4408, %v4270
    %4426 = vst.msk [vmem:[#allocation2 + $0x88] sm:$0xff] %vm4408, %v4272
    %4427 = vst.msk [vmem:[#allocation2 + $0x90] sm:$0xff] %vm4408, %v4274
    %4428 = vst.msk [vmem:[#allocation2 + $0x98] sm:$0xff] %vm4408, %v4276
    %4429 = vst.msk [vmem:[#allocation2 + $0xa0] sm:$0xff] %vm4408, %v4278
    %4430 = vst.msk [vmem:[#allocation2 + $0xa8] sm:$0xff] %vm4408, %v4280
    %4431 = vst.msk [vmem:[#allocation2 + $0xb0] sm:$0xff] %vm4408, %v4282
    %4432 = vst.msk [vmem:[#allocation2 + $0xb8] sm:$0xff] %vm4408, %v4284
    %4433 = vst.msk [vmem:[#allocation2 + $0xc0] sm:$0xff] %vm4408, %v4286
    %4434 = vst.msk [vmem:[#allocation2 + $0xc8] sm:$0xff] %vm4408, %v4288
    %4435 = vst.msk [vmem:[#allocation2 + $0xd0] sm:$0xff] %vm4408, %v4290
    %4436 = vst.msk [vmem:[#allocation2 + $0xd8] sm:$0xff] %vm4408, %v4292
    %4437 = vst.msk [vmem:[#allocation2 + $0xe0] sm:$0xff] %vm4408, %v4294
    %4438 = vst.msk [vmem:[#allocation2 + $0xe8] sm:$0xff] %vm4408, %v4296
    %4439 = vst.msk [vmem:[#allocation2 + $0xf0] sm:$0xff] %vm4408, %v4298
    %4440 = vst.msk [vmem:[#allocation2 + $0xf8] sm:$0xff] %vm4408, %v4300
    %4441 = vst.msk [vmem:[#allocation2 + $0x100] sm:$0xff] %vm4408, %v4302
    %4442 = vst.msk [vmem:[#allocation2 + $0x108] sm:$0xff] %vm4408, %v4304
    %4443 = vst.msk [vmem:[#allocation2 + $0x110] sm:$0xff] %vm4408, %v4306
    %4444 = vst.msk [vmem:[#allocation2 + $0x118] sm:$0xff] %vm4408, %v4308
    %4445 = vst.msk [vmem:[#allocation2 + $0x120] sm:$0xff] %vm4408, %v4310
    %4446 = vst.msk [vmem:[#allocation2 + $0x128] sm:$0xff] %vm4408, %v4312
    %4447 = vst.msk [vmem:[#allocation2 + $0x130] sm:$0xff] %vm4408, %v4314
    %4448 = vst.msk [vmem:[#allocation2 + $0x138] sm:$0xff] %vm4408, %v4316
    %4449 = vst.msk [vmem:[#allocation2 + $0x140] sm:$0xff] %vm4408, %v4318
    %4450 = vst.msk [vmem:[#allocation2 + $0x148] sm:$0xff] %vm4408, %v4320
    %4451 = vst.msk [vmem:[#allocation2 + $0x150] sm:$0xff] %vm4408, %v4322
    %4452 = vst.msk [vmem:[#allocation2 + $0x158] sm:$0xff] %vm4408, %v4324
    %4453 = vst.msk [vmem:[#allocation2 + $0x160] sm:$0xff] %vm4408, %v4326
    %4454 = vst.msk [vmem:[#allocation2 + $0x168] sm:$0xff] %vm4408, %v4328
    %4455 = vst.msk [vmem:[#allocation2 + $0x170] sm:$0xff] %vm4408, %v4330
    %4456 = vst.msk [vmem:[#allocation2 + $0x178] sm:$0xff] %vm4408, %v4332
    %4457 = vst.msk [vmem:[#allocation2 + $0x180] sm:$0xff] %vm4408, %v4334
    %4458 = vst.msk [vmem:[#allocation2 + $0x188] sm:$0xff] %vm4408, %v4336
    %4459 = vst.msk [vmem:[#allocation2 + $0x190] sm:$0xff] %vm4408, %v4338
    %4460 = vst.msk [vmem:[#allocation2 + $0x198] sm:$0xff] %vm4408, %v4340
    %4461 = vst.msk [vmem:[#allocation2 + $0x1a0] sm:$0xff] %vm4408, %v4342
    %4462 = vst.msk [vmem:[#allocation2 + $0x1a8] sm:$0xff] %vm4408, %v4344
    %4463 = vst.msk [vmem:[#allocation2 + $0x1b0] sm:$0xff] %vm4408, %v4346
    %4464 = vst.msk [vmem:[#allocation2 + $0x1b8] sm:$0xff] %vm4408, %v4348
    %vm4465 = vcmask 124000
    %4466 = vst.msk [vmem:[#allocation2 + $0x1c0] sm:$0x3] %vm4465, %v4350
    %v4467 = vld [vmem:[#allocation2] sm:$0xff]
    %v4468 = vld [vmem:[#allocation2 + $0x8] sm:$0xff]
    %v4469 = vld [vmem:[#allocation2 + $0x10] sm:$0xff]
    %v4470 = vld [vmem:[#allocation2 + $0x18] sm:$0xff]
    %v4471 = vld [vmem:[#allocation2 + $0x20] sm:$0xff]
    %v4472 = vld [vmem:[#allocation2 + $0x28] sm:$0xff]
    %v4473 = vld [vmem:[#allocation2 + $0x30] sm:$0xff]
    %v4474 = vld [vmem:[#allocation2 + $0x38] sm:$0xff]
    %v4475 = vld [vmem:[#allocation2 + $0x40] sm:$0xff]
    %v4476 = vld [vmem:[#allocation2 + $0x48] sm:$0xff]
    %v4477 = vld [vmem:[#allocation2 + $0x50] sm:$0xff]
    %v4478 = vld [vmem:[#allocation2 + $0x58] sm:$0xff]
    %v4479 = vld [vmem:[#allocation2 + $0x60] sm:$0xff]
    %v4480 = vld [vmem:[#allocation2 + $0x68] sm:$0xff]
    %v4481 = vld [vmem:[#allocation2 + $0x70] sm:$0xff]
    %v4482 = vld [vmem:[#allocation2 + $0x78] sm:$0xff]
    %v4483 = vld [vmem:[#allocation2 + $0x80] sm:$0xff]
    %v4484 = vld [vmem:[#allocation2 + $0x88] sm:$0xff]
    %v4485 = vld [vmem:[#allocation2 + $0x90] sm:$0xff]
    %v4486 = vld [vmem:[#allocation2 + $0x98] sm:$0xff]
    %v4487 = vld [vmem:[#allocation2 + $0xa0] sm:$0xff]
    %v4488 = vld [vmem:[#allocation2 + $0xa8] sm:$0xff]
    %v4489 = vld [vmem:[#allocation2 + $0xb0] sm:$0xff]
    %v4490 = vld [vmem:[#allocation2 + $0xb8] sm:$0xff]
    %v4491 = vld [vmem:[#allocation2 + $0xc0] sm:$0xff]
    %v4492 = vld [vmem:[#allocation2 + $0xc8] sm:$0xff]
    %v4493 = vld [vmem:[#allocation2 + $0xd0] sm:$0xff]
    %v4494 = vld [vmem:[#allocation2 + $0xd8] sm:$0xff]
    %v4495 = vld [vmem:[#allocation2 + $0xe0] sm:$0xff]
    %v4496 = vld [vmem:[#allocation2 + $0xe8] sm:$0xff]
    %v4497 = vld [vmem:[#allocation2 + $0xf0] sm:$0xff]
    %v4498 = vld [vmem:[#allocation2 + $0xf8] sm:$0xff]
    %v4499 = vld [vmem:[#allocation2 + $0x100] sm:$0xff]
    %v4500 = vld [vmem:[#allocation2 + $0x108] sm:$0xff]
    %v4501 = vld [vmem:[#allocation2 + $0x110] sm:$0xff]
    %v4502 = vld [vmem:[#allocation2 + $0x118] sm:$0xff]
    %v4503 = vld [vmem:[#allocation2 + $0x120] sm:$0xff]
    %v4504 = vld [vmem:[#allocation2 + $0x128] sm:$0xff]
    %v4505 = vld [vmem:[#allocation2 + $0x130] sm:$0xff]
    %v4506 = vld [vmem:[#allocation2 + $0x138] sm:$0xff]
    %v4507 = vld [vmem:[#allocation2 + $0x140] sm:$0xff]
    %v4508 = vld [vmem:[#allocation2 + $0x148] sm:$0xff]
    %v4509 = vld [vmem:[#allocation2 + $0x150] sm:$0xff]
    %v4510 = vld [vmem:[#allocation2 + $0x158] sm:$0xff]
    %v4511 = vld [vmem:[#allocation2 + $0x160] sm:$0xff]
    %v4512 = vld [vmem:[#allocation2 + $0x168] sm:$0xff]
    %v4513 = vld [vmem:[#allocation2 + $0x170] sm:$0xff]
    %v4514 = vld [vmem:[#allocation2 + $0x178] sm:$0xff]
    %v4515 = vld [vmem:[#allocation2 + $0x180] sm:$0xff]
    %v4516 = vld [vmem:[#allocation2 + $0x188] sm:$0xff]
    %v4517 = vld [vmem:[#allocation2 + $0x190] sm:$0xff]
    %v4518 = vld [vmem:[#allocation2 + $0x198] sm:$0xff]
    %v4519 = vld [vmem:[#allocation2 + $0x1a0] sm:$0xff]
    %v4520 = vld [vmem:[#allocation2 + $0x1a8] sm:$0xff]
    %v4521 = vld [vmem:[#allocation2 + $0x1b0] sm:$0xff]
    %v4522 = vld [vmem:[#allocation2 + $0x1b8] sm:$0xff]
    %v4523 = vld [vmem:[#allocation2 + $0x1c0] sm:$0x3]
    %v4524 = vld [vmem:[%s1] sm:$0xff]
    %v4525 = vld [vmem:[%s1 + $0x8] sm:$0xff]
    %vm4526 = vcmask 130048
    %v4528 = vsel %vm4526, %v4467, 0
    %v4531 = vsel %vm4526, %v4468, 0
    %v4534 = vsel %vm4526, %v4469, 0
    %v4537 = vsel %vm4526, %v4470, 0
    %v4540 = vsel %vm4526, %v4471, 0
    %v4543 = vsel %vm4526, %v4472, 0
    %v4546 = vsel %vm4526, %v4473, 0
    %v4549 = vsel %vm4526, %v4474, 0
    %v4552 = vsel %vm4526, %v4475, 0
    %v4555 = vsel %vm4526, %v4476, 0
    %v4558 = vsel %vm4526, %v4477, 0
    %v4561 = vsel %vm4526, %v4478, 0
    %v4564 = vsel %vm4526, %v4479, 0
    %v4567 = vsel %vm4526, %v4480, 0
    %v4570 = vsel %vm4526, %v4481, 0
    %v4573 = vsel %vm4526, %v4482, 0
    %v4576 = vsel %vm4526, %v4483, 0
    %v4579 = vsel %vm4526, %v4484, 0
    %v4582 = vsel %vm4526, %v4485, 0
    %v4585 = vsel %vm4526, %v4486, 0
    %v4588 = vsel %vm4526, %v4487, 0
    %v4591 = vsel %vm4526, %v4488, 0
    %v4594 = vsel %vm4526, %v4489, 0
    %v4597 = vsel %vm4526, %v4490, 0
    %v4600 = vsel %vm4526, %v4491, 0
    %v4603 = vsel %vm4526, %v4492, 0
    %v4606 = vsel %vm4526, %v4493, 0
    %v4609 = vsel %vm4526, %v4494, 0
    %v4612 = vsel %vm4526, %v4495, 0
    %v4615 = vsel %vm4526, %v4496, 0
    %v4618 = vsel %vm4526, %v4497, 0
    %v4621 = vsel %vm4526, %v4498, 0
    %v4624 = vsel %vm4526, %v4499, 0
    %v4627 = vsel %vm4526, %v4500, 0
    %v4630 = vsel %vm4526, %v4501, 0
    %v4633 = vsel %vm4526, %v4502, 0
    %v4636 = vsel %vm4526, %v4503, 0
    %v4639 = vsel %vm4526, %v4504, 0
    %v4642 = vsel %vm4526, %v4505, 0
    %v4645 = vsel %vm4526, %v4506, 0
    %v4648 = vsel %vm4526, %v4507, 0
    %v4651 = vsel %vm4526, %v4508, 0
    %v4654 = vsel %vm4526, %v4509, 0
    %v4657 = vsel %vm4526, %v4510, 0
    %v4660 = vsel %vm4526, %v4511, 0
    %v4663 = vsel %vm4526, %v4512, 0
    %v4666 = vsel %vm4526, %v4513, 0
    %v4669 = vsel %vm4526, %v4514, 0
    %v4672 = vsel %vm4526, %v4515, 0
    %v4675 = vsel %vm4526, %v4516, 0
    %v4678 = vsel %vm4526, %v4517, 0
    %v4681 = vsel %vm4526, %v4518, 0
    %v4684 = vsel %vm4526, %v4519, 0
    %v4687 = vsel %vm4526, %v4520, 0
    %v4690 = vsel %vm4526, %v4521, 0
    %v4693 = vsel %vm4526, %v4522, 0
    %v4696 = vsel %vm4526, %v4523, 0
    %4698 = vmatpush.msra.mxu0 0.0
    %4699 = vmatpush.msra.mxu0 0.0
    %4700 = vmatpush.msra.mxu0 0.0
    %4701 = vmatpush.msra.mxu0 0.0
    %4702 = vmatpush.msra.mxu0 0.0
    %4703 = vmatpush.msra.mxu0 0.0
    %4704 = vmatpush.msra.mxu0 0.0
    %4705 = vmatpush.msra.mxu0 0.0
    %4706 = vmatpush.msra.mxu0 0.0
    %4707 = vmatpush.msra.mxu0 0.0
    %4708 = vmatpush.msra.mxu0 0.0
    %4709 = vmatpush.msra.mxu0 0.0
    %4710 = vmatpush.msra.mxu0 0.0
    %4711 = vmatpush.msra.mxu0 0.0
    %4712 = vmatpush.msra.mxu0 %v4525
    %4713 = vmatpush.msra.mxu0 %v4524
    %4714 = vmatmul.f32.gmra.mxu0 %v4528
    %v4715 = vpop.f32.mrf.mxu0
    %v4716 = vadd.f32 0.0, %v4715
    %4717 = vmatmul.f32.gmra.mxu0 %v4531
    %v4718 = vpop.f32.mrf.mxu0
    %v4719 = vadd.f32 0.0, %v4718
    %4720 = vmatmul.f32.gmra.mxu0 %v4534
    %v4721 = vpop.f32.mrf.mxu0
    %v4722 = vadd.f32 0.0, %v4721
    %4723 = vmatmul.f32.gmra.mxu0 %v4537
    %v4724 = vpop.f32.mrf.mxu0
    %v4725 = vadd.f32 0.0, %v4724
    %4726 = vmatmul.f32.gmra.mxu0 %v4540
    %v4727 = vpop.f32.mrf.mxu0
    %v4728 = vadd.f32 0.0, %v4727
    %4729 = vmatmul.f32.gmra.mxu0 %v4543
    %v4730 = vpop.f32.mrf.mxu0
    %v4731 = vadd.f32 0.0, %v4730
    %4732 = vmatmul.f32.gmra.mxu0 %v4546
    %v4733 = vpop.f32.mrf.mxu0
    %v4734 = vadd.f32 0.0, %v4733
    %4735 = vmatmul.f32.gmra.mxu0 %v4549
    %v4736 = vpop.f32.mrf.mxu0
    %v4737 = vadd.f32 0.0, %v4736
    %4738 = vmatmul.f32.gmra.mxu0 %v4552
    %v4739 = vpop.f32.mrf.mxu0
    %v4740 = vadd.f32 0.0, %v4739
    %4741 = vmatmul.f32.gmra.mxu0 %v4555
    %v4742 = vpop.f32.mrf.mxu0
    %v4743 = vadd.f32 0.0, %v4742
    %4744 = vmatmul.f32.gmra.mxu0 %v4558
    %v4745 = vpop.f32.mrf.mxu0
    %v4746 = vadd.f32 0.0, %v4745
    %4747 = vmatmul.f32.gmra.mxu0 %v4561
    %v4748 = vpop.f32.mrf.mxu0
    %v4749 = vadd.f32 0.0, %v4748
    %4750 = vmatmul.f32.gmra.mxu0 %v4564
    %v4751 = vpop.f32.mrf.mxu0
    %v4752 = vadd.f32 0.0, %v4751
    %4753 = vmatmul.f32.gmra.mxu0 %v4567
    %v4754 = vpop.f32.mrf.mxu0
    %v4755 = vadd.f32 0.0, %v4754
    %4756 = vmatmul.f32.gmra.mxu0 %v4570
    %v4757 = vpop.f32.mrf.mxu0
    %v4758 = vadd.f32 0.0, %v4757
    %4759 = vmatmul.f32.gmra.mxu0 %v4573
    %v4760 = vpop.f32.mrf.mxu0
    %v4761 = vadd.f32 0.0, %v4760
    %4762 = vmatmul.f32.gmra.mxu0 %v4576
    %v4763 = vpop.f32.mrf.mxu0
    %v4764 = vadd.f32 0.0, %v4763
    %4765 = vmatmul.f32.gmra.mxu0 %v4579
    %v4766 = vpop.f32.mrf.mxu0
    %v4767 = vadd.f32 0.0, %v4766
    %4768 = vmatmul.f32.gmra.mxu0 %v4582
    %v4769 = vpop.f32.mrf.mxu0
    %v4770 = vadd.f32 0.0, %v4769
    %4771 = vmatmul.f32.gmra.mxu0 %v4585
    %v4772 = vpop.f32.mrf.mxu0
    %v4773 = vadd.f32 0.0, %v4772
    %4774 = vmatmul.f32.gmra.mxu0 %v4588
    %v4775 = vpop.f32.mrf.mxu0
    %v4776 = vadd.f32 0.0, %v4775
    %4777 = vmatmul.f32.gmra.mxu0 %v4591
    %v4778 = vpop.f32.mrf.mxu0
    %v4779 = vadd.f32 0.0, %v4778
    %4780 = vmatmul.f32.gmra.mxu0 %v4594
    %v4781 = vpop.f32.mrf.mxu0
    %v4782 = vadd.f32 0.0, %v4781
    %4783 = vmatmul.f32.gmra.mxu0 %v4597
    %v4784 = vpop.f32.mrf.mxu0
    %v4785 = vadd.f32 0.0, %v4784
    %4786 = vmatmul.f32.gmra.mxu0 %v4600
    %v4787 = vpop.f32.mrf.mxu0
    %v4788 = vadd.f32 0.0, %v4787
    %4789 = vmatmul.f32.gmra.mxu0 %v4603
    %v4790 = vpop.f32.mrf.mxu0
    %v4791 = vadd.f32 0.0, %v4790
    %4792 = vmatmul.f32.gmra.mxu0 %v4606
    %v4793 = vpop.f32.mrf.mxu0
    %v4794 = vadd.f32 0.0, %v4793
    %4795 = vmatmul.f32.gmra.mxu0 %v4609
    %v4796 = vpop.f32.mrf.mxu0
    %v4797 = vadd.f32 0.0, %v4796
    %4798 = vmatmul.f32.gmra.mxu0 %v4612
    %v4799 = vpop.f32.mrf.mxu0
    %v4800 = vadd.f32 0.0, %v4799
    %4801 = vmatmul.f32.gmra.mxu0 %v4615
    %v4802 = vpop.f32.mrf.mxu0
    %v4803 = vadd.f32 0.0, %v4802
    %4804 = vmatmul.f32.gmra.mxu0 %v4618
    %v4805 = vpop.f32.mrf.mxu0
    %v4806 = vadd.f32 0.0, %v4805
    %4807 = vmatmul.f32.gmra.mxu0 %v4621
    %v4808 = vpop.f32.mrf.mxu0
    %v4809 = vadd.f32 0.0, %v4808
    %4810 = vmatmul.f32.gmra.mxu0 %v4624
    %v4811 = vpop.f32.mrf.mxu0
    %v4812 = vadd.f32 0.0, %v4811
    %4813 = vmatmul.f32.gmra.mxu0 %v4627
    %v4814 = vpop.f32.mrf.mxu0
    %v4815 = vadd.f32 0.0, %v4814
    %4816 = vmatmul.f32.gmra.mxu0 %v4630
    %v4817 = vpop.f32.mrf.mxu0
    %v4818 = vadd.f32 0.0, %v4817
    %4819 = vmatmul.f32.gmra.mxu0 %v4633
    %v4820 = vpop.f32.mrf.mxu0
    %v4821 = vadd.f32 0.0, %v4820
    %4822 = vmatmul.f32.gmra.mxu0 %v4636
    %v4823 = vpop.f32.mrf.mxu0
    %v4824 = vadd.f32 0.0, %v4823
    %4825 = vmatmul.f32.gmra.mxu0 %v4639
    %v4826 = vpop.f32.mrf.mxu0
    %v4827 = vadd.f32 0.0, %v4826
    %4828 = vmatmul.f32.gmra.mxu0 %v4642
    %v4829 = vpop.f32.mrf.mxu0
    %v4830 = vadd.f32 0.0, %v4829
    %4831 = vmatmul.f32.gmra.mxu0 %v4645
    %v4832 = vpop.f32.mrf.mxu0
    %v4833 = vadd.f32 0.0, %v4832
    %4834 = vmatmul.f32.gmra.mxu0 %v4648
    %v4835 = vpop.f32.mrf.mxu0
    %v4836 = vadd.f32 0.0, %v4835
    %4837 = vmatmul.f32.gmra.mxu0 %v4651
    %v4838 = vpop.f32.mrf.mxu0
    %v4839 = vadd.f32 0.0, %v4838
    %4840 = vmatmul.f32.gmra.mxu0 %v4654
    %v4841 = vpop.f32.mrf.mxu0
    %v4842 = vadd.f32 0.0, %v4841
    %4843 = vmatmul.f32.gmra.mxu0 %v4657
    %v4844 = vpop.f32.mrf.mxu0
    %v4845 = vadd.f32 0.0, %v4844
    %4846 = vmatmul.f32.gmra.mxu0 %v4660
    %v4847 = vpop.f32.mrf.mxu0
    %v4848 = vadd.f32 0.0, %v4847
    %4849 = vmatmul.f32.gmra.mxu0 %v4663
    %v4850 = vpop.f32.mrf.mxu0
    %v4851 = vadd.f32 0.0, %v4850
    %4852 = vmatmul.f32.gmra.mxu0 %v4666
    %v4853 = vpop.f32.mrf.mxu0
    %v4854 = vadd.f32 0.0, %v4853
    %4855 = vmatmul.f32.gmra.mxu0 %v4669
    %v4856 = vpop.f32.mrf.mxu0
    %v4857 = vadd.f32 0.0, %v4856
    %4858 = vmatmul.f32.gmra.mxu0 %v4672
    %v4859 = vpop.f32.mrf.mxu0
    %v4860 = vadd.f32 0.0, %v4859
    %4861 = vmatmul.f32.gmra.mxu0 %v4675
    %v4862 = vpop.f32.mrf.mxu0
    %v4863 = vadd.f32 0.0, %v4862
    %4864 = vmatmul.f32.gmra.mxu0 %v4678
    %v4865 = vpop.f32.mrf.mxu0
    %v4866 = vadd.f32 0.0, %v4865
    %4867 = vmatmul.f32.gmra.mxu0 %v4681
    %v4868 = vpop.f32.mrf.mxu0
    %v4869 = vadd.f32 0.0, %v4868
    %4870 = vmatmul.f32.gmra.mxu0 %v4684
    %v4871 = vpop.f32.mrf.mxu0
    %v4872 = vadd.f32 0.0, %v4871
    %4873 = vmatmul.f32.gmra.mxu0 %v4687
    %v4874 = vpop.f32.mrf.mxu0
    %v4875 = vadd.f32 0.0, %v4874
    %4876 = vmatmul.f32.gmra.mxu0 %v4690
    %v4877 = vpop.f32.mrf.mxu0
    %v4878 = vadd.f32 0.0, %v4877
    %4879 = vmatmul.f32.gmra.mxu0 %v4693
    %v4880 = vpop.f32.mrf.mxu0
    %v4881 = vadd.f32 0.0, %v4880
    %4882 = vmatmul.f32.gmra.mxu0 %v4696
    %v4883 = vpop.f32.mrf.mxu0
    %v4884 = vadd.f32 0.0, %v4883
    %4885 = vdwg.mxu0
    %vm4886 = vcmask 64512
    %v4887 = vsel %vm4886, %v4716, 0.0
    %v4888 = vsel %vm4886, %v4719, 0.0
    %v4889 = vadd.f32 %v4887, %v4888
    %v4890 = vsel %vm4886, %v4722, 0.0
    %v4891 = vadd.f32 %v4889, %v4890
    %v4892 = vsel %vm4886, %v4725, 0.0
    %v4893 = vadd.f32 %v4891, %v4892
    %v4894 = vsel %vm4886, %v4728, 0.0
    %v4895 = vadd.f32 %v4893, %v4894
    %v4896 = vsel %vm4886, %v4731, 0.0
    %v4897 = vadd.f32 %v4895, %v4896
    %v4898 = vsel %vm4886, %v4734, 0.0
    %v4899 = vadd.f32 %v4897, %v4898
    %v4900 = vsel %vm4886, %v4737, 0.0
    %v4901 = vadd.f32 %v4899, %v4900
    %v4902 = vsel %vm4886, %v4740, 0.0
    %v4903 = vadd.f32 %v4901, %v4902
    %v4904 = vsel %vm4886, %v4743, 0.0
    %v4905 = vadd.f32 %v4903, %v4904
    %v4906 = vsel %vm4886, %v4746, 0.0
    %v4907 = vadd.f32 %v4905, %v4906
    %v4908 = vsel %vm4886, %v4749, 0.0
    %v4909 = vadd.f32 %v4907, %v4908
    %v4910 = vsel %vm4886, %v4752, 0.0
    %v4911 = vadd.f32 %v4909, %v4910
    %v4912 = vsel %vm4886, %v4755, 0.0
    %v4913 = vadd.f32 %v4911, %v4912
    %v4914 = vsel %vm4886, %v4758, 0.0
    %v4915 = vadd.f32 %v4913, %v4914
    %v4916 = vsel %vm4886, %v4761, 0.0
    %v4917 = vadd.f32 %v4915, %v4916
    %v4918 = vsel %vm4886, %v4764, 0.0
    %v4919 = vadd.f32 %v4917, %v4918
    %v4920 = vsel %vm4886, %v4767, 0.0
    %v4921 = vadd.f32 %v4919, %v4920
    %v4922 = vsel %vm4886, %v4770, 0.0
    %v4923 = vadd.f32 %v4921, %v4922
    %v4924 = vsel %vm4886, %v4773, 0.0
    %v4925 = vadd.f32 %v4923, %v4924
    %v4926 = vsel %vm4886, %v4776, 0.0
    %v4927 = vadd.f32 %v4925, %v4926
    %v4928 = vsel %vm4886, %v4779, 0.0
    %v4929 = vadd.f32 %v4927, %v4928
    %v4930 = vsel %vm4886, %v4782, 0.0
    %v4931 = vadd.f32 %v4929, %v4930
    %v4932 = vsel %vm4886, %v4785, 0.0
    %v4933 = vadd.f32 %v4931, %v4932
    %v4934 = vsel %vm4886, %v4788, 0.0
    %v4935 = vadd.f32 %v4933, %v4934
    %v4936 = vsel %vm4886, %v4791, 0.0
    %v4937 = vadd.f32 %v4935, %v4936
    %v4938 = vsel %vm4886, %v4794, 0.0
    %v4939 = vadd.f32 %v4937, %v4938
    %v4940 = vsel %vm4886, %v4797, 0.0
    %v4941 = vadd.f32 %v4939, %v4940
    %v4942 = vsel %vm4886, %v4800, 0.0
    %v4943 = vadd.f32 %v4941, %v4942
    %v4944 = vsel %vm4886, %v4803, 0.0
    %v4945 = vadd.f32 %v4943, %v4944
    %v4946 = vsel %vm4886, %v4806, 0.0
    %v4947 = vadd.f32 %v4945, %v4946
    %v4948 = vsel %vm4886, %v4809, 0.0
    %v4949 = vadd.f32 %v4947, %v4948
    %v4950 = vsel %vm4886, %v4812, 0.0
    %v4951 = vadd.f32 %v4949, %v4950
    %v4952 = vsel %vm4886, %v4815, 0.0
    %v4953 = vadd.f32 %v4951, %v4952
    %v4954 = vsel %vm4886, %v4818, 0.0
    %v4955 = vadd.f32 %v4953, %v4954
    %v4956 = vsel %vm4886, %v4821, 0.0
    %v4957 = vadd.f32 %v4955, %v4956
    %v4958 = vsel %vm4886, %v4824, 0.0
    %v4959 = vadd.f32 %v4957, %v4958
    %v4960 = vsel %vm4886, %v4827, 0.0
    %v4961 = vadd.f32 %v4959, %v4960
    %v4962 = vsel %vm4886, %v4830, 0.0
    %v4963 = vadd.f32 %v4961, %v4962
    %v4964 = vsel %vm4886, %v4833, 0.0
    %v4965 = vadd.f32 %v4963, %v4964
    %v4966 = vsel %vm4886, %v4836, 0.0
    %v4967 = vadd.f32 %v4965, %v4966
    %v4968 = vsel %vm4886, %v4839, 0.0
    %v4969 = vadd.f32 %v4967, %v4968
    %v4970 = vsel %vm4886, %v4842, 0.0
    %v4971 = vadd.f32 %v4969, %v4970
    %v4972 = vsel %vm4886, %v4845, 0.0
    %v4973 = vadd.f32 %v4971, %v4972
    %v4974 = vsel %vm4886, %v4848, 0.0
    %v4975 = vadd.f32 %v4973, %v4974
    %v4976 = vsel %vm4886, %v4851, 0.0
    %v4977 = vadd.f32 %v4975, %v4976
    %v4978 = vsel %vm4886, %v4854, 0.0
    %v4979 = vadd.f32 %v4977, %v4978
    %v4980 = vsel %vm4886, %v4857, 0.0
    %v4981 = vadd.f32 %v4979, %v4980
    %v4982 = vsel %vm4886, %v4860, 0.0
    %v4983 = vadd.f32 %v4981, %v4982
    %v4984 = vsel %vm4886, %v4863, 0.0
    %v4985 = vadd.f32 %v4983, %v4984
    %v4986 = vsel %vm4886, %v4866, 0.0
    %v4987 = vadd.f32 %v4985, %v4986
    %v4988 = vsel %vm4886, %v4869, 0.0
    %v4989 = vadd.f32 %v4987, %v4988
    %v4990 = vsel %vm4886, %v4872, 0.0
    %v4991 = vadd.f32 %v4989, %v4990
    %v4992 = vsel %vm4886, %v4875, 0.0
    %v4993 = vadd.f32 %v4991, %v4992
    %v4994 = vsel %vm4886, %v4878, 0.0
    %v4995 = vadd.f32 %v4993, %v4994
    %v4996 = vsel %vm4886, %v4881, 0.0
    %v4997 = vadd.f32 %v4995, %v4996
    %vm4998 = vcmask 58368
    %v4999 = vsel %vm4998, %v4884, 0.0
    %v5000 = vadd.f32 %v4997, %v4999
    %v5001 = vrot.slane %v5000, 4
    %v5002 = vadd.f32 %v5000, %v5001
    %v5003 = vrot.slane %v5002, 2
    %v5004 = vadd.f32 %v5002, %v5003
    %v5005 = vrot.slane %v5004, 1
    %v5006 = vadd.f32 %v5004, %v5005
    %v5007 = vrcp.pop 450.0
    %v5008 = vmul.f32 450.0, %v5007
    %v5009 = vsub.f32 1.0, %v5008
    %v5010 = vmul.f32 %v5007, %v5009
    %v5011 = vadd.f32 %v5007, %v5010
    %vm5012 = vweird.f32 %v5007
    %v5013 = vsel %vm5012, %v5007, %v5011
    %v5014 = vmul.f32 %v5006, %v5013
    %v5015 = vmul.f32 %v4716, %v4716
    %v5016 = vmul.f32 %v4719, %v4719
    %v5017 = vmul.f32 %v4722, %v4722
    %v5018 = vmul.f32 %v4725, %v4725
    %v5019 = vmul.f32 %v4728, %v4728
    %v5020 = vmul.f32 %v4731, %v4731
    %v5021 = vmul.f32 %v4734, %v4734
    %v5022 = vmul.f32 %v4737, %v4737
    %v5023 = vmul.f32 %v4740, %v4740
    %v5024 = vmul.f32 %v4743, %v4743
    %v5025 = vmul.f32 %v4746, %v4746
    %v5026 = vmul.f32 %v4749, %v4749
    %v5027 = vmul.f32 %v4752, %v4752
    %v5028 = vmul.f32 %v4755, %v4755
    %v5029 = vmul.f32 %v4758, %v4758
    %v5030 = vmul.f32 %v4761, %v4761
    %v5031 = vmul.f32 %v4764, %v4764
    %v5032 = vmul.f32 %v4767, %v4767
    %v5033 = vmul.f32 %v4770, %v4770
    %v5034 = vmul.f32 %v4773, %v4773
    %v5035 = vmul.f32 %v4776, %v4776
    %v5036 = vmul.f32 %v4779, %v4779
    %v5037 = vmul.f32 %v4782, %v4782
    %v5038 = vmul.f32 %v4785, %v4785
    %v5039 = vmul.f32 %v4788, %v4788
    %v5040 = vmul.f32 %v4791, %v4791
    %v5041 = vmul.f32 %v4794, %v4794
    %v5042 = vmul.f32 %v4797, %v4797
    %v5043 = vmul.f32 %v4800, %v4800
    %v5044 = vmul.f32 %v4803, %v4803
    %v5045 = vmul.f32 %v4806, %v4806
    %v5046 = vmul.f32 %v4809, %v4809
    %v5047 = vmul.f32 %v4812, %v4812
    %v5048 = vmul.f32 %v4815, %v4815
    %v5049 = vmul.f32 %v4818, %v4818
    %v5050 = vmul.f32 %v4821, %v4821
    %v5051 = vmul.f32 %v4824, %v4824
    %v5052 = vmul.f32 %v4827, %v4827
    %v5053 = vmul.f32 %v4830, %v4830
    %v5054 = vmul.f32 %v4833, %v4833
    %v5055 = vmul.f32 %v4836, %v4836
    %v5056 = vmul.f32 %v4839, %v4839
    %v5057 = vmul.f32 %v4842, %v4842
    %v5058 = vmul.f32 %v4845, %v4845
    %v5059 = vmul.f32 %v4848, %v4848
    %v5060 = vmul.f32 %v4851, %v4851
    %v5061 = vmul.f32 %v4854, %v4854
    %v5062 = vmul.f32 %v4857, %v4857
    %v5063 = vmul.f32 %v4860, %v4860
    %v5064 = vmul.f32 %v4863, %v4863
    %v5065 = vmul.f32 %v4866, %v4866
    %v5066 = vmul.f32 %v4869, %v4869
    %v5067 = vmul.f32 %v4872, %v4872
    %v5068 = vmul.f32 %v4875, %v4875
    %v5069 = vmul.f32 %v4878, %v4878
    %v5070 = vmul.f32 %v4881, %v4881
    %v5071 = vmul.f32 %v4884, %v4884
    %v5072 = vsel %vm4886, %v5015, 0.0
    %v5073 = vsel %vm4886, %v5016, 0.0
    %v5074 = vadd.f32 %v5072, %v5073
    %v5075 = vsel %vm4886, %v5017, 0.0
    %v5076 = vadd.f32 %v5074, %v5075
    %v5077 = vsel %vm4886, %v5018, 0.0
    %v5078 = vadd.f32 %v5076, %v5077
    %v5079 = vsel %vm4886, %v5019, 0.0
    %v5080 = vadd.f32 %v5078, %v5079
    %v5081 = vsel %vm4886, %v5020, 0.0
    %v5082 = vadd.f32 %v5080, %v5081
    %v5083 = vsel %vm4886, %v5021, 0.0
    %v5084 = vadd.f32 %v5082, %v5083
    %v5085 = vsel %vm4886, %v5022, 0.0
    %v5086 = vadd.f32 %v5084, %v5085
    %v5087 = vsel %vm4886, %v5023, 0.0
    %v5088 = vadd.f32 %v5086, %v5087
    %v5089 = vsel %vm4886, %v5024, 0.0
    %v5090 = vadd.f32 %v5088, %v5089
    %v5091 = vsel %vm4886, %v5025, 0.0
    %v5092 = vadd.f32 %v5090, %v5091
    %v5093 = vsel %vm4886, %v5026, 0.0
    %v5094 = vadd.f32 %v5092, %v5093
    %v5095 = vsel %vm4886, %v5027, 0.0
    %v5096 = vadd.f32 %v5094, %v5095
    %v5097 = vsel %vm4886, %v5028, 0.0
    %v5098 = vadd.f32 %v5096, %v5097
    %v5099 = vsel %vm4886, %v5029, 0.0
    %v5100 = vadd.f32 %v5098, %v5099
    %v5101 = vsel %vm4886, %v5030, 0.0
    %v5102 = vadd.f32 %v5100, %v5101
    %v5103 = vsel %vm4886, %v5031, 0.0
    %v5104 = vadd.f32 %v5102, %v5103
    %v5105 = vsel %vm4886, %v5032, 0.0
    %v5106 = vadd.f32 %v5104, %v5105
    %v5107 = vsel %vm4886, %v5033, 0.0
    %v5108 = vadd.f32 %v5106, %v5107
    %v5109 = vsel %vm4886, %v5034, 0.0
    %v5110 = vadd.f32 %v5108, %v5109
    %v5111 = vsel %vm4886, %v5035, 0.0
    %v5112 = vadd.f32 %v5110, %v5111
    %v5113 = vsel %vm4886, %v5036, 0.0
    %v5114 = vadd.f32 %v5112, %v5113
    %v5115 = vsel %vm4886, %v5037, 0.0
    %v5116 = vadd.f32 %v5114, %v5115
    %v5117 = vsel %vm4886, %v5038, 0.0
    %v5118 = vadd.f32 %v5116, %v5117
    %v5119 = vsel %vm4886, %v5039, 0.0
    %v5120 = vadd.f32 %v5118, %v5119
    %v5121 = vsel %vm4886, %v5040, 0.0
    %v5122 = vadd.f32 %v5120, %v5121
    %v5123 = vsel %vm4886, %v5041, 0.0
    %v5124 = vadd.f32 %v5122, %v5123
    %v5125 = vsel %vm4886, %v5042, 0.0
    %v5126 = vadd.f32 %v5124, %v5125
    %v5127 = vsel %vm4886, %v5043, 0.0
    %v5128 = vadd.f32 %v5126, %v5127
    %v5129 = vsel %vm4886, %v5044, 0.0
    %v5130 = vadd.f32 %v5128, %v5129
    %v5131 = vsel %vm4886, %v5045, 0.0
    %v5132 = vadd.f32 %v5130, %v5131
    %v5133 = vsel %vm4886, %v5046, 0.0
    %v5134 = vadd.f32 %v5132, %v5133
    %v5135 = vsel %vm4886, %v5047, 0.0
    %v5136 = vadd.f32 %v5134, %v5135
    %v5137 = vsel %vm4886, %v5048, 0.0
    %v5138 = vadd.f32 %v5136, %v5137
    %v5139 = vsel %vm4886, %v5049, 0.0
    %v5140 = vadd.f32 %v5138, %v5139
    %v5141 = vsel %vm4886, %v5050, 0.0
    %v5142 = vadd.f32 %v5140, %v5141
    %v5143 = vsel %vm4886, %v5051, 0.0
    %v5144 = vadd.f32 %v5142, %v5143
    %v5145 = vsel %vm4886, %v5052, 0.0
    %v5146 = vadd.f32 %v5144, %v5145
    %v5147 = vsel %vm4886, %v5053, 0.0
    %v5148 = vadd.f32 %v5146, %v5147
    %v5149 = vsel %vm4886, %v5054, 0.0
    %v5150 = vadd.f32 %v5148, %v5149
    %v5151 = vsel %vm4886, %v5055, 0.0
    %v5152 = vadd.f32 %v5150, %v5151
    %v5153 = vsel %vm4886, %v5056, 0.0
    %v5154 = vadd.f32 %v5152, %v5153
    %v5155 = vsel %vm4886, %v5057, 0.0
    %v5156 = vadd.f32 %v5154, %v5155
    %v5157 = vsel %vm4886, %v5058, 0.0
    %v5158 = vadd.f32 %v5156, %v5157
    %v5159 = vsel %vm4886, %v5059, 0.0
    %v5160 = vadd.f32 %v5158, %v5159
    %v5161 = vsel %vm4886, %v5060, 0.0
    %v5162 = vadd.f32 %v5160, %v5161
    %v5163 = vsel %vm4886, %v5061, 0.0
    %v5164 = vadd.f32 %v5162, %v5163
    %v5165 = vsel %vm4886, %v5062, 0.0
    %v5166 = vadd.f32 %v5164, %v5165
    %v5167 = vsel %vm4886, %v5063, 0.0
    %v5168 = vadd.f32 %v5166, %v5167
    %v5169 = vsel %vm4886, %v5064, 0.0
    %v5170 = vadd.f32 %v5168, %v5169
    %v5171 = vsel %vm4886, %v5065, 0.0
    %v5172 = vadd.f32 %v5170, %v5171
    %v5173 = vsel %vm4886, %v5066, 0.0
    %v5174 = vadd.f32 %v5172, %v5173
    %v5175 = vsel %vm4886, %v5067, 0.0
    %v5176 = vadd.f32 %v5174, %v5175
    %v5177 = vsel %vm4886, %v5068, 0.0
    %v5178 = vadd.f32 %v5176, %v5177
    %v5179 = vsel %vm4886, %v5069, 0.0
    %v5180 = vadd.f32 %v5178, %v5179
    %v5181 = vsel %vm4886, %v5070, 0.0
    %v5182 = vadd.f32 %v5180, %v5181
    %v5183 = vsel %vm4998, %v5071, 0.0
    %v5184 = vadd.f32 %v5182, %v5183
    %v5185 = vrot.slane %v5184, 4
    %v5186 = vadd.f32 %v5184, %v5185
    %v5187 = vrot.slane %v5186, 2
    %v5188 = vadd.f32 %v5186, %v5187
    %v5189 = vrot.slane %v5188, 1
    %v5190 = vadd.f32 %v5188, %v5189
    %v5191 = vmul.f32 %v5190, %v5013
    %v5192 = vmul.f32 %v5014, %v5014
    %v5193 = vsub.f32 %v5191, %v5192
    %v5194 = vld [vmem:[%s2] sm:$0x1]
    %v5195 = vadd.f32 %v5193, 1e-05
    %v5196 = vrsqrt.pop %v5195
    %v5197 = vmul.f32 %v5196, %v5195
    %v5198 = vmul.f32 %v5197, %v5196
    %v5199 = vmul.f32 0.5, %v5198
    %v5200 = vsub.f32 1.5, %v5199
    %v5201 = vmul.f32 %v5196, %v5200
    %vm5202 = vweird.f32 %v5195
    %vm5203 = vweird.f32 %v5196
    %vm5204 = vmor %vm5202, %vm5203
    %v5205 = vsel %vm5204, %v5196, %v5201
    %v5206 = vmul.f32 %v5194, %v5205
    %v5207 = vld [vmem:[%s3] sm:$0x1]
    %v5208 = vmul.f32 %v5014, %v5206
    %v5209 = vsub.f32 %v5207, %v5208
    %v5211 = vperm.slane %v5206, 0
    %v5213 = vmul.f32 %v4716, %v5211
    %v5214 = vmul.f32 %v4719, %v5211
    %v5215 = vmul.f32 %v4722, %v5211
    %v5216 = vmul.f32 %v4725, %v5211
    %v5217 = vmul.f32 %v4728, %v5211
    %v5218 = vmul.f32 %v4731, %v5211
    %v5219 = vmul.f32 %v4734, %v5211
    %v5220 = vmul.f32 %v4737, %v5211
    %v5221 = vmul.f32 %v4740, %v5211
    %v5222 = vmul.f32 %v4743, %v5211
    %v5223 = vmul.f32 %v4746, %v5211
    %v5224 = vmul.f32 %v4749, %v5211
    %v5225 = vmul.f32 %v4752, %v5211
    %v5226 = vmul.f32 %v4755, %v5211
    %v5227 = vmul.f32 %v4758, %v5211
    %v5228 = vmul.f32 %v4761, %v5211
    %v5229 = vmul.f32 %v4764, %v5211
    %v5230 = vmul.f32 %v4767, %v5211
    %v5231 = vmul.f32 %v4770, %v5211
    %v5232 = vmul.f32 %v4773, %v5211
    %v5233 = vmul.f32 %v4776, %v5211
    %v5234 = vmul.f32 %v4779, %v5211
    %v5235 = vmul.f32 %v4782, %v5211
    %v5236 = vmul.f32 %v4785, %v5211
    %v5237 = vmul.f32 %v4788, %v5211
    %v5238 = vmul.f32 %v4791, %v5211
    %v5239 = vmul.f32 %v4794, %v5211
    %v5240 = vmul.f32 %v4797, %v5211
    %v5241 = vmul.f32 %v4800, %v5211
    %v5242 = vmul.f32 %v4803, %v5211
    %v5243 = vmul.f32 %v4806, %v5211
    %v5244 = vmul.f32 %v4809, %v5211
    %v5245 = vmul.f32 %v4812, %v5211
    %v5246 = vmul.f32 %v4815, %v5211
    %v5247 = vmul.f32 %v4818, %v5211
    %v5248 = vmul.f32 %v4821, %v5211
    %v5249 = vmul.f32 %v4824, %v5211
    %v5250 = vmul.f32 %v4827, %v5211
    %v5251 = vmul.f32 %v4830, %v5211
    %v5252 = vmul.f32 %v4833, %v5211
    %v5253 = vmul.f32 %v4836, %v5211
    %v5254 = vmul.f32 %v4839, %v5211
    %v5255 = vmul.f32 %v4842, %v5211
    %v5256 = vmul.f32 %v4845, %v5211
    %v5257 = vmul.f32 %v4848, %v5211
    %v5258 = vmul.f32 %v4851, %v5211
    %v5259 = vmul.f32 %v4854, %v5211
    %v5260 = vmul.f32 %v4857, %v5211
    %v5261 = vmul.f32 %v4860, %v5211
    %v5262 = vmul.f32 %v4863, %v5211
    %v5263 = vmul.f32 %v4866, %v5211
    %v5264 = vmul.f32 %v4869, %v5211
    %v5265 = vmul.f32 %v4872, %v5211
    %v5266 = vmul.f32 %v4875, %v5211
    %v5267 = vmul.f32 %v4878, %v5211
    %v5268 = vmul.f32 %v4881, %v5211
    %v5269 = vmul.f32 %v4884, %v5211
    %v5271 = vperm.slane %v5209, 0
    %v5273 = vadd.f32 %v5213, %v5271
    %v5274 = vadd.f32 %v5214, %v5271
    %v5275 = vadd.f32 %v5215, %v5271
    %v5276 = vadd.f32 %v5216, %v5271
    %v5277 = vadd.f32 %v5217, %v5271
    %v5278 = vadd.f32 %v5218, %v5271
    %v5279 = vadd.f32 %v5219, %v5271
    %v5280 = vadd.f32 %v5220, %v5271
    %v5281 = vadd.f32 %v5221, %v5271
    %v5282 = vadd.f32 %v5222, %v5271
    %v5283 = vadd.f32 %v5223, %v5271
    %v5284 = vadd.f32 %v5224, %v5271
    %v5285 = vadd.f32 %v5225, %v5271
    %v5286 = vadd.f32 %v5226, %v5271
    %v5287 = vadd.f32 %v5227, %v5271
    %v5288 = vadd.f32 %v5228, %v5271
    %v5289 = vadd.f32 %v5229, %v5271
    %v5290 = vadd.f32 %v5230, %v5271
    %v5291 = vadd.f32 %v5231, %v5271
    %v5292 = vadd.f32 %v5232, %v5271
    %v5293 = vadd.f32 %v5233, %v5271
    %v5294 = vadd.f32 %v5234, %v5271
    %v5295 = vadd.f32 %v5235, %v5271
    %v5296 = vadd.f32 %v5236, %v5271
    %v5297 = vadd.f32 %v5237, %v5271
    %v5298 = vadd.f32 %v5238, %v5271
    %v5299 = vadd.f32 %v5239, %v5271
    %v5300 = vadd.f32 %v5240, %v5271
    %v5301 = vadd.f32 %v5241, %v5271
    %v5302 = vadd.f32 %v5242, %v5271
    %v5303 = vadd.f32 %v5243, %v5271
    %v5304 = vadd.f32 %v5244, %v5271
    %v5305 = vadd.f32 %v5245, %v5271
    %v5306 = vadd.f32 %v5246, %v5271
    %v5307 = vadd.f32 %v5247, %v5271
    %v5308 = vadd.f32 %v5248, %v5271
    %v5309 = vadd.f32 %v5249, %v5271
    %v5310 = vadd.f32 %v5250, %v5271
    %v5311 = vadd.f32 %v5251, %v5271
    %v5312 = vadd.f32 %v5252, %v5271
    %v5313 = vadd.f32 %v5253, %v5271
    %v5314 = vadd.f32 %v5254, %v5271
    %v5315 = vadd.f32 %v5255, %v5271
    %v5316 = vadd.f32 %v5256, %v5271
    %v5317 = vadd.f32 %v5257, %v5271
    %v5318 = vadd.f32 %v5258, %v5271
    %v5319 = vadd.f32 %v5259, %v5271
    %v5320 = vadd.f32 %v5260, %v5271
    %v5321 = vadd.f32 %v5261, %v5271
    %v5322 = vadd.f32 %v5262, %v5271
    %v5323 = vadd.f32 %v5263, %v5271
    %v5324 = vadd.f32 %v5264, %v5271
    %v5325 = vadd.f32 %v5265, %v5271
    %v5326 = vadd.f32 %v5266, %v5271
    %v5327 = vadd.f32 %v5267, %v5271
    %v5328 = vadd.f32 %v5268, %v5271
    %v5329 = vadd.f32 %v5269, %v5271
    %v5330 = vmax.f32 %v5273, 0.0
    %v5331 = vmax.f32 %v5274, 0.0
    %v5332 = vmax.f32 %v5275, 0.0
    %v5333 = vmax.f32 %v5276, 0.0
    %v5334 = vmax.f32 %v5277, 0.0
    %v5335 = vmax.f32 %v5278, 0.0
    %v5336 = vmax.f32 %v5279, 0.0
    %v5337 = vmax.f32 %v5280, 0.0
    %v5338 = vmax.f32 %v5281, 0.0
    %v5339 = vmax.f32 %v5282, 0.0
    %v5340 = vmax.f32 %v5283, 0.0
    %v5341 = vmax.f32 %v5284, 0.0
    %v5342 = vmax.f32 %v5285, 0.0
    %v5343 = vmax.f32 %v5286, 0.0
    %v5344 = vmax.f32 %v5287, 0.0
    %v5345 = vmax.f32 %v5288, 0.0
    %v5346 = vmax.f32 %v5289, 0.0
    %v5347 = vmax.f32 %v5290, 0.0
    %v5348 = vmax.f32 %v5291, 0.0
    %v5349 = vmax.f32 %v5292, 0.0
    %v5350 = vmax.f32 %v5293, 0.0
    %v5351 = vmax.f32 %v5294, 0.0
    %v5352 = vmax.f32 %v5295, 0.0
    %v5353 = vmax.f32 %v5296, 0.0
    %v5354 = vmax.f32 %v5297, 0.0
    %v5355 = vmax.f32 %v5298, 0.0
    %v5356 = vmax.f32 %v5299, 0.0
    %v5357 = vmax.f32 %v5300, 0.0
    %v5358 = vmax.f32 %v5301, 0.0
    %v5359 = vmax.f32 %v5302, 0.0
    %v5360 = vmax.f32 %v5303, 0.0
    %v5361 = vmax.f32 %v5304, 0.0
    %v5362 = vmax.f32 %v5305, 0.0
    %v5363 = vmax.f32 %v5306, 0.0
    %v5364 = vmax.f32 %v5307, 0.0
    %v5365 = vmax.f32 %v5308, 0.0
    %v5366 = vmax.f32 %v5309, 0.0
    %v5367 = vmax.f32 %v5310, 0.0
    %v5368 = vmax.f32 %v5311, 0.0
    %v5369 = vmax.f32 %v5312, 0.0
    %v5370 = vmax.f32 %v5313, 0.0
    %v5371 = vmax.f32 %v5314, 0.0
    %v5372 = vmax.f32 %v5315, 0.0
    %v5373 = vmax.f32 %v5316, 0.0
    %v5374 = vmax.f32 %v5317, 0.0
    %v5375 = vmax.f32 %v5318, 0.0
    %v5376 = vmax.f32 %v5319, 0.0
    %v5377 = vmax.f32 %v5320, 0.0
    %v5378 = vmax.f32 %v5321, 0.0
    %v5379 = vmax.f32 %v5322, 0.0
    %v5380 = vmax.f32 %v5323, 0.0
    %v5381 = vmax.f32 %v5324, 0.0
    %v5382 = vmax.f32 %v5325, 0.0
    %v5383 = vmax.f32 %v5326, 0.0
    %v5384 = vmax.f32 %v5327, 0.0
    %v5385 = vmax.f32 %v5328, 0.0
    %v5386 = vmax.f32 %v5329, 0.0
    %v5444 = vrot.slane %v5330, 1
    %v5445 = vrot.slane %v5330, 2
    %v5446 = vrot.slane %v5330, 3
    %v5447 = vrot.slane %v5330, 4
    %v5448 = vrot.slane %v5330, 5
    %v5449 = vrot.slane %v5330, 6
    %v5450 = vrot.slane %v5330, 7
    %v5451 = vrot.slane %v5331, 1
    %v5452 = vrot.slane %v5331, 2
    %v5453 = vrot.slane %v5331, 3
    %v5454 = vrot.slane %v5331, 4
    %v5455 = vrot.slane %v5331, 5
    %v5456 = vrot.slane %v5331, 6
    %v5457 = vrot.slane %v5331, 7
    %v5458 = vrot.slane %v5332, 1
    %v5459 = vrot.slane %v5332, 2
    %v5460 = vrot.slane %v5332, 3
    %v5461 = vrot.slane %v5332, 4
    %v5462 = vrot.slane %v5332, 5
    %v5463 = vrot.slane %v5332, 6
    %v5464 = vrot.slane %v5332, 7
    %v5465 = vrot.slane %v5333, 1
    %v5466 = vrot.slane %v5333, 2
    %v5467 = vrot.slane %v5333, 3
    %v5468 = vrot.slane %v5333, 4
    %v5469 = vrot.slane %v5333, 5
    %v5470 = vrot.slane %v5333, 6
    %v5471 = vrot.slane %v5333, 7
    %v5472 = vrot.slane %v5334, 1
    %v5473 = vrot.slane %v5334, 2
    %v5474 = vrot.slane %v5334, 3
    %v5475 = vrot.slane %v5334, 4
    %v5476 = vrot.slane %v5334, 5
    %v5477 = vrot.slane %v5334, 6
    %v5478 = vrot.slane %v5334, 7
    %v5479 = vrot.slane %v5335, 1
    %v5480 = vrot.slane %v5335, 2
    %v5481 = vrot.slane %v5335, 3
    %v5482 = vrot.slane %v5335, 4
    %v5483 = vrot.slane %v5335, 5
    %v5484 = vrot.slane %v5335, 6
    %v5485 = vrot.slane %v5335, 7
    %v5486 = vrot.slane %v5336, 1
    %v5487 = vrot.slane %v5336, 2
    %v5488 = vrot.slane %v5336, 3
    %v5489 = vrot.slane %v5336, 4
    %v5490 = vrot.slane %v5336, 5
    %v5491 = vrot.slane %v5336, 6
    %v5492 = vrot.slane %v5336, 7
    %v5493 = vrot.slane %v5337, 1
    %v5494 = vrot.slane %v5337, 2
    %v5495 = vrot.slane %v5337, 3
    %v5496 = vrot.slane %v5337, 4
    %v5497 = vrot.slane %v5337, 5
    %v5498 = vrot.slane %v5337, 6
    %v5499 = vrot.slane %v5337, 7
    %v5500 = vrot.slane %v5338, 1
    %v5501 = vrot.slane %v5338, 2
    %v5502 = vrot.slane %v5338, 3
    %v5503 = vrot.slane %v5338, 4
    %v5504 = vrot.slane %v5338, 5
    %v5505 = vrot.slane %v5338, 6
    %v5506 = vrot.slane %v5338, 7
    %v5507 = vrot.slane %v5339, 1
    %v5508 = vrot.slane %v5339, 2
    %v5509 = vrot.slane %v5339, 3
    %v5510 = vrot.slane %v5339, 4
    %v5511 = vrot.slane %v5339, 5
    %v5512 = vrot.slane %v5339, 6
    %v5513 = vrot.slane %v5339, 7
    %v5514 = vrot.slane %v5340, 1
    %v5515 = vrot.slane %v5340, 2
    %v5516 = vrot.slane %v5340, 3
    %v5517 = vrot.slane %v5340, 4
    %v5518 = vrot.slane %v5340, 5
    %v5519 = vrot.slane %v5340, 6
    %v5520 = vrot.slane %v5340, 7
    %v5521 = vrot.slane %v5341, 1
    %v5522 = vrot.slane %v5341, 2
    %v5523 = vrot.slane %v5341, 3
    %v5524 = vrot.slane %v5341, 4
    %v5525 = vrot.slane %v5341, 5
    %v5526 = vrot.slane %v5341, 6
    %v5527 = vrot.slane %v5341, 7
    %v5528 = vrot.slane %v5342, 1
    %v5529 = vrot.slane %v5342, 2
    %v5530 = vrot.slane %v5342, 3
    %v5531 = vrot.slane %v5342, 4
    %v5532 = vrot.slane %v5342, 5
    %v5533 = vrot.slane %v5342, 6
    %v5534 = vrot.slane %v5342, 7
    %v5535 = vrot.slane %v5343, 1
    %v5536 = vrot.slane %v5343, 2
    %v5537 = vrot.slane %v5343, 3
    %v5538 = vrot.slane %v5343, 4
    %v5539 = vrot.slane %v5343, 5
    %v5540 = vrot.slane %v5343, 6
    %v5541 = vrot.slane %v5343, 7
    %v5542 = vrot.slane %v5344, 1
    %v5543 = vrot.slane %v5344, 2
    %v5544 = vrot.slane %v5344, 3
    %v5545 = vrot.slane %v5344, 4
    %v5546 = vrot.slane %v5344, 5
    %v5547 = vrot.slane %v5344, 6
    %v5548 = vrot.slane %v5344, 7
    %v5549 = vrot.slane %v5345, 1
    %v5550 = vrot.slane %v5345, 2
    %v5551 = vrot.slane %v5345, 3
    %v5552 = vrot.slane %v5345, 4
    %v5553 = vrot.slane %v5345, 5
    %v5554 = vrot.slane %v5345, 6
    %v5555 = vrot.slane %v5345, 7
    %v5556 = vrot.slane %v5346, 1
    %v5557 = vrot.slane %v5346, 2
    %v5558 = vrot.slane %v5346, 3
    %v5559 = vrot.slane %v5346, 4
    %v5560 = vrot.slane %v5346, 5
    %v5561 = vrot.slane %v5346, 6
    %v5562 = vrot.slane %v5346, 7
    %v5563 = vrot.slane %v5347, 1
    %v5564 = vrot.slane %v5347, 2
    %v5565 = vrot.slane %v5347, 3
    %v5566 = vrot.slane %v5347, 4
    %v5567 = vrot.slane %v5347, 5
    %v5568 = vrot.slane %v5347, 6
    %v5569 = vrot.slane %v5347, 7
    %v5570 = vrot.slane %v5348, 1
    %v5571 = vrot.slane %v5348, 2
    %v5572 = vrot.slane %v5348, 3
    %v5573 = vrot.slane %v5348, 4
    %v5574 = vrot.slane %v5348, 5
    %v5575 = vrot.slane %v5348, 6
    %v5576 = vrot.slane %v5348, 7
    %v5577 = vrot.slane %v5349, 1
    %v5578 = vrot.slane %v5349, 2
    %v5579 = vrot.slane %v5349, 3
    %v5580 = vrot.slane %v5349, 4
    %v5581 = vrot.slane %v5349, 5
    %v5582 = vrot.slane %v5349, 6
    %v5583 = vrot.slane %v5349, 7
    %v5584 = vrot.slane %v5350, 1
    %v5585 = vrot.slane %v5350, 2
    %v5586 = vrot.slane %v5350, 3
    %v5587 = vrot.slane %v5350, 4
    %v5588 = vrot.slane %v5350, 5
    %v5589 = vrot.slane %v5350, 6
    %v5590 = vrot.slane %v5350, 7
    %v5591 = vrot.slane %v5351, 1
    %v5592 = vrot.slane %v5351, 2
    %v5593 = vrot.slane %v5351, 3
    %v5594 = vrot.slane %v5351, 4
    %v5595 = vrot.slane %v5351, 5
    %v5596 = vrot.slane %v5351, 6
    %v5597 = vrot.slane %v5351, 7
    %v5598 = vrot.slane %v5352, 1
    %v5599 = vrot.slane %v5352, 2
    %v5600 = vrot.slane %v5352, 3
    %v5601 = vrot.slane %v5352, 4
    %v5602 = vrot.slane %v5352, 5
    %v5603 = vrot.slane %v5352, 6
    %v5604 = vrot.slane %v5352, 7
    %v5605 = vrot.slane %v5353, 1
    %v5606 = vrot.slane %v5353, 2
    %v5607 = vrot.slane %v5353, 3
    %v5608 = vrot.slane %v5353, 4
    %v5609 = vrot.slane %v5353, 5
    %v5610 = vrot.slane %v5353, 6
    %v5611 = vrot.slane %v5353, 7
    %v5612 = vrot.slane %v5354, 1
    %v5613 = vrot.slane %v5354, 2
    %v5614 = vrot.slane %v5354, 3
    %v5615 = vrot.slane %v5354, 4
    %v5616 = vrot.slane %v5354, 5
    %v5617 = vrot.slane %v5354, 6
    %v5618 = vrot.slane %v5354, 7
    %v5619 = vrot.slane %v5355, 1
    %v5620 = vrot.slane %v5355, 2
    %v5621 = vrot.slane %v5355, 3
    %v5622 = vrot.slane %v5355, 4
    %v5623 = vrot.slane %v5355, 5
    %v5624 = vrot.slane %v5355, 6
    %v5625 = vrot.slane %v5355, 7
    %v5626 = vrot.slane %v5356, 1
    %v5627 = vrot.slane %v5356, 2
    %v5628 = vrot.slane %v5356, 3
    %v5629 = vrot.slane %v5356, 4
    %v5630 = vrot.slane %v5356, 5
    %v5631 = vrot.slane %v5356, 6
    %v5632 = vrot.slane %v5356, 7
    %v5633 = vrot.slane %v5357, 1
    %v5634 = vrot.slane %v5357, 2
    %v5635 = vrot.slane %v5357, 3
    %v5636 = vrot.slane %v5357, 4
    %v5637 = vrot.slane %v5357, 5
    %v5638 = vrot.slane %v5357, 6
    %v5639 = vrot.slane %v5357, 7
    %v5640 = vrot.slane %v5358, 1
    %v5641 = vrot.slane %v5358, 2
    %v5642 = vrot.slane %v5358, 3
    %v5643 = vrot.slane %v5358, 4
    %v5644 = vrot.slane %v5358, 5
    %v5645 = vrot.slane %v5358, 6
    %v5646 = vrot.slane %v5358, 7
    %v5647 = vrot.slane %v5359, 1
    %v5648 = vrot.slane %v5359, 2
    %v5649 = vrot.slane %v5359, 3
    %v5650 = vrot.slane %v5359, 4
    %v5651 = vrot.slane %v5359, 5
    %v5652 = vrot.slane %v5359, 6
    %v5653 = vrot.slane %v5359, 7
    %v5654 = vrot.slane %v5360, 1
    %v5655 = vrot.slane %v5360, 2
    %v5656 = vrot.slane %v5360, 3
    %v5657 = vrot.slane %v5360, 4
    %v5658 = vrot.slane %v5360, 5
    %v5659 = vrot.slane %v5360, 6
    %v5660 = vrot.slane %v5360, 7
    %v5661 = vrot.slane %v5361, 1
    %v5662 = vrot.slane %v5361, 2
    %v5663 = vrot.slane %v5361, 3
    %v5664 = vrot.slane %v5361, 4
    %v5665 = vrot.slane %v5361, 5
    %v5666 = vrot.slane %v5361, 6
    %v5667 = vrot.slane %v5361, 7
    %v5668 = vrot.slane %v5362, 1
    %v5669 = vrot.slane %v5362, 2
    %v5670 = vrot.slane %v5362, 3
    %v5671 = vrot.slane %v5362, 4
    %v5672 = vrot.slane %v5362, 5
    %v5673 = vrot.slane %v5362, 6
    %v5674 = vrot.slane %v5362, 7
    %v5675 = vrot.slane %v5363, 1
    %v5676 = vrot.slane %v5363, 2
    %v5677 = vrot.slane %v5363, 3
    %v5678 = vrot.slane %v5363, 4
    %v5679 = vrot.slane %v5363, 5
    %v5680 = vrot.slane %v5363, 6
    %v5681 = vrot.slane %v5363, 7
    %v5682 = vrot.slane %v5364, 1
    %v5683 = vrot.slane %v5364, 2
    %v5684 = vrot.slane %v5364, 3
    %v5685 = vrot.slane %v5364, 4
    %v5686 = vrot.slane %v5364, 5
    %v5687 = vrot.slane %v5364, 6
    %v5688 = vrot.slane %v5364, 7
    %v5689 = vrot.slane %v5365, 1
    %v5690 = vrot.slane %v5365, 2
    %v5691 = vrot.slane %v5365, 3
    %v5692 = vrot.slane %v5365, 4
    %v5693 = vrot.slane %v5365, 5
    %v5694 = vrot.slane %v5365, 6
    %v5695 = vrot.slane %v5365, 7
    %v5696 = vrot.slane %v5366, 1
    %v5697 = vrot.slane %v5366, 2
    %v5698 = vrot.slane %v5366, 3
    %v5699 = vrot.slane %v5366, 4
    %v5700 = vrot.slane %v5366, 5
    %v5701 = vrot.slane %v5366, 6
    %v5702 = vrot.slane %v5366, 7
    %v5703 = vrot.slane %v5367, 1
    %v5704 = vrot.slane %v5367, 2
    %v5705 = vrot.slane %v5367, 3
    %v5706 = vrot.slane %v5367, 4
    %v5707 = vrot.slane %v5367, 5
    %v5708 = vrot.slane %v5367, 6
    %v5709 = vrot.slane %v5367, 7
    %v5710 = vrot.slane %v5368, 1
    %v5711 = vrot.slane %v5368, 2
    %v5712 = vrot.slane %v5368, 3
    %v5713 = vrot.slane %v5368, 4
    %v5714 = vrot.slane %v5368, 5
    %v5715 = vrot.slane %v5368, 6
    %v5716 = vrot.slane %v5368, 7
    %v5717 = vrot.slane %v5369, 1
    %v5718 = vrot.slane %v5369, 2
    %v5719 = vrot.slane %v5369, 3
    %v5720 = vrot.slane %v5369, 4
    %v5721 = vrot.slane %v5369, 5
    %v5722 = vrot.slane %v5369, 6
    %v5723 = vrot.slane %v5369, 7
    %v5724 = vrot.slane %v5370, 1
    %v5725 = vrot.slane %v5370, 2
    %v5726 = vrot.slane %v5370, 3
    %v5727 = vrot.slane %v5370, 4
    %v5728 = vrot.slane %v5370, 5
    %v5729 = vrot.slane %v5370, 6
    %v5730 = vrot.slane %v5370, 7
    %v5731 = vrot.slane %v5371, 1
    %v5732 = vrot.slane %v5371, 2
    %v5733 = vrot.slane %v5371, 3
    %v5734 = vrot.slane %v5371, 4
    %v5735 = vrot.slane %v5371, 5
    %v5736 = vrot.slane %v5371, 6
    %v5737 = vrot.slane %v5371, 7
    %v5738 = vrot.slane %v5372, 1
    %v5739 = vrot.slane %v5372, 2
    %v5740 = vrot.slane %v5372, 3
    %v5741 = vrot.slane %v5372, 4
    %v5742 = vrot.slane %v5372, 5
    %v5743 = vrot.slane %v5372, 6
    %v5744 = vrot.slane %v5372, 7
    %v5745 = vrot.slane %v5373, 1
    %v5746 = vrot.slane %v5373, 2
    %v5747 = vrot.slane %v5373, 3
    %v5748 = vrot.slane %v5373, 4
    %v5749 = vrot.slane %v5373, 5
    %v5750 = vrot.slane %v5373, 6
    %v5751 = vrot.slane %v5373, 7
    %v5752 = vrot.slane %v5374, 1
    %v5753 = vrot.slane %v5374, 2
    %v5754 = vrot.slane %v5374, 3
    %v5755 = vrot.slane %v5374, 4
    %v5756 = vrot.slane %v5374, 5
    %v5757 = vrot.slane %v5374, 6
    %v5758 = vrot.slane %v5374, 7
    %v5759 = vrot.slane %v5375, 1
    %v5760 = vrot.slane %v5375, 2
    %v5761 = vrot.slane %v5375, 3
    %v5762 = vrot.slane %v5375, 4
    %v5763 = vrot.slane %v5375, 5
    %v5764 = vrot.slane %v5375, 6
    %v5765 = vrot.slane %v5375, 7
    %v5766 = vrot.slane %v5376, 1
    %v5767 = vrot.slane %v5376, 2
    %v5768 = vrot.slane %v5376, 3
    %v5769 = vrot.slane %v5376, 4
    %v5770 = vrot.slane %v5376, 5
    %v5771 = vrot.slane %v5376, 6
    %v5772 = vrot.slane %v5376, 7
    %v5773 = vrot.slane %v5377, 1
    %v5774 = vrot.slane %v5377, 2
    %v5775 = vrot.slane %v5377, 3
    %v5776 = vrot.slane %v5377, 4
    %v5777 = vrot.slane %v5377, 5
    %v5778 = vrot.slane %v5377, 6
    %v5779 = vrot.slane %v5377, 7
    %v5780 = vrot.slane %v5378, 1
    %v5781 = vrot.slane %v5378, 2
    %v5782 = vrot.slane %v5378, 3
    %v5783 = vrot.slane %v5378, 4
    %v5784 = vrot.slane %v5378, 5
    %v5785 = vrot.slane %v5378, 6
    %v5786 = vrot.slane %v5378, 7
    %v5787 = vrot.slane %v5379, 1
    %v5788 = vrot.slane %v5379, 2
    %v5789 = vrot.slane %v5379, 3
    %v5790 = vrot.slane %v5379, 4
    %v5791 = vrot.slane %v5379, 5
    %v5792 = vrot.slane %v5379, 6
    %v5793 = vrot.slane %v5379, 7
    %v5794 = vrot.slane %v5380, 1
    %v5795 = vrot.slane %v5380, 2
    %v5796 = vrot.slane %v5380, 3
    %v5797 = vrot.slane %v5380, 4
    %v5798 = vrot.slane %v5380, 5
    %v5799 = vrot.slane %v5380, 6
    %v5800 = vrot.slane %v5380, 7
    %v5801 = vrot.slane %v5381, 1
    %v5802 = vrot.slane %v5381, 2
    %v5803 = vrot.slane %v5381, 3
    %v5804 = vrot.slane %v5381, 4
    %v5805 = vrot.slane %v5381, 5
    %v5806 = vrot.slane %v5381, 6
    %v5807 = vrot.slane %v5381, 7
    %v5808 = vrot.slane %v5382, 1
    %v5809 = vrot.slane %v5382, 2
    %v5810 = vrot.slane %v5382, 3
    %v5811 = vrot.slane %v5382, 4
    %v5812 = vrot.slane %v5382, 5
    %v5813 = vrot.slane %v5382, 6
    %v5814 = vrot.slane %v5382, 7
    %v5815 = vrot.slane %v5383, 1
    %v5816 = vrot.slane %v5383, 2
    %v5817 = vrot.slane %v5383, 3
    %v5818 = vrot.slane %v5383, 4
    %v5819 = vrot.slane %v5383, 5
    %v5820 = vrot.slane %v5383, 6
    %v5821 = vrot.slane %v5383, 7
    %v5822 = vrot.slane %v5384, 1
    %v5823 = vrot.slane %v5384, 2
    %v5824 = vrot.slane %v5384, 3
    %v5825 = vrot.slane %v5384, 4
    %v5826 = vrot.slane %v5384, 5
    %v5827 = vrot.slane %v5384, 6
    %v5828 = vrot.slane %v5384, 7
    %v5829 = vrot.slane %v5385, 1
    %v5830 = vrot.slane %v5385, 2
    %v5831 = vrot.slane %v5385, 3
    %v5832 = vrot.slane %v5385, 4
    %v5833 = vrot.slane %v5385, 5
    %v5834 = vrot.slane %v5385, 6
    %v5835 = vrot.slane %v5385, 7
    %v5836 = vrot.slane %v5386, 1
    %5837 = vst [vmem:[#allocation1] ss:$9 sm:$0xff] %v5330
    %s5838 = scalar_lea.vmem [#allocation1], 1
    %5839 = vst [vmem:[%s5838] ss:$9 sm:$0xff] %v5444
    %s5840 = scalar_lea.vmem [#allocation1], 2
    %5841 = vst [vmem:[%s5840] ss:$9 sm:$0xff] %v5445
    %s5842 = scalar_lea.vmem [#allocation1], 3
    %5843 = vst [vmem:[%s5842] ss:$9 sm:$0xff] %v5446
    %s5844 = scalar_lea.vmem [#allocation1], 4
    %5845 = vst [vmem:[%s5844] ss:$9 sm:$0xff] %v5447
    %s5846 = scalar_lea.vmem [#allocation1], 5
    %5847 = vst [vmem:[%s5846] ss:$9 sm:$0xff] %v5448
    %s5848 = scalar_lea.vmem [#allocation1], 6
    %5849 = vst [vmem:[%s5848] ss:$9 sm:$0xff] %v5449
    %s5850 = scalar_lea.vmem [#allocation1], 7
    %5851 = vst [vmem:[%s5850] ss:$9 sm:$0xff] %v5450
    %v5852 = vld [vmem:[#allocation1] sm:$0xff]
    %5853 = vst [vmem:[#allocation1] ss:$9 sm:$0xff] %v5331
    %5854 = vst [vmem:[%s5838] ss:$9 sm:$0xff] %v5451
    %5855 = vst [vmem:[%s5840] ss:$9 sm:$0xff] %v5452
    %5856 = vst [vmem:[%s5842] ss:$9 sm:$0xff] %v5453
    %5857 = vst [vmem:[%s5844] ss:$9 sm:$0xff] %v5454
    %5858 = vst [vmem:[%s5846] ss:$9 sm:$0xff] %v5455
    %5859 = vst [vmem:[%s5848] ss:$9 sm:$0xff] %v5457
    %5860 = vst [vmem:[%s5850] ss:$9 sm:$0xff] %v5332
    %v5861 = vld [vmem:[#allocation1] sm:$0xff]
    %5862 = vst [vmem:[#allocation1] ss:$9 sm:$0xff] %v5458
    %5863 = vst [vmem:[%s5838] ss:$9 sm:$0xff] %v5459
    %5864 = vst [vmem:[%s5840] ss:$9 sm:$0xff] %v5460
    %5865 = vst [vmem:[%s5842] ss:$9 sm:$0xff] %v5461
    %5866 = vst [vmem:[%s5844] ss:$9 sm:$0xff] %v5462
    %5867 = vst [vmem:[%s5846] ss:$9 sm:$0xff] %v5463
    %5868 = vst [vmem:[%s5848] ss:$9 sm:$0xff] %v5464
    %5869 = vst [vmem:[%s5850] ss:$9 sm:$0xff] %v5333
    %v5870 = vld [vmem:[#allocation1] sm:$0xff]
    %5871 = vst [vmem:[#allocation1] ss:$9 sm:$0xff] %v5465
    %5872 = vst [vmem:[%s5838] ss:$9 sm:$0xff] %v5466
    %5873 = vst [vmem:[%s5840] ss:$9 sm:$0xff] %v5467
    %5874 = vst [vmem:[%s5842] ss:$9 sm:$0xff] %v5468
    %5875 = vst [vmem:[%s5844] ss:$9 sm:$0xff] %v5470
    %5876 = vst [vmem:[%s5846] ss:$9 sm:$0xff] %v5471
    %5877 = vst [vmem:[%s5848] ss:$9 sm:$0xff] %v5334
    %5878 = vst [vmem:[%s5850] ss:$9 sm:$0xff] %v5472
    %v5879 = vld [vmem:[#allocation1] sm:$0xff]
    %5880 = vst [vmem:[#allocation1] ss:$9 sm:$0xff] %v5473
    %5881 = vst [vmem:[%s5838] ss:$9 sm:$0xff] %v5474
    %5882 = vst [vmem:[%s5840] ss:$9 sm:$0xff] %v5475
    %5883 = vst [vmem:[%s5842] ss:$9 sm:$0xff] %v5476
    %5884 = vst [vmem:[%s5844] ss:$9 sm:$0xff] %v5477
    %5885 = vst [vmem:[%s5846] ss:$9 sm:$0xff] %v5478
    %5886 = vst [vmem:[%s5848] ss:$9 sm:$0xff] %v5335
    %5887 = vst [vmem:[%s5850] ss:$9 sm:$0xff] %v5479
    %v5888 = vld [vmem:[#allocation1] sm:$0xff]
    %5889 = vst [vmem:[#allocation1] ss:$9 sm:$0xff] %v5480
    %5890 = vst [vmem:[%s5838] ss:$9 sm:$0xff] %v5481
    %5891 = vst [vmem:[%s5840] ss:$9 sm:$0xff] %v5483
    %5892 = vst [vmem:[%s5842] ss:$9 sm:$0xff] %v5484
    %5893 = vst [vmem:[%s5844] ss:$9 sm:$0xff] %v5485
    %5894 = vst [vmem:[%s5846] ss:$9 sm:$0xff] %v5336
    %5895 = vst [vmem:[%s5848] ss:$9 sm:$0xff] %v5486
    %5896 = vst [vmem:[%s5850] ss:$9 sm:$0xff] %v5487
    %v5897 = vld [vmem:[#allocation1] sm:$0xff]
    %5898 = vst [vmem:[#allocation1] ss:$9 sm:$0xff] %v5488
    %5899 = vst [vmem:[%s5838] ss:$9 sm:$0xff] %v5489
    %5900 = vst [vmem:[%s5840] ss:$9 sm:$0xff] %v5490
    %5901 = vst [vmem:[%s5842] ss:$9 sm:$0xff] %v5491
    %5902 = vst [vmem:[%s5844] ss:$9 sm:$0xff] %v5492
    %5903 = vst [vmem:[%s5846] ss:$9 sm:$0xff] %v5337
    %5904 = vst [vmem:[%s5848] ss:$9 sm:$0xff] %v5493
    %5905 = vst [vmem:[%s5850] ss:$9 sm:$0xff] %v5494
    %v5906 = vld [vmem:[#allocation1] sm:$0xff]
    %5907 = vst [vmem:[#allocation1] ss:$9 sm:$0xff] %v5496
    %5908 = vst [vmem:[%s5838] ss:$9 sm:$0xff] %v5497
    %5909 = vst [vmem:[%s5840] ss:$9 sm:$0xff] %v5498
    %5910 = vst [vmem:[%s5842] ss:$9 sm:$0xff] %v5499
    %5911 = vst [vmem:[%s5844] ss:$9 sm:$0xff] %v5338
    %5912 = vst [vmem:[%s5846] ss:$9 sm:$0xff] %v5500
    %5913 = vst [vmem:[%s5848] ss:$9 sm:$0xff] %v5501
    %5914 = vst [vmem:[%s5850] ss:$9 sm:$0xff] %v5502
    %v5915 = vld [vmem:[#allocation1] sm:$0xff]
    %5916 = vst [vmem:[#allocation1] ss:$9 sm:$0xff] %v5503
    %5917 = vst [vmem:[%s5838] ss:$9 sm:$0xff] %v5504
    %5918 = vst [vmem:[%s5840] ss:$9 sm:$0xff] %v5505
    %5919 = vst [vmem:[%s5842] ss:$9 sm:$0xff] %v5506
    %5920 = vst [vmem:[%s5844] ss:$9 sm:$0xff] %v5339
    %5921 = vst [vmem:[%s5846] ss:$9 sm:$0xff] %v5507
    %5922 = vst [vmem:[%s5848] ss:$9 sm:$0xff] %v5509
    %5923 = vst [vmem:[%s5850] ss:$9 sm:$0xff] %v5510
    %v5924 = vld [vmem:[#allocation1] sm:$0xff]
    %5925 = vst [vmem:[#allocation1] ss:$9 sm:$0xff] %v5511
    %5926 = vst [vmem:[%s5838] ss:$9 sm:$0xff] %v5512
    %5927 = vst [vmem:[%s5840] ss:$9 sm:$0xff] %v5513
    %5928 = vst [vmem:[%s5842] ss:$9 sm:$0xff] %v5340
    %5929 = vst [vmem:[%s5844] ss:$9 sm:$0xff] %v5514
    %5930 = vst [vmem:[%s5846] ss:$9 sm:$0xff] %v5515
    %5931 = vst [vmem:[%s5848] ss:$9 sm:$0xff] %v5516
    %5932 = vst [vmem:[%s5850] ss:$9 sm:$0xff] %v5517
    %v5933 = vld [vmem:[#allocation1] sm:$0xff]
    %5934 = vst [vmem:[#allocation1] ss:$9 sm:$0xff] %v5518
    %5935 = vst [vmem:[%s5838] ss:$9 sm:$0xff] %v5519
    %5936 = vst [vmem:[%s5840] ss:$9 sm:$0xff] %v5520
    %5937 = vst [vmem:[%s5842] ss:$9 sm:$0xff] %v5341
    %5938 = vst [vmem:[%s5844] ss:$9 sm:$0xff] %v5522
    %5939 = vst [vmem:[%s5846] ss:$9 sm:$0xff] %v5523
    %5940 = vst [vmem:[%s5848] ss:$9 sm:$0xff] %v5524
    %5941 = vst [vmem:[%s5850] ss:$9 sm:$0xff] %v5525
    %v5942 = vld [vmem:[#allocation1] sm:$0xff]
    %5943 = vst [vmem:[#allocation1] ss:$9 sm:$0xff] %v5526
    %5944 = vst [vmem:[%s5838] ss:$9 sm:$0xff] %v5527
    %5945 = vst [vmem:[%s5840] ss:$9 sm:$0xff] %v5342
    %5946 = vst [vmem:[%s5842] ss:$9 sm:$0xff] %v5528
    %5947 = vst [vmem:[%s5844] ss:$9 sm:$0xff] %v5529
    %5948 = vst [vmem:[%s5846] ss:$9 sm:$0xff] %v5530
    %5949 = vst [vmem:[%s5848] ss:$9 sm:$0xff] %v5531
    %5950 = vst [vmem:[%s5850] ss:$9 sm:$0xff] %v5532
    %v5951 = vld [vmem:[#allocation1] sm:$0xff]
    %5952 = vst [vmem:[#allocation1] ss:$9 sm:$0xff] %v5533
    %5953 = vst [vmem:[%s5838] ss:$9 sm:$0xff] %v5534
    %5954 = vst [vmem:[%s5840] ss:$9 sm:$0xff] %v5535
    %5955 = vst [vmem:[%s5842] ss:$9 sm:$0xff] %v5536
    %5956 = vst [vmem:[%s5844] ss:$9 sm:$0xff] %v5537
    %5957 = vst [vmem:[%s5846] ss:$9 sm:$0xff] %v5538
    %5958 = vst [vmem:[%s5848] ss:$9 sm:$0xff] %v5539
    %5959 = vst [vmem:[%s5850] ss:$9 sm:$0xff] %v5540
    %v5960 = vld [vmem:[#allocation1] sm:$0xff]
    %5961 = vst [vmem:[#allocation1] ss:$9 sm:$0xff] %v5541
    %5962 = vst [vmem:[%s5838] ss:$9 sm:$0xff] %v5344
    %5963 = vst [vmem:[%s5840] ss:$9 sm:$0xff] %v5542
    %5964 = vst [vmem:[%s5842] ss:$9 sm:$0xff] %v5543
    %5965 = vst [vmem:[%s5844] ss:$9 sm:$0xff] %v5544
    %5966 = vst [vmem:[%s5846] ss:$9 sm:$0xff] %v5545
    %5967 = vst [vmem:[%s5848] ss:$9 sm:$0xff] %v5546
    %5968 = vst [vmem:[%s5850] ss:$9 sm:$0xff] %v5547
    %v5969 = vld [vmem:[#allocation1] sm:$0xff]
    %5970 = vst [vmem:[#allocation1] ss:$9 sm:$0xff] %v5345
    %5971 = vst [vmem:[%s5838] ss:$9 sm:$0xff] %v5549
    %5972 = vst [vmem:[%s5840] ss:$9 sm:$0xff] %v5550
    %5973 = vst [vmem:[%s5842] ss:$9 sm:$0xff] %v5551
    %5974 = vst [vmem:[%s5844] ss:$9 sm:$0xff] %v5552
    %5975 = vst [vmem:[%s5846] ss:$9 sm:$0xff] %v5553
    %5976 = vst [vmem:[%s5848] ss:$9 sm:$0xff] %v5554
    %5977 = vst [vmem:[%s5850] ss:$9 sm:$0xff] %v5555
    %v5978 = vld [vmem:[#allocation1] sm:$0xff]
    %5979 = vst [vmem:[#allocation1] ss:$9 sm:$0xff] %v5346
    %5980 = vst [vmem:[%s5838] ss:$9 sm:$0xff] %v5556
    %5981 = vst [vmem:[%s5840] ss:$9 sm:$0xff] %v5557
    %5982 = vst [vmem:[%s5842] ss:$9 sm:$0xff] %v5558
    %5983 = vst [vmem:[%s5844] ss:$9 sm:$0xff] %v5559
    %5984 = vst [vmem:[%s5846] ss:$9 sm:$0xff] %v5560
    %5985 = vst [vmem:[%s5848] ss:$9 sm:$0xff] %v5562
    %5986 = vst [vmem:[%s5850] ss:$9 sm:$0xff] %v5347
    %v5987 = vld [vmem:[#allocation1] sm:$0xff]
    %5988 = vst [vmem:[#allocation1] ss:$9 sm:$0xff] %v5563
    %5989 = vst [vmem:[%s5838] ss:$9 sm:$0xff] %v5564
    %5990 = vst [vmem:[%s5840] ss:$9 sm:$0xff] %v5565
    %5991 = vst [vmem:[%s5842] ss:$9 sm:$0xff] %v5566
    %5992 = vst [vmem:[%s5844] ss:$9 sm:$0xff] %v5567
    %5993 = vst [vmem:[%s5846] ss:$9 sm:$0xff] %v5568
    %5994 = vst [vmem:[%s5848] ss:$9 sm:$0xff] %v5569
    %5995 = vst [vmem:[%s5850] ss:$9 sm:$0xff] %v5348
    %v5996 = vld [vmem:[#allocation1] sm:$0xff]
    %5997 = vst [vmem:[#allocation1] ss:$9 sm:$0xff] %v5570
    %5998 = vst [vmem:[%s5838] ss:$9 sm:$0xff] %v5571
    %5999 = vst [vmem:[%s5840] ss:$9 sm:$0xff] %v5572
    %6000 = vst [vmem:[%s5842] ss:$9 sm:$0xff] %v5573
    %6001 = vst [vmem:[%s5844] ss:$9 sm:$0xff] %v5575
    %6002 = vst [vmem:[%s5846] ss:$9 sm:$0xff] %v5576
    %6003 = vst [vmem:[%s5848] ss:$9 sm:$0xff] %v5349
    %6004 = vst [vmem:[%s5850] ss:$9 sm:$0xff] %v5577
    %v6005 = vld [vmem:[#allocation1] sm:$0xff]
    %6006 = vst [vmem:[#allocation1] ss:$9 sm:$0xff] %v5578
    %6007 = vst [vmem:[%s5838] ss:$9 sm:$0xff] %v5579
    %6008 = vst [vmem:[%s5840] ss:$9 sm:$0xff] %v5580
    %6009 = vst [vmem:[%s5842] ss:$9 sm:$0xff] %v5581
    %6010 = vst [vmem:[%s5844] ss:$9 sm:$0xff] %v5582
    %6011 = vst [vmem:[%s5846] ss:$9 sm:$0xff] %v5583
    %6012 = vst [vmem:[%s5848] ss:$9 sm:$0xff] %v5350
    %6013 = vst [vmem:[%s5850] ss:$9 sm:$0xff] %v5584
    %v6014 = vld [vmem:[#allocation1] sm:$0xff]
    %6015 = vst [vmem:[#allocation1] ss:$9 sm:$0xff] %v5585
    %6016 = vst [vmem:[%s5838] ss:$9 sm:$0xff] %v5586
    %6017 = vst [vmem:[%s5840] ss:$9 sm:$0xff] %v5588
    %6018 = vst [vmem:[%s5842] ss:$9 sm:$0xff] %v5589
    %6019 = vst [vmem:[%s5844] ss:$9 sm:$0xff] %v5590
    %6020 = vst [vmem:[%s5846] ss:$9 sm:$0xff] %v5351
    %6021 = vst [vmem:[%s5848] ss:$9 sm:$0xff] %v5591
    %6022 = vst [vmem:[%s5850] ss:$9 sm:$0xff] %v5592
    %v6023 = vld [vmem:[#allocation1] sm:$0xff]
    %6024 = vst [vmem:[#allocation1] ss:$9 sm:$0xff] %v5593
    %6025 = vst [vmem:[%s5838] ss:$9 sm:$0xff] %v5594
    %6026 = vst [vmem:[%s5840] ss:$9 sm:$0xff] %v5595
    %6027 = vst [vmem:[%s5842] ss:$9 sm:$0xff] %v5596
    %6028 = vst [vmem:[%s5844] ss:$9 sm:$0xff] %v5597
    %6029 = vst [vmem:[%s5846] ss:$9 sm:$0xff] %v5352
    %6030 = vst [vmem:[%s5848] ss:$9 sm:$0xff] %v5598
    %6031 = vst [vmem:[%s5850] ss:$9 sm:$0xff] %v5599
    %v6032 = vld [vmem:[#allocation1] sm:$0xff]
    %6033 = vst [vmem:[#allocation1] ss:$9 sm:$0xff] %v5601
    %6034 = vst [vmem:[%s5838] ss:$9 sm:$0xff] %v5602
    %6035 = vst [vmem:[%s5840] ss:$9 sm:$0xff] %v5603
    %6036 = vst [vmem:[%s5842] ss:$9 sm:$0xff] %v5604
    %6037 = vst [vmem:[%s5844] ss:$9 sm:$0xff] %v5353
    %6038 = vst [vmem:[%s5846] ss:$9 sm:$0xff] %v5605
    %6039 = vst [vmem:[%s5848] ss:$9 sm:$0xff] %v5606
    %6040 = vst [vmem:[%s5850] ss:$9 sm:$0xff] %v5607
    %v6041 = vld [vmem:[#allocation1] sm:$0xff]
    %6042 = vst [vmem:[#allocation1] ss:$9 sm:$0xff] %v5608
    %6043 = vst [vmem:[%s5838] ss:$9 sm:$0xff] %v5609
    %6044 = vst [vmem:[%s5840] ss:$9 sm:$0xff] %v5610
    %6045 = vst [vmem:[%s5842] ss:$9 sm:$0xff] %v5611
    %6046 = vst [vmem:[%s5844] ss:$9 sm:$0xff] %v5354
    %6047 = vst [vmem:[%s5846] ss:$9 sm:$0xff] %v5612
    %6048 = vst [vmem:[%s5848] ss:$9 sm:$0xff] %v5614
    %6049 = vst [vmem:[%s5850] ss:$9 sm:$0xff] %v5615
    %v6050 = vld [vmem:[#allocation1] sm:$0xff]
    %6051 = vst [vmem:[#allocation1] ss:$9 sm:$0xff] %v5616
    %6052 = vst [vmem:[%s5838] ss:$9 sm:$0xff] %v5617
    %6053 = vst [vmem:[%s5840] ss:$9 sm:$0xff] %v5618
    %6054 = vst [vmem:[%s5842] ss:$9 sm:$0xff] %v5355
    %6055 = vst [vmem:[%s5844] ss:$9 sm:$0xff] %v5619
    %6056 = vst [vmem:[%s5846] ss:$9 sm:$0xff] %v5620
    %6057 = vst [vmem:[%s5848] ss:$9 sm:$0xff] %v5621
    %6058 = vst [vmem:[%s5850] ss:$9 sm:$0xff] %v5622
    %v6059 = vld [vmem:[#allocation1] sm:$0xff]
    %6060 = vst [vmem:[#allocation1] ss:$9 sm:$0xff] %v5623
    %6061 = vst [vmem:[%s5838] ss:$9 sm:$0xff] %v5624
    %6062 = vst [vmem:[%s5840] ss:$9 sm:$0xff] %v5625
    %6063 = vst [vmem:[%s5842] ss:$9 sm:$0xff] %v5356
    %6064 = vst [vmem:[%s5844] ss:$9 sm:$0xff] %v5640
    %6065 = vst [vmem:[%s5846] ss:$9 sm:$0xff] %v5641
    %6066 = vst [vmem:[%s5848] ss:$9 sm:$0xff] %v5642
    %6067 = vst [vmem:[%s5850] ss:$9 sm:$0xff] %v5643
    %v6068 = vld [vmem:[#allocation1] sm:$0xff]
    %6069 = vst [vmem:[#allocation1] ss:$9 sm:$0xff] %v5644
    %6070 = vst [vmem:[%s5838] ss:$9 sm:$0xff] %v5645
    %6071 = vst [vmem:[%s5840] ss:$9 sm:$0xff] %v5646
    %6072 = vst [vmem:[%s5842] ss:$9 sm:$0xff] %v5359
    %6073 = vst [vmem:[%s5844] ss:$9 sm:$0xff] %v5647
    %6074 = vst [vmem:[%s5846] ss:$9 sm:$0xff] %v5648
    %6075 = vst [vmem:[%s5848] ss:$9 sm:$0xff] %v5649
    %6076 = vst [vmem:[%s5850] ss:$9 sm:$0xff] %v5650
    %v6077 = vld [vmem:[#allocation1] sm:$0xff]
    %6078 = vst [vmem:[#allocation1] ss:$9 sm:$0xff] %v5651
    %6079 = vst [vmem:[%s5838] ss:$9 sm:$0xff] %v5652
    %6080 = vst [vmem:[%s5840] ss:$9 sm:$0xff] %v5360
    %6081 = vst [vmem:[%s5842] ss:$9 sm:$0xff] %v5654
    %6082 = vst [vmem:[%s5844] ss:$9 sm:$0xff] %v5655
    %6083 = vst [vmem:[%s5846] ss:$9 sm:$0xff] %v5656
    %6084 = vst [vmem:[%s5848] ss:$9 sm:$0xff] %v5657
    %6085 = vst [vmem:[%s5850] ss:$9 sm:$0xff] %v5658
    %v6086 = vld [vmem:[#allocation1] sm:$0xff]
    %6087 = vst [vmem:[#allocation1] ss:$9 sm:$0xff] %v5659
    %6088 = vst [vmem:[%s5838] ss:$9 sm:$0xff] %v5660
    %6089 = vst [vmem:[%s5840] ss:$9 sm:$0xff] %v5361
    %6090 = vst [vmem:[%s5842] ss:$9 sm:$0xff] %v5661
    %6091 = vst [vmem:[%s5844] ss:$9 sm:$0xff] %v5662
    %6092 = vst [vmem:[%s5846] ss:$9 sm:$0xff] %v5663
    %6093 = vst [vmem:[%s5848] ss:$9 sm:$0xff] %v5664
    %6094 = vst [vmem:[%s5850] ss:$9 sm:$0xff] %v5665
    %v6095 = vld [vmem:[#allocation1] sm:$0xff]
    %6096 = vst [vmem:[#allocation1] ss:$9 sm:$0xff] %v5667
    %6097 = vst [vmem:[%s5838] ss:$9 sm:$0xff] %v5362
    %6098 = vst [vmem:[%s5840] ss:$9 sm:$0xff] %v5668
    %6099 = vst [vmem:[%s5842] ss:$9 sm:$0xff] %v5669
    %6100 = vst [vmem:[%s5844] ss:$9 sm:$0xff] %v5670
    %6101 = vst [vmem:[%s5846] ss:$9 sm:$0xff] %v5671
    %6102 = vst [vmem:[%s5848] ss:$9 sm:$0xff] %v5672
    %6103 = vst [vmem:[%s5850] ss:$9 sm:$0xff] %v5673
    %v6104 = vld [vmem:[#allocation1] sm:$0xff]
    %6105 = vst [vmem:[#allocation1] ss:$9 sm:$0xff] %v5674
    %6106 = vst [vmem:[%s5838] ss:$9 sm:$0xff] %v5363
    %6107 = vst [vmem:[%s5840] ss:$9 sm:$0xff] %v5675
    %6108 = vst [vmem:[%s5842] ss:$9 sm:$0xff] %v5676
    %6109 = vst [vmem:[%s5844] ss:$9 sm:$0xff] %v5677
    %6110 = vst [vmem:[%s5846] ss:$9 sm:$0xff] %v5678
    %6111 = vst [vmem:[%s5848] ss:$9 sm:$0xff] %v5680
    %6112 = vst [vmem:[%s5850] ss:$9 sm:$0xff] %v5681
    %v6113 = vld [vmem:[#allocation1] sm:$0xff]
    %6114 = vst [vmem:[#allocation1] ss:$9 sm:$0xff] %v5364
    %6115 = vst [vmem:[%s5838] ss:$9 sm:$0xff] %v5682
    %6116 = vst [vmem:[%s5840] ss:$9 sm:$0xff] %v5683
    %6117 = vst [vmem:[%s5842] ss:$9 sm:$0xff] %v5684
    %6118 = vst [vmem:[%s5844] ss:$9 sm:$0xff] %v5685
    %6119 = vst [vmem:[%s5846] ss:$9 sm:$0xff] %v5686
    %6120 = vst [vmem:[%s5848] ss:$9 sm:$0xff] %v5687
    %6121 = vst [vmem:[%s5850] ss:$9 sm:$0xff] %v5688
    %v6122 = vld [vmem:[#allocation1] sm:$0xff]
    %6123 = vst [vmem:[#allocation1] ss:$9 sm:$0xff] %v5365
    %6124 = vst [vmem:[%s5838] ss:$9 sm:$0xff] %v5689
    %6125 = vst [vmem:[%s5840] ss:$9 sm:$0xff] %v5690
    %6126 = vst [vmem:[%s5842] ss:$9 sm:$0xff] %v5691
    %6127 = vst [vmem:[%s5844] ss:$9 sm:$0xff] %v5693
    %6128 = vst [vmem:[%s5846] ss:$9 sm:$0xff] %v5694
    %6129 = vst [vmem:[%s5848] ss:$9 sm:$0xff] %v5695
    %6130 = vst [vmem:[%s5850] ss:$9 sm:$0xff] %v5366
    %v6131 = vld [vmem:[#allocation1] sm:$0xff]
    %6132 = vst [vmem:[#allocation1] ss:$9 sm:$0xff] %v5696
    %6133 = vst [vmem:[%s5838] ss:$9 sm:$0xff] %v5697
    %6134 = vst [vmem:[%s5840] ss:$9 sm:$0xff] %v5698
    %6135 = vst [vmem:[%s5842] ss:$9 sm:$0xff] %v5699
    %6136 = vst [vmem:[%s5844] ss:$9 sm:$0xff] %v5700
    %6137 = vst [vmem:[%s5846] ss:$9 sm:$0xff] %v5701
    %6138 = vst [vmem:[%s5848] ss:$9 sm:$0xff] %v5702
    %6139 = vst [vmem:[%s5850] ss:$9 sm:$0xff] %v5367
    %v6140 = vld [vmem:[#allocation1] sm:$0xff]
    %6141 = vst [vmem:[#allocation1] ss:$9 sm:$0xff] %v5703
    %6142 = vst [vmem:[%s5838] ss:$9 sm:$0xff] %v5704
    %6143 = vst [vmem:[%s5840] ss:$9 sm:$0xff] %v5706
    %6144 = vst [vmem:[%s5842] ss:$9 sm:$0xff] %v5707
    %6145 = vst [vmem:[%s5844] ss:$9 sm:$0xff] %v5708
    %6146 = vst [vmem:[%s5846] ss:$9 sm:$0xff] %v5709
    %6147 = vst [vmem:[%s5848] ss:$9 sm:$0xff] %v5368
    %6148 = vst [vmem:[%s5850] ss:$9 sm:$0xff] %v5710
    %v6149 = vld [vmem:[#allocation1] sm:$0xff]
    %6150 = vst [vmem:[#allocation1] ss:$9 sm:$0xff] %v5711
    %6151 = vst [vmem:[%s5838] ss:$9 sm:$0xff] %v5712
    %6152 = vst [vmem:[%s5840] ss:$9 sm:$0xff] %v5713
    %6153 = vst [vmem:[%s5842] ss:$9 sm:$0xff] %v5714
    %6154 = vst [vmem:[%s5844] ss:$9 sm:$0xff] %v5715
    %6155 = vst [vmem:[%s5846] ss:$9 sm:$0xff] %v5716
    %6156 = vst [vmem:[%s5848] ss:$9 sm:$0xff] %v5369
    %6157 = vst [vmem:[%s5850] ss:$9 sm:$0xff] %v5717
    %v6158 = vld [vmem:[#allocation1] sm:$0xff]
    %6159 = vst [vmem:[#allocation1] ss:$9 sm:$0xff] %v5719
    %6160 = vst [vmem:[%s5838] ss:$9 sm:$0xff] %v5720
    %6161 = vst [vmem:[%s5840] ss:$9 sm:$0xff] %v5721
    %6162 = vst [vmem:[%s5842] ss:$9 sm:$0xff] %v5722
    %6163 = vst [vmem:[%s5844] ss:$9 sm:$0xff] %v5723
    %6164 = vst [vmem:[%s5846] ss:$9 sm:$0xff] %v5370
    %6165 = vst [vmem:[%s5848] ss:$9 sm:$0xff] %v5724
    %6166 = vst [vmem:[%s5850] ss:$9 sm:$0xff] %v5725
    %v6167 = vld [vmem:[#allocation1] sm:$0xff]
    %6168 = vst [vmem:[#allocation1] ss:$9 sm:$0xff] %v5726
    %6169 = vst [vmem:[%s5838] ss:$9 sm:$0xff] %v5727
    %6170 = vst [vmem:[%s5840] ss:$9 sm:$0xff] %v5728
    %6171 = vst [vmem:[%s5842] ss:$9 sm:$0xff] %v5729
    %6172 = vst [vmem:[%s5844] ss:$9 sm:$0xff] %v5730
    %6173 = vst [vmem:[%s5846] ss:$9 sm:$0xff] %v5371
    %6174 = vst [vmem:[%s5848] ss:$9 sm:$0xff] %v5732
    %6175 = vst [vmem:[%s5850] ss:$9 sm:$0xff] %v5733
    %v6176 = vld [vmem:[#allocation1] sm:$0xff]
    %6177 = vst [vmem:[#allocation1] ss:$9 sm:$0xff] %v5734
    %6178 = vst [vmem:[%s5838] ss:$9 sm:$0xff] %v5735
    %6179 = vst [vmem:[%s5840] ss:$9 sm:$0xff] %v5736
    %6180 = vst [vmem:[%s5842] ss:$9 sm:$0xff] %v5737
    %6181 = vst [vmem:[%s5844] ss:$9 sm:$0xff] %v5372
    %6182 = vst [vmem:[%s5846] ss:$9 sm:$0xff] %v5738
    %6183 = vst [vmem:[%s5848] ss:$9 sm:$0xff] %v5739
    %6184 = vst [vmem:[%s5850] ss:$9 sm:$0xff] %v5740
    %v6185 = vld [vmem:[#allocation1] sm:$0xff]
    %6186 = vst [vmem:[#allocation1] ss:$9 sm:$0xff] %v5741
    %6187 = vst [vmem:[%s5838] ss:$9 sm:$0xff] %v5742
    %6188 = vst [vmem:[%s5840] ss:$9 sm:$0xff] %v5743
    %6189 = vst [vmem:[%s5842] ss:$9 sm:$0xff] %v5744
    %6190 = vst [vmem:[%s5844] ss:$9 sm:$0xff] %v5745
    %6191 = vst [vmem:[%s5846] ss:$9 sm:$0xff] %v5746
    %6192 = vst [vmem:[%s5848] ss:$9 sm:$0xff] %v5747
    %6193 = vst [vmem:[%s5850] ss:$9 sm:$0xff] %v5748
    %v6194 = vld [vmem:[#allocation1] sm:$0xff]
    %6195 = vst [vmem:[#allocation1] ss:$9 sm:$0xff] %v5749
    %6196 = vst [vmem:[%s5838] ss:$9 sm:$0xff] %v5750
    %6197 = vst [vmem:[%s5840] ss:$9 sm:$0xff] %v5751
    %6198 = vst [vmem:[%s5842] ss:$9 sm:$0xff] %v5374
    %6199 = vst [vmem:[%s5844] ss:$9 sm:$0xff] %v5752
    %6200 = vst [vmem:[%s5846] ss:$9 sm:$0xff] %v5753
    %6201 = vst [vmem:[%s5848] ss:$9 sm:$0xff] %v5754
    %6202 = vst [vmem:[%s5850] ss:$9 sm:$0xff] %v5755
    %v6203 = vld [vmem:[#allocation1] sm:$0xff]
    %6204 = vst [vmem:[#allocation1] ss:$9 sm:$0xff] %v5756
    %6205 = vst [vmem:[%s5838] ss:$9 sm:$0xff] %v5757
    %6206 = vst [vmem:[%s5840] ss:$9 sm:$0xff] %v5375
    %6207 = vst [vmem:[%s5842] ss:$9 sm:$0xff] %v5759
    %6208 = vst [vmem:[%s5844] ss:$9 sm:$0xff] %v5760
    %6209 = vst [vmem:[%s5846] ss:$9 sm:$0xff] %v5761
    %6210 = vst [vmem:[%s5848] ss:$9 sm:$0xff] %v5762
    %6211 = vst [vmem:[%s5850] ss:$9 sm:$0xff] %v5763
    %v6212 = vld [vmem:[#allocation1] sm:$0xff]
    %6213 = vst [vmem:[#allocation1] ss:$9 sm:$0xff] %v5764
    %6214 = vst [vmem:[%s5838] ss:$9 sm:$0xff] %v5765
    %6215 = vst [vmem:[%s5840] ss:$9 sm:$0xff] %v5376
    %6216 = vst [vmem:[%s5842] ss:$9 sm:$0xff] %v5766
    %6217 = vst [vmem:[%s5844] ss:$9 sm:$0xff] %v5767
    %6218 = vst [vmem:[%s5846] ss:$9 sm:$0xff] %v5768
    %6219 = vst [vmem:[%s5848] ss:$9 sm:$0xff] %v5769
    %6220 = vst [vmem:[%s5850] ss:$9 sm:$0xff] %v5770
    %v6221 = vld [vmem:[#allocation1] sm:$0xff]
    %6222 = vst [vmem:[#allocation1] ss:$9 sm:$0xff] %v5772
    %6223 = vst [vmem:[%s5838] ss:$9 sm:$0xff] %v5377
    %6224 = vst [vmem:[%s5840] ss:$9 sm:$0xff] %v5773
    %6225 = vst [vmem:[%s5842] ss:$9 sm:$0xff] %v5774
    %6226 = vst [vmem:[%s5844] ss:$9 sm:$0xff] %v5775
    %6227 = vst [vmem:[%s5846] ss:$9 sm:$0xff] %v5776
    %6228 = vst [vmem:[%s5848] ss:$9 sm:$0xff] %v5777
    %6229 = vst [vmem:[%s5850] ss:$9 sm:$0xff] %v5778
    %v6230 = vld [vmem:[#allocation1] sm:$0xff]
    %6231 = vst [vmem:[#allocation1] ss:$9 sm:$0xff] %v5779
    %6232 = vst [vmem:[%s5838] ss:$9 sm:$0xff] %v5378
    %6233 = vst [vmem:[%s5840] ss:$9 sm:$0xff] %v5780
    %6234 = vst [vmem:[%s5842] ss:$9 sm:$0xff] %v5781
    %6235 = vst [vmem:[%s5844] ss:$9 sm:$0xff] %v5782
    %6236 = vst [vmem:[%s5846] ss:$9 sm:$0xff] %v5783
    %6237 = vst [vmem:[%s5848] ss:$9 sm:$0xff] %v5785
    %6238 = vst [vmem:[%s5850] ss:$9 sm:$0xff] %v5786
    %v6239 = vld [vmem:[#allocation1] sm:$0xff]
    %6240 = vst [vmem:[#allocation1] ss:$9 sm:$0xff] %v5379
    %6241 = vst [vmem:[%s5838] ss:$9 sm:$0xff] %v5787
    %6242 = vst [vmem:[%s5840] ss:$9 sm:$0xff] %v5788
    %6243 = vst [vmem:[%s5842] ss:$9 sm:$0xff] %v5789
    %6244 = vst [vmem:[%s5844] ss:$9 sm:$0xff] %v5790
    %6245 = vst [vmem:[%s5846] ss:$9 sm:$0xff] %v5791
    %6246 = vst [vmem:[%s5848] ss:$9 sm:$0xff] %v5792
    %6247 = vst [vmem:[%s5850] ss:$9 sm:$0xff] %v5793
    %v6248 = vld [vmem:[#allocation1] sm:$0xff]
    %6249 = vst [vmem:[#allocation1] ss:$9 sm:$0xff] %v5380
    %6250 = vst [vmem:[%s5838] ss:$9 sm:$0xff] %v5794
    %6251 = vst [vmem:[%s5840] ss:$9 sm:$0xff] %v5795
    %6252 = vst [vmem:[%s5842] ss:$9 sm:$0xff] %v5796
    %6253 = vst [vmem:[%s5844] ss:$9 sm:$0xff] %v5798
    %6254 = vst [vmem:[%s5846] ss:$9 sm:$0xff] %v5799
    %6255 = vst [vmem:[%s5848] ss:$9 sm:$0xff] %v5800
    %6256 = vst [vmem:[%s5850] ss:$9 sm:$0xff] %v5381
    %v6257 = vld [vmem:[#allocation1] sm:$0xff]
    %6258 = vst [vmem:[#allocation1] ss:$9 sm:$0xff] %v5801
    %6259 = vst [vmem:[%s5838] ss:$9 sm:$0xff] %v5802
    %6260 = vst [vmem:[%s5840] ss:$9 sm:$0xff] %v5803
    %6261 = vst [vmem:[%s5842] ss:$9 sm:$0xff] %v5804
    %6262 = vst [vmem:[%s5844] ss:$9 sm:$0xff] %v5805
    %6263 = vst [vmem:[%s5846] ss:$9 sm:$0xff] %v5806
    %6264 = vst [vmem:[%s5848] ss:$9 sm:$0xff] %v5807
    %6265 = vst [vmem:[%s5850] ss:$9 sm:$0xff] %v5382
    %v6266 = vld [vmem:[#allocation1] sm:$0xff]
    %6267 = vst [vmem:[#allocation1] ss:$9 sm:$0xff] %v5808
    %6268 = vst [vmem:[%s5838] ss:$9 sm:$0xff] %v5809
    %6269 = vst [vmem:[%s5840] ss:$9 sm:$0xff] %v5811
    %6270 = vst [vmem:[%s5842] ss:$9 sm:$0xff] %v5812
    %6271 = vst [vmem:[%s5844] ss:$9 sm:$0xff] %v5813
    %6272 = vst [vmem:[%s5846] ss:$9 sm:$0xff] %v5814
    %6273 = vst [vmem:[%s5848] ss:$9 sm:$0xff] %v5383
    %6274 = vst [vmem:[%s5850] ss:$9 sm:$0xff] %v5815
    %v6275 = vld [vmem:[#allocation1] sm:$0xff]
    %6276 = vst [vmem:[#allocation1] ss:$9 sm:$0xff] %v5816
    %6277 = vst [vmem:[%s5838] ss:$9 sm:$0xff] %v5817
    %6278 = vst [vmem:[%s5840] ss:$9 sm:$0xff] %v5818
    %6279 = vst [vmem:[%s5842] ss:$9 sm:$0xff] %v5819
    %6280 = vst [vmem:[%s5844] ss:$9 sm:$0xff] %v5820
    %6281 = vst [vmem:[%s5846] ss:$9 sm:$0xff] %v5821
    %6282 = vst [vmem:[%s5848] ss:$9 sm:$0xff] %v5384
    %6283 = vst [vmem:[%s5850] ss:$9 sm:$0xff] %v5822
    %v6284 = vld [vmem:[#allocation1] sm:$0xff]
    %6334 = vst.msk [vmem:[#allocation3] sm:$0xff] %vm4886, %v5852
    %6335 = vst.msk [vmem:[#allocation3 + $0x8] sm:$0xff] %vm4886, %v5861
    %6336 = vst.msk [vmem:[#allocation3 + $0x10] sm:$0xff] %vm4886, %v5870
    %6337 = vst.msk [vmem:[#allocation3 + $0x18] sm:$0xff] %vm4886, %v5879
    %6338 = vst.msk [vmem:[#allocation3 + $0x20] sm:$0xff] %vm4886, %v5888
    %6339 = vst.msk [vmem:[#allocation3 + $0x28] sm:$0xff] %vm4886, %v5897
    %6340 = vst.msk [vmem:[#allocation3 + $0x30] sm:$0xff] %vm4886, %v5906
    %6341 = vst.msk [vmem:[#allocation3 + $0x38] sm:$0xff] %vm4886, %v5915
    %6342 = vst.msk [vmem:[#allocation3 + $0x40] sm:$0xff] %vm4886, %v5924
    %6343 = vst.msk [vmem:[#allocation3 + $0x48] sm:$0xff] %vm4886, %v5933
    %6344 = vst.msk [vmem:[#allocation3 + $0x50] sm:$0xff] %vm4886, %v5942
    %6345 = vst.msk [vmem:[#allocation3 + $0x58] sm:$0xff] %vm4886, %v5951
    %6346 = vst.msk [vmem:[#allocation3 + $0x60] sm:$0xff] %vm4886, %v5960
    %6347 = vst.msk [vmem:[#allocation3 + $0x68] sm:$0xff] %vm4886, %v5969
    %6348 = vst.msk [vmem:[#allocation3 + $0x70] sm:$0xff] %vm4886, %v5978
    %6349 = vst.msk [vmem:[#allocation3 + $0x78] sm:$0xff] %vm4886, %v5987
    %6350 = vst.msk [vmem:[#allocation3 + $0x80] sm:$0xff] %vm4886, %v5996
    %6351 = vst.msk [vmem:[#allocation3 + $0x88] sm:$0xff] %vm4886, %v6005
    %6352 = vst.msk [vmem:[#allocation3 + $0x90] sm:$0xff] %vm4886, %v6014
    %6353 = vst.msk [vmem:[#allocation3 + $0x98] sm:$0xff] %vm4886, %v6023
    %6354 = vst.msk [vmem:[#allocation3 + $0xa0] sm:$0xff] %vm4886, %v6032
    %6355 = vst.msk [vmem:[#allocation3 + $0xa8] sm:$0xff] %vm4886, %v6041
    %6356 = vst.msk [vmem:[#allocation3 + $0xb0] sm:$0xff] %vm4886, %v6050
    %6357 = vst.msk [vmem:[#allocation3 + $0xb8] sm:$0xff] %vm4886, %v6059
    %6358 = vst.msk [vmem:[#allocation3 + $0xc0] sm:$0xff] %vm4886, %v6068
    %6359 = vst.msk [vmem:[#allocation3 + $0xc8] sm:$0xff] %vm4886, %v6077
    %6360 = vst.msk [vmem:[#allocation3 + $0xd0] sm:$0xff] %vm4886, %v6086
    %6361 = vst.msk [vmem:[#allocation3 + $0xd8] sm:$0xff] %vm4886, %v6095
    %6362 = vst.msk [vmem:[#allocation3 + $0xe0] sm:$0xff] %vm4886, %v6104
    %6363 = vst.msk [vmem:[#allocation3 + $0xe8] sm:$0xff] %vm4886, %v6113
    %6364 = vst.msk [vmem:[#allocation3 + $0xf0] sm:$0xff] %vm4886, %v6122
    %6365 = vst.msk [vmem:[#allocation3 + $0xf8] sm:$0xff] %vm4886, %v6131
    %6366 = vst.msk [vmem:[#allocation3 + $0x100] sm:$0xff] %vm4886, %v6140
    %6367 = vst.msk [vmem:[#allocation3 + $0x108] sm:$0xff] %vm4886, %v6149
    %6368 = vst.msk [vmem:[#allocation3 + $0x110] sm:$0xff] %vm4886, %v6158
    %6369 = vst.msk [vmem:[#allocation3 + $0x118] sm:$0xff] %vm4886, %v6167
    %6370 = vst.msk [vmem:[#allocation3 + $0x120] sm:$0xff] %vm4886, %v6176
    %6371 = vst.msk [vmem:[#allocation3 + $0x128] sm:$0xff] %vm4886, %v6185
    %6372 = vst.msk [vmem:[#allocation3 + $0x130] sm:$0xff] %vm4886, %v6194
    %6373 = vst.msk [vmem:[#allocation3 + $0x138] sm:$0xff] %vm4886, %v6203
    %6374 = vst.msk [vmem:[#allocation3 + $0x140] sm:$0xff] %vm4886, %v6212
    %6375 = vst.msk [vmem:[#allocation3 + $0x148] sm:$0xff] %vm4886, %v6221
    %6376 = vst.msk [vmem:[#allocation3 + $0x150] sm:$0xff] %vm4886, %v6230
    %6377 = vst.msk [vmem:[#allocation3 + $0x158] sm:$0xff] %vm4886, %v6239
    %6378 = vst.msk [vmem:[#allocation3 + $0x160] sm:$0xff] %vm4886, %v6248
    %6379 = vst.msk [vmem:[#allocation3 + $0x168] sm:$0xff] %vm4886, %v6257
    %6380 = vst.msk [vmem:[#allocation3 + $0x170] sm:$0xff] %vm4886, %v6266
    %6381 = vst.msk [vmem:[#allocation3 + $0x178] sm:$0xff] %vm4886, %v6275
    %6382 = vst.msk [vmem:[#allocation3 + $0x180] sm:$0xff] %vm4886, %v6284
    %6383 = vst [vmem:[#allocation1] ss:$9 sm:$0xff] %v5444
    %s6384 = scalar_lea.vmem [#allocation1], 1
    %6385 = vst [vmem:[%s6384] ss:$9 sm:$0xff] %v5445
    %s6386 = scalar_lea.vmem [#allocation1], 2
    %6387 = vst [vmem:[%s6386] ss:$9 sm:$0xff] %v5446
    %s6388 = scalar_lea.vmem [#allocation1], 3
    %6389 = vst [vmem:[%s6388] ss:$9 sm:$0xff] %v5447
    %s6390 = scalar_lea.vmem [#allocation1], 4
    %6391 = vst [vmem:[%s6390] ss:$9 sm:$0xff] %v5448
    %s6392 = scalar_lea.vmem [#allocation1], 5
    %6393 = vst [vmem:[%s6392] ss:$9 sm:$0xff] %v5449
    %s6394 = scalar_lea.vmem [#allocation1], 6
    %6395 = vst [vmem:[%s6394] ss:$9 sm:$0xff] %v5450
    %s6396 = scalar_lea.vmem [#allocation1], 7
    %6397 = vst [vmem:[%s6396] ss:$9 sm:$0xff] %v5331
    %v6398 = vld [vmem:[#allocation1] sm:$0xff]
    %6399 = vst [vmem:[#allocation1] ss:$9 sm:$0xff] %v5451
    %6400 = vst [vmem:[%s6384] ss:$9 sm:$0xff] %v5452
    %6401 = vst [vmem:[%s6386] ss:$9 sm:$0xff] %v5453
    %6402 = vst [vmem:[%s6388] ss:$9 sm:$0xff] %v5454
    %6403 = vst [vmem:[%s6390] ss:$9 sm:$0xff] %v5455
    %6404 = vst [vmem:[%s6392] ss:$9 sm:$0xff] %v5456
    %6405 = vst [vmem:[%s6394] ss:$9 sm:$0xff] %v5332
    %6406 = vst [vmem:[%s6396] ss:$9 sm:$0xff] %v5458
    %v6407 = vld [vmem:[#allocation1] sm:$0xff]
    %6408 = vst [vmem:[#allocation1] ss:$9 sm:$0xff] %v5459
    %6409 = vst [vmem:[%s6384] ss:$9 sm:$0xff] %v5460
    %6410 = vst [vmem:[%s6386] ss:$9 sm:$0xff] %v5461
    %6411 = vst [vmem:[%s6388] ss:$9 sm:$0xff] %v5462
    %6412 = vst [vmem:[%s6390] ss:$9 sm:$0xff] %v5463
    %6413 = vst [vmem:[%s6392] ss:$9 sm:$0xff] %v5464
    %6414 = vst [vmem:[%s6394] ss:$9 sm:$0xff] %v5333
    %6415 = vst [vmem:[%s6396] ss:$9 sm:$0xff] %v5465
    %v6416 = vld [vmem:[#allocation1] sm:$0xff]
    %6417 = vst [vmem:[#allocation1] ss:$9 sm:$0xff] %v5466
    %6418 = vst [vmem:[%s6384] ss:$9 sm:$0xff] %v5467
    %6419 = vst [vmem:[%s6386] ss:$9 sm:$0xff] %v5468
    %6420 = vst [vmem:[%s6388] ss:$9 sm:$0xff] %v5469
    %6421 = vst [vmem:[%s6390] ss:$9 sm:$0xff] %v5471
    %6422 = vst [vmem:[%s6392] ss:$9 sm:$0xff] %v5334
    %6423 = vst [vmem:[%s6394] ss:$9 sm:$0xff] %v5472
    %6424 = vst [vmem:[%s6396] ss:$9 sm:$0xff] %v5473
    %v6425 = vld [vmem:[#allocation1] sm:$0xff]
    %6426 = vst [vmem:[#allocation1] ss:$9 sm:$0xff] %v5474
    %6427 = vst [vmem:[%s6384] ss:$9 sm:$0xff] %v5475
    %6428 = vst [vmem:[%s6386] ss:$9 sm:$0xff] %v5476
    %6429 = vst [vmem:[%s6388] ss:$9 sm:$0xff] %v5477
    %6430 = vst [vmem:[%s6390] ss:$9 sm:$0xff] %v5478
    %6431 = vst [vmem:[%s6392] ss:$9 sm:$0xff] %v5335
    %6432 = vst [vmem:[%s6394] ss:$9 sm:$0xff] %v5479
    %6433 = vst [vmem:[%s6396] ss:$9 sm:$0xff] %v5480
    %v6434 = vld [vmem:[#allocation1] sm:$0xff]
    %6435 = vst [vmem:[#allocation1] ss:$9 sm:$0xff] %v5481
    %6436 = vst [vmem:[%s6384] ss:$9 sm:$0xff] %v5482
    %6437 = vst [vmem:[%s6386] ss:$9 sm:$0xff] %v5484
    %6438 = vst [vmem:[%s6388] ss:$9 sm:$0xff] %v5485
    %6439 = vst [vmem:[%s6390] ss:$9 sm:$0xff] %v5336
    %6440 = vst [vmem:[%s6392] ss:$9 sm:$0xff] %v5486
    %6441 = vst [vmem:[%s6394] ss:$9 sm:$0xff] %v5487
    %6442 = vst [vmem:[%s6396] ss:$9 sm:$0xff] %v5488
    %v6443 = vld [vmem:[#allocation1] sm:$0xff]
    %6444 = vst [vmem:[#allocation1] ss:$9 sm:$0xff] %v5489
    %6445 = vst [vmem:[%s6384] ss:$9 sm:$0xff] %v5490
    %6446 = vst [vmem:[%s6386] ss:$9 sm:$0xff] %v5491
    %6447 = vst [vmem:[%s6388] ss:$9 sm:$0xff] %v5492
    %6448 = vst [vmem:[%s6390] ss:$9 sm:$0xff] %v5337
    %6449 = vst [vmem:[%s6392] ss:$9 sm:$0xff] %v5493
    %6450 = vst [vmem:[%s6394] ss:$9 sm:$0xff] %v5494
    %6451 = vst [vmem:[%s6396] ss:$9 sm:$0xff] %v5495
    %v6452 = vld [vmem:[#allocation1] sm:$0xff]
    %6453 = vst [vmem:[#allocation1] ss:$9 sm:$0xff] %v5497
    %6454 = vst [vmem:[%s6384] ss:$9 sm:$0xff] %v5498
    %6455 = vst [vmem:[%s6386] ss:$9 sm:$0xff] %v5499
    %6456 = vst [vmem:[%s6388] ss:$9 sm:$0xff] %v5338
    %6457 = vst [vmem:[%s6390] ss:$9 sm:$0xff] %v5500
    %6458 = vst [vmem:[%s6392] ss:$9 sm:$0xff] %v5501
    %6459 = vst [vmem:[%s6394] ss:$9 sm:$0xff] %v5502
    %6460 = vst [vmem:[%s6396] ss:$9 sm:$0xff] %v5503
    %v6461 = vld [vmem:[#allocation1] sm:$0xff]
    %6462 = vst [vmem:[#allocation1] ss:$9 sm:$0xff] %v5504
    %6463 = vst [vmem:[%s6384] ss:$9 sm:$0xff] %v5505
    %6464 = vst [vmem:[%s6386] ss:$9 sm:$0xff] %v5506
    %6465 = vst [vmem:[%s6388] ss:$9 sm:$0xff] %v5339
    %6466 = vst [vmem:[%s6390] ss:$9 sm:$0xff] %v5507
    %6467 = vst [vmem:[%s6392] ss:$9 sm:$0xff] %v5508
    %6468 = vst [vmem:[%s6394] ss:$9 sm:$0xff] %v5510
    %6469 = vst [vmem:[%s6396] ss:$9 sm:$0xff] %v5511
    %v6470 = vld [vmem:[#allocation1] sm:$0xff]
    %6471 = vst [vmem:[#allocation1] ss:$9 sm:$0xff] %v5512
    %6472 = vst [vmem:[%s6384] ss:$9 sm:$0xff] %v5513
    %6473 = vst [vmem:[%s6386] ss:$9 sm:$0xff] %v5340
    %6474 = vst [vmem:[%s6388] ss:$9 sm:$0xff] %v5514
    %6475 = vst [vmem:[%s6390] ss:$9 sm:$0xff] %v5515
    %6476 = vst [vmem:[%s6392] ss:$9 sm:$0xff] %v5516
    %6477 = vst [vmem:[%s6394] ss:$9 sm:$0xff] %v5517
    %6478 = vst [vmem:[%s6396] ss:$9 sm:$0xff] %v5518
    %v6479 = vld [vmem:[#allocation1] sm:$0xff]
    %6480 = vst [vmem:[#allocation1] ss:$9 sm:$0xff] %v5519
    %6481 = vst [vmem:[%s6384] ss:$9 sm:$0xff] %v5520
    %6482 = vst [vmem:[%s6386] ss:$9 sm:$0xff] %v5341
    %6483 = vst [vmem:[%s6388] ss:$9 sm:$0xff] %v5521
    %6484 = vst [vmem:[%s6390] ss:$9 sm:$0xff] %v5523
    %6485 = vst [vmem:[%s6392] ss:$9 sm:$0xff] %v5524
    %6486 = vst [vmem:[%s6394] ss:$9 sm:$0xff] %v5525
    %6487 = vst [vmem:[%s6396] ss:$9 sm:$0xff] %v5526
    %v6488 = vld [vmem:[#allocation1] sm:$0xff]
    %6489 = vst [vmem:[#allocation1] ss:$9 sm:$0xff] %v5527
    %6490 = vst [vmem:[%s6384] ss:$9 sm:$0xff] %v5342
    %6491 = vst [vmem:[%s6386] ss:$9 sm:$0xff] %v5528
    %6492 = vst [vmem:[%s6388] ss:$9 sm:$0xff] %v5529
    %6493 = vst [vmem:[%s6390] ss:$9 sm:$0xff] %v5530
    %6494 = vst [vmem:[%s6392] ss:$9 sm:$0xff] %v5531
    %6495 = vst [vmem:[%s6394] ss:$9 sm:$0xff] %v5532
    %6496 = vst [vmem:[%s6396] ss:$9 sm:$0xff] %v5533
    %v6497 = vld [vmem:[#allocation1] sm:$0xff]
    %6498 = vst [vmem:[#allocation1] ss:$9 sm:$0xff] %v5534
    %6499 = vst [vmem:[%s6384] ss:$9 sm:$0xff] %v5343
    %6500 = vst [vmem:[%s6386] ss:$9 sm:$0xff] %v5536
    %6501 = vst [vmem:[%s6388] ss:$9 sm:$0xff] %v5537
    %6502 = vst [vmem:[%s6390] ss:$9 sm:$0xff] %v5538
    %6503 = vst [vmem:[%s6392] ss:$9 sm:$0xff] %v5539
    %6504 = vst [vmem:[%s6394] ss:$9 sm:$0xff] %v5540
    %6505 = vst [vmem:[%s6396] ss:$9 sm:$0xff] %v5541
    %v6506 = vld [vmem:[#allocation1] sm:$0xff]
    %6507 = vst [vmem:[#allocation1] ss:$9 sm:$0xff] %v5344
    %6508 = vst [vmem:[%s6384] ss:$9 sm:$0xff] %v5542
    %6509 = vst [vmem:[%s6386] ss:$9 sm:$0xff] %v5543
    %6510 = vst [vmem:[%s6388] ss:$9 sm:$0xff] %v5544
    %6511 = vst [vmem:[%s6390] ss:$9 sm:$0xff] %v5545
    %6512 = vst [vmem:[%s6392] ss:$9 sm:$0xff] %v5546
    %6513 = vst [vmem:[%s6394] ss:$9 sm:$0xff] %v5547
    %6514 = vst [vmem:[%s6396] ss:$9 sm:$0xff] %v5548
    %v6515 = vld [vmem:[#allocation1] sm:$0xff]
    %6516 = vst [vmem:[#allocation1] ss:$9 sm:$0xff] %v5549
    %6517 = vst [vmem:[%s6384] ss:$9 sm:$0xff] %v5550
    %6518 = vst [vmem:[%s6386] ss:$9 sm:$0xff] %v5551
    %6519 = vst [vmem:[%s6388] ss:$9 sm:$0xff] %v5552
    %6520 = vst [vmem:[%s6390] ss:$9 sm:$0xff] %v5553
    %6521 = vst [vmem:[%s6392] ss:$9 sm:$0xff] %v5554
    %6522 = vst [vmem:[%s6394] ss:$9 sm:$0xff] %v5555
    %6523 = vst [vmem:[%s6396] ss:$9 sm:$0xff] %v5346
    %v6524 = vld [vmem:[#allocation1] sm:$0xff]
    %6525 = vst [vmem:[#allocation1] ss:$9 sm:$0xff] %v5556
    %6526 = vst [vmem:[%s6384] ss:$9 sm:$0xff] %v5557
    %6527 = vst [vmem:[%s6386] ss:$9 sm:$0xff] %v5558
    %6528 = vst [vmem:[%s6388] ss:$9 sm:$0xff] %v5559
    %6529 = vst [vmem:[%s6390] ss:$9 sm:$0xff] %v5560
    %6530 = vst [vmem:[%s6392] ss:$9 sm:$0xff] %v5561
    %6531 = vst [vmem:[%s6394] ss:$9 sm:$0xff] %v5347
    %6532 = vst [vmem:[%s6396] ss:$9 sm:$0xff] %v5563
    %v6533 = vld [vmem:[#allocation1] sm:$0xff]
    %6534 = vst [vmem:[#allocation1] ss:$9 sm:$0xff] %v5564
    %6535 = vst [vmem:[%s6384] ss:$9 sm:$0xff] %v5565
    %6536 = vst [vmem:[%s6386] ss:$9 sm:$0xff] %v5566
    %6537 = vst [vmem:[%s6388] ss:$9 sm:$0xff] %v5567
    %6538 = vst [vmem:[%s6390] ss:$9 sm:$0xff] %v5568
    %6539 = vst [vmem:[%s6392] ss:$9 sm:$0xff] %v5569
    %6540 = vst [vmem:[%s6394] ss:$9 sm:$0xff] %v5348
    %6541 = vst [vmem:[%s6396] ss:$9 sm:$0xff] %v5570
    %v6542 = vld [vmem:[#allocation1] sm:$0xff]
    %6543 = vst [vmem:[#allocation1] ss:$9 sm:$0xff] %v5571
    %6544 = vst [vmem:[%s6384] ss:$9 sm:$0xff] %v5572
    %6545 = vst [vmem:[%s6386] ss:$9 sm:$0xff] %v5573
    %6546 = vst [vmem:[%s6388] ss:$9 sm:$0xff] %v5574
    %6547 = vst [vmem:[%s6390] ss:$9 sm:$0xff] %v5576
    %6548 = vst [vmem:[%s6392] ss:$9 sm:$0xff] %v5349
    %6549 = vst [vmem:[%s6394] ss:$9 sm:$0xff] %v5577
    %6550 = vst [vmem:[%s6396] ss:$9 sm:$0xff] %v5578
    %v6551 = vld [vmem:[#allocation1] sm:$0xff]
    %6552 = vst [vmem:[#allocation1] ss:$9 sm:$0xff] %v5579
    %6553 = vst [vmem:[%s6384] ss:$9 sm:$0xff] %v5580
    %6554 = vst [vmem:[%s6386] ss:$9 sm:$0xff] %v5581
    %6555 = vst [vmem:[%s6388] ss:$9 sm:$0xff] %v5582
    %6556 = vst [vmem:[%s6390] ss:$9 sm:$0xff] %v5583
    %6557 = vst [vmem:[%s6392] ss:$9 sm:$0xff] %v5350
    %6558 = vst [vmem:[%s6394] ss:$9 sm:$0xff] %v5584
    %6559 = vst [vmem:[%s6396] ss:$9 sm:$0xff] %v5585
    %v6560 = vld [vmem:[#allocation1] sm:$0xff]
    %6561 = vst [vmem:[#allocation1] ss:$9 sm:$0xff] %v5586
    %6562 = vst [vmem:[%s6384] ss:$9 sm:$0xff] %v5587
    %6563 = vst [vmem:[%s6386] ss:$9 sm:$0xff] %v5589
    %6564 = vst [vmem:[%s6388] ss:$9 sm:$0xff] %v5590
    %6565 = vst [vmem:[%s6390] ss:$9 sm:$0xff] %v5351
    %6566 = vst [vmem:[%s6392] ss:$9 sm:$0xff] %v5591
    %6567 = vst [vmem:[%s6394] ss:$9 sm:$0xff] %v5592
    %6568 = vst [vmem:[%s6396] ss:$9 sm:$0xff] %v5593
    %v6569 = vld [vmem:[#allocation1] sm:$0xff]
    %6570 = vst [vmem:[#allocation1] ss:$9 sm:$0xff] %v5594
    %6571 = vst [vmem:[%s6384] ss:$9 sm:$0xff] %v5595
    %6572 = vst [vmem:[%s6386] ss:$9 sm:$0xff] %v5596
    %6573 = vst [vmem:[%s6388] ss:$9 sm:$0xff] %v5597
    %6574 = vst [vmem:[%s6390] ss:$9 sm:$0xff] %v5352
    %6575 = vst [vmem:[%s6392] ss:$9 sm:$0xff] %v5598
    %6576 = vst [vmem:[%s6394] ss:$9 sm:$0xff] %v5599
    %6577 = vst [vmem:[%s6396] ss:$9 sm:$0xff] %v5600
    %v6578 = vld [vmem:[#allocation1] sm:$0xff]
    %6579 = vst [vmem:[#allocation1] ss:$9 sm:$0xff] %v5602
    %6580 = vst [vmem:[%s6384] ss:$9 sm:$0xff] %v5603
    %6581 = vst [vmem:[%s6386] ss:$9 sm:$0xff] %v5604
    %6582 = vst [vmem:[%s6388] ss:$9 sm:$0xff] %v5353
    %6583 = vst [vmem:[%s6390] ss:$9 sm:$0xff] %v5605
    %6584 = vst [vmem:[%s6392] ss:$9 sm:$0xff] %v5606
    %6585 = vst [vmem:[%s6394] ss:$9 sm:$0xff] %v5607
    %6586 = vst [vmem:[%s6396] ss:$9 sm:$0xff] %v5608
    %v6587 = vld [vmem:[#allocation1] sm:$0xff]
    %6588 = vst [vmem:[#allocation1] ss:$9 sm:$0xff] %v5609
    %6589 = vst [vmem:[%s6384] ss:$9 sm:$0xff] %v5610
    %6590 = vst [vmem:[%s6386] ss:$9 sm:$0xff] %v5611
    %6591 = vst [vmem:[%s6388] ss:$9 sm:$0xff] %v5354
    %6592 = vst [vmem:[%s6390] ss:$9 sm:$0xff] %v5612
    %6593 = vst [vmem:[%s6392] ss:$9 sm:$0xff] %v5613
    %6594 = vst [vmem:[%s6394] ss:$9 sm:$0xff] %v5615
    %6595 = vst [vmem:[%s6396] ss:$9 sm:$0xff] %v5616
    %v6596 = vld [vmem:[#allocation1] sm:$0xff]
    %6597 = vst [vmem:[#allocation1] ss:$9 sm:$0xff] %v5617
    %6598 = vst [vmem:[%s6384] ss:$9 sm:$0xff] %v5618
    %6599 = vst [vmem:[%s6386] ss:$9 sm:$0xff] %v5355
    %6600 = vst [vmem:[%s6388] ss:$9 sm:$0xff] %v5619
    %6601 = vst [vmem:[%s6390] ss:$9 sm:$0xff] %v5620
    %6602 = vst [vmem:[%s6392] ss:$9 sm:$0xff] %v5621
    %6603 = vst [vmem:[%s6394] ss:$9 sm:$0xff] %v5622
    %6604 = vst [vmem:[%s6396] ss:$9 sm:$0xff] %v5623
    %v6605 = vld [vmem:[#allocation1] sm:$0xff]
    %6606 = vst [vmem:[#allocation1] ss:$9 sm:$0xff] %v5624
    %6607 = vst [vmem:[%s6384] ss:$9 sm:$0xff] %v5625
    %6608 = vst [vmem:[%s6386] ss:$9 sm:$0xff] %v5356
    %6609 = vst [vmem:[%s6388] ss:$9 sm:$0xff] %v5626
    %6610 = vst [vmem:[%s6390] ss:$9 sm:$0xff] %v5641
    %6611 = vst [vmem:[%s6392] ss:$9 sm:$0xff] %v5642
    %6612 = vst [vmem:[%s6394] ss:$9 sm:$0xff] %v5643
    %6613 = vst [vmem:[%s6396] ss:$9 sm:$0xff] %v5644
    %v6614 = vld [vmem:[#allocation1] sm:$0xff]
    %6615 = vst [vmem:[#allocation1] ss:$9 sm:$0xff] %v5645
    %6616 = vst [vmem:[%s6384] ss:$9 sm:$0xff] %v5646
    %6617 = vst [vmem:[%s6386] ss:$9 sm:$0xff] %v5359
    %6618 = vst [vmem:[%s6388] ss:$9 sm:$0xff] %v5647
    %6619 = vst [vmem:[%s6390] ss:$9 sm:$0xff] %v5648
    %6620 = vst [vmem:[%s6392] ss:$9 sm:$0xff] %v5649
    %6621 = vst [vmem:[%s6394] ss:$9 sm:$0xff] %v5650
    %6622 = vst [vmem:[%s6396] ss:$9 sm:$0xff] %v5651
    %v6623 = vld [vmem:[#allocation1] sm:$0xff]
    %6624 = vst [vmem:[#allocation1] ss:$9 sm:$0xff] %v5652
    %6625 = vst [vmem:[%s6384] ss:$9 sm:$0xff] %v5653
    %6626 = vst [vmem:[%s6386] ss:$9 sm:$0xff] %v5654
    %6627 = vst [vmem:[%s6388] ss:$9 sm:$0xff] %v5655
    %6628 = vst [vmem:[%s6390] ss:$9 sm:$0xff] %v5656
    %6629 = vst [vmem:[%s6392] ss:$9 sm:$0xff] %v5657
    %6630 = vst [vmem:[%s6394] ss:$9 sm:$0xff] %v5658
    %6631 = vst [vmem:[%s6396] ss:$9 sm:$0xff] %v5659
    %v6632 = vld [vmem:[#allocation1] sm:$0xff]
    %6633 = vst [vmem:[#allocation1] ss:$9 sm:$0xff] %v5660
    %6634 = vst [vmem:[%s6384] ss:$9 sm:$0xff] %v5361
    %6635 = vst [vmem:[%s6386] ss:$9 sm:$0xff] %v5661
    %6636 = vst [vmem:[%s6388] ss:$9 sm:$0xff] %v5662
    %6637 = vst [vmem:[%s6390] ss:$9 sm:$0xff] %v5663
    %6638 = vst [vmem:[%s6392] ss:$9 sm:$0xff] %v5664
    %6639 = vst [vmem:[%s6394] ss:$9 sm:$0xff] %v5665
    %6640 = vst [vmem:[%s6396] ss:$9 sm:$0xff] %v5666
    %v6641 = vld [vmem:[#allocation1] sm:$0xff]
    %6642 = vst [vmem:[#allocation1] ss:$9 sm:$0xff] %v5362
    %6643 = vst [vmem:[%s6384] ss:$9 sm:$0xff] %v5668
    %6644 = vst [vmem:[%s6386] ss:$9 sm:$0xff] %v5669
    %6645 = vst [vmem:[%s6388] ss:$9 sm:$0xff] %v5670
    %6646 = vst [vmem:[%s6390] ss:$9 sm:$0xff] %v5671
    %6647 = vst [vmem:[%s6392] ss:$9 sm:$0xff] %v5672
    %6648 = vst [vmem:[%s6394] ss:$9 sm:$0xff] %v5673
    %6649 = vst [vmem:[%s6396] ss:$9 sm:$0xff] %v5674
    %v6650 = vld [vmem:[#allocation1] sm:$0xff]
    %6651 = vst [vmem:[#allocation1] ss:$9 sm:$0xff] %v5363
    %6652 = vst [vmem:[%s6384] ss:$9 sm:$0xff] %v5675
    %6653 = vst [vmem:[%s6386] ss:$9 sm:$0xff] %v5676
    %6654 = vst [vmem:[%s6388] ss:$9 sm:$0xff] %v5677
    %6655 = vst [vmem:[%s6390] ss:$9 sm:$0xff] %v5678
    %6656 = vst [vmem:[%s6392] ss:$9 sm:$0xff] %v5679
    %6657 = vst [vmem:[%s6394] ss:$9 sm:$0xff] %v5681
    %6658 = vst [vmem:[%s6396] ss:$9 sm:$0xff] %v5364
    %v6659 = vld [vmem:[#allocation1] sm:$0xff]
    %6660 = vst [vmem:[#allocation1] ss:$9 sm:$0xff] %v5682
    %6661 = vst [vmem:[%s6384] ss:$9 sm:$0xff] %v5683
    %6662 = vst [vmem:[%s6386] ss:$9 sm:$0xff] %v5684
    %6663 = vst [vmem:[%s6388] ss:$9 sm:$0xff] %v5685
    %6664 = vst [vmem:[%s6390] ss:$9 sm:$0xff] %v5686
    %6665 = vst [vmem:[%s6392] ss:$9 sm:$0xff] %v5687
    %6666 = vst [vmem:[%s6394] ss:$9 sm:$0xff] %v5688
    %6667 = vst [vmem:[%s6396] ss:$9 sm:$0xff] %v5365
    %v6668 = vld [vmem:[#allocation1] sm:$0xff]
    %6669 = vst [vmem:[#allocation1] ss:$9 sm:$0xff] %v5689
    %6670 = vst [vmem:[%s6384] ss:$9 sm:$0xff] %v5690
    %6671 = vst [vmem:[%s6386] ss:$9 sm:$0xff] %v5691
    %6672 = vst [vmem:[%s6388] ss:$9 sm:$0xff] %v5692
    %6673 = vst [vmem:[%s6390] ss:$9 sm:$0xff] %v5694
    %6674 = vst [vmem:[%s6392] ss:$9 sm:$0xff] %v5695
    %6675 = vst [vmem:[%s6394] ss:$9 sm:$0xff] %v5366
    %6676 = vst [vmem:[%s6396] ss:$9 sm:$0xff] %v5696
    %v6677 = vld [vmem:[#allocation1] sm:$0xff]
    %6678 = vst [vmem:[#allocation1] ss:$9 sm:$0xff] %v5697
    %6679 = vst [vmem:[%s6384] ss:$9 sm:$0xff] %v5698
    %6680 = vst [vmem:[%s6386] ss:$9 sm:$0xff] %v5699
    %6681 = vst [vmem:[%s6388] ss:$9 sm:$0xff] %v5700
    %6682 = vst [vmem:[%s6390] ss:$9 sm:$0xff] %v5701
    %6683 = vst [vmem:[%s6392] ss:$9 sm:$0xff] %v5702
    %6684 = vst [vmem:[%s6394] ss:$9 sm:$0xff] %v5367
    %6685 = vst [vmem:[%s6396] ss:$9 sm:$0xff] %v5703
    %v6686 = vld [vmem:[#allocation1] sm:$0xff]
    %6687 = vst [vmem:[#allocation1] ss:$9 sm:$0xff] %v5704
    %6688 = vst [vmem:[%s6384] ss:$9 sm:$0xff] %v5705
    %6689 = vst [vmem:[%s6386] ss:$9 sm:$0xff] %v5707
    %6690 = vst [vmem:[%s6388] ss:$9 sm:$0xff] %v5708
    %6691 = vst [vmem:[%s6390] ss:$9 sm:$0xff] %v5709
    %6692 = vst [vmem:[%s6392] ss:$9 sm:$0xff] %v5368
    %6693 = vst [vmem:[%s6394] ss:$9 sm:$0xff] %v5710
    %6694 = vst [vmem:[%s6396] ss:$9 sm:$0xff] %v5711
    %v6695 = vld [vmem:[#allocation1] sm:$0xff]
    %6696 = vst [vmem:[#allocation1] ss:$9 sm:$0xff] %v5712
    %6697 = vst [vmem:[%s6384] ss:$9 sm:$0xff] %v5713
    %6698 = vst [vmem:[%s6386] ss:$9 sm:$0xff] %v5714
    %6699 = vst [vmem:[%s6388] ss:$9 sm:$0xff] %v5715
    %6700 = vst [vmem:[%s6390] ss:$9 sm:$0xff] %v5716
    %6701 = vst [vmem:[%s6392] ss:$9 sm:$0xff] %v5369
    %6702 = vst [vmem:[%s6394] ss:$9 sm:$0xff] %v5717
    %6703 = vst [vmem:[%s6396] ss:$9 sm:$0xff] %v5718
    %v6704 = vld [vmem:[#allocation1] sm:$0xff]
    %6705 = vst [vmem:[#allocation1] ss:$9 sm:$0xff] %v5720
    %6706 = vst [vmem:[%s6384] ss:$9 sm:$0xff] %v5721
    %6707 = vst [vmem:[%s6386] ss:$9 sm:$0xff] %v5722
    %6708 = vst [vmem:[%s6388] ss:$9 sm:$0xff] %v5723
    %6709 = vst [vmem:[%s6390] ss:$9 sm:$0xff] %v5370
    %6710 = vst [vmem:[%s6392] ss:$9 sm:$0xff] %v5724
    %6711 = vst [vmem:[%s6394] ss:$9 sm:$0xff] %v5725
    %6712 = vst [vmem:[%s6396] ss:$9 sm:$0xff] %v5726
    %v6713 = vld [vmem:[#allocation1] sm:$0xff]
    %6714 = vst [vmem:[#allocation1] ss:$9 sm:$0xff] %v5727
    %6715 = vst [vmem:[%s6384] ss:$9 sm:$0xff] %v5728
    %6716 = vst [vmem:[%s6386] ss:$9 sm:$0xff] %v5729
    %6717 = vst [vmem:[%s6388] ss:$9 sm:$0xff] %v5730
    %6718 = vst [vmem:[%s6390] ss:$9 sm:$0xff] %v5371
    %6719 = vst [vmem:[%s6392] ss:$9 sm:$0xff] %v5731
    %6720 = vst [vmem:[%s6394] ss:$9 sm:$0xff] %v5733
    %6721 = vst [vmem:[%s6396] ss:$9 sm:$0xff] %v5734
    %v6722 = vld [vmem:[#allocation1] sm:$0xff]
    %6723 = vst [vmem:[#allocation1] ss:$9 sm:$0xff] %v5735
    %6724 = vst [vmem:[%s6384] ss:$9 sm:$0xff] %v5736
    %6725 = vst [vmem:[%s6386] ss:$9 sm:$0xff] %v5737
    %6726 = vst [vmem:[%s6388] ss:$9 sm:$0xff] %v5372
    %6727 = vst [vmem:[%s6390] ss:$9 sm:$0xff] %v5738
    %6728 = vst [vmem:[%s6392] ss:$9 sm:$0xff] %v5739
    %6729 = vst [vmem:[%s6394] ss:$9 sm:$0xff] %v5740
    %6730 = vst [vmem:[%s6396] ss:$9 sm:$0xff] %v5741
    %v6731 = vld [vmem:[#allocation1] sm:$0xff]
    %6732 = vst [vmem:[#allocation1] ss:$9 sm:$0xff] %v5742
    %6733 = vst [vmem:[%s6384] ss:$9 sm:$0xff] %v5743
    %6734 = vst [vmem:[%s6386] ss:$9 sm:$0xff] %v5744
    %6735 = vst [vmem:[%s6388] ss:$9 sm:$0xff] %v5373
    %6736 = vst [vmem:[%s6390] ss:$9 sm:$0xff] %v5746
    %6737 = vst [vmem:[%s6392] ss:$9 sm:$0xff] %v5747
    %6738 = vst [vmem:[%s6394] ss:$9 sm:$0xff] %v5748
    %6739 = vst [vmem:[%s6396] ss:$9 sm:$0xff] %v5749
    %v6740 = vld [vmem:[#allocation1] sm:$0xff]
    %6741 = vst [vmem:[#allocation1] ss:$9 sm:$0xff] %v5750
    %6742 = vst [vmem:[%s6384] ss:$9 sm:$0xff] %v5751
    %6743 = vst [vmem:[%s6386] ss:$9 sm:$0xff] %v5374
    %6744 = vst [vmem:[%s6388] ss:$9 sm:$0xff] %v5752
    %6745 = vst [vmem:[%s6390] ss:$9 sm:$0xff] %v5753
    %6746 = vst [vmem:[%s6392] ss:$9 sm:$0xff] %v5754
    %6747 = vst [vmem:[%s6394] ss:$9 sm:$0xff] %v5755
    %6748 = vst [vmem:[%s6396] ss:$9 sm:$0xff] %v5756
    %v6749 = vld [vmem:[#allocation1] sm:$0xff]
    %6750 = vst [vmem:[#allocation1] ss:$9 sm:$0xff] %v5757
    %6751 = vst [vmem:[%s6384] ss:$9 sm:$0xff] %v5758
    %6752 = vst [vmem:[%s6386] ss:$9 sm:$0xff] %v5759
    %6753 = vst [vmem:[%s6388] ss:$9 sm:$0xff] %v5760
    %6754 = vst [vmem:[%s6390] ss:$9 sm:$0xff] %v5761
    %6755 = vst [vmem:[%s6392] ss:$9 sm:$0xff] %v5762
    %6756 = vst [vmem:[%s6394] ss:$9 sm:$0xff] %v5763
    %6757 = vst [vmem:[%s6396] ss:$9 sm:$0xff] %v5764
    %v6758 = vld [vmem:[#allocation1] sm:$0xff]
    %6759 = vst [vmem:[#allocation1] ss:$9 sm:$0xff] %v5765
    %6760 = vst [vmem:[%s6384] ss:$9 sm:$0xff] %v5376
    %6761 = vst [vmem:[%s6386] ss:$9 sm:$0xff] %v5766
    %6762 = vst [vmem:[%s6388] ss:$9 sm:$0xff] %v5767
    %6763 = vst [vmem:[%s6390] ss:$9 sm:$0xff] %v5768
    %6764 = vst [vmem:[%s6392] ss:$9 sm:$0xff] %v5769
    %6765 = vst [vmem:[%s6394] ss:$9 sm:$0xff] %v5770
    %6766 = vst [vmem:[%s6396] ss:$9 sm:$0xff] %v5771
    %v6767 = vld [vmem:[#allocation1] sm:$0xff]
    %6768 = vst [vmem:[#allocation1] ss:$9 sm:$0xff] %v5377
    %6769 = vst [vmem:[%s6384] ss:$9 sm:$0xff] %v5773
    %6770 = vst [vmem:[%s6386] ss:$9 sm:$0xff] %v5774
    %6771 = vst [vmem:[%s6388] ss:$9 sm:$0xff] %v5775
    %6772 = vst [vmem:[%s6390] ss:$9 sm:$0xff] %v5776
    %6773 = vst [vmem:[%s6392] ss:$9 sm:$0xff] %v5777
    %6774 = vst [vmem:[%s6394] ss:$9 sm:$0xff] %v5778
    %6775 = vst [vmem:[%s6396] ss:$9 sm:$0xff] %v5779
    %v6776 = vld [vmem:[#allocation1] sm:$0xff]
    %6777 = vst [vmem:[#allocation1] ss:$9 sm:$0xff] %v5378
    %6778 = vst [vmem:[%s6384] ss:$9 sm:$0xff] %v5780
    %6779 = vst [vmem:[%s6386] ss:$9 sm:$0xff] %v5781
    %6780 = vst [vmem:[%s6388] ss:$9 sm:$0xff] %v5782
    %6781 = vst [vmem:[%s6390] ss:$9 sm:$0xff] %v5783
    %6782 = vst [vmem:[%s6392] ss:$9 sm:$0xff] %v5784
    %6783 = vst [vmem:[%s6394] ss:$9 sm:$0xff] %v5786
    %6784 = vst [vmem:[%s6396] ss:$9 sm:$0xff] %v5379
    %v6785 = vld [vmem:[#allocation1] sm:$0xff]
    %6786 = vst [vmem:[#allocation1] ss:$9 sm:$0xff] %v5787
    %6787 = vst [vmem:[%s6384] ss:$9 sm:$0xff] %v5788
    %6788 = vst [vmem:[%s6386] ss:$9 sm:$0xff] %v5789
    %6789 = vst [vmem:[%s6388] ss:$9 sm:$0xff] %v5790
    %6790 = vst [vmem:[%s6390] ss:$9 sm:$0xff] %v5791
    %6791 = vst [vmem:[%s6392] ss:$9 sm:$0xff] %v5792
    %6792 = vst [vmem:[%s6394] ss:$9 sm:$0xff] %v5793
    %6793 = vst [vmem:[%s6396] ss:$9 sm:$0xff] %v5380
    %v6794 = vld [vmem:[#allocation1] sm:$0xff]
    %6795 = vst [vmem:[#allocation1] ss:$9 sm:$0xff] %v5794
    %6796 = vst [vmem:[%s6384] ss:$9 sm:$0xff] %v5795
    %6797 = vst [vmem:[%s6386] ss:$9 sm:$0xff] %v5796
    %6798 = vst [vmem:[%s6388] ss:$9 sm:$0xff] %v5797
    %6799 = vst [vmem:[%s6390] ss:$9 sm:$0xff] %v5799
    %6800 = vst [vmem:[%s6392] ss:$9 sm:$0xff] %v5800
    %6801 = vst [vmem:[%s6394] ss:$9 sm:$0xff] %v5381
    %6802 = vst [vmem:[%s6396] ss:$9 sm:$0xff] %v5801
    %v6803 = vld [vmem:[#allocation1] sm:$0xff]
    %6804 = vst [vmem:[#allocation1] ss:$9 sm:$0xff] %v5802
    %6805 = vst [vmem:[%s6384] ss:$9 sm:$0xff] %v5803
    %6806 = vst [vmem:[%s6386] ss:$9 sm:$0xff] %v5804
    %6807 = vst [vmem:[%s6388] ss:$9 sm:$0xff] %v5805
    %6808 = vst [vmem:[%s6390] ss:$9 sm:$0xff] %v5806
    %6809 = vst [vmem:[%s6392] ss:$9 sm:$0xff] %v5807
    %6810 = vst [vmem:[%s6394] ss:$9 sm:$0xff] %v5382
    %6811 = vst [vmem:[%s6396] ss:$9 sm:$0xff] %v5808
    %v6812 = vld [vmem:[#allocation1] sm:$0xff]
    %6813 = vst [vmem:[#allocation1] ss:$9 sm:$0xff] %v5809
    %6814 = vst [vmem:[%s6384] ss:$9 sm:$0xff] %v5810
    %6815 = vst [vmem:[%s6386] ss:$9 sm:$0xff] %v5812
    %6816 = vst [vmem:[%s6388] ss:$9 sm:$0xff] %v5813
    %6817 = vst [vmem:[%s6390] ss:$9 sm:$0xff] %v5814
    %6818 = vst [vmem:[%s6392] ss:$9 sm:$0xff] %v5383
    %6819 = vst [vmem:[%s6394] ss:$9 sm:$0xff] %v5815
    %6820 = vst [vmem:[%s6396] ss:$9 sm:$0xff] %v5816
    %v6821 = vld [vmem:[#allocation1] sm:$0xff]
    %6822 = vst [vmem:[#allocation1] ss:$9 sm:$0xff] %v5817
    %6823 = vst [vmem:[%s6384] ss:$9 sm:$0xff] %v5818
    %6824 = vst [vmem:[%s6386] ss:$9 sm:$0xff] %v5819
    %6825 = vst [vmem:[%s6388] ss:$9 sm:$0xff] %v5820
    %6826 = vst [vmem:[%s6390] ss:$9 sm:$0xff] %v5821
    %6827 = vst [vmem:[%s6392] ss:$9 sm:$0xff] %v5384
    %6828 = vst [vmem:[%s6394] ss:$9 sm:$0xff] %v5822
    %6829 = vst [vmem:[%s6396] ss:$9 sm:$0xff] %v5823
    %v6830 = vld [vmem:[#allocation1] sm:$0xff]
    %6831 = vrot.lane.b32.xlu0 %v6398, 8
    %v6832 = vpop.permute.xlu0 %6831
    %6833 = vrot.lane.b32.xlu0 %v6407, 8
    %v6834 = vpop.permute.xlu0 %6833
    %6835 = vrot.lane.b32.xlu0 %v6416, 8
    %v6836 = vpop.permute.xlu0 %6835
    %6837 = vrot.lane.b32.xlu0 %v6425, 8
    %v6838 = vpop.permute.xlu0 %6837
    %6839 = vrot.lane.b32.xlu0 %v6434, 8
    %v6840 = vpop.permute.xlu0 %6839
    %6841 = vrot.lane.b32.xlu0 %v6443, 8
    %v6842 = vpop.permute.xlu0 %6841
    %6843 = vrot.lane.b32.xlu0 %v6452, 8
    %v6844 = vpop.permute.xlu0 %6843
    %6845 = vrot.lane.b32.xlu0 %v6461, 8
    %v6846 = vpop.permute.xlu0 %6845
    %6847 = vrot.lane.b32.xlu0 %v6470, 8
    %v6848 = vpop.permute.xlu0 %6847
    %6849 = vrot.lane.b32.xlu0 %v6479, 8
    %v6850 = vpop.permute.xlu0 %6849
    %6851 = vrot.lane.b32.xlu0 %v6488, 8
    %v6852 = vpop.permute.xlu0 %6851
    %6853 = vrot.lane.b32.xlu0 %v6497, 8
    %v6854 = vpop.permute.xlu0 %6853
    %6855 = vrot.lane.b32.xlu0 %v6506, 8
    %v6856 = vpop.permute.xlu0 %6855
    %6857 = vrot.lane.b32.xlu0 %v6515, 8
    %v6858 = vpop.permute.xlu0 %6857
    %6859 = vrot.lane.b32.xlu0 %v6524, 8
    %v6860 = vpop.permute.xlu0 %6859
    %6861 = vrot.lane.b32.xlu0 %v6533, 8
    %v6862 = vpop.permute.xlu0 %6861
    %6863 = vrot.lane.b32.xlu0 %v6542, 8
    %v6864 = vpop.permute.xlu0 %6863
    %6865 = vrot.lane.b32.xlu0 %v6551, 8
    %v6866 = vpop.permute.xlu0 %6865
    %6867 = vrot.lane.b32.xlu0 %v6560, 8
    %v6868 = vpop.permute.xlu0 %6867
    %6869 = vrot.lane.b32.xlu0 %v6569, 8
    %v6870 = vpop.permute.xlu0 %6869
    %6871 = vrot.lane.b32.xlu0 %v6578, 8
    %v6872 = vpop.permute.xlu0 %6871
    %6873 = vrot.lane.b32.xlu0 %v6587, 8
    %v6874 = vpop.permute.xlu0 %6873
    %6875 = vrot.lane.b32.xlu0 %v6596, 8
    %v6876 = vpop.permute.xlu0 %6875
    %6877 = vrot.lane.b32.xlu0 %v6605, 8
    %v6878 = vpop.permute.xlu0 %6877
    %6879 = vrot.lane.b32.xlu0 %v6614, 8
    %v6880 = vpop.permute.xlu0 %6879
    %6881 = vrot.lane.b32.xlu0 %v6623, 8
    %v6882 = vpop.permute.xlu0 %6881
    %6883 = vrot.lane.b32.xlu0 %v6632, 8
    %v6884 = vpop.permute.xlu0 %6883
    %6885 = vrot.lane.b32.xlu0 %v6641, 8
    %v6886 = vpop.permute.xlu0 %6885
    %6887 = vrot.lane.b32.xlu0 %v6650, 8
    %v6888 = vpop.permute.xlu0 %6887
    %6889 = vrot.lane.b32.xlu0 %v6659, 8
    %v6890 = vpop.permute.xlu0 %6889
    %6891 = vrot.lane.b32.xlu0 %v6668, 8
    %v6892 = vpop.permute.xlu0 %6891
    %6893 = vrot.lane.b32.xlu0 %v6677, 8
    %v6894 = vpop.permute.xlu0 %6893
    %6895 = vrot.lane.b32.xlu0 %v6686, 8
    %v6896 = vpop.permute.xlu0 %6895
    %6897 = vrot.lane.b32.xlu0 %v6695, 8
    %v6898 = vpop.permute.xlu0 %6897
    %6899 = vrot.lane.b32.xlu0 %v6704, 8
    %v6900 = vpop.permute.xlu0 %6899
    %6901 = vrot.lane.b32.xlu0 %v6713, 8
    %v6902 = vpop.permute.xlu0 %6901
    %6903 = vrot.lane.b32.xlu0 %v6722, 8
    %v6904 = vpop.permute.xlu0 %6903
    %6905 = vrot.lane.b32.xlu0 %v6731, 8
    %v6906 = vpop.permute.xlu0 %6905
    %6907 = vrot.lane.b32.xlu0 %v6740, 8
    %v6908 = vpop.permute.xlu0 %6907
    %6909 = vrot.lane.b32.xlu0 %v6749, 8
    %v6910 = vpop.permute.xlu0 %6909
    %6911 = vrot.lane.b32.xlu0 %v6758, 8
    %v6912 = vpop.permute.xlu0 %6911
    %6913 = vrot.lane.b32.xlu0 %v6767, 8
    %v6914 = vpop.permute.xlu0 %6913
    %6915 = vrot.lane.b32.xlu0 %v6776, 8
    %v6916 = vpop.permute.xlu0 %6915
    %6917 = vrot.lane.b32.xlu0 %v6785, 8
    %v6918 = vpop.permute.xlu0 %6917
    %6919 = vrot.lane.b32.xlu0 %v6794, 8
    %v6920 = vpop.permute.xlu0 %6919
    %6921 = vrot.lane.b32.xlu0 %v6803, 8
    %v6922 = vpop.permute.xlu0 %6921
    %6923 = vrot.lane.b32.xlu0 %v6812, 8
    %v6924 = vpop.permute.xlu0 %6923
    %6925 = vrot.lane.b32.xlu0 %v6821, 8
    %v6926 = vpop.permute.xlu0 %6925
    %6927 = vrot.lane.b32.xlu0 %v6830, 8
    %v6928 = vpop.permute.xlu0 %6927
    %vm6978 = vcmask 130112
    %6979 = vst.msk [vmem:[#allocation3] sm:$0xff] %vm6978, %v6832
    %6980 = vst.msk [vmem:[#allocation3 + $0x8] sm:$0xff] %vm6978, %v6834
    %6981 = vst.msk [vmem:[#allocation3 + $0x10] sm:$0xff] %vm6978, %v6836
    %6982 = vst.msk [vmem:[#allocation3 + $0x18] sm:$0xff] %vm6978, %v6838
    %6983 = vst.msk [vmem:[#allocation3 + $0x20] sm:$0xff] %vm6978, %v6840
    %6984 = vst.msk [vmem:[#allocation3 + $0x28] sm:$0xff] %vm6978, %v6842
    %6985 = vst.msk [vmem:[#allocation3 + $0x30] sm:$0xff] %vm6978, %v6844
    %6986 = vst.msk [vmem:[#allocation3 + $0x38] sm:$0xff] %vm6978, %v6846
    %6987 = vst.msk [vmem:[#allocation3 + $0x40] sm:$0xff] %vm6978, %v6848
    %6988 = vst.msk [vmem:[#allocation3 + $0x48] sm:$0xff] %vm6978, %v6850
    %6989 = vst.msk [vmem:[#allocation3 + $0x50] sm:$0xff] %vm6978, %v6852
    %6990 = vst.msk [vmem:[#allocation3 + $0x58] sm:$0xff] %vm6978, %v6854
    %6991 = vst.msk [vmem:[#allocation3 + $0x60] sm:$0xff] %vm6978, %v6856
    %6992 = vst.msk [vmem:[#allocation3 + $0x68] sm:$0xff] %vm6978, %v6858
    %6993 = vst.msk [vmem:[#allocation3 + $0x70] sm:$0xff] %vm6978, %v6860
    %6994 = vst.msk [vmem:[#allocation3 + $0x78] sm:$0xff] %vm6978, %v6862
    %6995 = vst.msk [vmem:[#allocation3 + $0x80] sm:$0xff] %vm6978, %v6864
    %6996 = vst.msk [vmem:[#allocation3 + $0x88] sm:$0xff] %vm6978, %v6866
    %6997 = vst.msk [vmem:[#allocation3 + $0x90] sm:$0xff] %vm6978, %v6868
    %6998 = vst.msk [vmem:[#allocation3 + $0x98] sm:$0xff] %vm6978, %v6870
    %6999 = vst.msk [vmem:[#allocation3 + $0xa0] sm:$0xff] %vm6978, %v6872
    %7000 = vst.msk [vmem:[#allocation3 + $0xa8] sm:$0xff] %vm6978, %v6874
    %7001 = vst.msk [vmem:[#allocation3 + $0xb0] sm:$0xff] %vm6978, %v6876
    %7002 = vst.msk [vmem:[#allocation3 + $0xb8] sm:$0xff] %vm6978, %v6878
    %7003 = vst.msk [vmem:[#allocation3 + $0xc0] sm:$0xff] %vm6978, %v6880
    %7004 = vst.msk [vmem:[#allocation3 + $0xc8] sm:$0xff] %vm6978, %v6882
    %7005 = vst.msk [vmem:[#allocation3 + $0xd0] sm:$0xff] %vm6978, %v6884
    %7006 = vst.msk [vmem:[#allocation3 + $0xd8] sm:$0xff] %vm6978, %v6886
    %7007 = vst.msk [vmem:[#allocation3 + $0xe0] sm:$0xff] %vm6978, %v6888
    %7008 = vst.msk [vmem:[#allocation3 + $0xe8] sm:$0xff] %vm6978, %v6890
    %7009 = vst.msk [vmem:[#allocation3 + $0xf0] sm:$0xff] %vm6978, %v6892
    %7010 = vst.msk [vmem:[#allocation3 + $0xf8] sm:$0xff] %vm6978, %v6894
    %7011 = vst.msk [vmem:[#allocation3 + $0x100] sm:$0xff] %vm6978, %v6896
    %7012 = vst.msk [vmem:[#allocation3 + $0x108] sm:$0xff] %vm6978, %v6898
    %7013 = vst.msk [vmem:[#allocation3 + $0x110] sm:$0xff] %vm6978, %v6900
    %7014 = vst.msk [vmem:[#allocation3 + $0x118] sm:$0xff] %vm6978, %v6902
    %7015 = vst.msk [vmem:[#allocation3 + $0x120] sm:$0xff] %vm6978, %v6904
    %7016 = vst.msk [vmem:[#allocation3 + $0x128] sm:$0xff] %vm6978, %v6906
    %7017 = vst.msk [vmem:[#allocation3 + $0x130] sm:$0xff] %vm6978, %v6908
    %7018 = vst.msk [vmem:[#allocation3 + $0x138] sm:$0xff] %vm6978, %v6910
    %7019 = vst.msk [vmem:[#allocation3 + $0x140] sm:$0xff] %vm6978, %v6912
    %7020 = vst.msk [vmem:[#allocation3 + $0x148] sm:$0xff] %vm6978, %v6914
    %7021 = vst.msk [vmem:[#allocation3 + $0x150] sm:$0xff] %vm6978, %v6916
    %7022 = vst.msk [vmem:[#allocation3 + $0x158] sm:$0xff] %vm6978, %v6918
    %7023 = vst.msk [vmem:[#allocation3 + $0x160] sm:$0xff] %vm6978, %v6920
    %7024 = vst.msk [vmem:[#allocation3 + $0x168] sm:$0xff] %vm6978, %v6922
    %7025 = vst.msk [vmem:[#allocation3 + $0x170] sm:$0xff] %vm6978, %v6924
    %7026 = vst.msk [vmem:[#allocation3 + $0x178] sm:$0xff] %vm6978, %v6926
    %7027 = vst.msk [vmem:[#allocation3 + $0x180] sm:$0xff] %vm6978, %v6928
    %7028 = vst [vmem:[#allocation1] ss:$9 sm:$0xff] %v5457
    %s7029 = scalar_lea.vmem [#allocation1], 1
    %7030 = vst [vmem:[%s7029] ss:$9 sm:$0xff] %v5332
    %s7031 = scalar_lea.vmem [#allocation1], 2
    %7032 = vst [vmem:[%s7031] ss:$9 sm:$0xff] %v5458
    %s7033 = scalar_lea.vmem [#allocation1], 3
    %7034 = vst [vmem:[%s7033] ss:$9 sm:$0xff] %v5459
    %s7035 = scalar_lea.vmem [#allocation1], 4
    %7036 = vst [vmem:[%s7035] ss:$9 sm:$0xff] %v5460
    %s7037 = scalar_lea.vmem [#allocation1], 5
    %7038 = vst [vmem:[%s7037] ss:$9 sm:$0xff] %v5461
    %s7039 = scalar_lea.vmem [#allocation1], 6
    %7040 = vst [vmem:[%s7039] ss:$9 sm:$0xff] %v5462
    %s7041 = scalar_lea.vmem [#allocation1], 7
    %7042 = vst [vmem:[%s7041] ss:$9 sm:$0xff] %v5463
    %v7043 = vld [vmem:[#allocation1] sm:$0xff]
    %7044 = vst [vmem:[#allocation1] ss:$9 sm:$0xff] %v5464
    %7045 = vst [vmem:[%s7029] ss:$9 sm:$0xff] %v5333
    %7046 = vst [vmem:[%s7031] ss:$9 sm:$0xff] %v5465
    %7047 = vst [vmem:[%s7033] ss:$9 sm:$0xff] %v5466
    %7048 = vst [vmem:[%s7035] ss:$9 sm:$0xff] %v5467
    %7049 = vst [vmem:[%s7037] ss:$9 sm:$0xff] %v5468
    %7050 = vst [vmem:[%s7039] ss:$9 sm:$0xff] %v5470
    %7051 = vst [vmem:[%s7041] ss:$9 sm:$0xff] %v5471
    %v7052 = vld [vmem:[#allocation1] sm:$0xff]
    %7053 = vst [vmem:[#allocation1] ss:$9 sm:$0xff] %v5334
    %7054 = vst [vmem:[%s7029] ss:$9 sm:$0xff] %v5472
    %7055 = vst [vmem:[%s7031] ss:$9 sm:$0xff] %v5473
    %7056 = vst [vmem:[%s7033] ss:$9 sm:$0xff] %v5474
    %7057 = vst [vmem:[%s7035] ss:$9 sm:$0xff] %v5475
    %7058 = vst [vmem:[%s7037] ss:$9 sm:$0xff] %v5476
    %7059 = vst [vmem:[%s7039] ss:$9 sm:$0xff] %v5477
    %7060 = vst [vmem:[%s7041] ss:$9 sm:$0xff] %v5478
    %v7061 = vld [vmem:[#allocation1] sm:$0xff]
    %7062 = vst [vmem:[#allocation1] ss:$9 sm:$0xff] %v5335
    %7063 = vst [vmem:[%s7029] ss:$9 sm:$0xff] %v5479
    %7064 = vst [vmem:[%s7031] ss:$9 sm:$0xff] %v5480
    %7065 = vst [vmem:[%s7033] ss:$9 sm:$0xff] %v5481
    %7066 = vst [vmem:[%s7035] ss:$9 sm:$0xff] %v5483
    %7067 = vst [vmem:[%s7037] ss:$9 sm:$0xff] %v5484
    %7068 = vst [vmem:[%s7039] ss:$9 sm:$0xff] %v5485
    %7069 = vst [vmem:[%s7041] ss:$9 sm:$0xff] %v5336
    %v7070 = vld [vmem:[#allocation1] sm:$0xff]
    %7071 = vst [vmem:[#allocation1] ss:$9 sm:$0xff] %v5486
    %7072 = vst [vmem:[%s7029] ss:$9 sm:$0xff] %v5487
    %7073 = vst [vmem:[%s7031] ss:$9 sm:$0xff] %v5488
    %7074 = vst [vmem:[%s7033] ss:$9 sm:$0xff] %v5489
    %7075 = vst [vmem:[%s7035] ss:$9 sm:$0xff] %v5490
    %7076 = vst [vmem:[%s7037] ss:$9 sm:$0xff] %v5491
    %7077 = vst [vmem:[%s7039] ss:$9 sm:$0xff] %v5492
    %7078 = vst [vmem:[%s7041] ss:$9 sm:$0xff] %v5337
    %v7079 = vld [vmem:[#allocation1] sm:$0xff]
    %7080 = vst [vmem:[#allocation1] ss:$9 sm:$0xff] %v5493
    %7081 = vst [vmem:[%s7029] ss:$9 sm:$0xff] %v5494
    %7082 = vst [vmem:[%s7031] ss:$9 sm:$0xff] %v5496
    %7083 = vst [vmem:[%s7033] ss:$9 sm:$0xff] %v5497
    %7084 = vst [vmem:[%s7035] ss:$9 sm:$0xff] %v5498
    %7085 = vst [vmem:[%s7037] ss:$9 sm:$0xff] %v5499
    %7086 = vst [vmem:[%s7039] ss:$9 sm:$0xff] %v5338
    %7087 = vst [vmem:[%s7041] ss:$9 sm:$0xff] %v5500
    %v7088 = vld [vmem:[#allocation1] sm:$0xff]
    %7089 = vst [vmem:[#allocation1] ss:$9 sm:$0xff] %v5501
    %7090 = vst [vmem:[%s7029] ss:$9 sm:$0xff] %v5502
    %7091 = vst [vmem:[%s7031] ss:$9 sm:$0xff] %v5503
    %7092 = vst [vmem:[%s7033] ss:$9 sm:$0xff] %v5504
    %7093 = vst [vmem:[%s7035] ss:$9 sm:$0xff] %v5505
    %7094 = vst [vmem:[%s7037] ss:$9 sm:$0xff] %v5506
    %7095 = vst [vmem:[%s7039] ss:$9 sm:$0xff] %v5339
    %7096 = vst [vmem:[%s7041] ss:$9 sm:$0xff] %v5507
    %v7097 = vld [vmem:[#allocation1] sm:$0xff]
    %7098 = vst [vmem:[#allocation1] ss:$9 sm:$0xff] %v5509
    %7099 = vst [vmem:[%s7029] ss:$9 sm:$0xff] %v5510
    %7100 = vst [vmem:[%s7031] ss:$9 sm:$0xff] %v5511
    %7101 = vst [vmem:[%s7033] ss:$9 sm:$0xff] %v5512
    %7102 = vst [vmem:[%s7035] ss:$9 sm:$0xff] %v5513
    %7103 = vst [vmem:[%s7037] ss:$9 sm:$0xff] %v5340
    %7104 = vst [vmem:[%s7039] ss:$9 sm:$0xff] %v5514
    %7105 = vst [vmem:[%s7041] ss:$9 sm:$0xff] %v5515
    %v7106 = vld [vmem:[#allocation1] sm:$0xff]
    %7107 = vst [vmem:[#allocation1] ss:$9 sm:$0xff] %v5516
    %7108 = vst [vmem:[%s7029] ss:$9 sm:$0xff] %v5517
    %7109 = vst [vmem:[%s7031] ss:$9 sm:$0xff] %v5518
    %7110 = vst [vmem:[%s7033] ss:$9 sm:$0xff] %v5519
    %7111 = vst [vmem:[%s7035] ss:$9 sm:$0xff] %v5520
    %7112 = vst [vmem:[%s7037] ss:$9 sm:$0xff] %v5341
    %7113 = vst [vmem:[%s7039] ss:$9 sm:$0xff] %v5522
    %7114 = vst [vmem:[%s7041] ss:$9 sm:$0xff] %v5523
    %v7115 = vld [vmem:[#allocation1] sm:$0xff]
    %7116 = vst [vmem:[#allocation1] ss:$9 sm:$0xff] %v5524
    %7117 = vst [vmem:[%s7029] ss:$9 sm:$0xff] %v5525
    %7118 = vst [vmem:[%s7031] ss:$9 sm:$0xff] %v5526
    %7119 = vst [vmem:[%s7033] ss:$9 sm:$0xff] %v5527
    %7120 = vst [vmem:[%s7035] ss:$9 sm:$0xff] %v5342
    %7121 = vst [vmem:[%s7037] ss:$9 sm:$0xff] %v5528
    %7122 = vst [vmem:[%s7039] ss:$9 sm:$0xff] %v5529
    %7123 = vst [vmem:[%s7041] ss:$9 sm:$0xff] %v5530
    %v7124 = vld [vmem:[#allocation1] sm:$0xff]
    %7125 = vst [vmem:[#allocation1] ss:$9 sm:$0xff] %v5531
    %7126 = vst [vmem:[%s7029] ss:$9 sm:$0xff] %v5532
    %7127 = vst [vmem:[%s7031] ss:$9 sm:$0xff] %v5533
    %7128 = vst [vmem:[%s7033] ss:$9 sm:$0xff] %v5534
    %7129 = vst [vmem:[%s7035] ss:$9 sm:$0xff] %v5535
    %7130 = vst [vmem:[%s7037] ss:$9 sm:$0xff] %v5536
    %7131 = vst [vmem:[%s7039] ss:$9 sm:$0xff] %v5537
    %7132 = vst [vmem:[%s7041] ss:$9 sm:$0xff] %v5538
    %v7133 = vld [vmem:[#allocation1] sm:$0xff]
    %7134 = vst [vmem:[#allocation1] ss:$9 sm:$0xff] %v5539
    %7135 = vst [vmem:[%s7029] ss:$9 sm:$0xff] %v5540
    %7136 = vst [vmem:[%s7031] ss:$9 sm:$0xff] %v5541
    %7137 = vst [vmem:[%s7033] ss:$9 sm:$0xff] %v5344
    %7138 = vst [vmem:[%s7035] ss:$9 sm:$0xff] %v5542
    %7139 = vst [vmem:[%s7037] ss:$9 sm:$0xff] %v5543
    %7140 = vst [vmem:[%s7039] ss:$9 sm:$0xff] %v5544
    %7141 = vst [vmem:[%s7041] ss:$9 sm:$0xff] %v5545
    %v7142 = vld [vmem:[#allocation1] sm:$0xff]
    %7143 = vst [vmem:[#allocation1] ss:$9 sm:$0xff] %v5546
    %7144 = vst [vmem:[%s7029] ss:$9 sm:$0xff] %v5547
    %7145 = vst [vmem:[%s7031] ss:$9 sm:$0xff] %v5345
    %7146 = vst [vmem:[%s7033] ss:$9 sm:$0xff] %v5549
    %7147 = vst [vmem:[%s7035] ss:$9 sm:$0xff] %v5550
    %7148 = vst [vmem:[%s7037] ss:$9 sm:$0xff] %v5551
    %7149 = vst [vmem:[%s7039] ss:$9 sm:$0xff] %v5552
    %7150 = vst [vmem:[%s7041] ss:$9 sm:$0xff] %v5553
    %v7151 = vld [vmem:[#allocation1] sm:$0xff]
    %7152 = vst [vmem:[#allocation1] ss:$9 sm:$0xff] %v5554
    %7153 = vst [vmem:[%s7029] ss:$9 sm:$0xff] %v5555
    %7154 = vst [vmem:[%s7031] ss:$9 sm:$0xff] %v5346
    %7155 = vst [vmem:[%s7033] ss:$9 sm:$0xff] %v5556
    %7156 = vst [vmem:[%s7035] ss:$9 sm:$0xff] %v5557
    %7157 = vst [vmem:[%s7037] ss:$9 sm:$0xff] %v5558
    %7158 = vst [vmem:[%s7039] ss:$9 sm:$0xff] %v5559
    %7159 = vst [vmem:[%s7041] ss:$9 sm:$0xff] %v5560
    %v7160 = vld [vmem:[#allocation1] sm:$0xff]
    %7161 = vst [vmem:[#allocation1] ss:$9 sm:$0xff] %v5562
    %7162 = vst [vmem:[%s7029] ss:$9 sm:$0xff] %v5347
    %7163 = vst [vmem:[%s7031] ss:$9 sm:$0xff] %v5563
    %7164 = vst [vmem:[%s7033] ss:$9 sm:$0xff] %v5564
    %7165 = vst [vmem:[%s7035] ss:$9 sm:$0xff] %v5565
    %7166 = vst [vmem:[%s7037] ss:$9 sm:$0xff] %v5566
    %7167 = vst [vmem:[%s7039] ss:$9 sm:$0xff] %v5567
    %7168 = vst [vmem:[%s7041] ss:$9 sm:$0xff] %v5568
    %v7169 = vld [vmem:[#allocation1] sm:$0xff]
    %7170 = vst [vmem:[#allocation1] ss:$9 sm:$0xff] %v5569
    %7171 = vst [vmem:[%s7029] ss:$9 sm:$0xff] %v5348
    %7172 = vst [vmem:[%s7031] ss:$9 sm:$0xff] %v5570
    %7173 = vst [vmem:[%s7033] ss:$9 sm:$0xff] %v5571
    %7174 = vst [vmem:[%s7035] ss:$9 sm:$0xff] %v5572
    %7175 = vst [vmem:[%s7037] ss:$9 sm:$0xff] %v5573
    %7176 = vst [vmem:[%s7039] ss:$9 sm:$0xff] %v5575
    %7177 = vst [vmem:[%s7041] ss:$9 sm:$0xff] %v5576
    %v7178 = vld [vmem:[#allocation1] sm:$0xff]
    %7179 = vst [vmem:[#allocation1] ss:$9 sm:$0xff] %v5349
    %7180 = vst [vmem:[%s7029] ss:$9 sm:$0xff] %v5577
    %7181 = vst [vmem:[%s7031] ss:$9 sm:$0xff] %v5578
    %7182 = vst [vmem:[%s7033] ss:$9 sm:$0xff] %v5579
    %7183 = vst [vmem:[%s7035] ss:$9 sm:$0xff] %v5580
    %7184 = vst [vmem:[%s7037] ss:$9 sm:$0xff] %v5581
    %7185 = vst [vmem:[%s7039] ss:$9 sm:$0xff] %v5582
    %7186 = vst [vmem:[%s7041] ss:$9 sm:$0xff] %v5583
    %v7187 = vld [vmem:[#allocation1] sm:$0xff]
    %7188 = vst [vmem:[#allocation1] ss:$9 sm:$0xff] %v5350
    %7189 = vst [vmem:[%s7029] ss:$9 sm:$0xff] %v5584
    %7190 = vst [vmem:[%s7031] ss:$9 sm:$0xff] %v5585
    %7191 = vst [vmem:[%s7033] ss:$9 sm:$0xff] %v5586
    %7192 = vst [vmem:[%s7035] ss:$9 sm:$0xff] %v5588
    %7193 = vst [vmem:[%s7037] ss:$9 sm:$0xff] %v5589
    %7194 = vst [vmem:[%s7039] ss:$9 sm:$0xff] %v5590
    %7195 = vst [vmem:[%s7041] ss:$9 sm:$0xff] %v5351
    %v7196 = vld [vmem:[#allocation1] sm:$0xff]
    %7197 = vst [vmem:[#allocation1] ss:$9 sm:$0xff] %v5591
    %7198 = vst [vmem:[%s7029] ss:$9 sm:$0xff] %v5592
    %7199 = vst [vmem:[%s7031] ss:$9 sm:$0xff] %v5593
    %7200 = vst [vmem:[%s7033] ss:$9 sm:$0xff] %v5594
    %7201 = vst [vmem:[%s7035] ss:$9 sm:$0xff] %v5595
    %7202 = vst [vmem:[%s7037] ss:$9 sm:$0xff] %v5596
    %7203 = vst [vmem:[%s7039] ss:$9 sm:$0xff] %v5597
    %7204 = vst [vmem:[%s7041] ss:$9 sm:$0xff] %v5352
    %v7205 = vld [vmem:[#allocation1] sm:$0xff]
    %7206 = vst [vmem:[#allocation1] ss:$9 sm:$0xff] %v5598
    %7207 = vst [vmem:[%s7029] ss:$9 sm:$0xff] %v5599
    %7208 = vst [vmem:[%s7031] ss:$9 sm:$0xff] %v5601
    %7209 = vst [vmem:[%s7033] ss:$9 sm:$0xff] %v5602
    %7210 = vst [vmem:[%s7035] ss:$9 sm:$0xff] %v5603
    %7211 = vst [vmem:[%s7037] ss:$9 sm:$0xff] %v5604
    %7212 = vst [vmem:[%s7039] ss:$9 sm:$0xff] %v5353
    %7213 = vst [vmem:[%s7041] ss:$9 sm:$0xff] %v5605
    %v7214 = vld [vmem:[#allocation1] sm:$0xff]
    %7215 = vst [vmem:[#allocation1] ss:$9 sm:$0xff] %v5606
    %7216 = vst [vmem:[%s7029] ss:$9 sm:$0xff] %v5607
    %7217 = vst [vmem:[%s7031] ss:$9 sm:$0xff] %v5608
    %7218 = vst [vmem:[%s7033] ss:$9 sm:$0xff] %v5609
    %7219 = vst [vmem:[%s7035] ss:$9 sm:$0xff] %v5610
    %7220 = vst [vmem:[%s7037] ss:$9 sm:$0xff] %v5611
    %7221 = vst [vmem:[%s7039] ss:$9 sm:$0xff] %v5354
    %7222 = vst [vmem:[%s7041] ss:$9 sm:$0xff] %v5612
    %v7223 = vld [vmem:[#allocation1] sm:$0xff]
    %7224 = vst [vmem:[#allocation1] ss:$9 sm:$0xff] %v5614
    %7225 = vst [vmem:[%s7029] ss:$9 sm:$0xff] %v5615
    %7226 = vst [vmem:[%s7031] ss:$9 sm:$0xff] %v5616
    %7227 = vst [vmem:[%s7033] ss:$9 sm:$0xff] %v5617
    %7228 = vst [vmem:[%s7035] ss:$9 sm:$0xff] %v5618
    %7229 = vst [vmem:[%s7037] ss:$9 sm:$0xff] %v5355
    %7230 = vst [vmem:[%s7039] ss:$9 sm:$0xff] %v5619
    %7231 = vst [vmem:[%s7041] ss:$9 sm:$0xff] %v5620
    %v7232 = vld [vmem:[#allocation1] sm:$0xff]
    %7233 = vst [vmem:[#allocation1] ss:$9 sm:$0xff] %v5621
    %7234 = vst [vmem:[%s7029] ss:$9 sm:$0xff] %v5622
    %7235 = vst [vmem:[%s7031] ss:$9 sm:$0xff] %v5623
    %7236 = vst [vmem:[%s7033] ss:$9 sm:$0xff] %v5624
    %7237 = vst [vmem:[%s7035] ss:$9 sm:$0xff] %v5625
    %7238 = vst [vmem:[%s7037] ss:$9 sm:$0xff] %v5356
    %7239 = vst [vmem:[%s7039] ss:$9 sm:$0xff] %v5627
    %7240 = vst [vmem:[%s7041] ss:$9 sm:$0xff] %v5628
    %v7241 = vld [vmem:[#allocation1] sm:$0xff]
    %7242 = vst [vmem:[#allocation1] ss:$9 sm:$0xff] %v5629
    %7243 = vst [vmem:[%s7029] ss:$9 sm:$0xff] %v5630
    %7244 = vst [vmem:[%s7031] ss:$9 sm:$0xff] %v5631
    %7245 = vst [vmem:[%s7033] ss:$9 sm:$0xff] %v5632
    %7246 = vst [vmem:[%s7035] ss:$9 sm:$0xff] %v5357
    %7247 = vst [vmem:[%s7037] ss:$9 sm:$0xff] %v5633
    %7248 = vst [vmem:[%s7039] ss:$9 sm:$0xff] %v5634
    %7249 = vst [vmem:[%s7041] ss:$9 sm:$0xff] %v5635
    %v7250 = vld [vmem:[#allocation1] sm:$0xff]
    %7251 = vst [vmem:[#allocation1] ss:$9 sm:$0xff] %v5636
    %7252 = vst [vmem:[%s7029] ss:$9 sm:$0xff] %v5637
    %7253 = vst [vmem:[%s7031] ss:$9 sm:$0xff] %v5638
    %7254 = vst [vmem:[%s7033] ss:$9 sm:$0xff] %v5639
    %7255 = vst [vmem:[%s7035] ss:$9 sm:$0xff] %v5360
    %7256 = vst [vmem:[%s7037] ss:$9 sm:$0xff] %v5654
    %7257 = vst [vmem:[%s7039] ss:$9 sm:$0xff] %v5655
    %7258 = vst [vmem:[%s7041] ss:$9 sm:$0xff] %v5656
    %v7259 = vld [vmem:[#allocation1] sm:$0xff]
    %7260 = vst [vmem:[#allocation1] ss:$9 sm:$0xff] %v5657
    %7261 = vst [vmem:[%s7029] ss:$9 sm:$0xff] %v5658
    %7262 = vst [vmem:[%s7031] ss:$9 sm:$0xff] %v5659
    %7263 = vst [vmem:[%s7033] ss:$9 sm:$0xff] %v5660
    %7264 = vst [vmem:[%s7035] ss:$9 sm:$0xff] %v5361
    %7265 = vst [vmem:[%s7037] ss:$9 sm:$0xff] %v5661
    %7266 = vst [vmem:[%s7039] ss:$9 sm:$0xff] %v5662
    %7267 = vst [vmem:[%s7041] ss:$9 sm:$0xff] %v5663
    %v7268 = vld [vmem:[#allocation1] sm:$0xff]
    %7269 = vst [vmem:[#allocation1] ss:$9 sm:$0xff] %v5664
    %7270 = vst [vmem:[%s7029] ss:$9 sm:$0xff] %v5665
    %7271 = vst [vmem:[%s7031] ss:$9 sm:$0xff] %v5667
    %7272 = vst [vmem:[%s7033] ss:$9 sm:$0xff] %v5362
    %7273 = vst [vmem:[%s7035] ss:$9 sm:$0xff] %v5668
    %7274 = vst [vmem:[%s7037] ss:$9 sm:$0xff] %v5669
    %7275 = vst [vmem:[%s7039] ss:$9 sm:$0xff] %v5670
    %7276 = vst [vmem:[%s7041] ss:$9 sm:$0xff] %v5671
    %v7277 = vld [vmem:[#allocation1] sm:$0xff]
    %7278 = vst [vmem:[#allocation1] ss:$9 sm:$0xff] %v5672
    %7279 = vst [vmem:[%s7029] ss:$9 sm:$0xff] %v5673
    %7280 = vst [vmem:[%s7031] ss:$9 sm:$0xff] %v5674
    %7281 = vst [vmem:[%s7033] ss:$9 sm:$0xff] %v5363
    %7282 = vst [vmem:[%s7035] ss:$9 sm:$0xff] %v5675
    %7283 = vst [vmem:[%s7037] ss:$9 sm:$0xff] %v5676
    %7284 = vst [vmem:[%s7039] ss:$9 sm:$0xff] %v5677
    %7285 = vst [vmem:[%s7041] ss:$9 sm:$0xff] %v5678
    %v7286 = vld [vmem:[#allocation1] sm:$0xff]
    %7287 = vst [vmem:[#allocation1] ss:$9 sm:$0xff] %v5680
    %7288 = vst [vmem:[%s7029] ss:$9 sm:$0xff] %v5681
    %7289 = vst [vmem:[%s7031] ss:$9 sm:$0xff] %v5364
    %7290 = vst [vmem:[%s7033] ss:$9 sm:$0xff] %v5682
    %7291 = vst [vmem:[%s7035] ss:$9 sm:$0xff] %v5683
    %7292 = vst [vmem:[%s7037] ss:$9 sm:$0xff] %v5684
    %7293 = vst [vmem:[%s7039] ss:$9 sm:$0xff] %v5685
    %7294 = vst [vmem:[%s7041] ss:$9 sm:$0xff] %v5686
    %v7295 = vld [vmem:[#allocation1] sm:$0xff]
    %7296 = vst [vmem:[#allocation1] ss:$9 sm:$0xff] %v5687
    %7297 = vst [vmem:[%s7029] ss:$9 sm:$0xff] %v5688
    %7298 = vst [vmem:[%s7031] ss:$9 sm:$0xff] %v5365
    %7299 = vst [vmem:[%s7033] ss:$9 sm:$0xff] %v5689
    %7300 = vst [vmem:[%s7035] ss:$9 sm:$0xff] %v5690
    %7301 = vst [vmem:[%s7037] ss:$9 sm:$0xff] %v5691
    %7302 = vst [vmem:[%s7039] ss:$9 sm:$0xff] %v5693
    %7303 = vst [vmem:[%s7041] ss:$9 sm:$0xff] %v5694
    %v7304 = vld [vmem:[#allocation1] sm:$0xff]
    %7305 = vst [vmem:[#allocation1] ss:$9 sm:$0xff] %v5695
    %7306 = vst [vmem:[%s7029] ss:$9 sm:$0xff] %v5366
    %7307 = vst [vmem:[%s7031] ss:$9 sm:$0xff] %v5696
    %7308 = vst [vmem:[%s7033] ss:$9 sm:$0xff] %v5697
    %7309 = vst [vmem:[%s7035] ss:$9 sm:$0xff] %v5698
    %7310 = vst [vmem:[%s7037] ss:$9 sm:$0xff] %v5699
    %7311 = vst [vmem:[%s7039] ss:$9 sm:$0xff] %v5700
    %7312 = vst [vmem:[%s7041] ss:$9 sm:$0xff] %v5701
    %v7313 = vld [vmem:[#allocation1] sm:$0xff]
    %7314 = vst [vmem:[#allocation1] ss:$9 sm:$0xff] %v5702
    %7315 = vst [vmem:[%s7029] ss:$9 sm:$0xff] %v5367
    %7316 = vst [vmem:[%s7031] ss:$9 sm:$0xff] %v5703
    %7317 = vst [vmem:[%s7033] ss:$9 sm:$0xff] %v5704
    %7318 = vst [vmem:[%s7035] ss:$9 sm:$0xff] %v5706
    %7319 = vst [vmem:[%s7037] ss:$9 sm:$0xff] %v5707
    %7320 = vst [vmem:[%s7039] ss:$9 sm:$0xff] %v5708
    %7321 = vst [vmem:[%s7041] ss:$9 sm:$0xff] %v5709
    %v7322 = vld [vmem:[#allocation1] sm:$0xff]
    %7323 = vst [vmem:[#allocation1] ss:$9 sm:$0xff] %v5368
    %7324 = vst [vmem:[%s7029] ss:$9 sm:$0xff] %v5710
    %7325 = vst [vmem:[%s7031] ss:$9 sm:$0xff] %v5711
    %7326 = vst [vmem:[%s7033] ss:$9 sm:$0xff] %v5712
    %7327 = vst [vmem:[%s7035] ss:$9 sm:$0xff] %v5713
    %7328 = vst [vmem:[%s7037] ss:$9 sm:$0xff] %v5714
    %7329 = vst [vmem:[%s7039] ss:$9 sm:$0xff] %v5715
    %7330 = vst [vmem:[%s7041] ss:$9 sm:$0xff] %v5716
    %v7331 = vld [vmem:[#allocation1] sm:$0xff]
    %7332 = vst [vmem:[#allocation1] ss:$9 sm:$0xff] %v5369
    %7333 = vst [vmem:[%s7029] ss:$9 sm:$0xff] %v5717
    %7334 = vst [vmem:[%s7031] ss:$9 sm:$0xff] %v5719
    %7335 = vst [vmem:[%s7033] ss:$9 sm:$0xff] %v5720
    %7336 = vst [vmem:[%s7035] ss:$9 sm:$0xff] %v5721
    %7337 = vst [vmem:[%s7037] ss:$9 sm:$0xff] %v5722
    %7338 = vst [vmem:[%s7039] ss:$9 sm:$0xff] %v5723
    %7339 = vst [vmem:[%s7041] ss:$9 sm:$0xff] %v5370
    %v7340 = vld [vmem:[#allocation1] sm:$0xff]
    %7341 = vst [vmem:[#allocation1] ss:$9 sm:$0xff] %v5724
    %7342 = vst [vmem:[%s7029] ss:$9 sm:$0xff] %v5725
    %7343 = vst [vmem:[%s7031] ss:$9 sm:$0xff] %v5726
    %7344 = vst [vmem:[%s7033] ss:$9 sm:$0xff] %v5727
    %7345 = vst [vmem:[%s7035] ss:$9 sm:$0xff] %v5728
    %7346 = vst [vmem:[%s7037] ss:$9 sm:$0xff] %v5729
    %7347 = vst [vmem:[%s7039] ss:$9 sm:$0xff] %v5730
    %7348 = vst [vmem:[%s7041] ss:$9 sm:$0xff] %v5371
    %v7349 = vld [vmem:[#allocation1] sm:$0xff]
    %7350 = vst [vmem:[#allocation1] ss:$9 sm:$0xff] %v5732
    %7351 = vst [vmem:[%s7029] ss:$9 sm:$0xff] %v5733
    %7352 = vst [vmem:[%s7031] ss:$9 sm:$0xff] %v5734
    %7353 = vst [vmem:[%s7033] ss:$9 sm:$0xff] %v5735
    %7354 = vst [vmem:[%s7035] ss:$9 sm:$0xff] %v5736
    %7355 = vst [vmem:[%s7037] ss:$9 sm:$0xff] %v5737
    %7356 = vst [vmem:[%s7039] ss:$9 sm:$0xff] %v5372
    %7357 = vst [vmem:[%s7041] ss:$9 sm:$0xff] %v5738
    %v7358 = vld [vmem:[#allocation1] sm:$0xff]
    %7359 = vst [vmem:[#allocation1] ss:$9 sm:$0xff] %v5739
    %7360 = vst [vmem:[%s7029] ss:$9 sm:$0xff] %v5740
    %7361 = vst [vmem:[%s7031] ss:$9 sm:$0xff] %v5741
    %7362 = vst [vmem:[%s7033] ss:$9 sm:$0xff] %v5742
    %7363 = vst [vmem:[%s7035] ss:$9 sm:$0xff] %v5743
    %7364 = vst [vmem:[%s7037] ss:$9 sm:$0xff] %v5744
    %7365 = vst [vmem:[%s7039] ss:$9 sm:$0xff] %v5745
    %7366 = vst [vmem:[%s7041] ss:$9 sm:$0xff] %v5746
    %v7367 = vld [vmem:[#allocation1] sm:$0xff]
    %7368 = vst [vmem:[#allocation1] ss:$9 sm:$0xff] %v5747
    %7369 = vst [vmem:[%s7029] ss:$9 sm:$0xff] %v5748
    %7370 = vst [vmem:[%s7031] ss:$9 sm:$0xff] %v5749
    %7371 = vst [vmem:[%s7033] ss:$9 sm:$0xff] %v5750
    %7372 = vst [vmem:[%s7035] ss:$9 sm:$0xff] %v5751
    %7373 = vst [vmem:[%s7037] ss:$9 sm:$0xff] %v5374
    %7374 = vst [vmem:[%s7039] ss:$9 sm:$0xff] %v5752
    %7375 = vst [vmem:[%s7041] ss:$9 sm:$0xff] %v5753
    %v7376 = vld [vmem:[#allocation1] sm:$0xff]
    %7377 = vst [vmem:[#allocation1] ss:$9 sm:$0xff] %v5754
    %7378 = vst [vmem:[%s7029] ss:$9 sm:$0xff] %v5755
    %7379 = vst [vmem:[%s7031] ss:$9 sm:$0xff] %v5756
    %7380 = vst [vmem:[%s7033] ss:$9 sm:$0xff] %v5757
    %7381 = vst [vmem:[%s7035] ss:$9 sm:$0xff] %v5375
    %7382 = vst [vmem:[%s7037] ss:$9 sm:$0xff] %v5759
    %7383 = vst [vmem:[%s7039] ss:$9 sm:$0xff] %v5760
    %7384 = vst [vmem:[%s7041] ss:$9 sm:$0xff] %v5761
    %v7385 = vld [vmem:[#allocation1] sm:$0xff]
    %7386 = vst [vmem:[#allocation1] ss:$9 sm:$0xff] %v5762
    %7387 = vst [vmem:[%s7029] ss:$9 sm:$0xff] %v5763
    %7388 = vst [vmem:[%s7031] ss:$9 sm:$0xff] %v5764
    %7389 = vst [vmem:[%s7033] ss:$9 sm:$0xff] %v5765
    %7390 = vst [vmem:[%s7035] ss:$9 sm:$0xff] %v5376
    %7391 = vst [vmem:[%s7037] ss:$9 sm:$0xff] %v5766
    %7392 = vst [vmem:[%s7039] ss:$9 sm:$0xff] %v5767
    %7393 = vst [vmem:[%s7041] ss:$9 sm:$0xff] %v5768
    %v7394 = vld [vmem:[#allocation1] sm:$0xff]
    %7395 = vst [vmem:[#allocation1] ss:$9 sm:$0xff] %v5769
    %7396 = vst [vmem:[%s7029] ss:$9 sm:$0xff] %v5770
    %7397 = vst [vmem:[%s7031] ss:$9 sm:$0xff] %v5772
    %7398 = vst [vmem:[%s7033] ss:$9 sm:$0xff] %v5377
    %7399 = vst [vmem:[%s7035] ss:$9 sm:$0xff] %v5773
    %7400 = vst [vmem:[%s7037] ss:$9 sm:$0xff] %v5774
    %7401 = vst [vmem:[%s7039] ss:$9 sm:$0xff] %v5775
    %7402 = vst [vmem:[%s7041] ss:$9 sm:$0xff] %v5776
    %v7403 = vld [vmem:[#allocation1] sm:$0xff]
    %7404 = vst [vmem:[#allocation1] ss:$9 sm:$0xff] %v5777
    %7405 = vst [vmem:[%s7029] ss:$9 sm:$0xff] %v5778
    %7406 = vst [vmem:[%s7031] ss:$9 sm:$0xff] %v5779
    %7407 = vst [vmem:[%s7033] ss:$9 sm:$0xff] %v5378
    %7408 = vst [vmem:[%s7035] ss:$9 sm:$0xff] %v5780
    %7409 = vst [vmem:[%s7037] ss:$9 sm:$0xff] %v5781
    %7410 = vst [vmem:[%s7039] ss:$9 sm:$0xff] %v5782
    %7411 = vst [vmem:[%s7041] ss:$9 sm:$0xff] %v5783
    %v7412 = vld [vmem:[#allocation1] sm:$0xff]
    %7413 = vst [vmem:[#allocation1] ss:$9 sm:$0xff] %v5785
    %7414 = vst [vmem:[%s7029] ss:$9 sm:$0xff] %v5786
    %7415 = vst [vmem:[%s7031] ss:$9 sm:$0xff] %v5379
    %7416 = vst [vmem:[%s7033] ss:$9 sm:$0xff] %v5787
    %7417 = vst [vmem:[%s7035] ss:$9 sm:$0xff] %v5788
    %7418 = vst [vmem:[%s7037] ss:$9 sm:$0xff] %v5789
    %7419 = vst [vmem:[%s7039] ss:$9 sm:$0xff] %v5790
    %7420 = vst [vmem:[%s7041] ss:$9 sm:$0xff] %v5791
    %v7421 = vld [vmem:[#allocation1] sm:$0xff]
    %7422 = vst [vmem:[#allocation1] ss:$9 sm:$0xff] %v5792
    %7423 = vst [vmem:[%s7029] ss:$9 sm:$0xff] %v5793
    %7424 = vst [vmem:[%s7031] ss:$9 sm:$0xff] %v5380
    %7425 = vst [vmem:[%s7033] ss:$9 sm:$0xff] %v5794
    %7426 = vst [vmem:[%s7035] ss:$9 sm:$0xff] %v5795
    %7427 = vst [vmem:[%s7037] ss:$9 sm:$0xff] %v5796
    %7428 = vst [vmem:[%s7039] ss:$9 sm:$0xff] %v5798
    %7429 = vst [vmem:[%s7041] ss:$9 sm:$0xff] %v5799
    %v7430 = vld [vmem:[#allocation1] sm:$0xff]
    %7431 = vst [vmem:[#allocation1] ss:$9 sm:$0xff] %v5800
    %7432 = vst [vmem:[%s7029] ss:$9 sm:$0xff] %v5381
    %7433 = vst [vmem:[%s7031] ss:$9 sm:$0xff] %v5801
    %7434 = vst [vmem:[%s7033] ss:$9 sm:$0xff] %v5802
    %7435 = vst [vmem:[%s7035] ss:$9 sm:$0xff] %v5803
    %7436 = vst [vmem:[%s7037] ss:$9 sm:$0xff] %v5804
    %7437 = vst [vmem:[%s7039] ss:$9 sm:$0xff] %v5805
    %7438 = vst [vmem:[%s7041] ss:$9 sm:$0xff] %v5806
    %v7439 = vld [vmem:[#allocation1] sm:$0xff]
    %7440 = vst [vmem:[#allocation1] ss:$9 sm:$0xff] %v5807
    %7441 = vst [vmem:[%s7029] ss:$9 sm:$0xff] %v5382
    %7442 = vst [vmem:[%s7031] ss:$9 sm:$0xff] %v5808
    %7443 = vst [vmem:[%s7033] ss:$9 sm:$0xff] %v5809
    %7444 = vst [vmem:[%s7035] ss:$9 sm:$0xff] %v5811
    %7445 = vst [vmem:[%s7037] ss:$9 sm:$0xff] %v5812
    %7446 = vst [vmem:[%s7039] ss:$9 sm:$0xff] %v5813
    %7447 = vst [vmem:[%s7041] ss:$9 sm:$0xff] %v5814
    %v7448 = vld [vmem:[#allocation1] sm:$0xff]
    %7449 = vst [vmem:[#allocation1] ss:$9 sm:$0xff] %v5383
    %7450 = vst [vmem:[%s7029] ss:$9 sm:$0xff] %v5815
    %7451 = vst [vmem:[%s7031] ss:$9 sm:$0xff] %v5816
    %7452 = vst [vmem:[%s7033] ss:$9 sm:$0xff] %v5817
    %7453 = vst [vmem:[%s7035] ss:$9 sm:$0xff] %v5818
    %7454 = vst [vmem:[%s7037] ss:$9 sm:$0xff] %v5819
    %7455 = vst [vmem:[%s7039] ss:$9 sm:$0xff] %v5820
    %7456 = vst [vmem:[%s7041] ss:$9 sm:$0xff] %v5821
    %v7457 = vld [vmem:[#allocation1] sm:$0xff]
    %7458 = vst [vmem:[#allocation1] ss:$9 sm:$0xff] %v5384
    %7459 = vst [vmem:[%s7029] ss:$9 sm:$0xff] %v5822
    %7460 = vst [vmem:[%s7031] ss:$9 sm:$0xff] %v5824
    %7461 = vst [vmem:[%s7033] ss:$9 sm:$0xff] %v5825
    %7462 = vst [vmem:[%s7035] ss:$9 sm:$0xff] %v5826
    %7463 = vst [vmem:[%s7037] ss:$9 sm:$0xff] %v5827
    %7464 = vst [vmem:[%s7039] ss:$9 sm:$0xff] %v5828
    %7465 = vst [vmem:[%s7041] ss:$9 sm:$0xff] %v5385
    %v7466 = vld [vmem:[#allocation1] sm:$0xff]
    %7467 = vst [vmem:[#allocation1] ss:$9 sm:$0xff] %v5829
    %7468 = vst [vmem:[%s7029] ss:$9 sm:$0xff] %v5830
    %7469 = vst [vmem:[%s7031] ss:$9 sm:$0xff] %v5831
    %7470 = vst [vmem:[%s7033] ss:$9 sm:$0xff] %v5832
    %7471 = vst [vmem:[%s7035] ss:$9 sm:$0xff] %v5833
    %7472 = vst [vmem:[%s7037] ss:$9 sm:$0xff] %v5834
    %7473 = vst [vmem:[%s7039] ss:$9 sm:$0xff] %v5835
    %7474 = vst [vmem:[%s7041] ss:$9 sm:$0xff] %v5386
    %v7475 = vld [vmem:[#allocation1] sm:$0xff]
    %7476 = vrot.lane.b32.xlu0 %v7043, 16
    %v7477 = vpop.permute.xlu0 %7476
    %7478 = vrot.lane.b32.xlu0 %v7052, 16
    %v7479 = vpop.permute.xlu0 %7478
    %7480 = vrot.lane.b32.xlu0 %v7061, 16
    %v7481 = vpop.permute.xlu0 %7480
    %7482 = vrot.lane.b32.xlu0 %v7070, 16
    %v7483 = vpop.permute.xlu0 %7482
    %7484 = vrot.lane.b32.xlu0 %v7079, 16
    %v7485 = vpop.permute.xlu0 %7484
    %7486 = vrot.lane.b32.xlu0 %v7088, 16
    %v7487 = vpop.permute.xlu0 %7486
    %7488 = vrot.lane.b32.xlu0 %v7097, 16
    %v7489 = vpop.permute.xlu0 %7488
    %7490 = vrot.lane.b32.xlu0 %v7106, 16
    %v7491 = vpop.permute.xlu0 %7490
    %7492 = vrot.lane.b32.xlu0 %v7115, 16
    %v7493 = vpop.permute.xlu0 %7492
    %7494 = vrot.lane.b32.xlu0 %v7124, 16
    %v7495 = vpop.permute.xlu0 %7494
    %7496 = vrot.lane.b32.xlu0 %v7133, 16
    %v7497 = vpop.permute.xlu0 %7496
    %7498 = vrot.lane.b32.xlu0 %v7142, 16
    %v7499 = vpop.permute.xlu0 %7498
    %7500 = vrot.lane.b32.xlu0 %v7151, 16
    %v7501 = vpop.permute.xlu0 %7500
    %7502 = vrot.lane.b32.xlu0 %v7160, 16
    %v7503 = vpop.permute.xlu0 %7502
    %7504 = vrot.lane.b32.xlu0 %v7169, 16
    %v7505 = vpop.permute.xlu0 %7504
    %7506 = vrot.lane.b32.xlu0 %v7178, 16
    %v7507 = vpop.permute.xlu0 %7506
    %7508 = vrot.lane.b32.xlu0 %v7187, 16
    %v7509 = vpop.permute.xlu0 %7508
    %7510 = vrot.lane.b32.xlu0 %v7196, 16
    %v7511 = vpop.permute.xlu0 %7510
    %7512 = vrot.lane.b32.xlu0 %v7205, 16
    %v7513 = vpop.permute.xlu0 %7512
    %7514 = vrot.lane.b32.xlu0 %v7214, 16
    %v7515 = vpop.permute.xlu0 %7514
    %7516 = vrot.lane.b32.xlu0 %v7223, 16
    %v7517 = vpop.permute.xlu0 %7516
    %7518 = vrot.lane.b32.xlu0 %v7232, 16
    %v7519 = vpop.permute.xlu0 %7518
    %7520 = vrot.lane.b32.xlu0 %v7241, 16
    %v7521 = vpop.permute.xlu0 %7520
    %7522 = vrot.lane.b32.xlu0 %v7250, 16
    %v7523 = vpop.permute.xlu0 %7522
    %7524 = vrot.lane.b32.xlu0 %v7259, 16
    %v7525 = vpop.permute.xlu0 %7524
    %7526 = vrot.lane.b32.xlu0 %v7268, 16
    %v7527 = vpop.permute.xlu0 %7526
    %7528 = vrot.lane.b32.xlu0 %v7277, 16
    %v7529 = vpop.permute.xlu0 %7528
    %7530 = vrot.lane.b32.xlu0 %v7286, 16
    %v7531 = vpop.permute.xlu0 %7530
    %7532 = vrot.lane.b32.xlu0 %v7295, 16
    %v7533 = vpop.permute.xlu0 %7532
    %7534 = vrot.lane.b32.xlu0 %v7304, 16
    %v7535 = vpop.permute.xlu0 %7534
    %7536 = vrot.lane.b32.xlu0 %v7313, 16
    %v7537 = vpop.permute.xlu0 %7536
    %7538 = vrot.lane.b32.xlu0 %v7322, 16
    %v7539 = vpop.permute.xlu0 %7538
    %7540 = vrot.lane.b32.xlu0 %v7331, 16
    %v7541 = vpop.permute.xlu0 %7540
    %7542 = vrot.lane.b32.xlu0 %v7340, 16
    %v7543 = vpop.permute.xlu0 %7542
    %7544 = vrot.lane.b32.xlu0 %v7349, 16
    %v7545 = vpop.permute.xlu0 %7544
    %7546 = vrot.lane.b32.xlu0 %v7358, 16
    %v7547 = vpop.permute.xlu0 %7546
    %7548 = vrot.lane.b32.xlu0 %v7367, 16
    %v7549 = vpop.permute.xlu0 %7548
    %7550 = vrot.lane.b32.xlu0 %v7376, 16
    %v7551 = vpop.permute.xlu0 %7550
    %7552 = vrot.lane.b32.xlu0 %v7385, 16
    %v7553 = vpop.permute.xlu0 %7552
    %7554 = vrot.lane.b32.xlu0 %v7394, 16
    %v7555 = vpop.permute.xlu0 %7554
    %7556 = vrot.lane.b32.xlu0 %v7403, 16
    %v7557 = vpop.permute.xlu0 %7556
    %7558 = vrot.lane.b32.xlu0 %v7412, 16
    %v7559 = vpop.permute.xlu0 %7558
    %7560 = vrot.lane.b32.xlu0 %v7421, 16
    %v7561 = vpop.permute.xlu0 %7560
    %7562 = vrot.lane.b32.xlu0 %v7430, 16
    %v7563 = vpop.permute.xlu0 %7562
    %7564 = vrot.lane.b32.xlu0 %v7439, 16
    %v7565 = vpop.permute.xlu0 %7564
    %7566 = vrot.lane.b32.xlu0 %v7448, 16
    %v7567 = vpop.permute.xlu0 %7566
    %7568 = vrot.lane.b32.xlu0 %v7457, 16
    %v7569 = vpop.permute.xlu0 %7568
    %7570 = vrot.lane.b32.xlu0 %v7466, 16
    %v7571 = vpop.permute.xlu0 %7570
    %7572 = vrot.lane.b32.xlu0 %v7475, 16
    %v7573 = vpop.permute.xlu0 %7572
    %vm7623 = vcmask 195712
    %7624 = vst.msk [vmem:[#allocation3] sm:$0xff] %vm7623, %v7477
    %7625 = vst.msk [vmem:[#allocation3 + $0x8] sm:$0xff] %vm7623, %v7479
    %7626 = vst.msk [vmem:[#allocation3 + $0x10] sm:$0xff] %vm7623, %v7481
    %7627 = vst.msk [vmem:[#allocation3 + $0x18] sm:$0xff] %vm7623, %v7483
    %7628 = vst.msk [vmem:[#allocation3 + $0x20] sm:$0xff] %vm7623, %v7485
    %7629 = vst.msk [vmem:[#allocation3 + $0x28] sm:$0xff] %vm7623, %v7487
    %7630 = vst.msk [vmem:[#allocation3 + $0x30] sm:$0xff] %vm7623, %v7489
    %7631 = vst.msk [vmem:[#allocation3 + $0x38] sm:$0xff] %vm7623, %v7491
    %7632 = vst.msk [vmem:[#allocation3 + $0x40] sm:$0xff] %vm7623, %v7493
    %7633 = vst.msk [vmem:[#allocation3 + $0x48] sm:$0xff] %vm7623, %v7495
    %7634 = vst.msk [vmem:[#allocation3 + $0x50] sm:$0xff] %vm7623, %v7497
    %7635 = vst.msk [vmem:[#allocation3 + $0x58] sm:$0xff] %vm7623, %v7499
    %7636 = vst.msk [vmem:[#allocation3 + $0x60] sm:$0xff] %vm7623, %v7501
    %7637 = vst.msk [vmem:[#allocation3 + $0x68] sm:$0xff] %vm7623, %v7503
    %7638 = vst.msk [vmem:[#allocation3 + $0x70] sm:$0xff] %vm7623, %v7505
    %7639 = vst.msk [vmem:[#allocation3 + $0x78] sm:$0xff] %vm7623, %v7507
    %7640 = vst.msk [vmem:[#allocation3 + $0x80] sm:$0xff] %vm7623, %v7509
    %7641 = vst.msk [vmem:[#allocation3 + $0x88] sm:$0xff] %vm7623, %v7511
    %7642 = vst.msk [vmem:[#allocation3 + $0x90] sm:$0xff] %vm7623, %v7513
    %7643 = vst.msk [vmem:[#allocation3 + $0x98] sm:$0xff] %vm7623, %v7515
    %7644 = vst.msk [vmem:[#allocation3 + $0xa0] sm:$0xff] %vm7623, %v7517
    %7645 = vst.msk [vmem:[#allocation3 + $0xa8] sm:$0xff] %vm7623, %v7519
    %7646 = vst.msk [vmem:[#allocation3 + $0xb0] sm:$0xff] %vm7623, %v7521
    %7647 = vst.msk [vmem:[#allocation3 + $0xb8] sm:$0xff] %vm7623, %v7523
    %7648 = vst.msk [vmem:[#allocation3 + $0xc0] sm:$0xff] %vm7623, %v7525
    %7649 = vst.msk [vmem:[#allocation3 + $0xc8] sm:$0xff] %vm7623, %v7527
    %7650 = vst.msk [vmem:[#allocation3 + $0xd0] sm:$0xff] %vm7623, %v7529
    %7651 = vst.msk [vmem:[#allocation3 + $0xd8] sm:$0xff] %vm7623, %v7531
    %7652 = vst.msk [vmem:[#allocation3 + $0xe0] sm:$0xff] %vm7623, %v7533
    %7653 = vst.msk [vmem:[#allocation3 + $0xe8] sm:$0xff] %vm7623, %v7535
    %7654 = vst.msk [vmem:[#allocation3 + $0xf0] sm:$0xff] %vm7623, %v7537
    %7655 = vst.msk [vmem:[#allocation3 + $0xf8] sm:$0xff] %vm7623, %v7539
    %7656 = vst.msk [vmem:[#allocation3 + $0x100] sm:$0xff] %vm7623, %v7541
    %7657 = vst.msk [vmem:[#allocation3 + $0x108] sm:$0xff] %vm7623, %v7543
    %7658 = vst.msk [vmem:[#allocation3 + $0x110] sm:$0xff] %vm7623, %v7545
    %7659 = vst.msk [vmem:[#allocation3 + $0x118] sm:$0xff] %vm7623, %v7547
    %7660 = vst.msk [vmem:[#allocation3 + $0x120] sm:$0xff] %vm7623, %v7549
    %7661 = vst.msk [vmem:[#allocation3 + $0x128] sm:$0xff] %vm7623, %v7551
    %7662 = vst.msk [vmem:[#allocation3 + $0x130] sm:$0xff] %vm7623, %v7553
    %7663 = vst.msk [vmem:[#allocation3 + $0x138] sm:$0xff] %vm7623, %v7555
    %7664 = vst.msk [vmem:[#allocation3 + $0x140] sm:$0xff] %vm7623, %v7557
    %7665 = vst.msk [vmem:[#allocation3 + $0x148] sm:$0xff] %vm7623, %v7559
    %7666 = vst.msk [vmem:[#allocation3 + $0x150] sm:$0xff] %vm7623, %v7561
    %7667 = vst.msk [vmem:[#allocation3 + $0x158] sm:$0xff] %vm7623, %v7563
    %7668 = vst.msk [vmem:[#allocation3 + $0x160] sm:$0xff] %vm7623, %v7565
    %7669 = vst.msk [vmem:[#allocation3 + $0x168] sm:$0xff] %vm7623, %v7567
    %7670 = vst.msk [vmem:[#allocation3 + $0x170] sm:$0xff] %vm7623, %v7569
    %7671 = vst.msk [vmem:[#allocation3 + $0x178] sm:$0xff] %vm7623, %v7571
    %7672 = vst.msk [vmem:[#allocation3 + $0x180] sm:$0xff] %vm7623, %v7573
    %7673 = vst [vmem:[#allocation1] ss:$9 sm:$0xff] %v5332
    %s7674 = scalar_lea.vmem [#allocation1], 1
    %7675 = vst [vmem:[%s7674] ss:$9 sm:$0xff] %v5458
    %s7676 = scalar_lea.vmem [#allocation1], 2
    %7677 = vst [vmem:[%s7676] ss:$9 sm:$0xff] %v5459
    %s7678 = scalar_lea.vmem [#allocation1], 3
    %7679 = vst [vmem:[%s7678] ss:$9 sm:$0xff] %v5460
    %s7680 = scalar_lea.vmem [#allocation1], 4
    %7681 = vst [vmem:[%s7680] ss:$9 sm:$0xff] %v5461
    %s7682 = scalar_lea.vmem [#allocation1], 5
    %7683 = vst [vmem:[%s7682] ss:$9 sm:$0xff] %v5462
    %s7684 = scalar_lea.vmem [#allocation1], 6
    %7685 = vst [vmem:[%s7684] ss:$9 sm:$0xff] %v5463
    %s7686 = scalar_lea.vmem [#allocation1], 7
    %7687 = vst [vmem:[%s7686] ss:$9 sm:$0xff] %v5464
    %v7688 = vld [vmem:[#allocation1] sm:$0xff]
    %7689 = vst [vmem:[#allocation1] ss:$9 sm:$0xff] %v5333
    %7690 = vst [vmem:[%s7674] ss:$9 sm:$0xff] %v5465
    %7691 = vst [vmem:[%s7676] ss:$9 sm:$0xff] %v5466
    %7692 = vst [vmem:[%s7678] ss:$9 sm:$0xff] %v5467
    %7693 = vst [vmem:[%s7680] ss:$9 sm:$0xff] %v5468
    %7694 = vst [vmem:[%s7682] ss:$9 sm:$0xff] %v5469
    %7695 = vst [vmem:[%s7684] ss:$9 sm:$0xff] %v5471
    %7696 = vst [vmem:[%s7686] ss:$9 sm:$0xff] %v5334
    %v7697 = vld [vmem:[#allocation1] sm:$0xff]
    %7698 = vst [vmem:[#allocation1] ss:$9 sm:$0xff] %v5472
    %7699 = vst [vmem:[%s7674] ss:$9 sm:$0xff] %v5473
    %7700 = vst [vmem:[%s7676] ss:$9 sm:$0xff] %v5474
    %7701 = vst [vmem:[%s7678] ss:$9 sm:$0xff] %v5475
    %7702 = vst [vmem:[%s7680] ss:$9 sm:$0xff] %v5476
    %7703 = vst [vmem:[%s7682] ss:$9 sm:$0xff] %v5477
    %7704 = vst [vmem:[%s7684] ss:$9 sm:$0xff] %v5478
    %7705 = vst [vmem:[%s7686] ss:$9 sm:$0xff] %v5335
    %v7706 = vld [vmem:[#allocation1] sm:$0xff]
    %7707 = vst [vmem:[#allocation1] ss:$9 sm:$0xff] %v5479
    %7708 = vst [vmem:[%s7674] ss:$9 sm:$0xff] %v5480
    %7709 = vst [vmem:[%s7676] ss:$9 sm:$0xff] %v5481
    %7710 = vst [vmem:[%s7678] ss:$9 sm:$0xff] %v5482
    %7711 = vst [vmem:[%s7680] ss:$9 sm:$0xff] %v5484
    %7712 = vst [vmem:[%s7682] ss:$9 sm:$0xff] %v5485
    %7713 = vst [vmem:[%s7684] ss:$9 sm:$0xff] %v5336
    %7714 = vst [vmem:[%s7686] ss:$9 sm:$0xff] %v5486
    %v7715 = vld [vmem:[#allocation1] sm:$0xff]
    %7716 = vst [vmem:[#allocation1] ss:$9 sm:$0xff] %v5487
    %7717 = vst [vmem:[%s7674] ss:$9 sm:$0xff] %v5488
    %7718 = vst [vmem:[%s7676] ss:$9 sm:$0xff] %v5489
    %7719 = vst [vmem:[%s7678] ss:$9 sm:$0xff] %v5490
    %7720 = vst [vmem:[%s7680] ss:$9 sm:$0xff] %v5491
    %7721 = vst [vmem:[%s7682] ss:$9 sm:$0xff] %v5492
    %7722 = vst [vmem:[%s7684] ss:$9 sm:$0xff] %v5337
    %7723 = vst [vmem:[%s7686] ss:$9 sm:$0xff] %v5493
    %v7724 = vld [vmem:[#allocation1] sm:$0xff]
    %7725 = vst [vmem:[#allocation1] ss:$9 sm:$0xff] %v5494
    %7726 = vst [vmem:[%s7674] ss:$9 sm:$0xff] %v5495
    %7727 = vst [vmem:[%s7676] ss:$9 sm:$0xff] %v5497
    %7728 = vst [vmem:[%s7678] ss:$9 sm:$0xff] %v5498
    %7729 = vst [vmem:[%s7680] ss:$9 sm:$0xff] %v5499
    %7730 = vst [vmem:[%s7682] ss:$9 sm:$0xff] %v5338
    %7731 = vst [vmem:[%s7684] ss:$9 sm:$0xff] %v5500
    %7732 = vst [vmem:[%s7686] ss:$9 sm:$0xff] %v5501
    %v7733 = vld [vmem:[#allocation1] sm:$0xff]
    %7734 = vst [vmem:[#allocation1] ss:$9 sm:$0xff] %v5502
    %7735 = vst [vmem:[%s7674] ss:$9 sm:$0xff] %v5503
    %7736 = vst [vmem:[%s7676] ss:$9 sm:$0xff] %v5504
    %7737 = vst [vmem:[%s7678] ss:$9 sm:$0xff] %v5505
    %7738 = vst [vmem:[%s7680] ss:$9 sm:$0xff] %v5506
    %7739 = vst [vmem:[%s7682] ss:$9 sm:$0xff] %v5339
    %7740 = vst [vmem:[%s7684] ss:$9 sm:$0xff] %v5507
    %7741 = vst [vmem:[%s7686] ss:$9 sm:$0xff] %v5508
    %v7742 = vld [vmem:[#allocation1] sm:$0xff]
    %7743 = vst [vmem:[#allocation1] ss:$9 sm:$0xff] %v5510
    %7744 = vst [vmem:[%s7674] ss:$9 sm:$0xff] %v5511
    %7745 = vst [vmem:[%s7676] ss:$9 sm:$0xff] %v5512
    %7746 = vst [vmem:[%s7678] ss:$9 sm:$0xff] %v5513
    %7747 = vst [vmem:[%s7680] ss:$9 sm:$0xff] %v5340
    %7748 = vst [vmem:[%s7682] ss:$9 sm:$0xff] %v5514
    %7749 = vst [vmem:[%s7684] ss:$9 sm:$0xff] %v5515
    %7750 = vst [vmem:[%s7686] ss:$9 sm:$0xff] %v5516
    %v7751 = vld [vmem:[#allocation1] sm:$0xff]
    %7752 = vst [vmem:[#allocation1] ss:$9 sm:$0xff] %v5517
    %7753 = vst [vmem:[%s7674] ss:$9 sm:$0xff] %v5518
    %7754 = vst [vmem:[%s7676] ss:$9 sm:$0xff] %v5519
    %7755 = vst [vmem:[%s7678] ss:$9 sm:$0xff] %v5520
    %7756 = vst [vmem:[%s7680] ss:$9 sm:$0xff] %v5341
    %7757 = vst [vmem:[%s7682] ss:$9 sm:$0xff] %v5521
    %7758 = vst [vmem:[%s7684] ss:$9 sm:$0xff] %v5523
    %7759 = vst [vmem:[%s7686] ss:$9 sm:$0xff] %v5524
    %v7760 = vld [vmem:[#allocation1] sm:$0xff]
    %7761 = vst [vmem:[#allocation1] ss:$9 sm:$0xff] %v5525
    %7762 = vst [vmem:[%s7674] ss:$9 sm:$0xff] %v5526
    %7763 = vst [vmem:[%s7676] ss:$9 sm:$0xff] %v5527
    %7764 = vst [vmem:[%s7678] ss:$9 sm:$0xff] %v5342
    %7765 = vst [vmem:[%s7680] ss:$9 sm:$0xff] %v5528
    %7766 = vst [vmem:[%s7682] ss:$9 sm:$0xff] %v5529
    %7767 = vst [vmem:[%s7684] ss:$9 sm:$0xff] %v5530
    %7768 = vst [vmem:[%s7686] ss:$9 sm:$0xff] %v5531
    %v7769 = vld [vmem:[#allocation1] sm:$0xff]
    %7770 = vst [vmem:[#allocation1] ss:$9 sm:$0xff] %v5532
    %7771 = vst [vmem:[%s7674] ss:$9 sm:$0xff] %v5533
    %7772 = vst [vmem:[%s7676] ss:$9 sm:$0xff] %v5534
    %7773 = vst [vmem:[%s7678] ss:$9 sm:$0xff] %v5343
    %7774 = vst [vmem:[%s7680] ss:$9 sm:$0xff] %v5536
    %7775 = vst [vmem:[%s7682] ss:$9 sm:$0xff] %v5537
    %7776 = vst [vmem:[%s7684] ss:$9 sm:$0xff] %v5538
    %7777 = vst [vmem:[%s7686] ss:$9 sm:$0xff] %v5539
    %v7778 = vld [vmem:[#allocation1] sm:$0xff]
    %7779 = vst [vmem:[#allocation1] ss:$9 sm:$0xff] %v5540
    %7780 = vst [vmem:[%s7674] ss:$9 sm:$0xff] %v5541
    %7781 = vst [vmem:[%s7676] ss:$9 sm:$0xff] %v5344
    %7782 = vst [vmem:[%s7678] ss:$9 sm:$0xff] %v5542
    %7783 = vst [vmem:[%s7680] ss:$9 sm:$0xff] %v5543
    %7784 = vst [vmem:[%s7682] ss:$9 sm:$0xff] %v5544
    %7785 = vst [vmem:[%s7684] ss:$9 sm:$0xff] %v5545
    %7786 = vst [vmem:[%s7686] ss:$9 sm:$0xff] %v5546
    %v7787 = vld [vmem:[#allocation1] sm:$0xff]
    %7788 = vst [vmem:[#allocation1] ss:$9 sm:$0xff] %v5547
    %7789 = vst [vmem:[%s7674] ss:$9 sm:$0xff] %v5548
    %7790 = vst [vmem:[%s7676] ss:$9 sm:$0xff] %v5549
    %7791 = vst [vmem:[%s7678] ss:$9 sm:$0xff] %v5550
    %7792 = vst [vmem:[%s7680] ss:$9 sm:$0xff] %v5551
    %7793 = vst [vmem:[%s7682] ss:$9 sm:$0xff] %v5552
    %7794 = vst [vmem:[%s7684] ss:$9 sm:$0xff] %v5553
    %7795 = vst [vmem:[%s7686] ss:$9 sm:$0xff] %v5554
    %v7796 = vld [vmem:[#allocation1] sm:$0xff]
    %7797 = vst [vmem:[#allocation1] ss:$9 sm:$0xff] %v5555
    %7798 = vst [vmem:[%s7674] ss:$9 sm:$0xff] %v5346
    %7799 = vst [vmem:[%s7676] ss:$9 sm:$0xff] %v5556
    %7800 = vst [vmem:[%s7678] ss:$9 sm:$0xff] %v5557
    %7801 = vst [vmem:[%s7680] ss:$9 sm:$0xff] %v5558
    %7802 = vst [vmem:[%s7682] ss:$9 sm:$0xff] %v5559
    %7803 = vst [vmem:[%s7684] ss:$9 sm:$0xff] %v5560
    %7804 = vst [vmem:[%s7686] ss:$9 sm:$0xff] %v5561
    %v7805 = vld [vmem:[#allocation1] sm:$0xff]
    %7806 = vst [vmem:[#allocation1] ss:$9 sm:$0xff] %v5347
    %7807 = vst [vmem:[%s7674] ss:$9 sm:$0xff] %v5563
    %7808 = vst [vmem:[%s7676] ss:$9 sm:$0xff] %v5564
    %7809 = vst [vmem:[%s7678] ss:$9 sm:$0xff] %v5565
    %7810 = vst [vmem:[%s7680] ss:$9 sm:$0xff] %v5566
    %7811 = vst [vmem:[%s7682] ss:$9 sm:$0xff] %v5567
    %7812 = vst [vmem:[%s7684] ss:$9 sm:$0xff] %v5568
    %7813 = vst [vmem:[%s7686] ss:$9 sm:$0xff] %v5569
    %v7814 = vld [vmem:[#allocation1] sm:$0xff]
    %7815 = vst [vmem:[#allocation1] ss:$9 sm:$0xff] %v5348
    %7816 = vst [vmem:[%s7674] ss:$9 sm:$0xff] %v5570
    %7817 = vst [vmem:[%s7676] ss:$9 sm:$0xff] %v5571
    %7818 = vst [vmem:[%s7678] ss:$9 sm:$0xff] %v5572
    %7819 = vst [vmem:[%s7680] ss:$9 sm:$0xff] %v5573
    %7820 = vst [vmem:[%s7682] ss:$9 sm:$0xff] %v5574
    %7821 = vst [vmem:[%s7684] ss:$9 sm:$0xff] %v5576
    %7822 = vst [vmem:[%s7686] ss:$9 sm:$0xff] %v5349
    %v7823 = vld [vmem:[#allocation1] sm:$0xff]
    %7824 = vst [vmem:[#allocation1] ss:$9 sm:$0xff] %v5577
    %7825 = vst [vmem:[%s7674] ss:$9 sm:$0xff] %v5578
    %7826 = vst [vmem:[%s7676] ss:$9 sm:$0xff] %v5579
    %7827 = vst [vmem:[%s7678] ss:$9 sm:$0xff] %v5580
    %7828 = vst [vmem:[%s7680] ss:$9 sm:$0xff] %v5581
    %7829 = vst [vmem:[%s7682] ss:$9 sm:$0xff] %v5582
    %7830 = vst [vmem:[%s7684] ss:$9 sm:$0xff] %v5583
    %7831 = vst [vmem:[%s7686] ss:$9 sm:$0xff] %v5350
    %v7832 = vld [vmem:[#allocation1] sm:$0xff]
    %7833 = vst [vmem:[#allocation1] ss:$9 sm:$0xff] %v5584
    %7834 = vst [vmem:[%s7674] ss:$9 sm:$0xff] %v5585
    %7835 = vst [vmem:[%s7676] ss:$9 sm:$0xff] %v5586
    %7836 = vst [vmem:[%s7678] ss:$9 sm:$0xff] %v5587
    %7837 = vst [vmem:[%s7680] ss:$9 sm:$0xff] %v5589
    %7838 = vst [vmem:[%s7682] ss:$9 sm:$0xff] %v5590
    %7839 = vst [vmem:[%s7684] ss:$9 sm:$0xff] %v5351
    %7840 = vst [vmem:[%s7686] ss:$9 sm:$0xff] %v5591
    %v7841 = vld [vmem:[#allocation1] sm:$0xff]
    %7842 = vst [vmem:[#allocation1] ss:$9 sm:$0xff] %v5592
    %7843 = vst [vmem:[%s7674] ss:$9 sm:$0xff] %v5593
    %7844 = vst [vmem:[%s7676] ss:$9 sm:$0xff] %v5594
    %7845 = vst [vmem:[%s7678] ss:$9 sm:$0xff] %v5595
    %7846 = vst [vmem:[%s7680] ss:$9 sm:$0xff] %v5596
    %7847 = vst [vmem:[%s7682] ss:$9 sm:$0xff] %v5597
    %7848 = vst [vmem:[%s7684] ss:$9 sm:$0xff] %v5352
    %7849 = vst [vmem:[%s7686] ss:$9 sm:$0xff] %v5598
    %v7850 = vld [vmem:[#allocation1] sm:$0xff]
    %7851 = vst [vmem:[#allocation1] ss:$9 sm:$0xff] %v5599
    %7852 = vst [vmem:[%s7674] ss:$9 sm:$0xff] %v5600
    %7853 = vst [vmem:[%s7676] ss:$9 sm:$0xff] %v5602
    %7854 = vst [vmem:[%s7678] ss:$9 sm:$0xff] %v5603
    %7855 = vst [vmem:[%s7680] ss:$9 sm:$0xff] %v5604
    %7856 = vst [vmem:[%s7682] ss:$9 sm:$0xff] %v5353
    %7857 = vst [vmem:[%s7684] ss:$9 sm:$0xff] %v5605
    %7858 = vst [vmem:[%s7686] ss:$9 sm:$0xff] %v5606
    %v7859 = vld [vmem:[#allocation1] sm:$0xff]
    %7860 = vst [vmem:[#allocation1] ss:$9 sm:$0xff] %v5607
    %7861 = vst [vmem:[%s7674] ss:$9 sm:$0xff] %v5608
    %7862 = vst [vmem:[%s7676] ss:$9 sm:$0xff] %v5609
    %7863 = vst [vmem:[%s7678] ss:$9 sm:$0xff] %v5610
    %7864 = vst [vmem:[%s7680] ss:$9 sm:$0xff] %v5611
    %7865 = vst [vmem:[%s7682] ss:$9 sm:$0xff] %v5354
    %7866 = vst [vmem:[%s7684] ss:$9 sm:$0xff] %v5612
    %7867 = vst [vmem:[%s7686] ss:$9 sm:$0xff] %v5613
    %v7868 = vld [vmem:[#allocation1] sm:$0xff]
    %7869 = vst [vmem:[#allocation1] ss:$9 sm:$0xff] %v5615
    %7870 = vst [vmem:[%s7674] ss:$9 sm:$0xff] %v5616
    %7871 = vst [vmem:[%s7676] ss:$9 sm:$0xff] %v5617
    %7872 = vst [vmem:[%s7678] ss:$9 sm:$0xff] %v5618
    %7873 = vst [vmem:[%s7680] ss:$9 sm:$0xff] %v5355
    %7874 = vst [vmem:[%s7682] ss:$9 sm:$0xff] %v5619
    %7875 = vst [vmem:[%s7684] ss:$9 sm:$0xff] %v5620
    %7876 = vst [vmem:[%s7686] ss:$9 sm:$0xff] %v5621
    %v7877 = vld [vmem:[#allocation1] sm:$0xff]
    %7878 = vst [vmem:[#allocation1] ss:$9 sm:$0xff] %v5622
    %7879 = vst [vmem:[%s7674] ss:$9 sm:$0xff] %v5623
    %7880 = vst [vmem:[%s7676] ss:$9 sm:$0xff] %v5624
    %7881 = vst [vmem:[%s7678] ss:$9 sm:$0xff] %v5625
    %7882 = vst [vmem:[%s7680] ss:$9 sm:$0xff] %v5356
    %7883 = vst [vmem:[%s7682] ss:$9 sm:$0xff] %v5626
    %7884 = vst [vmem:[%s7684] ss:$9 sm:$0xff] %v5628
    %7885 = vst [vmem:[%s7686] ss:$9 sm:$0xff] %v5629
    %v7886 = vld [vmem:[#allocation1] sm:$0xff]
    %7887 = vst [vmem:[#allocation1] ss:$9 sm:$0xff] %v5630
    %7888 = vst [vmem:[%s7674] ss:$9 sm:$0xff] %v5631
    %7889 = vst [vmem:[%s7676] ss:$9 sm:$0xff] %v5632
    %7890 = vst [vmem:[%s7678] ss:$9 sm:$0xff] %v5357
    %7891 = vst [vmem:[%s7680] ss:$9 sm:$0xff] %v5633
    %7892 = vst [vmem:[%s7682] ss:$9 sm:$0xff] %v5634
    %7893 = vst [vmem:[%s7684] ss:$9 sm:$0xff] %v5635
    %7894 = vst [vmem:[%s7686] ss:$9 sm:$0xff] %v5636
    %v7895 = vld [vmem:[#allocation1] sm:$0xff]
    %7896 = vst [vmem:[#allocation1] ss:$9 sm:$0xff] %v5637
    %7897 = vst [vmem:[%s7674] ss:$9 sm:$0xff] %v5638
    %7898 = vst [vmem:[%s7676] ss:$9 sm:$0xff] %v5639
    %7899 = vst [vmem:[%s7678] ss:$9 sm:$0xff] %v5358
    %7900 = vst [vmem:[%s7680] ss:$9 sm:$0xff] %v5654
    %7901 = vst [vmem:[%s7682] ss:$9 sm:$0xff] %v5655
    %7902 = vst [vmem:[%s7684] ss:$9 sm:$0xff] %v5656
    %7903 = vst [vmem:[%s7686] ss:$9 sm:$0xff] %v5657
    %v7904 = vld [vmem:[#allocation1] sm:$0xff]
    %7905 = vst [vmem:[#allocation1] ss:$9 sm:$0xff] %v5658
    %7906 = vst [vmem:[%s7674] ss:$9 sm:$0xff] %v5659
    %7907 = vst [vmem:[%s7676] ss:$9 sm:$0xff] %v5660
    %7908 = vst [vmem:[%s7678] ss:$9 sm:$0xff] %v5361
    %7909 = vst [vmem:[%s7680] ss:$9 sm:$0xff] %v5661
    %7910 = vst [vmem:[%s7682] ss:$9 sm:$0xff] %v5662
    %7911 = vst [vmem:[%s7684] ss:$9 sm:$0xff] %v5663
    %7912 = vst [vmem:[%s7686] ss:$9 sm:$0xff] %v5664
    %v7913 = vld [vmem:[#allocation1] sm:$0xff]
    %7914 = vst [vmem:[#allocation1] ss:$9 sm:$0xff] %v5665
    %7915 = vst [vmem:[%s7674] ss:$9 sm:$0xff] %v5666
    %7916 = vst [vmem:[%s7676] ss:$9 sm:$0xff] %v5362
    %7917 = vst [vmem:[%s7678] ss:$9 sm:$0xff] %v5668
    %7918 = vst [vmem:[%s7680] ss:$9 sm:$0xff] %v5669
    %7919 = vst [vmem:[%s7682] ss:$9 sm:$0xff] %v5670
    %7920 = vst [vmem:[%s7684] ss:$9 sm:$0xff] %v5671
    %7921 = vst [vmem:[%s7686] ss:$9 sm:$0xff] %v5672
    %v7922 = vld [vmem:[#allocation1] sm:$0xff]
    %7923 = vst [vmem:[#allocation1] ss:$9 sm:$0xff] %v5673
    %7924 = vst [vmem:[%s7674] ss:$9 sm:$0xff] %v5674
    %7925 = vst [vmem:[%s7676] ss:$9 sm:$0xff] %v5363
    %7926 = vst [vmem:[%s7678] ss:$9 sm:$0xff] %v5675
    %7927 = vst [vmem:[%s7680] ss:$9 sm:$0xff] %v5676
    %7928 = vst [vmem:[%s7682] ss:$9 sm:$0xff] %v5677
    %7929 = vst [vmem:[%s7684] ss:$9 sm:$0xff] %v5678
    %7930 = vst [vmem:[%s7686] ss:$9 sm:$0xff] %v5679
    %v7931 = vld [vmem:[#allocation1] sm:$0xff]
    %7932 = vst [vmem:[#allocation1] ss:$9 sm:$0xff] %v5681
    %7933 = vst [vmem:[%s7674] ss:$9 sm:$0xff] %v5364
    %7934 = vst [vmem:[%s7676] ss:$9 sm:$0xff] %v5682
    %7935 = vst [vmem:[%s7678] ss:$9 sm:$0xff] %v5683
    %7936 = vst [vmem:[%s7680] ss:$9 sm:$0xff] %v5684
    %7937 = vst [vmem:[%s7682] ss:$9 sm:$0xff] %v5685
    %7938 = vst [vmem:[%s7684] ss:$9 sm:$0xff] %v5686
    %7939 = vst [vmem:[%s7686] ss:$9 sm:$0xff] %v5687
    %v7940 = vld [vmem:[#allocation1] sm:$0xff]
    %7941 = vst [vmem:[#allocation1] ss:$9 sm:$0xff] %v5688
    %7942 = vst [vmem:[%s7674] ss:$9 sm:$0xff] %v5365
    %7943 = vst [vmem:[%s7676] ss:$9 sm:$0xff] %v5689
    %7944 = vst [vmem:[%s7678] ss:$9 sm:$0xff] %v5690
    %7945 = vst [vmem:[%s7680] ss:$9 sm:$0xff] %v5691
    %7946 = vst [vmem:[%s7682] ss:$9 sm:$0xff] %v5692
    %7947 = vst [vmem:[%s7684] ss:$9 sm:$0xff] %v5694
    %7948 = vst [vmem:[%s7686] ss:$9 sm:$0xff] %v5695
    %v7949 = vld [vmem:[#allocation1] sm:$0xff]
    %7950 = vst [vmem:[#allocation1] ss:$9 sm:$0xff] %v5366
    %7951 = vst [vmem:[%s7674] ss:$9 sm:$0xff] %v5696
    %7952 = vst [vmem:[%s7676] ss:$9 sm:$0xff] %v5697
    %7953 = vst [vmem:[%s7678] ss:$9 sm:$0xff] %v5698
    %7954 = vst [vmem:[%s7680] ss:$9 sm:$0xff] %v5699
    %7955 = vst [vmem:[%s7682] ss:$9 sm:$0xff] %v5700
    %7956 = vst [vmem:[%s7684] ss:$9 sm:$0xff] %v5701
    %7957 = vst [vmem:[%s7686] ss:$9 sm:$0xff] %v5702
    %v7958 = vld [vmem:[#allocation1] sm:$0xff]
    %7959 = vst [vmem:[#allocation1] ss:$9 sm:$0xff] %v5367
    %7960 = vst [vmem:[%s7674] ss:$9 sm:$0xff] %v5703
    %7961 = vst [vmem:[%s7676] ss:$9 sm:$0xff] %v5704
    %7962 = vst [vmem:[%s7678] ss:$9 sm:$0xff] %v5705
    %7963 = vst [vmem:[%s7680] ss:$9 sm:$0xff] %v5707
    %7964 = vst [vmem:[%s7682] ss:$9 sm:$0xff] %v5708
    %7965 = vst [vmem:[%s7684] ss:$9 sm:$0xff] %v5709
    %7966 = vst [vmem:[%s7686] ss:$9 sm:$0xff] %v5368
    %v7967 = vld [vmem:[#allocation1] sm:$0xff]
    %7968 = vst [vmem:[#allocation1] ss:$9 sm:$0xff] %v5710
    %7969 = vst [vmem:[%s7674] ss:$9 sm:$0xff] %v5711
    %7970 = vst [vmem:[%s7676] ss:$9 sm:$0xff] %v5712
    %7971 = vst [vmem:[%s7678] ss:$9 sm:$0xff] %v5713
    %7972 = vst [vmem:[%s7680] ss:$9 sm:$0xff] %v5714
    %7973 = vst [vmem:[%s7682] ss:$9 sm:$0xff] %v5715
    %7974 = vst [vmem:[%s7684] ss:$9 sm:$0xff] %v5716
    %7975 = vst [vmem:[%s7686] ss:$9 sm:$0xff] %v5369
    %v7976 = vld [vmem:[#allocation1] sm:$0xff]
    %7977 = vst [vmem:[#allocation1] ss:$9 sm:$0xff] %v5717
    %7978 = vst [vmem:[%s7674] ss:$9 sm:$0xff] %v5718
    %7979 = vst [vmem:[%s7676] ss:$9 sm:$0xff] %v5720
    %7980 = vst [vmem:[%s7678] ss:$9 sm:$0xff] %v5721
    %7981 = vst [vmem:[%s7680] ss:$9 sm:$0xff] %v5722
    %7982 = vst [vmem:[%s7682] ss:$9 sm:$0xff] %v5723
    %7983 = vst [vmem:[%s7684] ss:$9 sm:$0xff] %v5370
    %7984 = vst [vmem:[%s7686] ss:$9 sm:$0xff] %v5724
    %v7985 = vld [vmem:[#allocation1] sm:$0xff]
    %7986 = vst [vmem:[#allocation1] ss:$9 sm:$0xff] %v5725
    %7987 = vst [vmem:[%s7674] ss:$9 sm:$0xff] %v5726
    %7988 = vst [vmem:[%s7676] ss:$9 sm:$0xff] %v5727
    %7989 = vst [vmem:[%s7678] ss:$9 sm:$0xff] %v5728
    %7990 = vst [vmem:[%s7680] ss:$9 sm:$0xff] %v5729
    %7991 = vst [vmem:[%s7682] ss:$9 sm:$0xff] %v5730
    %7992 = vst [vmem:[%s7684] ss:$9 sm:$0xff] %v5371
    %7993 = vst [vmem:[%s7686] ss:$9 sm:$0xff] %v5731
    %v7994 = vld [vmem:[#allocation1] sm:$0xff]
    %7995 = vst [vmem:[#allocation1] ss:$9 sm:$0xff] %v5733
    %7996 = vst [vmem:[%s7674] ss:$9 sm:$0xff] %v5734
    %7997 = vst [vmem:[%s7676] ss:$9 sm:$0xff] %v5735
    %7998 = vst [vmem:[%s7678] ss:$9 sm:$0xff] %v5736
    %7999 = vst [vmem:[%s7680] ss:$9 sm:$0xff] %v5737
    %8000 = vst [vmem:[%s7682] ss:$9 sm:$0xff] %v5372
    %8001 = vst [vmem:[%s7684] ss:$9 sm:$0xff] %v5738
    %8002 = vst [vmem:[%s7686] ss:$9 sm:$0xff] %v5739
    %v8003 = vld [vmem:[#allocation1] sm:$0xff]
    %8004 = vst [vmem:[#allocation1] ss:$9 sm:$0xff] %v5740
    %8005 = vst [vmem:[%s7674] ss:$9 sm:$0xff] %v5741
    %8006 = vst [vmem:[%s7676] ss:$9 sm:$0xff] %v5742
    %8007 = vst [vmem:[%s7678] ss:$9 sm:$0xff] %v5743
    %8008 = vst [vmem:[%s7680] ss:$9 sm:$0xff] %v5744
    %8009 = vst [vmem:[%s7682] ss:$9 sm:$0xff] %v5373
    %8010 = vst [vmem:[%s7684] ss:$9 sm:$0xff] %v5746
    %8011 = vst [vmem:[%s7686] ss:$9 sm:$0xff] %v5747
    %v8012 = vld [vmem:[#allocation1] sm:$0xff]
    %8013 = vst [vmem:[#allocation1] ss:$9 sm:$0xff] %v5748
    %8014 = vst [vmem:[%s7674] ss:$9 sm:$0xff] %v5749
    %8015 = vst [vmem:[%s7676] ss:$9 sm:$0xff] %v5750
    %8016 = vst [vmem:[%s7678] ss:$9 sm:$0xff] %v5751
    %8017 = vst [vmem:[%s7680] ss:$9 sm:$0xff] %v5374
    %8018 = vst [vmem:[%s7682] ss:$9 sm:$0xff] %v5752
    %8019 = vst [vmem:[%s7684] ss:$9 sm:$0xff] %v5753
    %8020 = vst [vmem:[%s7686] ss:$9 sm:$0xff] %v5754
    %v8021 = vld [vmem:[#allocation1] sm:$0xff]
    %8022 = vst [vmem:[#allocation1] ss:$9 sm:$0xff] %v5755
    %8023 = vst [vmem:[%s7674] ss:$9 sm:$0xff] %v5756
    %8024 = vst [vmem:[%s7676] ss:$9 sm:$0xff] %v5757
    %8025 = vst [vmem:[%s7678] ss:$9 sm:$0xff] %v5758
    %8026 = vst [vmem:[%s7680] ss:$9 sm:$0xff] %v5759
    %8027 = vst [vmem:[%s7682] ss:$9 sm:$0xff] %v5760
    %8028 = vst [vmem:[%s7684] ss:$9 sm:$0xff] %v5761
    %8029 = vst [vmem:[%s7686] ss:$9 sm:$0xff] %v5762
    %v8030 = vld [vmem:[#allocation1] sm:$0xff]
    %8031 = vst [vmem:[#allocation1] ss:$9 sm:$0xff] %v5763
    %8032 = vst [vmem:[%s7674] ss:$9 sm:$0xff] %v5764
    %8033 = vst [vmem:[%s7676] ss:$9 sm:$0xff] %v5765
    %8034 = vst [vmem:[%s7678] ss:$9 sm:$0xff] %v5376
    %8035 = vst [vmem:[%s7680] ss:$9 sm:$0xff] %v5766
    %8036 = vst [vmem:[%s7682] ss:$9 sm:$0xff] %v5767
    %8037 = vst [vmem:[%s7684] ss:$9 sm:$0xff] %v5768
    %8038 = vst [vmem:[%s7686] ss:$9 sm:$0xff] %v5769
    %v8039 = vld [vmem:[#allocation1] sm:$0xff]
    %8040 = vst [vmem:[#allocation1] ss:$9 sm:$0xff] %v5770
    %8041 = vst [vmem:[%s7674] ss:$9 sm:$0xff] %v5771
    %8042 = vst [vmem:[%s7676] ss:$9 sm:$0xff] %v5377
    %8043 = vst [vmem:[%s7678] ss:$9 sm:$0xff] %v5773
    %8044 = vst [vmem:[%s7680] ss:$9 sm:$0xff] %v5774
    %8045 = vst [vmem:[%s7682] ss:$9 sm:$0xff] %v5775
    %8046 = vst [vmem:[%s7684] ss:$9 sm:$0xff] %v5776
    %8047 = vst [vmem:[%s7686] ss:$9 sm:$0xff] %v5777
    %v8048 = vld [vmem:[#allocation1] sm:$0xff]
    %8049 = vst [vmem:[#allocation1] ss:$9 sm:$0xff] %v5778
    %8050 = vst [vmem:[%s7674] ss:$9 sm:$0xff] %v5779
    %8051 = vst [vmem:[%s7676] ss:$9 sm:$0xff] %v5378
    %8052 = vst [vmem:[%s7678] ss:$9 sm:$0xff] %v5780
    %8053 = vst [vmem:[%s7680] ss:$9 sm:$0xff] %v5781
    %8054 = vst [vmem:[%s7682] ss:$9 sm:$0xff] %v5782
    %8055 = vst [vmem:[%s7684] ss:$9 sm:$0xff] %v5783
    %8056 = vst [vmem:[%s7686] ss:$9 sm:$0xff] %v5784
    %v8057 = vld [vmem:[#allocation1] sm:$0xff]
    %8058 = vst [vmem:[#allocation1] ss:$9 sm:$0xff] %v5786
    %8059 = vst [vmem:[%s7674] ss:$9 sm:$0xff] %v5379
    %8060 = vst [vmem:[%s7676] ss:$9 sm:$0xff] %v5787
    %8061 = vst [vmem:[%s7678] ss:$9 sm:$0xff] %v5788
    %8062 = vst [vmem:[%s7680] ss:$9 sm:$0xff] %v5789
    %8063 = vst [vmem:[%s7682] ss:$9 sm:$0xff] %v5790
    %8064 = vst [vmem:[%s7684] ss:$9 sm:$0xff] %v5791
    %8065 = vst [vmem:[%s7686] ss:$9 sm:$0xff] %v5792
    %v8066 = vld [vmem:[#allocation1] sm:$0xff]
    %8067 = vst [vmem:[#allocation1] ss:$9 sm:$0xff] %v5793
    %8068 = vst [vmem:[%s7674] ss:$9 sm:$0xff] %v5380
    %8069 = vst [vmem:[%s7676] ss:$9 sm:$0xff] %v5794
    %8070 = vst [vmem:[%s7678] ss:$9 sm:$0xff] %v5795
    %8071 = vst [vmem:[%s7680] ss:$9 sm:$0xff] %v5796
    %8072 = vst [vmem:[%s7682] ss:$9 sm:$0xff] %v5797
    %8073 = vst [vmem:[%s7684] ss:$9 sm:$0xff] %v5799
    %8074 = vst [vmem:[%s7686] ss:$9 sm:$0xff] %v5800
    %v8075 = vld [vmem:[#allocation1] sm:$0xff]
    %8076 = vst [vmem:[#allocation1] ss:$9 sm:$0xff] %v5381
    %8077 = vst [vmem:[%s7674] ss:$9 sm:$0xff] %v5801
    %8078 = vst [vmem:[%s7676] ss:$9 sm:$0xff] %v5802
    %8079 = vst [vmem:[%s7678] ss:$9 sm:$0xff] %v5803
    %8080 = vst [vmem:[%s7680] ss:$9 sm:$0xff] %v5804
    %8081 = vst [vmem:[%s7682] ss:$9 sm:$0xff] %v5805
    %8082 = vst [vmem:[%s7684] ss:$9 sm:$0xff] %v5806
    %8083 = vst [vmem:[%s7686] ss:$9 sm:$0xff] %v5807
    %v8084 = vld [vmem:[#allocation1] sm:$0xff]
    %8085 = vst [vmem:[#allocation1] ss:$9 sm:$0xff] %v5382
    %8086 = vst [vmem:[%s7674] ss:$9 sm:$0xff] %v5808
    %8087 = vst [vmem:[%s7676] ss:$9 sm:$0xff] %v5809
    %8088 = vst [vmem:[%s7678] ss:$9 sm:$0xff] %v5810
    %8089 = vst [vmem:[%s7680] ss:$9 sm:$0xff] %v5812
    %8090 = vst [vmem:[%s7682] ss:$9 sm:$0xff] %v5813
    %8091 = vst [vmem:[%s7684] ss:$9 sm:$0xff] %v5814
    %8092 = vst [vmem:[%s7686] ss:$9 sm:$0xff] %v5383
    %v8093 = vld [vmem:[#allocation1] sm:$0xff]
    %8094 = vst [vmem:[#allocation1] ss:$9 sm:$0xff] %v5815
    %8095 = vst [vmem:[%s7674] ss:$9 sm:$0xff] %v5816
    %8096 = vst [vmem:[%s7676] ss:$9 sm:$0xff] %v5817
    %8097 = vst [vmem:[%s7678] ss:$9 sm:$0xff] %v5818
    %8098 = vst [vmem:[%s7680] ss:$9 sm:$0xff] %v5819
    %8099 = vst [vmem:[%s7682] ss:$9 sm:$0xff] %v5820
    %8100 = vst [vmem:[%s7684] ss:$9 sm:$0xff] %v5821
    %8101 = vst [vmem:[%s7686] ss:$9 sm:$0xff] %v5384
    %v8102 = vld [vmem:[#allocation1] sm:$0xff]
    %8103 = vst [vmem:[#allocation1] ss:$9 sm:$0xff] %v5822
    %8104 = vst [vmem:[%s7674] ss:$9 sm:$0xff] %v5823
    %8105 = vst [vmem:[%s7676] ss:$9 sm:$0xff] %v5825
    %8106 = vst [vmem:[%s7678] ss:$9 sm:$0xff] %v5826
    %8107 = vst [vmem:[%s7680] ss:$9 sm:$0xff] %v5827
    %8108 = vst [vmem:[%s7682] ss:$9 sm:$0xff] %v5828
    %8109 = vst [vmem:[%s7684] ss:$9 sm:$0xff] %v5385
    %8110 = vst [vmem:[%s7686] ss:$9 sm:$0xff] %v5829
    %v8111 = vld [vmem:[#allocation1] sm:$0xff]
    %8112 = vst [vmem:[#allocation1] ss:$9 sm:$0xff] %v5830
    %8113 = vst [vmem:[%s7674] ss:$9 sm:$0xff] %v5831
    %8114 = vst [vmem:[%s7676] ss:$9 sm:$0xff] %v5832
    %8115 = vst [vmem:[%s7678] ss:$9 sm:$0xff] %v5833
    %8116 = vst [vmem:[%s7680] ss:$9 sm:$0xff] %v5834
    %8117 = vst [vmem:[%s7682] ss:$9 sm:$0xff] %v5835
    %8118 = vst [vmem:[%s7684] ss:$9 sm:$0xff] %v5386
    %8119 = vst [vmem:[%s7686] ss:$9 sm:$0xff] %v5836
    %v8120 = vld [vmem:[#allocation1] sm:$0xff]
    %8121 = vrot.lane.b32.xlu0 %v7688, 24
    %v8122 = vpop.permute.xlu0 %8121
    %8123 = vrot.lane.b32.xlu0 %v7697, 24
    %v8124 = vpop.permute.xlu0 %8123
    %8125 = vrot.lane.b32.xlu0 %v7706, 24
    %v8126 = vpop.permute.xlu0 %8125
    %8127 = vrot.lane.b32.xlu0 %v7715, 24
    %v8128 = vpop.permute.xlu0 %8127
    %8129 = vrot.lane.b32.xlu0 %v7724, 24
    %v8130 = vpop.permute.xlu0 %8129
    %8131 = vrot.lane.b32.xlu0 %v7733, 24
    %v8132 = vpop.permute.xlu0 %8131
    %8133 = vrot.lane.b32.xlu0 %v7742, 24
    %v8134 = vpop.permute.xlu0 %8133
    %8135 = vrot.lane.b32.xlu0 %v7751, 24
    %v8136 = vpop.permute.xlu0 %8135
    %8137 = vrot.lane.b32.xlu0 %v7760, 24
    %v8138 = vpop.permute.xlu0 %8137
    %8139 = vrot.lane.b32.xlu0 %v7769, 24
    %v8140 = vpop.permute.xlu0 %8139
    %8141 = vrot.lane.b32.xlu0 %v7778, 24
    %v8142 = vpop.permute.xlu0 %8141
    %8143 = vrot.lane.b32.xlu0 %v7787, 24
    %v8144 = vpop.permute.xlu0 %8143
    %8145 = vrot.lane.b32.xlu0 %v7796, 24
    %v8146 = vpop.permute.xlu0 %8145
    %8147 = vrot.lane.b32.xlu0 %v7805, 24
    %v8148 = vpop.permute.xlu0 %8147
    %8149 = vrot.lane.b32.xlu0 %v7814, 24
    %v8150 = vpop.permute.xlu0 %8149
    %8151 = vrot.lane.b32.xlu0 %v7823, 24
    %v8152 = vpop.permute.xlu0 %8151
    %8153 = vrot.lane.b32.xlu0 %v7832, 24
    %v8154 = vpop.permute.xlu0 %8153
    %8155 = vrot.lane.b32.xlu0 %v7841, 24
    %v8156 = vpop.permute.xlu0 %8155
    %8157 = vrot.lane.b32.xlu0 %v7850, 24
    %v8158 = vpop.permute.xlu0 %8157
    %8159 = vrot.lane.b32.xlu0 %v7859, 24
    %v8160 = vpop.permute.xlu0 %8159
    %8161 = vrot.lane.b32.xlu0 %v7868, 24
    %v8162 = vpop.permute.xlu0 %8161
    %8163 = vrot.lane.b32.xlu0 %v7877, 24
    %v8164 = vpop.permute.xlu0 %8163
    %8165 = vrot.lane.b32.xlu0 %v7886, 24
    %v8166 = vpop.permute.xlu0 %8165
    %8167 = vrot.lane.b32.xlu0 %v7895, 24
    %v8168 = vpop.permute.xlu0 %8167
    %8169 = vrot.lane.b32.xlu0 %v7904, 24
    %v8170 = vpop.permute.xlu0 %8169
    %8171 = vrot.lane.b32.xlu0 %v7913, 24
    %v8172 = vpop.permute.xlu0 %8171
    %8173 = vrot.lane.b32.xlu0 %v7922, 24
    %v8174 = vpop.permute.xlu0 %8173
    %8175 = vrot.lane.b32.xlu0 %v7931, 24
    %v8176 = vpop.permute.xlu0 %8175
    %8177 = vrot.lane.b32.xlu0 %v7940, 24
    %v8178 = vpop.permute.xlu0 %8177
    %8179 = vrot.lane.b32.xlu0 %v7949, 24
    %v8180 = vpop.permute.xlu0 %8179
    %8181 = vrot.lane.b32.xlu0 %v7958, 24
    %v8182 = vpop.permute.xlu0 %8181
    %8183 = vrot.lane.b32.xlu0 %v7967, 24
    %v8184 = vpop.permute.xlu0 %8183
    %8185 = vrot.lane.b32.xlu0 %v7976, 24
    %v8186 = vpop.permute.xlu0 %8185
    %8187 = vrot.lane.b32.xlu0 %v7985, 24
    %v8188 = vpop.permute.xlu0 %8187
    %8189 = vrot.lane.b32.xlu0 %v7994, 24
    %v8190 = vpop.permute.xlu0 %8189
    %8191 = vrot.lane.b32.xlu0 %v8003, 24
    %v8192 = vpop.permute.xlu0 %8191
    %8193 = vrot.lane.b32.xlu0 %v8012, 24
    %v8194 = vpop.permute.xlu0 %8193
    %8195 = vrot.lane.b32.xlu0 %v8021, 24
    %v8196 = vpop.permute.xlu0 %8195
    %8197 = vrot.lane.b32.xlu0 %v8030, 24
    %v8198 = vpop.permute.xlu0 %8197
    %8199 = vrot.lane.b32.xlu0 %v8039, 24
    %v8200 = vpop.permute.xlu0 %8199
    %8201 = vrot.lane.b32.xlu0 %v8048, 24
    %v8202 = vpop.permute.xlu0 %8201
    %8203 = vrot.lane.b32.xlu0 %v8057, 24
    %v8204 = vpop.permute.xlu0 %8203
    %8205 = vrot.lane.b32.xlu0 %v8066, 24
    %v8206 = vpop.permute.xlu0 %8205
    %8207 = vrot.lane.b32.xlu0 %v8075, 24
    %v8208 = vpop.permute.xlu0 %8207
    %8209 = vrot.lane.b32.xlu0 %v8084, 24
    %v8210 = vpop.permute.xlu0 %8209
    %8211 = vrot.lane.b32.xlu0 %v8093, 24
    %v8212 = vpop.permute.xlu0 %8211
    %8213 = vrot.lane.b32.xlu0 %v8102, 24
    %v8214 = vpop.permute.xlu0 %8213
    %8215 = vrot.lane.b32.xlu0 %v8111, 24
    %v8216 = vpop.permute.xlu0 %8215
    %8217 = vrot.lane.b32.xlu0 %v8120, 24
    %v8218 = vpop.permute.xlu0 %8217
    %vm8268 = vcmask 261312
    %8269 = vst.msk [vmem:[#allocation3] sm:$0xff] %vm8268, %v8122
    %8270 = vst.msk [vmem:[#allocation3 + $0x8] sm:$0xff] %vm8268, %v8124
    %8271 = vst.msk [vmem:[#allocation3 + $0x10] sm:$0xff] %vm8268, %v8126
    %8272 = vst.msk [vmem:[#allocation3 + $0x18] sm:$0xff] %vm8268, %v8128
    %8273 = vst.msk [vmem:[#allocation3 + $0x20] sm:$0xff] %vm8268, %v8130
    %8274 = vst.msk [vmem:[#allocation3 + $0x28] sm:$0xff] %vm8268, %v8132
    %8275 = vst.msk [vmem:[#allocation3 + $0x30] sm:$0xff] %vm8268, %v8134
    %8276 = vst.msk [vmem:[#allocation3 + $0x38] sm:$0xff] %vm8268, %v8136
    %8277 = vst.msk [vmem:[#allocation3 + $0x40] sm:$0xff] %vm8268, %v8138
    %8278 = vst.msk [vmem:[#allocation3 + $0x48] sm:$0xff] %vm8268, %v8140
    %8279 = vst.msk [vmem:[#allocation3 + $0x50] sm:$0xff] %vm8268, %v8142
    %8280 = vst.msk [vmem:[#allocation3 + $0x58] sm:$0xff] %vm8268, %v8144
    %8281 = vst.msk [vmem:[#allocation3 + $0x60] sm:$0xff] %vm8268, %v8146
    %8282 = vst.msk [vmem:[#allocation3 + $0x68] sm:$0xff] %vm8268, %v8148
    %8283 = vst.msk [vmem:[#allocation3 + $0x70] sm:$0xff] %vm8268, %v8150
    %8284 = vst.msk [vmem:[#allocation3 + $0x78] sm:$0xff] %vm8268, %v8152
    %8285 = vst.msk [vmem:[#allocation3 + $0x80] sm:$0xff] %vm8268, %v8154
    %8286 = vst.msk [vmem:[#allocation3 + $0x88] sm:$0xff] %vm8268, %v8156
    %8287 = vst.msk [vmem:[#allocation3 + $0x90] sm:$0xff] %vm8268, %v8158
    %8288 = vst.msk [vmem:[#allocation3 + $0x98] sm:$0xff] %vm8268, %v8160
    %8289 = vst.msk [vmem:[#allocation3 + $0xa0] sm:$0xff] %vm8268, %v8162
    %8290 = vst.msk [vmem:[#allocation3 + $0xa8] sm:$0xff] %vm8268, %v8164
    %8291 = vst.msk [vmem:[#allocation3 + $0xb0] sm:$0xff] %vm8268, %v8166
    %8292 = vst.msk [vmem:[#allocation3 + $0xb8] sm:$0xff] %vm8268, %v8168
    %8293 = vst.msk [vmem:[#allocation3 + $0xc0] sm:$0xff] %vm8268, %v8170
    %8294 = vst.msk [vmem:[#allocation3 + $0xc8] sm:$0xff] %vm8268, %v8172
    %8295 = vst.msk [vmem:[#allocation3 + $0xd0] sm:$0xff] %vm8268, %v8174
    %8296 = vst.msk [vmem:[#allocation3 + $0xd8] sm:$0xff] %vm8268, %v8176
    %8297 = vst.msk [vmem:[#allocation3 + $0xe0] sm:$0xff] %vm8268, %v8178
    %8298 = vst.msk [vmem:[#allocation3 + $0xe8] sm:$0xff] %vm8268, %v8180
    %8299 = vst.msk [vmem:[#allocation3 + $0xf0] sm:$0xff] %vm8268, %v8182
    %8300 = vst.msk [vmem:[#allocation3 + $0xf8] sm:$0xff] %vm8268, %v8184
    %8301 = vst.msk [vmem:[#allocation3 + $0x100] sm:$0xff] %vm8268, %v8186
    %8302 = vst.msk [vmem:[#allocation3 + $0x108] sm:$0xff] %vm8268, %v8188
    %8303 = vst.msk [vmem:[#allocation3 + $0x110] sm:$0xff] %vm8268, %v8190
    %8304 = vst.msk [vmem:[#allocation3 + $0x118] sm:$0xff] %vm8268, %v8192
    %8305 = vst.msk [vmem:[#allocation3 + $0x120] sm:$0xff] %vm8268, %v8194
    %8306 = vst.msk [vmem:[#allocation3 + $0x128] sm:$0xff] %vm8268, %v8196
    %8307 = vst.msk [vmem:[#allocation3 + $0x130] sm:$0xff] %vm8268, %v8198
    %8308 = vst.msk [vmem:[#allocation3 + $0x138] sm:$0xff] %vm8268, %v8200
    %8309 = vst.msk [vmem:[#allocation3 + $0x140] sm:$0xff] %vm8268, %v8202
    %8310 = vst.msk [vmem:[#allocation3 + $0x148] sm:$0xff] %vm8268, %v8204
    %8311 = vst.msk [vmem:[#allocation3 + $0x150] sm:$0xff] %vm8268, %v8206
    %8312 = vst.msk [vmem:[#allocation3 + $0x158] sm:$0xff] %vm8268, %v8208
    %8313 = vst.msk [vmem:[#allocation3 + $0x160] sm:$0xff] %vm8268, %v8210
    %8314 = vst.msk [vmem:[#allocation3 + $0x168] sm:$0xff] %vm8268, %v8212
    %8315 = vst.msk [vmem:[#allocation3 + $0x170] sm:$0xff] %vm8268, %v8214
    %8316 = vst.msk [vmem:[#allocation3 + $0x178] sm:$0xff] %vm8268, %v8216
    %8317 = vst.msk [vmem:[#allocation3 + $0x180] sm:$0xff] %vm8268, %v8218
    %v8318 = vld [vmem:[%s4] sm:$0xff]
    %v8319 = vld [vmem:[#allocation3] sm:$0xff]
    %v8320 = vld [vmem:[#allocation3 + $0x8] sm:$0xff]
    %v8321 = vld [vmem:[#allocation3 + $0x10] sm:$0xff]
    %v8322 = vld [vmem:[#allocation3 + $0x18] sm:$0xff]
    %v8323 = vld [vmem:[#allocation3 + $0x20] sm:$0xff]
    %v8324 = vld [vmem:[#allocation3 + $0x28] sm:$0xff]
    %v8325 = vld [vmem:[#allocation3 + $0x30] sm:$0xff]
    %v8326 = vld [vmem:[#allocation3 + $0x38] sm:$0xff]
    %v8327 = vld [vmem:[#allocation3 + $0x40] sm:$0xff]
    %v8328 = vld [vmem:[#allocation3 + $0x48] sm:$0xff]
    %v8329 = vld [vmem:[#allocation3 + $0x50] sm:$0xff]
    %v8330 = vld [vmem:[#allocation3 + $0x58] sm:$0xff]
    %v8331 = vld [vmem:[#allocation3 + $0x60] sm:$0xff]
    %v8332 = vld [vmem:[#allocation3 + $0x68] sm:$0xff]
    %v8333 = vld [vmem:[#allocation3 + $0x70] sm:$0xff]
    %v8334 = vld [vmem:[#allocation3 + $0x78] sm:$0xff]
    %v8335 = vld [vmem:[#allocation3 + $0x80] sm:$0xff]
    %v8336 = vld [vmem:[#allocation3 + $0x88] sm:$0xff]
    %v8337 = vld [vmem:[#allocation3 + $0x90] sm:$0xff]
    %v8338 = vld [vmem:[#allocation3 + $0x98] sm:$0xff]
    %v8339 = vld [vmem:[#allocation3 + $0xa0] sm:$0xff]
    %v8340 = vld [vmem:[#allocation3 + $0xa8] sm:$0xff]
    %v8341 = vld [vmem:[#allocation3 + $0xb0] sm:$0xff]
    %v8342 = vld [vmem:[#allocation3 + $0xb8] sm:$0xff]
    %v8343 = vld [vmem:[#allocation3 + $0xc0] sm:$0xff]
    %v8344 = vld [vmem:[#allocation3 + $0xc8] sm:$0xff]
    %v8345 = vld [vmem:[#allocation3 + $0xd0] sm:$0xff]
    %v8346 = vld [vmem:[#allocation3 + $0xd8] sm:$0xff]
    %v8347 = vld [vmem:[#allocation3 + $0xe0] sm:$0xff]
    %v8348 = vld [vmem:[#allocation3 + $0xe8] sm:$0xff]
    %v8349 = vld [vmem:[#allocation3 + $0xf0] sm:$0xff]
    %v8350 = vld [vmem:[#allocation3 + $0xf8] sm:$0xff]
    %v8351 = vld [vmem:[#allocation3 + $0x100] sm:$0xff]
    %v8352 = vld [vmem:[#allocation3 + $0x108] sm:$0xff]
    %v8353 = vld [vmem:[#allocation3 + $0x110] sm:$0xff]
    %v8354 = vld [vmem:[#allocation3 + $0x118] sm:$0xff]
    %v8355 = vld [vmem:[#allocation3 + $0x120] sm:$0xff]
    %v8356 = vld [vmem:[#allocation3 + $0x128] sm:$0xff]
    %v8357 = vld [vmem:[#allocation3 + $0x130] sm:$0xff]
    %v8358 = vld [vmem:[#allocation3 + $0x138] sm:$0xff]
    %v8359 = vld [vmem:[#allocation3 + $0x140] sm:$0xff]
    %v8360 = vld [vmem:[#allocation3 + $0x148] sm:$0xff]
    %v8361 = vld [vmem:[#allocation3 + $0x150] sm:$0xff]
    %v8362 = vld [vmem:[#allocation3 + $0x158] sm:$0xff]
    %v8363 = vld [vmem:[#allocation3 + $0x160] sm:$0xff]
    %v8364 = vld [vmem:[#allocation3 + $0x168] sm:$0xff]
    %v8365 = vld [vmem:[#allocation3 + $0x170] sm:$0xff]
    %v8366 = vld [vmem:[#allocation3 + $0x178] sm:$0xff]
    %v8367 = vld [vmem:[#allocation3 + $0x180] sm:$0xff]
    %vm8368 = vcmask 261120
    %v8370 = vsel %vm8368, %v8318, 0
    %v8373 = vsel %vm8368, %v8319, 0
    %v8376 = vsel %vm8368, %v8320, 0
    %v8379 = vsel %vm8368, %v8321, 0
    %v8382 = vsel %vm8368, %v8322, 0
    %v8385 = vsel %vm8368, %v8323, 0
    %v8388 = vsel %vm8368, %v8324, 0
    %v8391 = vsel %vm8368, %v8325, 0
    %v8394 = vsel %vm8368, %v8326, 0
    %v8397 = vsel %vm8368, %v8327, 0
    %v8400 = vsel %vm8368, %v8328, 0
    %v8403 = vsel %vm8368, %v8329, 0
    %v8406 = vsel %vm8368, %v8330, 0
    %v8409 = vsel %vm8368, %v8331, 0
    %v8412 = vsel %vm8368, %v8332, 0
    %v8415 = vsel %vm8368, %v8333, 0
    %v8418 = vsel %vm8368, %v8334, 0
    %v8421 = vsel %vm8368, %v8335, 0
    %v8424 = vsel %vm8368, %v8336, 0
    %v8427 = vsel %vm8368, %v8337, 0
    %v8430 = vsel %vm8368, %v8338, 0
    %v8433 = vsel %vm8368, %v8339, 0
    %v8436 = vsel %vm8368, %v8340, 0
    %v8439 = vsel %vm8368, %v8341, 0
    %v8442 = vsel %vm8368, %v8342, 0
    %v8445 = vsel %vm8368, %v8343, 0
    %v8448 = vsel %vm8368, %v8344, 0
    %v8451 = vsel %vm8368, %v8345, 0
    %v8454 = vsel %vm8368, %v8346, 0
    %v8457 = vsel %vm8368, %v8347, 0
    %v8460 = vsel %vm8368, %v8348, 0
    %v8463 = vsel %vm8368, %v8349, 0
    %v8466 = vsel %vm8368, %v8350, 0
    %v8469 = vsel %vm8368, %v8351, 0
    %v8472 = vsel %vm8368, %v8352, 0
    %v8475 = vsel %vm8368, %v8353, 0
    %v8478 = vsel %vm8368, %v8354, 0
    %v8481 = vsel %vm8368, %v8355, 0
    %v8484 = vsel %vm8368, %v8356, 0
    %v8487 = vsel %vm8368, %v8357, 0
    %v8490 = vsel %vm8368, %v8358, 0
    %v8493 = vsel %vm8368, %v8359, 0
    %v8496 = vsel %vm8368, %v8360, 0
    %v8499 = vsel %vm8368, %v8361, 0
    %v8502 = vsel %vm8368, %v8362, 0
    %v8505 = vsel %vm8368, %v8363, 0
    %v8508 = vsel %vm8368, %v8364, 0
    %v8511 = vsel %vm8368, %v8365, 0
    %v8514 = vsel %vm8368, %v8366, 0
    %v8517 = vsel %vm8368, %v8367, 0
    %8519 = vmatpush.xpose.msra.mxu0 %v8418
    %8520 = vmatpush.xpose.msra.mxu0 %v8415
    %8521 = vmatpush.xpose.msra.mxu0 %v8412
    %8522 = vmatpush.xpose.msra.mxu0 %v8409
    %8523 = vmatpush.xpose.msra.mxu0 %v8406
    %8524 = vmatpush.xpose.msra.mxu0 %v8403
    %8525 = vmatpush.xpose.msra.mxu0 %v8400
    %8526 = vmatpush.xpose.msra.mxu0 %v8397
    %8527 = vmatpush.xpose.msra.mxu0 %v8394
    %8528 = vmatpush.xpose.msra.mxu0 %v8391
    %8529 = vmatpush.xpose.msra.mxu0 %v8388
    %8530 = vmatpush.xpose.msra.mxu0 %v8385
    %8531 = vmatpush.xpose.msra.mxu0 %v8382
    %8532 = vmatpush.xpose.msra.mxu0 %v8379
    %8533 = vmatpush.xpose.msra.mxu0 %v8376
    %8534 = vmatpush.xpose.msra.mxu0 %v8373
    %8535 = vmatmul.f32.gmra.mxu0 %v8370
    %v8536 = vpop.f32.mrf.mxu0
    %v8537 = vadd.f32 0.0, %v8536
    %8538 = vdwg.mxu0
    %8539 = vmatpush.xpose.msra.mxu0 %v8466
    %8540 = vmatpush.xpose.msra.mxu0 %v8463
    %8541 = vmatpush.xpose.msra.mxu0 %v8460
    %8542 = vmatpush.xpose.msra.mxu0 %v8457
    %8543 = vmatpush.xpose.msra.mxu0 %v8454
    %8544 = vmatpush.xpose.msra.mxu0 %v8451
    %8545 = vmatpush.xpose.msra.mxu0 %v8448
    %8546 = vmatpush.xpose.msra.mxu0 %v8445
    %8547 = vmatpush.xpose.msra.mxu0 %v8442
    %8548 = vmatpush.xpose.msra.mxu0 %v8439
    %8549 = vmatpush.xpose.msra.mxu0 %v8436
    %8550 = vmatpush.xpose.msra.mxu0 %v8433
    %8551 = vmatpush.xpose.msra.mxu0 %v8430
    %8552 = vmatpush.xpose.msra.mxu0 %v8427
    %8553 = vmatpush.xpose.msra.mxu0 %v8424
    %8554 = vmatpush.xpose.msra.mxu0 %v8421
    %8555 = vmatmul.f32.gmra.mxu0 %v8370
    %v8556 = vpop.f32.mrf.mxu0
    %v8557 = vadd.f32 0.0, %v8556
    %8558 = vdwg.mxu0
    %8559 = vmatpush.xpose.msra.mxu0 %v8514
    %8560 = vmatpush.xpose.msra.mxu0 %v8511
    %8561 = vmatpush.xpose.msra.mxu0 %v8508
    %8562 = vmatpush.xpose.msra.mxu0 %v8505
    %8563 = vmatpush.xpose.msra.mxu0 %v8502
    %8564 = vmatpush.xpose.msra.mxu0 %v8499
    %8565 = vmatpush.xpose.msra.mxu0 %v8496
    %8566 = vmatpush.xpose.msra.mxu0 %v8493
    %8567 = vmatpush.xpose.msra.mxu0 %v8490
    %8568 = vmatpush.xpose.msra.mxu0 %v8487
    %8569 = vmatpush.xpose.msra.mxu0 %v8484
    %8570 = vmatpush.xpose.msra.mxu0 %v8481
    %8571 = vmatpush.xpose.msra.mxu0 %v8478
    %8572 = vmatpush.xpose.msra.mxu0 %v8475
    %8573 = vmatpush.xpose.msra.mxu0 %v8472
    %8574 = vmatpush.xpose.msra.mxu0 %v8469
    %8575 = vmatmul.f32.gmra.mxu0 %v8370
    %v8576 = vpop.f32.mrf.mxu0
    %v8577 = vadd.f32 0.0, %v8576
    %8578 = vdwg.mxu0
    %8579 = vmatpush.xpose.msra.mxu0 0.0
    %8580 = vmatpush.xpose.msra.mxu0 0.0
    %8581 = vmatpush.xpose.msra.mxu0 0.0
    %8582 = vmatpush.xpose.msra.mxu0 0.0
    %8583 = vmatpush.xpose.msra.mxu0 0.0
    %8584 = vmatpush.xpose.msra.mxu0 0.0
    %8585 = vmatpush.xpose.msra.mxu0 0.0
    %8586 = vmatpush.xpose.msra.mxu0 0.0
    %8587 = vmatpush.xpose.msra.mxu0 0.0
    %8588 = vmatpush.xpose.msra.mxu0 0.0
    %8589 = vmatpush.xpose.msra.mxu0 0.0
    %8590 = vmatpush.xpose.msra.mxu0 0.0
    %8591 = vmatpush.xpose.msra.mxu0 0.0
    %8592 = vmatpush.xpose.msra.mxu0 0.0
    %8593 = vmatpush.xpose.msra.mxu0 0.0
    %8594 = vmatpush.xpose.msra.mxu0 %v8517
    %8595 = vmatmul.f32.gmra.mxu0 %v8370
    %v8596 = vpop.f32.mrf.mxu0
    %v8597 = vadd.f32 0.0, %v8596
    %8598 = vdwg.mxu0
    %v8599 = vadd.f32 %v8537, %v8557
    %v8600 = vadd.f32 %v8599, %v8577
    %v8601 = vsel %vm4886, %v8597, 0.0
    %v8602 = vadd.f32 %v8600, %v8601
    %8603 = vadd.xlane.f32.xlu0 %v8602
    %v8604 = vpop.xlane.xlu0 %8603
    %v8605 = vrcp.pop 392.0
    %v8606 = vmul.f32 392.0, %v8605
    %v8607 = vsub.f32 1.0, %v8606
    %v8608 = vmul.f32 %v8605, %v8607
    %v8609 = vadd.f32 %v8605, %v8608
    %vm8610 = vweird.f32 %v8605
    %v8611 = vsel %vm8610, %v8605, %v8609
    %v8612 = vmul.f32 %v8604, %v8611
    %v8613 = vmul.f32 %v8537, %v8537
    %v8614 = vmul.f32 %v8557, %v8557
    %v8615 = vmul.f32 %v8577, %v8577
    %v8616 = vmul.f32 %v8597, %v8597
    %v8617 = vadd.f32 %v8613, %v8614
    %v8618 = vadd.f32 %v8617, %v8615
    %v8619 = vsel %vm4886, %v8616, 0.0
    %v8620 = vadd.f32 %v8618, %v8619
    %8621 = vadd.xlane.f32.xlu0 %v8620
    %v8622 = vpop.xlane.xlu0 %8621
    %v8623 = vmul.f32 %v8622, %v8611
    %v8624 = vmul.f32 %v8612, %v8612
    %v8625 = vsub.f32 %v8623, %v8624
    %v8626 = vld [vmem:[%s5] sm:$0xff]
    %v8627 = vadd.f32 %v8625, 1e-05
    %v8628 = vrsqrt.pop %v8627
    %v8629 = vmul.f32 %v8628, %v8627
    %v8630 = vmul.f32 %v8629, %v8628
    %v8631 = vmul.f32 0.5, %v8630
    %v8632 = vsub.f32 1.5, %v8631
    %v8633 = vmul.f32 %v8628, %v8632
    %vm8634 = vweird.f32 %v8627
    %vm8635 = vweird.f32 %v8628
    %vm8636 = vmor %vm8634, %vm8635
    %v8637 = vsel %vm8636, %v8628, %v8633
    %v8638 = vmul.f32 %v8626, %v8637
    %v8639 = vld [vmem:[%s6] sm:$0xff]
    %v8640 = vmul.f32 %v8612, %v8638
    %v8641 = vsub.f32 %v8639, %v8640
    %8643 = vset.pattern.permute.xlu0 0
    %8644 = vperm.xlu0 %8643, %v8638
    %v8645 = vpop.permute.xlu0 %8644
    %v8647 = vmul.f32 %v8537, %v8645
    %v8648 = vmul.f32 %v8557, %v8645
    %v8649 = vmul.f32 %v8577, %v8645
    %v8650 = vmul.f32 %v8597, %v8645
    %8652 = vset.pattern.permute.xlu0 0
    %8653 = vperm.xlu0 %8652, %v8641
    %v8654 = vpop.permute.xlu0 %8653
    %v8656 = vadd.f32 %v8647, %v8654
    %v8657 = vadd.f32 %v8648, %v8654
    %v8658 = vadd.f32 %v8649, %v8654
    %v8659 = vadd.f32 %v8650, %v8654
    %v8660 = vmax.f32 %v8656, 0.0
    %v8661 = vmax.f32 %v8657, 0.0
    %v8662 = vmax.f32 %v8658, 0.0
    %v8663 = vmax.f32 %v8659, 0.0
    %8664 = vst [vmem:[#allocation4] sm:$0xff] %v8660
    %vm8665 = vcmask 556032
    %8666 = vst.msk [vmem:[#allocation4 + $0x8] sm:$0xff] %vm8665, %v8661
    %8670 = vrot.lane.b32.xlu0 %v8661, 60
    %v8671 = vpop.permute.xlu0 %8670
    %8672 = vrot.lane.b32.xlu0 %v8662, 60
    %v8673 = vpop.permute.xlu0 %8672
    %8674 = vrot.lane.b32.xlu0 %v8663, 60
    %v8675 = vpop.permute.xlu0 %8674
    %vm8676 = vcmask 490496
    %v8677 = vsel %vm8676, %v8671, %v8673
    %v8678 = vsel %vm8676, %v8673, %v8675
    %s8681 = scalar_lea.vmem [#allocation4], 16
    %8682 = vst [vmem:[%s8681] sm:$0xff] %v8677
    %8683 = vst.msk [vmem:[%s8681 + $0x8] sm:$0xff] %vm8665, %v8678
    // Predicated region
    $region30: #{tpu_custom_call.1} parent=1 // pred_check
      _
    $region31: #{tpu_custom_call.1} parent=1 // pred_check_branch
      %8685 = sbr.rel (0) target = $region33
    $region32: #{tpu_custom_call.1} parent=1 // pred_region
      %8687 = vsyncadd [#allocation5], 0
      %s8688 = sshll.u32 [#allocation4], 4
      %s8689 = int_to_ptr.vmem [resolvable:$true] %s8688
      %s8690 = sshll.u32 %s7, 4
      %s8691 = int_to_ptr.hbm [resolvable:$true] %s8690
      %8696 = dma.vmem_to_hbm [thread:$0]  %s8689, 512, %s8691, [#allocation5], 256, 256, 16
    $region33: #{tpu_custom_call.1} parent=1 // pred_fallthru
      _
    // Predicated region
    $region34: #{tpu_custom_call.1} parent=1 // pred_check
      _
    $region35: #{tpu_custom_call.1} parent=1 // pred_check_branch
      %8698 = sbr.rel (0) target = $region37
    $region36: #{tpu_custom_call.1} parent=1 // pred_region
      %8700 = dma.done [#allocation5], 512
    $region37: #{tpu_custom_call.1} parent=1 // pred_fallthru
      _
    %8701 = vsyncpa [#allocation5], 1

</llo_original>
